<compile_context>
chip_gen: v7x
topology: tpu7x:2x2x1
jax: 0.10.0
libtpu: 0.0.40
codegen_flags: <defaults>
</compile_context>

<pallas_src>
import jax
import jax.numpy as jnp
from jax.experimental import pallas as pl
from jax.experimental.pallas import tpu as pltpu

K = 9                 # Conv1d kernel_size
PAD = (K - 1) // 2    # padding = 4  ("same" length)
C1, C2, C3 = 64, 128, 128
HID = 32
TB = 8                # batch tile per grid step


def _leaky(x):
    # nn.LeakyReLU(0.2)
    return jnp.where(x > 0, x, 0.2 * x)


# ----------------------------------------------------------------------------
# Fused kernel: conv1 -> LReLU -> conv2 -> LReLU -> conv3 -> LReLU
#               -> Flatten -> Linear(128*L,32) -> LReLU -> Dropout(id) -> Linear(32,1)
# One batch tile (TB elements) per grid step; channels on the lane axis.
# ----------------------------------------------------------------------------
def disc_kernel(x_ref, w1_ref, b1_ref, w2_ref, b2_ref, w3_ref, b3_ref,
                wf1_ref, bf1_ref, wf2_ref, bf2_ref, o_ref,
                pad2, pad3, slab2, slab3, h3s):
    tb, lp, _ = x_ref.shape
    lseq = lp - (K - 1)                       # output length L

    # ---- conv1 (Cin=1): 9-tap broadcast MAC on the VPU, 64 channels on lanes --
    acc1 = jnp.zeros((tb, lseq, C1), jnp.float32)
    for k in range(K):
        # (TB, L, 1) * (1, C1) -> (TB, L, C1)
        acc1 = acc1 + x_ref[:, k:k + lseq, :] * w1_ref[k]
    h1 = _leaky(acc1 + b1_ref[...])                            # (TB, L, 64) f32

    # ---- conv2 via im2col: ONE (TB*L, K*C1) @ (K*C1, C2) bf16 matmul ---------
    # Only the halo columns are zeroed (cheap, and safe under "parallel"
    # grid semantics); the interior is fully overwritten every step.
    zero2 = jnp.zeros((tb, PAD, C1), pad2.dtype)
    pad2[:, :PAD, :] = zero2
    pad2[:, PAD + lseq:, :] = zero2
    pad2[:, PAD:PAD + lseq, :] = h1
    for k in range(K):
        slab2[:, :, k * C1:(k + 1) * C1] = \
            pad2[:, k:k + lseq, :].astype(slab2.dtype)
    a2 = jnp.dot(slab2[...].reshape(tb * lseq, K * C1), w2_ref[...],
                 preferred_element_type=jnp.float32)
    h2 = _leaky(a2 + b2_ref[...])                              # (TB*L, 128) f32

    # ---- conv3 via im2col: ONE (TB*L, K*C2) @ (K*C2, C3) bf16 matmul ---------
    zero3 = jnp.zeros((tb, PAD, C2), pad3.dtype)
    pad3[:, :PAD, :] = zero3
    pad3[:, PAD + lseq:, :] = zero3
    pad3[:, PAD:PAD + lseq, :] = h2.reshape(tb, lseq, C2)
    for k in range(K):
        slab3[:, :, k * C2:(k + 1) * C2] = \
            pad3[:, k:k + lseq, :].astype(slab3.dtype)
    a3 = jnp.dot(slab3[...].reshape(tb * lseq, K * C2), w3_ref[...],
                 preferred_element_type=jnp.float32)
    h3 = _leaky(a3 + b3_ref[...])                              # (TB*L, 128) f32
    h3s[...] = h3.reshape(tb, lseq, C3)

    # ---- fused MLP head (PyTorch channel-major flatten folded into wf1) ------
    # z[b, h] = sum_{l, c} h3[b, l, c] * wf1[l, c, h]
    z = jnp.zeros((tb, HID), jnp.float32)
    for j in range(lseq):
        z = z + jnp.dot(h3s[:, j, :].astype(jnp.bfloat16), wf1_ref[j],
                        preferred_element_type=jnp.float32)
    z = _leaky(z + bf1_ref[...])
    # TODO(synk): Dropout(p=0.5) treated as identity (inference semantics).
    o_ref[...] = jnp.sum(z * wf2_ref[...], axis=1, keepdims=True) + bf2_ref[...]


# ----------------------------------------------------------------------------
# One-time parameter re-layout (hoisted out of the forward, per review):
#   * conv weights packed into im2col layout (K*Cin, Cout), bf16,
#   * Wf1 permuted so the PyTorch channel-major flatten is absorbed,
#   * biases reshaped for lane-dense broadcasting.
# ----------------------------------------------------------------------------
def prepare_params(p):
    hid, f = p["Wf1"].shape
    lseq = f // C3
    return dict(
        w1=p["W1"][:, 0, :].T.reshape(K, 1, C1).astype(jnp.float32),
        b1=p["b1"].reshape(1, 1, C1).astype(jnp.float32),
        w2=jnp.transpose(p["W2"], (2, 1, 0)).reshape(K * C1, C2).astype(jnp.bfloat16),
        b2=p["b2"].reshape(1, C2).astype(jnp.float32),
        w3=jnp.transpose(p["W3"], (2, 1, 0)).reshape(K * C2, C3).astype(jnp.bfloat16),
        b3=p["b3"].reshape(1, C3).astype(jnp.float32),
        wf1=p["Wf1"].reshape(hid, C3, lseq).transpose(2, 1, 0).astype(jnp.bfloat16),
        bf1=p["bf1"].reshape(1, HID).astype(jnp.float32),
        wf2=p["Wf2"].reshape(1, HID).astype(jnp.float32),
        bf2=p["bf2"].reshape(1, 1).astype(jnp.float32),
    )


# ----------------------------------------------------------------------------
# Wrapper
# ----------------------------------------------------------------------------
@jax.jit
def discriminator_forward(label, x, prep):
    B = x.shape[0]
    L = x.shape[2] + label.shape[1]
    Lp = L + K - 1
    Bp = pl.cdiv(B, TB) * TB

    # out = cat((x, label.reshape(B, 1, label_size)), dim=2); layout glue only:
    # squeeze the single channel, add the "same" zero padding on the length
    # axis, pad batch up to a multiple of the batch tile.
    xcat = jnp.concatenate([x[:, 0, :], label], axis=1).astype(jnp.float32)
    xpad = jnp.pad(xcat, ((0, Bp - B), (PAD, PAD)))[:, :, None]   # (Bp, Lp, 1)

    flops = (2 * Bp * L * K * C1
             + 2 * Bp * L * K * C1 * C2
             + 2 * Bp * L * K * C2 * C3
             + 2 * Bp * L * C3 * HID
             + 2 * Bp * HID)
    param_bytes = sum(int(v.size) * v.dtype.itemsize for v in prep.values())
    bytes_accessed = int(xpad.size) * 4 + param_bytes + Bp * 4

    out = pl.pallas_call(
        disc_kernel,
        out_shape=jax.ShapeDtypeStruct((Bp, 1), jnp.float32),
        grid=(Bp // TB,),
        in_specs=[
            pl.BlockSpec((TB, Lp, 1), lambda i: (i, 0, 0)),        # x (padded)
            pl.BlockSpec((K, 1, C1), lambda i: (0, 0, 0)),         # w1
            pl.BlockSpec((1, 1, C1), lambda i: (0, 0, 0)),         # b1
            pl.BlockSpec((K * C1, C2), lambda i: (0, 0)),          # w2 (im2col)
            pl.BlockSpec((1, C2), lambda i: (0, 0)),               # b2
            pl.BlockSpec((K * C2, C3), lambda i: (0, 0)),          # w3 (im2col)
            pl.BlockSpec((1, C3), lambda i: (0, 0)),               # b3
            pl.BlockSpec((L, C3, HID), lambda i: (0, 0, 0)),       # wf1 (L,C3,HID)
            pl.BlockSpec((1, HID), lambda i: (0, 0)),              # bf1
            pl.BlockSpec((1, HID), lambda i: (0, 0)),              # wf2
            pl.BlockSpec((1, 1), lambda i: (0, 0)),                # bf2
        ],
        out_specs=pl.BlockSpec((TB, 1), lambda i: (i, 0)),
        scratch_shapes=[
            pltpu.VMEM((TB, Lp, C1), jnp.float32),                 # padded h1
            pltpu.VMEM((TB, Lp, C2), jnp.float32),                 # padded h2
            pltpu.VMEM((TB, L, K * C1), jnp.bfloat16),             # im2col conv2
            pltpu.VMEM((TB, L, K * C2), jnp.bfloat16),             # im2col conv3
            pltpu.VMEM((TB, L, C3), jnp.float32),                  # h3 for head
        ],
        compiler_params=pltpu.CompilerParams(
            dimension_semantics=("parallel",)),
        cost_estimate=pl.CostEstimate(flops=flops, transcendentals=0,
                                      bytes_accessed=bytes_accessed),
    )(xpad, prep["w1"], prep["b1"], prep["w2"], prep["b2"],
      prep["w3"], prep["b3"], prep["wf1"], prep["bf1"],
      prep["wf2"], prep["bf2"])
    return out[:B]


# ----------------------------------------------------------------------------
# Deterministic synthetic parameters (shapes from the module __init__)
# ----------------------------------------------------------------------------
def init_params(key, L):
    F = C3 * L
    ks = jax.random.split(key, 10)

    def w(k, shape, scale):
        return jax.random.normal(k, shape, jnp.float32) * scale

    return dict(
        W1=w(ks[0], (C1, 1, K), 0.20),   b1=w(ks[1], (C1,), 0.10),
        W2=w(ks[2], (C2, C1, K), 0.05),  b2=w(ks[3], (C2,), 0.10),
        W3=w(ks[4], (C3, C2, K), 0.04),  b3=w(ks[5], (C3,), 0.10),
        Wf1=w(ks[6], (HID, F), 0.02),    bf1=w(ks[7], (HID,), 0.10),
        Wf2=w(ks[8], (1, HID), 0.10),    bf2=w(ks[9], (1,), 0.10),
    )


# Pure-JAX reference (mirrors the PyTorch forward) for a sanity check.
def reference_forward(label, x, p):
    B = x.shape[0]
    h = jnp.concatenate([x, label[:, None, :]], axis=2)
    prec = jax.lax.Precision.HIGHEST

    def conv(a, w, b):
        y = jax.lax.conv_general_dilated(
            a, w, window_strides=(1,), padding=[(PAD, PAD)],
            dimension_numbers=("NCH", "OIH", "NCH"), precision=prec)
        return y + b[None, :, None]

    h = _leaky(conv(h, p["W1"], p["b1"]))
    h = _leaky(conv(h, p["W2"], p["b2"]))
    h = _leaky(conv(h, p["W3"], p["b3"]))
    h = h.reshape(B, -1)
    z = _leaky(jnp.dot(h, p["Wf1"].T, precision=prec) + p["bf1"])
    return jnp.dot(z, p["Wf2"].T, precision=prec) + p["bf2"]


if __name__ == "__main__":
    B = 2
    gan_dim_output = 24
    label_size = 8
    L = gan_dim_output + label_size   # 32

    key = jax.random.PRNGKey(0)
    kx, kl, kp = jax.random.split(key, 3)
    x = jax.random.normal(kx, (B, 1, gan_dim_output), jnp.float32)
    label = jax.random.normal(kl, (B, label_size), jnp.float32)
    params = init_params(kp, L)
    prep = prepare_params(params)     # one-time weight re-layout (hoisted)

    out = discriminator_forward(label, x, prep)
    out = jax.block_until_ready(out)

    ref = reference_forward(label, x, params)
    assert out.shape == (B, 1), out.shape
    err = float(jnp.max(jnp.abs(out - ref)))
    tol = 3e-2 * (1.0 + float(jnp.max(jnp.abs(ref))))   # bf16 MXU vs f32 HIGHEST ref
    assert err < tol, f"mismatch vs reference: {err} (tol {tol})"
    print("KERNEL_OK")
</pallas_src>

<mosaic_0001>
module attributes {stable_mosaic.version = 11 : i64} {
  func.func @disc_kernel(%arg0: i32, %arg1: memref<8x40x1xf32, #tpu.memory_space<vmem>>, %arg2: memref<9x1x64xf32, #tpu.memory_space<vmem>>, %arg3: memref<1x1x64xf32, #tpu.memory_space<vmem>>, %arg4: memref<576x128xbf16, #tpu.memory_space<vmem>>, %arg5: memref<1x128xf32, #tpu.memory_space<vmem>>, %arg6: memref<1152x128xbf16, #tpu.memory_space<vmem>>, %arg7: memref<1x128xf32, #tpu.memory_space<vmem>>, %arg8: memref<32x128x32xbf16, #tpu.memory_space<vmem>>, %arg9: memref<1x32xf32, #tpu.memory_space<vmem>>, %arg10: memref<1x32xf32, #tpu.memory_space<vmem>>, %arg11: memref<1x1xf32, #tpu.memory_space<vmem>>, %arg12: memref<8x1xf32, #tpu.memory_space<vmem>>, %arg13: memref<8x40x64xf32, #tpu.memory_space<vmem>>, %arg14: memref<8x40x128xf32, #tpu.memory_space<vmem>>, %arg15: memref<8x32x576xbf16, #tpu.memory_space<vmem>>, %arg16: memref<8x32x1152xbf16, #tpu.memory_space<vmem>>, %arg17: memref<8x32x128xf32, #tpu.memory_space<vmem>>) attributes {dimension_semantics = [#tpu.dimension_semantics<parallel>], iteration_bounds = array<i64: 1>, scalar_prefetch = 0 : i64, scratch_operands = 5 : i64, tpu.core_type = #tpu.core_type<tc>, window_params = [{transform_indices = @transform_0, window_bounds = array<i64: 8, 40, 1>}, {pipeline_mode = #tpu.pipeline_mode<synchronous>, transform_indices = @transform_1, window_bounds = array<i64: 9, 1, 64>}, {pipeline_mode = #tpu.pipeline_mode<synchronous>, transform_indices = @transform_2, window_bounds = array<i64: 1, 1, 64>}, {pipeline_mode = #tpu.pipeline_mode<synchronous>, transform_indices = @transform_3, window_bounds = array<i64: 576, 128>}, {pipeline_mode = #tpu.pipeline_mode<synchronous>, transform_indices = @transform_4, window_bounds = array<i64: 1, 128>}, {pipeline_mode = #tpu.pipeline_mode<synchronous>, transform_indices = @transform_5, window_bounds = array<i64: 1152, 128>}, {pipeline_mode = #tpu.pipeline_mode<synchronous>, transform_indices = @transform_6, window_bounds = array<i64: 1, 128>}, {pipeline_mode = #tpu.pipeline_mode<synchronous>, transform_indices = @transform_7, window_bounds = array<i64: 32, 128, 32>}, {pipeline_mode = #tpu.pipeline_mode<synchronous>, transform_indices = @transform_8, window_bounds = array<i64: 1, 32>}, {pipeline_mode = #tpu.pipeline_mode<synchronous>, transform_indices = @transform_9, window_bounds = array<i64: 1, 32>}, {pipeline_mode = #tpu.pipeline_mode<synchronous>, transform_indices = @transform_10, window_bounds = array<i64: 1, 1>}, {transform_indices = @transform_11, window_bounds = array<i64: 8, 1>}]} {
    %cst = arith.constant 0.000000e+00 : f32
    %0 = vector.broadcast %cst : f32 to vector<8x32x64xf32>
    %c0 = arith.constant 0 : index
    %c0_0 = arith.constant 0 : index
    %c0_1 = arith.constant 0 : index
    %1 = vector.load %arg1[%c0, %c0_0, %c0_1] : memref<8x40x1xf32, #tpu.memory_space<vmem>>, vector<8x32x1xf32>
    %c0_2 = arith.constant 0 : index
    %c0_3 = arith.constant 0 : index
    %c0_4 = arith.constant 0 : index
    %2 = vector.load %arg2[%c0_2, %c0_3, %c0_4] : memref<9x1x64xf32, #tpu.memory_space<vmem>>, vector<1x1x64xf32>
    %3 = vector.shape_cast %2 : vector<1x1x64xf32> to vector<1x64xf32>
    %4 = vector.shape_cast %3 : vector<1x64xf32> to vector<1x1x64xf32>
    %5 = vector.broadcast %1 : vector<8x32x1xf32> to vector<8x32x64xf32>
    %6 = vector.broadcast %4 : vector<1x1x64xf32> to vector<8x32x64xf32>
    %7 = arith.mulf %5, %6 : vector<8x32x64xf32>
    %8 = arith.addf %0, %7 : vector<8x32x64xf32>
    %c0_5 = arith.constant 0 : index
    %c1 = arith.constant 1 : index
    %c0_6 = arith.constant 0 : index
    %9 = vector.load %arg1[%c0_5, %c1, %c0_6] : memref<8x40x1xf32, #tpu.memory_space<vmem>>, vector<8x32x1xf32>
    %c1_7 = arith.constant 1 : index
    %c0_8 = arith.constant 0 : index
    %c0_9 = arith.constant 0 : index
    %10 = vector.load %arg2[%c1_7, %c0_8, %c0_9] : memref<9x1x64xf32, #tpu.memory_space<vmem>>, vector<1x1x64xf32>
    %11 = vector.shape_cast %10 : vector<1x1x64xf32> to vector<1x64xf32>
    %12 = vector.shape_cast %11 : vector<1x64xf32> to vector<1x1x64xf32>
    %13 = vector.broadcast %9 : vector<8x32x1xf32> to vector<8x32x64xf32>
    %14 = vector.broadcast %12 : vector<1x1x64xf32> to vector<8x32x64xf32>
    %15 = arith.mulf %13, %14 : vector<8x32x64xf32>
    %16 = arith.addf %8, %15 : vector<8x32x64xf32>
    %c0_10 = arith.constant 0 : index
    %c2 = arith.constant 2 : index
    %c0_11 = arith.constant 0 : index
    %17 = vector.load %arg1[%c0_10, %c2, %c0_11] : memref<8x40x1xf32, #tpu.memory_space<vmem>>, vector<8x32x1xf32>
    %c2_12 = arith.constant 2 : index
    %c0_13 = arith.constant 0 : index
    %c0_14 = arith.constant 0 : index
    %18 = vector.load %arg2[%c2_12, %c0_13, %c0_14] : memref<9x1x64xf32, #tpu.memory_space<vmem>>, vector<1x1x64xf32>
    %19 = vector.shape_cast %18 : vector<1x1x64xf32> to vector<1x64xf32>
    %20 = vector.shape_cast %19 : vector<1x64xf32> to vector<1x1x64xf32>
    %21 = vector.broadcast %17 : vector<8x32x1xf32> to vector<8x32x64xf32>
    %22 = vector.broadcast %20 : vector<1x1x64xf32> to vector<8x32x64xf32>
    %23 = arith.mulf %21, %22 : vector<8x32x64xf32>
    %24 = arith.addf %16, %23 : vector<8x32x64xf32>
    %c0_15 = arith.constant 0 : index
    %c3 = arith.constant 3 : index
    %c0_16 = arith.constant 0 : index
    %25 = vector.load %arg1[%c0_15, %c3, %c0_16] : memref<8x40x1xf32, #tpu.memory_space<vmem>>, vector<8x32x1xf32>
    %c3_17 = arith.constant 3 : index
    %c0_18 = arith.constant 0 : index
    %c0_19 = arith.constant 0 : index
    %26 = vector.load %arg2[%c3_17, %c0_18, %c0_19] : memref<9x1x64xf32, #tpu.memory_space<vmem>>, vector<1x1x64xf32>
    %27 = vector.shape_cast %26 : vector<1x1x64xf32> to vector<1x64xf32>
    %28 = vector.shape_cast %27 : vector<1x64xf32> to vector<1x1x64xf32>
    %29 = vector.broadcast %25 : vector<8x32x1xf32> to vector<8x32x64xf32>
    %30 = vector.broadcast %28 : vector<1x1x64xf32> to vector<8x32x64xf32>
    %31 = arith.mulf %29, %30 : vector<8x32x64xf32>
    %32 = arith.addf %24, %31 : vector<8x32x64xf32>
    %c0_20 = arith.constant 0 : index
    %c4 = arith.constant 4 : index
    %c0_21 = arith.constant 0 : index
    %33 = vector.load %arg1[%c0_20, %c4, %c0_21] : memref<8x40x1xf32, #tpu.memory_space<vmem>>, vector<8x32x1xf32>
    %c4_22 = arith.constant 4 : index
    %c0_23 = arith.constant 0 : index
    %c0_24 = arith.constant 0 : index
    %34 = vector.load %arg2[%c4_22, %c0_23, %c0_24] : memref<9x1x64xf32, #tpu.memory_space<vmem>>, vector<1x1x64xf32>
    %35 = vector.shape_cast %34 : vector<1x1x64xf32> to vector<1x64xf32>
    %36 = vector.shape_cast %35 : vector<1x64xf32> to vector<1x1x64xf32>
    %37 = vector.broadcast %33 : vector<8x32x1xf32> to vector<8x32x64xf32>
    %38 = vector.broadcast %36 : vector<1x1x64xf32> to vector<8x32x64xf32>
    %39 = arith.mulf %37, %38 : vector<8x32x64xf32>
    %40 = arith.addf %32, %39 : vector<8x32x64xf32>
    %c0_25 = arith.constant 0 : index
    %c5 = arith.constant 5 : index
    %c0_26 = arith.constant 0 : index
    %41 = vector.load %arg1[%c0_25, %c5, %c0_26] : memref<8x40x1xf32, #tpu.memory_space<vmem>>, vector<8x32x1xf32>
    %c5_27 = arith.constant 5 : index
    %c0_28 = arith.constant 0 : index
    %c0_29 = arith.constant 0 : index
    %42 = vector.load %arg2[%c5_27, %c0_28, %c0_29] : memref<9x1x64xf32, #tpu.memory_space<vmem>>, vector<1x1x64xf32>
    %43 = vector.shape_cast %42 : vector<1x1x64xf32> to vector<1x64xf32>
    %44 = vector.shape_cast %43 : vector<1x64xf32> to vector<1x1x64xf32>
    %45 = vector.broadcast %41 : vector<8x32x1xf32> to vector<8x32x64xf32>
    %46 = vector.broadcast %44 : vector<1x1x64xf32> to vector<8x32x64xf32>
    %47 = arith.mulf %45, %46 : vector<8x32x64xf32>
    %48 = arith.addf %40, %47 : vector<8x32x64xf32>
    %c0_30 = arith.constant 0 : index
    %c6 = arith.constant 6 : index
    %c0_31 = arith.constant 0 : index
    %49 = vector.load %arg1[%c0_30, %c6, %c0_31] : memref<8x40x1xf32, #tpu.memory_space<vmem>>, vector<8x32x1xf32>
    %c6_32 = arith.constant 6 : index
    %c0_33 = arith.constant 0 : index
    %c0_34 = arith.constant 0 : index
    %50 = vector.load %arg2[%c6_32, %c0_33, %c0_34] : memref<9x1x64xf32, #tpu.memory_space<vmem>>, vector<1x1x64xf32>
    %51 = vector.shape_cast %50 : vector<1x1x64xf32> to vector<1x64xf32>
    %52 = vector.shape_cast %51 : vector<1x64xf32> to vector<1x1x64xf32>
    %53 = vector.broadcast %49 : vector<8x32x1xf32> to vector<8x32x64xf32>
    %54 = vector.broadcast %52 : vector<1x1x64xf32> to vector<8x32x64xf32>
    %55 = arith.mulf %53, %54 : vector<8x32x64xf32>
    %56 = arith.addf %48, %55 : vector<8x32x64xf32>
    %c0_35 = arith.constant 0 : index
    %c7 = arith.constant 7 : index
    %c0_36 = arith.constant 0 : index
    %57 = vector.load %arg1[%c0_35, %c7, %c0_36] : memref<8x40x1xf32, #tpu.memory_space<vmem>>, vector<8x32x1xf32>
    %c7_37 = arith.constant 7 : index
    %c0_38 = arith.constant 0 : index
    %c0_39 = arith.constant 0 : index
    %58 = vector.load %arg2[%c7_37, %c0_38, %c0_39] : memref<9x1x64xf32, #tpu.memory_space<vmem>>, vector<1x1x64xf32>
    %59 = vector.shape_cast %58 : vector<1x1x64xf32> to vector<1x64xf32>
    %60 = vector.shape_cast %59 : vector<1x64xf32> to vector<1x1x64xf32>
    %61 = vector.broadcast %57 : vector<8x32x1xf32> to vector<8x32x64xf32>
    %62 = vector.broadcast %60 : vector<1x1x64xf32> to vector<8x32x64xf32>
    %63 = arith.mulf %61, %62 : vector<8x32x64xf32>
    %64 = arith.addf %56, %63 : vector<8x32x64xf32>
    %c0_40 = arith.constant 0 : index
    %c8 = arith.constant 8 : index
    %c0_41 = arith.constant 0 : index
    %65 = vector.load %arg1[%c0_40, %c8, %c0_41] : memref<8x40x1xf32, #tpu.memory_space<vmem>>, vector<8x32x1xf32>
    %c8_42 = arith.constant 8 : index
    %c0_43 = arith.constant 0 : index
    %c0_44 = arith.constant 0 : index
    %66 = vector.load %arg2[%c8_42, %c0_43, %c0_44] : memref<9x1x64xf32, #tpu.memory_space<vmem>>, vector<1x1x64xf32>
    %67 = vector.shape_cast %66 : vector<1x1x64xf32> to vector<1x64xf32>
    %68 = vector.shape_cast %67 : vector<1x64xf32> to vector<1x1x64xf32>
    %69 = vector.broadcast %65 : vector<8x32x1xf32> to vector<8x32x64xf32>
    %70 = vector.broadcast %68 : vector<1x1x64xf32> to vector<8x32x64xf32>
    %71 = arith.mulf %69, %70 : vector<8x32x64xf32>
    %72 = arith.addf %64, %71 : vector<8x32x64xf32>
    %c0_45 = arith.constant 0 : index
    %c0_46 = arith.constant 0 : index
    %c0_47 = arith.constant 0 : index
    %73 = vector.load %arg3[%c0_45, %c0_46, %c0_47] : memref<1x1x64xf32, #tpu.memory_space<vmem>>, vector<1x1x64xf32>
    %74 = vector.broadcast %73 : vector<1x1x64xf32> to vector<8x32x64xf32>
    %75 = arith.addf %72, %74 : vector<8x32x64xf32>
    %cst_48 = arith.constant 0.000000e+00 : f32
    %76 = vector.broadcast %cst_48 : f32 to vector<8x32x64xf32>
    %77 = arith.cmpf ogt, %75, %76 : vector<8x32x64xf32>
    %cst_49 = arith.constant 2.000000e-01 : f32
    %78 = vector.broadcast %cst_49 : f32 to vector<8x32x64xf32>
    %79 = arith.mulf %78, %75 : vector<8x32x64xf32>
    %80 = arith.select %77, %75, %79 : vector<8x32x64xi1>, vector<8x32x64xf32>
    %cst_50 = arith.constant 0.000000e+00 : f32
    %81 = vector.broadcast %cst_50 : f32 to vector<8x4x64xf32>
    %c0_51 = arith.constant 0 : index
    %c0_52 = arith.constant 0 : index
    %c0_53 = arith.constant 0 : index
    %82 = vector.load %arg13[%c0_51, %c0_52, %c0_53] : memref<8x40x64xf32, #tpu.memory_space<vmem>>, vector<8x4x64xf32>
    tpu.vector_store %arg13[%c0_51, %c0_52, %c0_53], %81 {strides = array<i32>} : memref<8x40x64xf32, #tpu.memory_space<vmem>>, vector<8x4x64xf32>,
    %c0_54 = arith.constant 0 : index
    %c36 = arith.constant 36 : index
    %c0_55 = arith.constant 0 : index
    %83 = vector.load %arg13[%c0_54, %c36, %c0_55] : memref<8x40x64xf32, #tpu.memory_space<vmem>>, vector<8x4x64xf32>
    tpu.vector_store %arg13[%c0_54, %c36, %c0_55], %81 {strides = array<i32>} : memref<8x40x64xf32, #tpu.memory_space<vmem>>, vector<8x4x64xf32>,
    %c0_56 = arith.constant 0 : index
    %c4_57 = arith.constant 4 : index
    %c0_58 = arith.constant 0 : index
    %84 = vector.load %arg13[%c0_56, %c4_57, %c0_58] : memref<8x40x64xf32, #tpu.memory_space<vmem>>, vector<8x32x64xf32>
    tpu.vector_store %arg13[%c0_56, %c4_57, %c0_58], %80 {strides = array<i32>} : memref<8x40x64xf32, #tpu.memory_space<vmem>>, vector<8x32x64xf32>,
    %c0_59 = arith.constant 0 : index
    %c0_60 = arith.constant 0 : index
    %c0_61 = arith.constant 0 : index
    %85 = vector.load %arg13[%c0_59, %c0_60, %c0_61] : memref<8x40x64xf32, #tpu.memory_space<vmem>>, vector<8x32x64xf32>
    %86 = arith.truncf %85 : vector<8x32x64xf32> to vector<8x32x64xbf16>
    %c0_62 = arith.constant 0 : index
    %c0_63 = arith.constant 0 : index
    %c0_64 = arith.constant 0 : index
    %87 = vector.load %arg15[%c0_62, %c0_63, %c0_64] : memref<8x32x576xbf16, #tpu.memory_space<vmem>>, vector<8x32x64xbf16>
    tpu.vector_store %arg15[%c0_62, %c0_63, %c0_64], %86 {strides = array<i32>} : memref<8x32x576xbf16, #tpu.memory_space<vmem>>, vector<8x32x64xbf16>,
    %c0_65 = arith.constant 0 : index
    %c1_66 = arith.constant 1 : index
    %c0_67 = arith.constant 0 : index
    %88 = vector.load %arg13[%c0_65, %c1_66, %c0_67] : memref<8x40x64xf32, #tpu.memory_space<vmem>>, vector<8x32x64xf32>
    %89 = arith.truncf %88 : vector<8x32x64xf32> to vector<8x32x64xbf16>
    %c0_68 = arith.constant 0 : index
    %c0_69 = arith.constant 0 : index
    %c64 = arith.constant 64 : index
    %90 = vector.load %arg15[%c0_68, %c0_69, %c64] : memref<8x32x576xbf16, #tpu.memory_space<vmem>>, vector<8x32x64xbf16>
    tpu.vector_store %arg15[%c0_68, %c0_69, %c64], %89 {strides = array<i32>} : memref<8x32x576xbf16, #tpu.memory_space<vmem>>, vector<8x32x64xbf16>,
    %c0_70 = arith.constant 0 : index
    %c2_71 = arith.constant 2 : index
    %c0_72 = arith.constant 0 : index
    %91 = vector.load %arg13[%c0_70, %c2_71, %c0_72] : memref<8x40x64xf32, #tpu.memory_space<vmem>>, vector<8x32x64xf32>
    %92 = arith.truncf %91 : vector<8x32x64xf32> to vector<8x32x64xbf16>
    %c0_73 = arith.constant 0 : index
    %c0_74 = arith.constant 0 : index
    %c128 = arith.constant 128 : index
    %93 = vector.load %arg15[%c0_73, %c0_74, %c128] : memref<8x32x576xbf16, #tpu.memory_space<vmem>>, vector<8x32x64xbf16>
    tpu.vector_store %arg15[%c0_73, %c0_74, %c128], %92 {strides = array<i32>} : memref<8x32x576xbf16, #tpu.memory_space<vmem>>, vector<8x32x64xbf16>,
    %c0_75 = arith.constant 0 : index
    %c3_76 = arith.constant 3 : index
    %c0_77 = arith.constant 0 : index
    %94 = vector.load %arg13[%c0_75, %c3_76, %c0_77] : memref<8x40x64xf32, #tpu.memory_space<vmem>>, vector<8x32x64xf32>
    %95 = arith.truncf %94 : vector<8x32x64xf32> to vector<8x32x64xbf16>
    %c0_78 = arith.constant 0 : index
    %c0_79 = arith.constant 0 : index
    %c192 = arith.constant 192 : index
    %96 = vector.load %arg15[%c0_78, %c0_79, %c192] : memref<8x32x576xbf16, #tpu.memory_space<vmem>>, vector<8x32x64xbf16>
    tpu.vector_store %arg15[%c0_78, %c0_79, %c192], %95 {strides = array<i32>} : memref<8x32x576xbf16, #tpu.memory_space<vmem>>, vector<8x32x64xbf16>,
    %c0_80 = arith.constant 0 : index
    %c4_81 = arith.constant 4 : index
    %c0_82 = arith.constant 0 : index
    %97 = vector.load %arg13[%c0_80, %c4_81, %c0_82] : memref<8x40x64xf32, #tpu.memory_space<vmem>>, vector<8x32x64xf32>
    %98 = arith.truncf %97 : vector<8x32x64xf32> to vector<8x32x64xbf16>
    %c0_83 = arith.constant 0 : index
    %c0_84 = arith.constant 0 : index
    %c256 = arith.constant 256 : index
    %99 = vector.load %arg15[%c0_83, %c0_84, %c256] : memref<8x32x576xbf16, #tpu.memory_space<vmem>>, vector<8x32x64xbf16>
    tpu.vector_store %arg15[%c0_83, %c0_84, %c256], %98 {strides = array<i32>} : memref<8x32x576xbf16, #tpu.memory_space<vmem>>, vector<8x32x64xbf16>,
    %c0_85 = arith.constant 0 : index
    %c5_86 = arith.constant 5 : index
    %c0_87 = arith.constant 0 : index
    %100 = vector.load %arg13[%c0_85, %c5_86, %c0_87] : memref<8x40x64xf32, #tpu.memory_space<vmem>>, vector<8x32x64xf32>
    %101 = arith.truncf %100 : vector<8x32x64xf32> to vector<8x32x64xbf16>
    %c0_88 = arith.constant 0 : index
    %c0_89 = arith.constant 0 : index
    %c320 = arith.constant 320 : index
    %102 = vector.load %arg15[%c0_88, %c0_89, %c320] : memref<8x32x576xbf16, #tpu.memory_space<vmem>>, vector<8x32x64xbf16>
    tpu.vector_store %arg15[%c0_88, %c0_89, %c320], %101 {strides = array<i32>} : memref<8x32x576xbf16, #tpu.memory_space<vmem>>, vector<8x32x64xbf16>,
    %c0_90 = arith.constant 0 : index
    %c6_91 = arith.constant 6 : index
    %c0_92 = arith.constant 0 : index
    %103 = vector.load %arg13[%c0_90, %c6_91, %c0_92] : memref<8x40x64xf32, #tpu.memory_space<vmem>>, vector<8x32x64xf32>
    %104 = arith.truncf %103 : vector<8x32x64xf32> to vector<8x32x64xbf16>
    %c0_93 = arith.constant 0 : index
    %c0_94 = arith.constant 0 : index
    %c384 = arith.constant 384 : index
    %105 = vector.load %arg15[%c0_93, %c0_94, %c384] : memref<8x32x576xbf16, #tpu.memory_space<vmem>>, vector<8x32x64xbf16>
    tpu.vector_store %arg15[%c0_93, %c0_94, %c384], %104 {strides = array<i32>} : memref<8x32x576xbf16, #tpu.memory_space<vmem>>, vector<8x32x64xbf16>,
    %c0_95 = arith.constant 0 : index
    %c7_96 = arith.constant 7 : index
    %c0_97 = arith.constant 0 : index
    %106 = vector.load %arg13[%c0_95, %c7_96, %c0_97] : memref<8x40x64xf32, #tpu.memory_space<vmem>>, vector<8x32x64xf32>
    %107 = arith.truncf %106 : vector<8x32x64xf32> to vector<8x32x64xbf16>
    %c0_98 = arith.constant 0 : index
    %c0_99 = arith.constant 0 : index
    %c448 = arith.constant 448 : index
    %108 = vector.load %arg15[%c0_98, %c0_99, %c448] : memref<8x32x576xbf16, #tpu.memory_space<vmem>>, vector<8x32x64xbf16>
    tpu.vector_store %arg15[%c0_98, %c0_99, %c448], %107 {strides = array<i32>} : memref<8x32x576xbf16, #tpu.memory_space<vmem>>, vector<8x32x64xbf16>,
    %c0_100 = arith.constant 0 : index
    %c8_101 = arith.constant 8 : index
    %c0_102 = arith.constant 0 : index
    %109 = vector.load %arg13[%c0_100, %c8_101, %c0_102] : memref<8x40x64xf32, #tpu.memory_space<vmem>>, vector<8x32x64xf32>
    %110 = arith.truncf %109 : vector<8x32x64xf32> to vector<8x32x64xbf16>
    %c0_103 = arith.constant 0 : index
    %c0_104 = arith.constant 0 : index
    %c512 = arith.constant 512 : index
    %111 = vector.load %arg15[%c0_103, %c0_104, %c512] : memref<8x32x576xbf16, #tpu.memory_space<vmem>>, vector<8x32x64xbf16>
    tpu.vector_store %arg15[%c0_103, %c0_104, %c512], %110 {strides = array<i32>} : memref<8x32x576xbf16, #tpu.memory_space<vmem>>, vector<8x32x64xbf16>,
    %c0_105 = arith.constant 0 : index
    %c0_106 = arith.constant 0 : index
    %c0_107 = arith.constant 0 : index
    %112 = vector.load %arg15[%c0_105, %c0_106, %c0_107] : memref<8x32x576xbf16, #tpu.memory_space<vmem>>, vector<8x32x576xbf16>
    %113 = vector.shape_cast %112 : vector<8x32x576xbf16> to vector<256x576xbf16>
    %c0_108 = arith.constant 0 : index
    %c0_109 = arith.constant 0 : index
    %114 = vector.load %arg4[%c0_108, %c0_109] : memref<576x128xbf16, #tpu.memory_space<vmem>>, vector<576x128xbf16>
    %cst_110 = arith.constant dense<0.000000e+00> : vector<256x128xf32>
    %115 = tpu.matmul %113, %114, %cst_110 {dimension_numbers = #tpu.dot_dimension_numbers<[1], [0], [0], [1], [0, 0, 1, 1], [], []>} : vector<256x576xbf16>, vector<576x128xbf16>, vector<256x128xf32> -> vector<256x128xf32>
    %c0_111 = arith.constant 0 : index
    %c0_112 = arith.constant 0 : index
    %116 = vector.load %arg5[%c0_111, %c0_112] : memref<1x128xf32, #tpu.memory_space<vmem>>, vector<1x128xf32>
    %117 = vector.broadcast %116 : vector<1x128xf32> to vector<256x128xf32>
    %118 = arith.addf %115, %117 : vector<256x128xf32>
    %cst_113 = arith.constant 0.000000e+00 : f32
    %119 = vector.broadcast %cst_113 : f32 to vector<256x128xf32>
    %120 = arith.cmpf ogt, %118, %119 : vector<256x128xf32>
    %cst_114 = arith.constant 2.000000e-01 : f32
    %121 = vector.broadcast %cst_114 : f32 to vector<256x128xf32>
    %122 = arith.mulf %121, %118 : vector<256x128xf32>
    %123 = arith.select %120, %118, %122 : vector<256x128xi1>, vector<256x128xf32>
    %cst_115 = arith.constant 0.000000e+00 : f32
    %124 = vector.broadcast %cst_115 : f32 to vector<8x4x128xf32>
    %c0_116 = arith.constant 0 : index
    %c0_117 = arith.constant 0 : index
    %c0_118 = arith.constant 0 : index
    %125 = vector.load %arg14[%c0_116, %c0_117, %c0_118] : memref<8x40x128xf32, #tpu.memory_space<vmem>>, vector<8x4x128xf32>
    tpu.vector_store %arg14[%c0_116, %c0_117, %c0_118], %124 {strides = array<i32>} : memref<8x40x128xf32, #tpu.memory_space<vmem>>, vector<8x4x128xf32>,
    %c0_119 = arith.constant 0 : index
    %c36_120 = arith.constant 36 : index
    %c0_121 = arith.constant 0 : index
    %126 = vector.load %arg14[%c0_119, %c36_120, %c0_121] : memref<8x40x128xf32, #tpu.memory_space<vmem>>, vector<8x4x128xf32>
    tpu.vector_store %arg14[%c0_119, %c36_120, %c0_121], %124 {strides = array<i32>} : memref<8x40x128xf32, #tpu.memory_space<vmem>>, vector<8x4x128xf32>,
    %127 = vector.shape_cast %123 : vector<256x128xf32> to vector<8x32x128xf32>
    %c0_122 = arith.constant 0 : index
    %c4_123 = arith.constant 4 : index
    %c0_124 = arith.constant 0 : index
    %128 = vector.load %arg14[%c0_122, %c4_123, %c0_124] : memref<8x40x128xf32, #tpu.memory_space<vmem>>, vector<8x32x128xf32>
    tpu.vector_store %arg14[%c0_122, %c4_123, %c0_124], %127 {strides = array<i32>} : memref<8x40x128xf32, #tpu.memory_space<vmem>>, vector<8x32x128xf32>,
    %c0_125 = arith.constant 0 : index
    %c0_126 = arith.constant 0 : index
    %c0_127 = arith.constant 0 : index
    %129 = vector.load %arg14[%c0_125, %c0_126, %c0_127] : memref<8x40x128xf32, #tpu.memory_space<vmem>>, vector<8x32x128xf32>
    %130 = arith.truncf %129 : vector<8x32x128xf32> to vector<8x32x128xbf16>
    %c0_128 = arith.constant 0 : index
    %c0_129 = arith.constant 0 : index
    %c0_130 = arith.constant 0 : index
    %131 = vector.load %arg16[%c0_128, %c0_129, %c0_130] : memref<8x32x1152xbf16, #tpu.memory_space<vmem>>, vector<8x32x128xbf16>
    tpu.vector_store %arg16[%c0_128, %c0_129, %c0_130], %130 {strides = array<i32>} : memref<8x32x1152xbf16, #tpu.memory_space<vmem>>, vector<8x32x128xbf16>,
    %c0_131 = arith.constant 0 : index
    %c1_132 = arith.constant 1 : index
    %c0_133 = arith.constant 0 : index
    %132 = vector.load %arg14[%c0_131, %c1_132, %c0_133] : memref<8x40x128xf32, #tpu.memory_space<vmem>>, vector<8x32x128xf32>
    %133 = arith.truncf %132 : vector<8x32x128xf32> to vector<8x32x128xbf16>
    %c0_134 = arith.constant 0 : index
    %c0_135 = arith.constant 0 : index
    %c128_136 = arith.constant 128 : index
    %134 = vector.load %arg16[%c0_134, %c0_135, %c128_136] : memref<8x32x1152xbf16, #tpu.memory_space<vmem>>, vector<8x32x128xbf16>
    tpu.vector_store %arg16[%c0_134, %c0_135, %c128_136], %133 {strides = array<i32>} : memref<8x32x1152xbf16, #tpu.memory_space<vmem>>, vector<8x32x128xbf16>,
    %c0_137 = arith.constant 0 : index
    %c2_138 = arith.constant 2 : index
    %c0_139 = arith.constant 0 : index
    %135 = vector.load %arg14[%c0_137, %c2_138, %c0_139] : memref<8x40x128xf32, #tpu.memory_space<vmem>>, vector<8x32x128xf32>
    %136 = arith.truncf %135 : vector<8x32x128xf32> to vector<8x32x128xbf16>
    %c0_140 = arith.constant 0 : index
    %c0_141 = arith.constant 0 : index
    %c256_142 = arith.constant 256 : index
    %137 = vector.load %arg16[%c0_140, %c0_141, %c256_142] : memref<8x32x1152xbf16, #tpu.memory_space<vmem>>, vector<8x32x128xbf16>
    tpu.vector_store %arg16[%c0_140, %c0_141, %c256_142], %136 {strides = array<i32>} : memref<8x32x1152xbf16, #tpu.memory_space<vmem>>, vector<8x32x128xbf16>,
    %c0_143 = arith.constant 0 : index
    %c3_144 = arith.constant 3 : index
    %c0_145 = arith.constant 0 : index
    %138 = vector.load %arg14[%c0_143, %c3_144, %c0_145] : memref<8x40x128xf32, #tpu.memory_space<vmem>>, vector<8x32x128xf32>
    %139 = arith.truncf %138 : vector<8x32x128xf32> to vector<8x32x128xbf16>
    %c0_146 = arith.constant 0 : index
    %c0_147 = arith.constant 0 : index
    %c384_148 = arith.constant 384 : index
    %140 = vector.load %arg16[%c0_146, %c0_147, %c384_148] : memref<8x32x1152xbf16, #tpu.memory_space<vmem>>, vector<8x32x128xbf16>
    tpu.vector_store %arg16[%c0_146, %c0_147, %c384_148], %139 {strides = array<i32>} : memref<8x32x1152xbf16, #tpu.memory_space<vmem>>, vector<8x32x128xbf16>,
    %c0_149 = arith.constant 0 : index
    %c4_150 = arith.constant 4 : index
    %c0_151 = arith.constant 0 : index
    %141 = vector.load %arg14[%c0_149, %c4_150, %c0_151] : memref<8x40x128xf32, #tpu.memory_space<vmem>>, vector<8x32x128xf32>
    %142 = arith.truncf %141 : vector<8x32x128xf32> to vector<8x32x128xbf16>
    %c0_152 = arith.constant 0 : index
    %c0_153 = arith.constant 0 : index
    %c512_154 = arith.constant 512 : index
    %143 = vector.load %arg16[%c0_152, %c0_153, %c512_154] : memref<8x32x1152xbf16, #tpu.memory_space<vmem>>, vector<8x32x128xbf16>
    tpu.vector_store %arg16[%c0_152, %c0_153, %c512_154], %142 {strides = array<i32>} : memref<8x32x1152xbf16, #tpu.memory_space<vmem>>, vector<8x32x128xbf16>,
    %c0_155 = arith.constant 0 : index
    %c5_156 = arith.constant 5 : index
    %c0_157 = arith.constant 0 : index
    %144 = vector.load %arg14[%c0_155, %c5_156, %c0_157] : memref<8x40x128xf32, #tpu.memory_space<vmem>>, vector<8x32x128xf32>
    %145 = arith.truncf %144 : vector<8x32x128xf32> to vector<8x32x128xbf16>
    %c0_158 = arith.constant 0 : index
    %c0_159 = arith.constant 0 : index
    %c640 = arith.constant 640 : index
    %146 = vector.load %arg16[%c0_158, %c0_159, %c640] : memref<8x32x1152xbf16, #tpu.memory_space<vmem>>, vector<8x32x128xbf16>
    tpu.vector_store %arg16[%c0_158, %c0_159, %c640], %145 {strides = array<i32>} : memref<8x32x1152xbf16, #tpu.memory_space<vmem>>, vector<8x32x128xbf16>,
    %c0_160 = arith.constant 0 : index
    %c6_161 = arith.constant 6 : index
    %c0_162 = arith.constant 0 : index
    %147 = vector.load %arg14[%c0_160, %c6_161, %c0_162] : memref<8x40x128xf32, #tpu.memory_space<vmem>>, vector<8x32x128xf32>
    %148 = arith.truncf %147 : vector<8x32x128xf32> to vector<8x32x128xbf16>
    %c0_163 = arith.constant 0 : index
    %c0_164 = arith.constant 0 : index
    %c768 = arith.constant 768 : index
    %149 = vector.load %arg16[%c0_163, %c0_164, %c768] : memref<8x32x1152xbf16, #tpu.memory_space<vmem>>, vector<8x32x128xbf16>
    tpu.vector_store %arg16[%c0_163, %c0_164, %c768], %148 {strides = array<i32>} : memref<8x32x1152xbf16, #tpu.memory_space<vmem>>, vector<8x32x128xbf16>,
    %c0_165 = arith.constant 0 : index
    %c7_166 = arith.constant 7 : index
    %c0_167 = arith.constant 0 : index
    %150 = vector.load %arg14[%c0_165, %c7_166, %c0_167] : memref<8x40x128xf32, #tpu.memory_space<vmem>>, vector<8x32x128xf32>
    %151 = arith.truncf %150 : vector<8x32x128xf32> to vector<8x32x128xbf16>
    %c0_168 = arith.constant 0 : index
    %c0_169 = arith.constant 0 : index
    %c896 = arith.constant 896 : index
    %152 = vector.load %arg16[%c0_168, %c0_169, %c896] : memref<8x32x1152xbf16, #tpu.memory_space<vmem>>, vector<8x32x128xbf16>
    tpu.vector_store %arg16[%c0_168, %c0_169, %c896], %151 {strides = array<i32>} : memref<8x32x1152xbf16, #tpu.memory_space<vmem>>, vector<8x32x128xbf16>,
    %c0_170 = arith.constant 0 : index
    %c8_171 = arith.constant 8 : index
    %c0_172 = arith.constant 0 : index
    %153 = vector.load %arg14[%c0_170, %c8_171, %c0_172] : memref<8x40x128xf32, #tpu.memory_space<vmem>>, vector<8x32x128xf32>
    %154 = arith.truncf %153 : vector<8x32x128xf32> to vector<8x32x128xbf16>
    %c0_173 = arith.constant 0 : index
    %c0_174 = arith.constant 0 : index
    %c1024 = arith.constant 1024 : index
    %155 = vector.load %arg16[%c0_173, %c0_174, %c1024] : memref<8x32x1152xbf16, #tpu.memory_space<vmem>>, vector<8x32x128xbf16>
    tpu.vector_store %arg16[%c0_173, %c0_174, %c1024], %154 {strides = array<i32>} : memref<8x32x1152xbf16, #tpu.memory_space<vmem>>, vector<8x32x128xbf16>,
    %c0_175 = arith.constant 0 : index
    %c0_176 = arith.constant 0 : index
    %c0_177 = arith.constant 0 : index
    %156 = vector.load %arg16[%c0_175, %c0_176, %c0_177] : memref<8x32x1152xbf16, #tpu.memory_space<vmem>>, vector<8x32x1152xbf16>
    %157 = vector.shape_cast %156 : vector<8x32x1152xbf16> to vector<256x1152xbf16>
    %c0_178 = arith.constant 0 : index
    %c0_179 = arith.constant 0 : index
    %158 = vector.load %arg6[%c0_178, %c0_179] : memref<1152x128xbf16, #tpu.memory_space<vmem>>, vector<1152x128xbf16>
    %cst_180 = arith.constant dense<0.000000e+00> : vector<256x128xf32>
    %159 = tpu.matmul %157, %158, %cst_180 {dimension_numbers = #tpu.dot_dimension_numbers<[1], [0], [0], [1], [0, 0, 1, 1], [], []>} : vector<256x1152xbf16>, vector<1152x128xbf16>, vector<256x128xf32> -> vector<256x128xf32>
    %c0_181 = arith.constant 0 : index
    %c0_182 = arith.constant 0 : index
    %160 = vector.load %arg7[%c0_181, %c0_182] : memref<1x128xf32, #tpu.memory_space<vmem>>, vector<1x128xf32>
    %161 = vector.broadcast %160 : vector<1x128xf32> to vector<256x128xf32>
    %162 = arith.addf %159, %161 : vector<256x128xf32>
    %cst_183 = arith.constant 0.000000e+00 : f32
    %163 = vector.broadcast %cst_183 : f32 to vector<256x128xf32>
    %164 = arith.cmpf ogt, %162, %163 : vector<256x128xf32>
    %cst_184 = arith.constant 2.000000e-01 : f32
    %165 = vector.broadcast %cst_184 : f32 to vector<256x128xf32>
    %166 = arith.mulf %165, %162 : vector<256x128xf32>
    %167 = arith.select %164, %162, %166 : vector<256x128xi1>, vector<256x128xf32>
    %168 = vector.shape_cast %167 : vector<256x128xf32> to vector<8x32x128xf32>
    %c0_185 = arith.constant 0 : index
    %c0_186 = arith.constant 0 : index
    %c0_187 = arith.constant 0 : index
    %169 = vector.load %arg17[%c0_185, %c0_186, %c0_187] : memref<8x32x128xf32, #tpu.memory_space<vmem>>, vector<8x32x128xf32>
    tpu.vector_store %arg17[%c0_185, %c0_186, %c0_187], %168 {strides = array<i32>} : memref<8x32x128xf32, #tpu.memory_space<vmem>>, vector<8x32x128xf32>,
    %cst_188 = arith.constant 0.000000e+00 : f32
    %170 = vector.broadcast %cst_188 : f32 to vector<8x32xf32>
    %c0_189 = arith.constant 0 : index
    %c0_190 = arith.constant 0 : index
    %c0_191 = arith.constant 0 : index
    %171 = vector.load %arg17[%c0_189, %c0_190, %c0_191] : memref<8x32x128xf32, #tpu.memory_space<vmem>>, vector<8x1x128xf32>
    %172 = vector.shape_cast %171 : vector<8x1x128xf32> to vector<8x128xf32>
    %173 = arith.truncf %172 : vector<8x128xf32> to vector<8x128xbf16>
    %c0_192 = arith.constant 0 : index
    %c0_193 = arith.constant 0 : index
    %c0_194 = arith.constant 0 : index
    %174 = vector.load %arg8[%c0_192, %c0_193, %c0_194] : memref<32x128x32xbf16, #tpu.memory_space<vmem>>, vector<1x128x32xbf16>
    %175 = vector.shape_cast %174 : vector<1x128x32xbf16> to vector<128x32xbf16>
    %cst_195 = arith.constant dense<0.000000e+00> : vector<8x32xf32>
    %176 = tpu.matmul %173, %175, %cst_195 {dimension_numbers = #tpu.dot_dimension_numbers<[1], [0], [0], [1], [0, 0, 1, 1], [], []>} : vector<8x128xbf16>, vector<128x32xbf16>, vector<8x32xf32> -> vector<8x32xf32>
    %177 = arith.addf %170, %176 : vector<8x32xf32>
    %c0_196 = arith.constant 0 : index
    %c1_197 = arith.constant 1 : index
    %c0_198 = arith.constant 0 : index
    %178 = vector.load %arg17[%c0_196, %c1_197, %c0_198] : memref<8x32x128xf32, #tpu.memory_space<vmem>>, vector<8x1x128xf32>
    %179 = vector.shape_cast %178 : vector<8x1x128xf32> to vector<8x128xf32>
    %180 = arith.truncf %179 : vector<8x128xf32> to vector<8x128xbf16>
    %c1_199 = arith.constant 1 : index
    %c0_200 = arith.constant 0 : index
    %c0_201 = arith.constant 0 : index
    %181 = vector.load %arg8[%c1_199, %c0_200, %c0_201] : memref<32x128x32xbf16, #tpu.memory_space<vmem>>, vector<1x128x32xbf16>
    %182 = vector.shape_cast %181 : vector<1x128x32xbf16> to vector<128x32xbf16>
    %cst_202 = arith.constant dense<0.000000e+00> : vector<8x32xf32>
    %183 = tpu.matmul %180, %182, %cst_202 {dimension_numbers = #tpu.dot_dimension_numbers<[1], [0], [0], [1], [0, 0, 1, 1], [], []>} : vector<8x128xbf16>, vector<128x32xbf16>, vector<8x32xf32> -> vector<8x32xf32>
    %184 = arith.addf %177, %183 : vector<8x32xf32>
    %c0_203 = arith.constant 0 : index
    %c2_204 = arith.constant 2 : index
    %c0_205 = arith.constant 0 : index
    %185 = vector.load %arg17[%c0_203, %c2_204, %c0_205] : memref<8x32x128xf32, #tpu.memory_space<vmem>>, vector<8x1x128xf32>
    %186 = vector.shape_cast %185 : vector<8x1x128xf32> to vector<8x128xf32>
    %187 = arith.truncf %186 : vector<8x128xf32> to vector<8x128xbf16>
    %c2_206 = arith.constant 2 : index
    %c0_207 = arith.constant 0 : index
    %c0_208 = arith.constant 0 : index
    %188 = vector.load %arg8[%c2_206, %c0_207, %c0_208] : memref<32x128x32xbf16, #tpu.memory_space<vmem>>, vector<1x128x32xbf16>
    %189 = vector.shape_cast %188 : vector<1x128x32xbf16> to vector<128x32xbf16>
    %cst_209 = arith.constant dense<0.000000e+00> : vector<8x32xf32>
    %190 = tpu.matmul %187, %189, %cst_209 {dimension_numbers = #tpu.dot_dimension_numbers<[1], [0], [0], [1], [0, 0, 1, 1], [], []>} : vector<8x128xbf16>, vector<128x32xbf16>, vector<8x32xf32> -> vector<8x32xf32>
    %191 = arith.addf %184, %190 : vector<8x32xf32>
    %c0_210 = arith.constant 0 : index
    %c3_211 = arith.constant 3 : index
    %c0_212 = arith.constant 0 : index
    %192 = vector.load %arg17[%c0_210, %c3_211, %c0_212] : memref<8x32x128xf32, #tpu.memory_space<vmem>>, vector<8x1x128xf32>
    %193 = vector.shape_cast %192 : vector<8x1x128xf32> to vector<8x128xf32>
    %194 = arith.truncf %193 : vector<8x128xf32> to vector<8x128xbf16>
    %c3_213 = arith.constant 3 : index
    %c0_214 = arith.constant 0 : index
    %c0_215 = arith.constant 0 : index
    %195 = vector.load %arg8[%c3_213, %c0_214, %c0_215] : memref<32x128x32xbf16, #tpu.memory_space<vmem>>, vector<1x128x32xbf16>
    %196 = vector.shape_cast %195 : vector<1x128x32xbf16> to vector<128x32xbf16>
    %cst_216 = arith.constant dense<0.000000e+00> : vector<8x32xf32>
    %197 = tpu.matmul %194, %196, %cst_216 {dimension_numbers = #tpu.dot_dimension_numbers<[1], [0], [0], [1], [0, 0, 1, 1], [], []>} : vector<8x128xbf16>, vector<128x32xbf16>, vector<8x32xf32> -> vector<8x32xf32>
    %198 = arith.addf %191, %197 : vector<8x32xf32>
    %c0_217 = arith.constant 0 : index
    %c4_218 = arith.constant 4 : index
    %c0_219 = arith.constant 0 : index
    %199 = vector.load %arg17[%c0_217, %c4_218, %c0_219] : memref<8x32x128xf32, #tpu.memory_space<vmem>>, vector<8x1x128xf32>
    %200 = vector.shape_cast %199 : vector<8x1x128xf32> to vector<8x128xf32>
    %201 = arith.truncf %200 : vector<8x128xf32> to vector<8x128xbf16>
    %c4_220 = arith.constant 4 : index
    %c0_221 = arith.constant 0 : index
    %c0_222 = arith.constant 0 : index
    %202 = vector.load %arg8[%c4_220, %c0_221, %c0_222] : memref<32x128x32xbf16, #tpu.memory_space<vmem>>, vector<1x128x32xbf16>
    %203 = vector.shape_cast %202 : vector<1x128x32xbf16> to vector<128x32xbf16>
    %cst_223 = arith.constant dense<0.000000e+00> : vector<8x32xf32>
    %204 = tpu.matmul %201, %203, %cst_223 {dimension_numbers = #tpu.dot_dimension_numbers<[1], [0], [0], [1], [0, 0, 1, 1], [], []>} : vector<8x128xbf16>, vector<128x32xbf16>, vector<8x32xf32> -> vector<8x32xf32>
    %205 = arith.addf %198, %204 : vector<8x32xf32>
    %c0_224 = arith.constant 0 : index
    %c5_225 = arith.constant 5 : index
    %c0_226 = arith.constant 0 : index
    %206 = vector.load %arg17[%c0_224, %c5_225, %c0_226] : memref<8x32x128xf32, #tpu.memory_space<vmem>>, vector<8x1x128xf32>
    %207 = vector.shape_cast %206 : vector<8x1x128xf32> to vector<8x128xf32>
    %208 = arith.truncf %207 : vector<8x128xf32> to vector<8x128xbf16>
    %c5_227 = arith.constant 5 : index
    %c0_228 = arith.constant 0 : index
    %c0_229 = arith.constant 0 : index
    %209 = vector.load %arg8[%c5_227, %c0_228, %c0_229] : memref<32x128x32xbf16, #tpu.memory_space<vmem>>, vector<1x128x32xbf16>
    %210 = vector.shape_cast %209 : vector<1x128x32xbf16> to vector<128x32xbf16>
    %cst_230 = arith.constant dense<0.000000e+00> : vector<8x32xf32>
    %211 = tpu.matmul %208, %210, %cst_230 {dimension_numbers = #tpu.dot_dimension_numbers<[1], [0], [0], [1], [0, 0, 1, 1], [], []>} : vector<8x128xbf16>, vector<128x32xbf16>, vector<8x32xf32> -> vector<8x32xf32>
    %212 = arith.addf %205, %211 : vector<8x32xf32>
    %c0_231 = arith.constant 0 : index
    %c6_232 = arith.constant 6 : index
    %c0_233 = arith.constant 0 : index
    %213 = vector.load %arg17[%c0_231, %c6_232, %c0_233] : memref<8x32x128xf32, #tpu.memory_space<vmem>>, vector<8x1x128xf32>
    %214 = vector.shape_cast %213 : vector<8x1x128xf32> to vector<8x128xf32>
    %215 = arith.truncf %214 : vector<8x128xf32> to vector<8x128xbf16>
    %c6_234 = arith.constant 6 : index
    %c0_235 = arith.constant 0 : index
    %c0_236 = arith.constant 0 : index
    %216 = vector.load %arg8[%c6_234, %c0_235, %c0_236] : memref<32x128x32xbf16, #tpu.memory_space<vmem>>, vector<1x128x32xbf16>
    %217 = vector.shape_cast %216 : vector<1x128x32xbf16> to vector<128x32xbf16>
    %cst_237 = arith.constant dense<0.000000e+00> : vector<8x32xf32>
    %218 = tpu.matmul %215, %217, %cst_237 {dimension_numbers = #tpu.dot_dimension_numbers<[1], [0], [0], [1], [0, 0, 1, 1], [], []>} : vector<8x128xbf16>, vector<128x32xbf16>, vector<8x32xf32> -> vector<8x32xf32>
    %219 = arith.addf %212, %218 : vector<8x32xf32>
    %c0_238 = arith.constant 0 : index
    %c7_239 = arith.constant 7 : index
    %c0_240 = arith.constant 0 : index
    %220 = vector.load %arg17[%c0_238, %c7_239, %c0_240] : memref<8x32x128xf32, #tpu.memory_space<vmem>>, vector<8x1x128xf32>
    %221 = vector.shape_cast %220 : vector<8x1x128xf32> to vector<8x128xf32>
    %222 = arith.truncf %221 : vector<8x128xf32> to vector<8x128xbf16>
    %c7_241 = arith.constant 7 : index
    %c0_242 = arith.constant 0 : index
    %c0_243 = arith.constant 0 : index
    %223 = vector.load %arg8[%c7_241, %c0_242, %c0_243] : memref<32x128x32xbf16, #tpu.memory_space<vmem>>, vector<1x128x32xbf16>
    %224 = vector.shape_cast %223 : vector<1x128x32xbf16> to vector<128x32xbf16>
    %cst_244 = arith.constant dense<0.000000e+00> : vector<8x32xf32>
    %225 = tpu.matmul %222, %224, %cst_244 {dimension_numbers = #tpu.dot_dimension_numbers<[1], [0], [0], [1], [0, 0, 1, 1], [], []>} : vector<8x128xbf16>, vector<128x32xbf16>, vector<8x32xf32> -> vector<8x32xf32>
    %226 = arith.addf %219, %225 : vector<8x32xf32>
    %c0_245 = arith.constant 0 : index
    %c8_246 = arith.constant 8 : index
    %c0_247 = arith.constant 0 : index
    %227 = vector.load %arg17[%c0_245, %c8_246, %c0_247] : memref<8x32x128xf32, #tpu.memory_space<vmem>>, vector<8x1x128xf32>
    %228 = vector.shape_cast %227 : vector<8x1x128xf32> to vector<8x128xf32>
    %229 = arith.truncf %228 : vector<8x128xf32> to vector<8x128xbf16>
    %c8_248 = arith.constant 8 : index
    %c0_249 = arith.constant 0 : index
    %c0_250 = arith.constant 0 : index
    %230 = vector.load %arg8[%c8_248, %c0_249, %c0_250] : memref<32x128x32xbf16, #tpu.memory_space<vmem>>, vector<1x128x32xbf16>
    %231 = vector.shape_cast %230 : vector<1x128x32xbf16> to vector<128x32xbf16>
    %cst_251 = arith.constant dense<0.000000e+00> : vector<8x32xf32>
    %232 = tpu.matmul %229, %231, %cst_251 {dimension_numbers = #tpu.dot_dimension_numbers<[1], [0], [0], [1], [0, 0, 1, 1], [], []>} : vector<8x128xbf16>, vector<128x32xbf16>, vector<8x32xf32> -> vector<8x32xf32>
    %233 = arith.addf %226, %232 : vector<8x32xf32>
    %c0_252 = arith.constant 0 : index
    %c9 = arith.constant 9 : index
    %c0_253 = arith.constant 0 : index
    %234 = vector.load %arg17[%c0_252, %c9, %c0_253] : memref<8x32x128xf32, #tpu.memory_space<vmem>>, vector<8x1x128xf32>
    %235 = vector.shape_cast %234 : vector<8x1x128xf32> to vector<8x128xf32>
    %236 = arith.truncf %235 : vector<8x128xf32> to vector<8x128xbf16>
    %c9_254 = arith.constant 9 : index
    %c0_255 = arith.constant 0 : index
    %c0_256 = arith.constant 0 : index
    %237 = vector.load %arg8[%c9_254, %c0_255, %c0_256] : memref<32x128x32xbf16, #tpu.memory_space<vmem>>, vector<1x128x32xbf16>
    %238 = vector.shape_cast %237 : vector<1x128x32xbf16> to vector<128x32xbf16>
    %cst_257 = arith.constant dense<0.000000e+00> : vector<8x32xf32>
    %239 = tpu.matmul %236, %238, %cst_257 {dimension_numbers = #tpu.dot_dimension_numbers<[1], [0], [0], [1], [0, 0, 1, 1], [], []>} : vector<8x128xbf16>, vector<128x32xbf16>, vector<8x32xf32> -> vector<8x32xf32>
    %240 = arith.addf %233, %239 : vector<8x32xf32>
    %c0_258 = arith.constant 0 : index
    %c10 = arith.constant 10 : index
    %c0_259 = arith.constant 0 : index
    %241 = vector.load %arg17[%c0_258, %c10, %c0_259] : memref<8x32x128xf32, #tpu.memory_space<vmem>>, vector<8x1x128xf32>
    %242 = vector.shape_cast %241 : vector<8x1x128xf32> to vector<8x128xf32>
    %243 = arith.truncf %242 : vector<8x128xf32> to vector<8x128xbf16>
    %c10_260 = arith.constant 10 : index
    %c0_261 = arith.constant 0 : index
    %c0_262 = arith.constant 0 : index
    %244 = vector.load %arg8[%c10_260, %c0_261, %c0_262] : memref<32x128x32xbf16, #tpu.memory_space<vmem>>, vector<1x128x32xbf16>
    %245 = vector.shape_cast %244 : vector<1x128x32xbf16> to vector<128x32xbf16>
    %cst_263 = arith.constant dense<0.000000e+00> : vector<8x32xf32>
    %246 = tpu.matmul %243, %245, %cst_263 {dimension_numbers = #tpu.dot_dimension_numbers<[1], [0], [0], [1], [0, 0, 1, 1], [], []>} : vector<8x128xbf16>, vector<128x32xbf16>, vector<8x32xf32> -> vector<8x32xf32>
    %247 = arith.addf %240, %246 : vector<8x32xf32>
    %c0_264 = arith.constant 0 : index
    %c11 = arith.constant 11 : index
    %c0_265 = arith.constant 0 : index
    %248 = vector.load %arg17[%c0_264, %c11, %c0_265] : memref<8x32x128xf32, #tpu.memory_space<vmem>>, vector<8x1x128xf32>
    %249 = vector.shape_cast %248 : vector<8x1x128xf32> to vector<8x128xf32>
    %250 = arith.truncf %249 : vector<8x128xf32> to vector<8x128xbf16>
    %c11_266 = arith.constant 11 : index
    %c0_267 = arith.constant 0 : index
    %c0_268 = arith.constant 0 : index
    %251 = vector.load %arg8[%c11_266, %c0_267, %c0_268] : memref<32x128x32xbf16, #tpu.memory_space<vmem>>, vector<1x128x32xbf16>
    %252 = vector.shape_cast %251 : vector<1x128x32xbf16> to vector<128x32xbf16>
    %cst_269 = arith.constant dense<0.000000e+00> : vector<8x32xf32>
    %253 = tpu.matmul %250, %252, %cst_269 {dimension_numbers = #tpu.dot_dimension_numbers<[1], [0], [0], [1], [0, 0, 1, 1], [], []>} : vector<8x128xbf16>, vector<128x32xbf16>, vector<8x32xf32> -> vector<8x32xf32>
    %254 = arith.addf %247, %253 : vector<8x32xf32>
    %c0_270 = arith.constant 0 : index
    %c12 = arith.constant 12 : index
    %c0_271 = arith.constant 0 : index
    %255 = vector.load %arg17[%c0_270, %c12, %c0_271] : memref<8x32x128xf32, #tpu.memory_space<vmem>>, vector<8x1x128xf32>
    %256 = vector.shape_cast %255 : vector<8x1x128xf32> to vector<8x128xf32>
    %257 = arith.truncf %256 : vector<8x128xf32> to vector<8x128xbf16>
    %c12_272 = arith.constant 12 : index
    %c0_273 = arith.constant 0 : index
    %c0_274 = arith.constant 0 : index
    %258 = vector.load %arg8[%c12_272, %c0_273, %c0_274] : memref<32x128x32xbf16, #tpu.memory_space<vmem>>, vector<1x128x32xbf16>
    %259 = vector.shape_cast %258 : vector<1x128x32xbf16> to vector<128x32xbf16>
    %cst_275 = arith.constant dense<0.000000e+00> : vector<8x32xf32>
    %260 = tpu.matmul %257, %259, %cst_275 {dimension_numbers = #tpu.dot_dimension_numbers<[1], [0], [0], [1], [0, 0, 1, 1], [], []>} : vector<8x128xbf16>, vector<128x32xbf16>, vector<8x32xf32> -> vector<8x32xf32>
    %261 = arith.addf %254, %260 : vector<8x32xf32>
    %c0_276 = arith.constant 0 : index
    %c13 = arith.constant 13 : index
    %c0_277 = arith.constant 0 : index
    %262 = vector.load %arg17[%c0_276, %c13, %c0_277] : memref<8x32x128xf32, #tpu.memory_space<vmem>>, vector<8x1x128xf32>
    %263 = vector.shape_cast %262 : vector<8x1x128xf32> to vector<8x128xf32>
    %264 = arith.truncf %263 : vector<8x128xf32> to vector<8x128xbf16>
    %c13_278 = arith.constant 13 : index
    %c0_279 = arith.constant 0 : index
    %c0_280 = arith.constant 0 : index
    %265 = vector.load %arg8[%c13_278, %c0_279, %c0_280] : memref<32x128x32xbf16, #tpu.memory_space<vmem>>, vector<1x128x32xbf16>
    %266 = vector.shape_cast %265 : vector<1x128x32xbf16> to vector<128x32xbf16>
    %cst_281 = arith.constant dense<0.000000e+00> : vector<8x32xf32>
    %267 = tpu.matmul %264, %266, %cst_281 {dimension_numbers = #tpu.dot_dimension_numbers<[1], [0], [0], [1], [0, 0, 1, 1], [], []>} : vector<8x128xbf16>, vector<128x32xbf16>, vector<8x32xf32> -> vector<8x32xf32>
    %268 = arith.addf %261, %267 : vector<8x32xf32>
    %c0_282 = arith.constant 0 : index
    %c14 = arith.constant 14 : index
    %c0_283 = arith.constant 0 : index
    %269 = vector.load %arg17[%c0_282, %c14, %c0_283] : memref<8x32x128xf32, #tpu.memory_space<vmem>>, vector<8x1x128xf32>
    %270 = vector.shape_cast %269 : vector<8x1x128xf32> to vector<8x128xf32>
    %271 = arith.truncf %270 : vector<8x128xf32> to vector<8x128xbf16>
    %c14_284 = arith.constant 14 : index
    %c0_285 = arith.constant 0 : index
    %c0_286 = arith.constant 0 : index
    %272 = vector.load %arg8[%c14_284, %c0_285, %c0_286] : memref<32x128x32xbf16, #tpu.memory_space<vmem>>, vector<1x128x32xbf16>
    %273 = vector.shape_cast %272 : vector<1x128x32xbf16> to vector<128x32xbf16>
    %cst_287 = arith.constant dense<0.000000e+00> : vector<8x32xf32>
    %274 = tpu.matmul %271, %273, %cst_287 {dimension_numbers = #tpu.dot_dimension_numbers<[1], [0], [0], [1], [0, 0, 1, 1], [], []>} : vector<8x128xbf16>, vector<128x32xbf16>, vector<8x32xf32> -> vector<8x32xf32>
    %275 = arith.addf %268, %274 : vector<8x32xf32>
    %c0_288 = arith.constant 0 : index
    %c15 = arith.constant 15 : index
    %c0_289 = arith.constant 0 : index
    %276 = vector.load %arg17[%c0_288, %c15, %c0_289] : memref<8x32x128xf32, #tpu.memory_space<vmem>>, vector<8x1x128xf32>
    %277 = vector.shape_cast %276 : vector<8x1x128xf32> to vector<8x128xf32>
    %278 = arith.truncf %277 : vector<8x128xf32> to vector<8x128xbf16>
    %c15_290 = arith.constant 15 : index
    %c0_291 = arith.constant 0 : index
    %c0_292 = arith.constant 0 : index
    %279 = vector.load %arg8[%c15_290, %c0_291, %c0_292] : memref<32x128x32xbf16, #tpu.memory_space<vmem>>, vector<1x128x32xbf16>
    %280 = vector.shape_cast %279 : vector<1x128x32xbf16> to vector<128x32xbf16>
    %cst_293 = arith.constant dense<0.000000e+00> : vector<8x32xf32>
    %281 = tpu.matmul %278, %280, %cst_293 {dimension_numbers = #tpu.dot_dimension_numbers<[1], [0], [0], [1], [0, 0, 1, 1], [], []>} : vector<8x128xbf16>, vector<128x32xbf16>, vector<8x32xf32> -> vector<8x32xf32>
    %282 = arith.addf %275, %281 : vector<8x32xf32>
    %c0_294 = arith.constant 0 : index
    %c16 = arith.constant 16 : index
    %c0_295 = arith.constant 0 : index
    %283 = vector.load %arg17[%c0_294, %c16, %c0_295] : memref<8x32x128xf32, #tpu.memory_space<vmem>>, vector<8x1x128xf32>
    %284 = vector.shape_cast %283 : vector<8x1x128xf32> to vector<8x128xf32>
    %285 = arith.truncf %284 : vector<8x128xf32> to vector<8x128xbf16>
    %c16_296 = arith.constant 16 : index
    %c0_297 = arith.constant 0 : index
    %c0_298 = arith.constant 0 : index
    %286 = vector.load %arg8[%c16_296, %c0_297, %c0_298] : memref<32x128x32xbf16, #tpu.memory_space<vmem>>, vector<1x128x32xbf16>
    %287 = vector.shape_cast %286 : vector<1x128x32xbf16> to vector<128x32xbf16>
    %cst_299 = arith.constant dense<0.000000e+00> : vector<8x32xf32>
    %288 = tpu.matmul %285, %287, %cst_299 {dimension_numbers = #tpu.dot_dimension_numbers<[1], [0], [0], [1], [0, 0, 1, 1], [], []>} : vector<8x128xbf16>, vector<128x32xbf16>, vector<8x32xf32> -> vector<8x32xf32>
    %289 = arith.addf %282, %288 : vector<8x32xf32>
    %c0_300 = arith.constant 0 : index
    %c17 = arith.constant 17 : index
    %c0_301 = arith.constant 0 : index
    %290 = vector.load %arg17[%c0_300, %c17, %c0_301] : memref<8x32x128xf32, #tpu.memory_space<vmem>>, vector<8x1x128xf32>
    %291 = vector.shape_cast %290 : vector<8x1x128xf32> to vector<8x128xf32>
    %292 = arith.truncf %291 : vector<8x128xf32> to vector<8x128xbf16>
    %c17_302 = arith.constant 17 : index
    %c0_303 = arith.constant 0 : index
    %c0_304 = arith.constant 0 : index
    %293 = vector.load %arg8[%c17_302, %c0_303, %c0_304] : memref<32x128x32xbf16, #tpu.memory_space<vmem>>, vector<1x128x32xbf16>
    %294 = vector.shape_cast %293 : vector<1x128x32xbf16> to vector<128x32xbf16>
    %cst_305 = arith.constant dense<0.000000e+00> : vector<8x32xf32>
    %295 = tpu.matmul %292, %294, %cst_305 {dimension_numbers = #tpu.dot_dimension_numbers<[1], [0], [0], [1], [0, 0, 1, 1], [], []>} : vector<8x128xbf16>, vector<128x32xbf16>, vector<8x32xf32> -> vector<8x32xf32>
    %296 = arith.addf %289, %295 : vector<8x32xf32>
    %c0_306 = arith.constant 0 : index
    %c18 = arith.constant 18 : index
    %c0_307 = arith.constant 0 : index
    %297 = vector.load %arg17[%c0_306, %c18, %c0_307] : memref<8x32x128xf32, #tpu.memory_space<vmem>>, vector<8x1x128xf32>
    %298 = vector.shape_cast %297 : vector<8x1x128xf32> to vector<8x128xf32>
    %299 = arith.truncf %298 : vector<8x128xf32> to vector<8x128xbf16>
    %c18_308 = arith.constant 18 : index
    %c0_309 = arith.constant 0 : index
    %c0_310 = arith.constant 0 : index
    %300 = vector.load %arg8[%c18_308, %c0_309, %c0_310] : memref<32x128x32xbf16, #tpu.memory_space<vmem>>, vector<1x128x32xbf16>
    %301 = vector.shape_cast %300 : vector<1x128x32xbf16> to vector<128x32xbf16>
    %cst_311 = arith.constant dense<0.000000e+00> : vector<8x32xf32>
    %302 = tpu.matmul %299, %301, %cst_311 {dimension_numbers = #tpu.dot_dimension_numbers<[1], [0], [0], [1], [0, 0, 1, 1], [], []>} : vector<8x128xbf16>, vector<128x32xbf16>, vector<8x32xf32> -> vector<8x32xf32>
    %303 = arith.addf %296, %302 : vector<8x32xf32>
    %c0_312 = arith.constant 0 : index
    %c19 = arith.constant 19 : index
    %c0_313 = arith.constant 0 : index
    %304 = vector.load %arg17[%c0_312, %c19, %c0_313] : memref<8x32x128xf32, #tpu.memory_space<vmem>>, vector<8x1x128xf32>
    %305 = vector.shape_cast %304 : vector<8x1x128xf32> to vector<8x128xf32>
    %306 = arith.truncf %305 : vector<8x128xf32> to vector<8x128xbf16>
    %c19_314 = arith.constant 19 : index
    %c0_315 = arith.constant 0 : index
    %c0_316 = arith.constant 0 : index
    %307 = vector.load %arg8[%c19_314, %c0_315, %c0_316] : memref<32x128x32xbf16, #tpu.memory_space<vmem>>, vector<1x128x32xbf16>
    %308 = vector.shape_cast %307 : vector<1x128x32xbf16> to vector<128x32xbf16>
    %cst_317 = arith.constant dense<0.000000e+00> : vector<8x32xf32>
    %309 = tpu.matmul %306, %308, %cst_317 {dimension_numbers = #tpu.dot_dimension_numbers<[1], [0], [0], [1], [0, 0, 1, 1], [], []>} : vector<8x128xbf16>, vector<128x32xbf16>, vector<8x32xf32> -> vector<8x32xf32>
    %310 = arith.addf %303, %309 : vector<8x32xf32>
    %c0_318 = arith.constant 0 : index
    %c20 = arith.constant 20 : index
    %c0_319 = arith.constant 0 : index
    %311 = vector.load %arg17[%c0_318, %c20, %c0_319] : memref<8x32x128xf32, #tpu.memory_space<vmem>>, vector<8x1x128xf32>
    %312 = vector.shape_cast %311 : vector<8x1x128xf32> to vector<8x128xf32>
    %313 = arith.truncf %312 : vector<8x128xf32> to vector<8x128xbf16>
    %c20_320 = arith.constant 20 : index
    %c0_321 = arith.constant 0 : index
    %c0_322 = arith.constant 0 : index
    %314 = vector.load %arg8[%c20_320, %c0_321, %c0_322] : memref<32x128x32xbf16, #tpu.memory_space<vmem>>, vector<1x128x32xbf16>
    %315 = vector.shape_cast %314 : vector<1x128x32xbf16> to vector<128x32xbf16>
    %cst_323 = arith.constant dense<0.000000e+00> : vector<8x32xf32>
    %316 = tpu.matmul %313, %315, %cst_323 {dimension_numbers = #tpu.dot_dimension_numbers<[1], [0], [0], [1], [0, 0, 1, 1], [], []>} : vector<8x128xbf16>, vector<128x32xbf16>, vector<8x32xf32> -> vector<8x32xf32>
    %317 = arith.addf %310, %316 : vector<8x32xf32>
    %c0_324 = arith.constant 0 : index
    %c21 = arith.constant 21 : index
    %c0_325 = arith.constant 0 : index
    %318 = vector.load %arg17[%c0_324, %c21, %c0_325] : memref<8x32x128xf32, #tpu.memory_space<vmem>>, vector<8x1x128xf32>
    %319 = vector.shape_cast %318 : vector<8x1x128xf32> to vector<8x128xf32>
    %320 = arith.truncf %319 : vector<8x128xf32> to vector<8x128xbf16>
    %c21_326 = arith.constant 21 : index
    %c0_327 = arith.constant 0 : index
    %c0_328 = arith.constant 0 : index
    %321 = vector.load %arg8[%c21_326, %c0_327, %c0_328] : memref<32x128x32xbf16, #tpu.memory_space<vmem>>, vector<1x128x32xbf16>
    %322 = vector.shape_cast %321 : vector<1x128x32xbf16> to vector<128x32xbf16>
    %cst_329 = arith.constant dense<0.000000e+00> : vector<8x32xf32>
    %323 = tpu.matmul %320, %322, %cst_329 {dimension_numbers = #tpu.dot_dimension_numbers<[1], [0], [0], [1], [0, 0, 1, 1], [], []>} : vector<8x128xbf16>, vector<128x32xbf16>, vector<8x32xf32> -> vector<8x32xf32>
    %324 = arith.addf %317, %323 : vector<8x32xf32>
    %c0_330 = arith.constant 0 : index
    %c22 = arith.constant 22 : index
    %c0_331 = arith.constant 0 : index
    %325 = vector.load %arg17[%c0_330, %c22, %c0_331] : memref<8x32x128xf32, #tpu.memory_space<vmem>>, vector<8x1x128xf32>
    %326 = vector.shape_cast %325 : vector<8x1x128xf32> to vector<8x128xf32>
    %327 = arith.truncf %326 : vector<8x128xf32> to vector<8x128xbf16>
    %c22_332 = arith.constant 22 : index
    %c0_333 = arith.constant 0 : index
    %c0_334 = arith.constant 0 : index
    %328 = vector.load %arg8[%c22_332, %c0_333, %c0_334] : memref<32x128x32xbf16, #tpu.memory_space<vmem>>, vector<1x128x32xbf16>
    %329 = vector.shape_cast %328 : vector<1x128x32xbf16> to vector<128x32xbf16>
    %cst_335 = arith.constant dense<0.000000e+00> : vector<8x32xf32>
    %330 = tpu.matmul %327, %329, %cst_335 {dimension_numbers = #tpu.dot_dimension_numbers<[1], [0], [0], [1], [0, 0, 1, 1], [], []>} : vector<8x128xbf16>, vector<128x32xbf16>, vector<8x32xf32> -> vector<8x32xf32>
    %331 = arith.addf %324, %330 : vector<8x32xf32>
    %c0_336 = arith.constant 0 : index
    %c23 = arith.constant 23 : index
    %c0_337 = arith.constant 0 : index
    %332 = vector.load %arg17[%c0_336, %c23, %c0_337] : memref<8x32x128xf32, #tpu.memory_space<vmem>>, vector<8x1x128xf32>
    %333 = vector.shape_cast %332 : vector<8x1x128xf32> to vector<8x128xf32>
    %334 = arith.truncf %333 : vector<8x128xf32> to vector<8x128xbf16>
    %c23_338 = arith.constant 23 : index
    %c0_339 = arith.constant 0 : index
    %c0_340 = arith.constant 0 : index
    %335 = vector.load %arg8[%c23_338, %c0_339, %c0_340] : memref<32x128x32xbf16, #tpu.memory_space<vmem>>, vector<1x128x32xbf16>
    %336 = vector.shape_cast %335 : vector<1x128x32xbf16> to vector<128x32xbf16>
    %cst_341 = arith.constant dense<0.000000e+00> : vector<8x32xf32>
    %337 = tpu.matmul %334, %336, %cst_341 {dimension_numbers = #tpu.dot_dimension_numbers<[1], [0], [0], [1], [0, 0, 1, 1], [], []>} : vector<8x128xbf16>, vector<128x32xbf16>, vector<8x32xf32> -> vector<8x32xf32>
    %338 = arith.addf %331, %337 : vector<8x32xf32>
    %c0_342 = arith.constant 0 : index
    %c24 = arith.constant 24 : index
    %c0_343 = arith.constant 0 : index
    %339 = vector.load %arg17[%c0_342, %c24, %c0_343] : memref<8x32x128xf32, #tpu.memory_space<vmem>>, vector<8x1x128xf32>
    %340 = vector.shape_cast %339 : vector<8x1x128xf32> to vector<8x128xf32>
    %341 = arith.truncf %340 : vector<8x128xf32> to vector<8x128xbf16>
    %c24_344 = arith.constant 24 : index
    %c0_345 = arith.constant 0 : index
    %c0_346 = arith.constant 0 : index
    %342 = vector.load %arg8[%c24_344, %c0_345, %c0_346] : memref<32x128x32xbf16, #tpu.memory_space<vmem>>, vector<1x128x32xbf16>
    %343 = vector.shape_cast %342 : vector<1x128x32xbf16> to vector<128x32xbf16>
    %cst_347 = arith.constant dense<0.000000e+00> : vector<8x32xf32>
    %344 = tpu.matmul %341, %343, %cst_347 {dimension_numbers = #tpu.dot_dimension_numbers<[1], [0], [0], [1], [0, 0, 1, 1], [], []>} : vector<8x128xbf16>, vector<128x32xbf16>, vector<8x32xf32> -> vector<8x32xf32>
    %345 = arith.addf %338, %344 : vector<8x32xf32>
    %c0_348 = arith.constant 0 : index
    %c25 = arith.constant 25 : index
    %c0_349 = arith.constant 0 : index
    %346 = vector.load %arg17[%c0_348, %c25, %c0_349] : memref<8x32x128xf32, #tpu.memory_space<vmem>>, vector<8x1x128xf32>
    %347 = vector.shape_cast %346 : vector<8x1x128xf32> to vector<8x128xf32>
    %348 = arith.truncf %347 : vector<8x128xf32> to vector<8x128xbf16>
    %c25_350 = arith.constant 25 : index
    %c0_351 = arith.constant 0 : index
    %c0_352 = arith.constant 0 : index
    %349 = vector.load %arg8[%c25_350, %c0_351, %c0_352] : memref<32x128x32xbf16, #tpu.memory_space<vmem>>, vector<1x128x32xbf16>
    %350 = vector.shape_cast %349 : vector<1x128x32xbf16> to vector<128x32xbf16>
    %cst_353 = arith.constant dense<0.000000e+00> : vector<8x32xf32>
    %351 = tpu.matmul %348, %350, %cst_353 {dimension_numbers = #tpu.dot_dimension_numbers<[1], [0], [0], [1], [0, 0, 1, 1], [], []>} : vector<8x128xbf16>, vector<128x32xbf16>, vector<8x32xf32> -> vector<8x32xf32>
    %352 = arith.addf %345, %351 : vector<8x32xf32>
    %c0_354 = arith.constant 0 : index
    %c26 = arith.constant 26 : index
    %c0_355 = arith.constant 0 : index
    %353 = vector.load %arg17[%c0_354, %c26, %c0_355] : memref<8x32x128xf32, #tpu.memory_space<vmem>>, vector<8x1x128xf32>
    %354 = vector.shape_cast %353 : vector<8x1x128xf32> to vector<8x128xf32>
    %355 = arith.truncf %354 : vector<8x128xf32> to vector<8x128xbf16>
    %c26_356 = arith.constant 26 : index
    %c0_357 = arith.constant 0 : index
    %c0_358 = arith.constant 0 : index
    %356 = vector.load %arg8[%c26_356, %c0_357, %c0_358] : memref<32x128x32xbf16, #tpu.memory_space<vmem>>, vector<1x128x32xbf16>
    %357 = vector.shape_cast %356 : vector<1x128x32xbf16> to vector<128x32xbf16>
    %cst_359 = arith.constant dense<0.000000e+00> : vector<8x32xf32>
    %358 = tpu.matmul %355, %357, %cst_359 {dimension_numbers = #tpu.dot_dimension_numbers<[1], [0], [0], [1], [0, 0, 1, 1], [], []>} : vector<8x128xbf16>, vector<128x32xbf16>, vector<8x32xf32> -> vector<8x32xf32>
    %359 = arith.addf %352, %358 : vector<8x32xf32>
    %c0_360 = arith.constant 0 : index
    %c27 = arith.constant 27 : index
    %c0_361 = arith.constant 0 : index
    %360 = vector.load %arg17[%c0_360, %c27, %c0_361] : memref<8x32x128xf32, #tpu.memory_space<vmem>>, vector<8x1x128xf32>
    %361 = vector.shape_cast %360 : vector<8x1x128xf32> to vector<8x128xf32>
    %362 = arith.truncf %361 : vector<8x128xf32> to vector<8x128xbf16>
    %c27_362 = arith.constant 27 : index
    %c0_363 = arith.constant 0 : index
    %c0_364 = arith.constant 0 : index
    %363 = vector.load %arg8[%c27_362, %c0_363, %c0_364] : memref<32x128x32xbf16, #tpu.memory_space<vmem>>, vector<1x128x32xbf16>
    %364 = vector.shape_cast %363 : vector<1x128x32xbf16> to vector<128x32xbf16>
    %cst_365 = arith.constant dense<0.000000e+00> : vector<8x32xf32>
    %365 = tpu.matmul %362, %364, %cst_365 {dimension_numbers = #tpu.dot_dimension_numbers<[1], [0], [0], [1], [0, 0, 1, 1], [], []>} : vector<8x128xbf16>, vector<128x32xbf16>, vector<8x32xf32> -> vector<8x32xf32>
    %366 = arith.addf %359, %365 : vector<8x32xf32>
    %c0_366 = arith.constant 0 : index
    %c28 = arith.constant 28 : index
    %c0_367 = arith.constant 0 : index
    %367 = vector.load %arg17[%c0_366, %c28, %c0_367] : memref<8x32x128xf32, #tpu.memory_space<vmem>>, vector<8x1x128xf32>
    %368 = vector.shape_cast %367 : vector<8x1x128xf32> to vector<8x128xf32>
    %369 = arith.truncf %368 : vector<8x128xf32> to vector<8x128xbf16>
    %c28_368 = arith.constant 28 : index
    %c0_369 = arith.constant 0 : index
    %c0_370 = arith.constant 0 : index
    %370 = vector.load %arg8[%c28_368, %c0_369, %c0_370] : memref<32x128x32xbf16, #tpu.memory_space<vmem>>, vector<1x128x32xbf16>
    %371 = vector.shape_cast %370 : vector<1x128x32xbf16> to vector<128x32xbf16>
    %cst_371 = arith.constant dense<0.000000e+00> : vector<8x32xf32>
    %372 = tpu.matmul %369, %371, %cst_371 {dimension_numbers = #tpu.dot_dimension_numbers<[1], [0], [0], [1], [0, 0, 1, 1], [], []>} : vector<8x128xbf16>, vector<128x32xbf16>, vector<8x32xf32> -> vector<8x32xf32>
    %373 = arith.addf %366, %372 : vector<8x32xf32>
    %c0_372 = arith.constant 0 : index
    %c29 = arith.constant 29 : index
    %c0_373 = arith.constant 0 : index
    %374 = vector.load %arg17[%c0_372, %c29, %c0_373] : memref<8x32x128xf32, #tpu.memory_space<vmem>>, vector<8x1x128xf32>
    %375 = vector.shape_cast %374 : vector<8x1x128xf32> to vector<8x128xf32>
    %376 = arith.truncf %375 : vector<8x128xf32> to vector<8x128xbf16>
    %c29_374 = arith.constant 29 : index
    %c0_375 = arith.constant 0 : index
    %c0_376 = arith.constant 0 : index
    %377 = vector.load %arg8[%c29_374, %c0_375, %c0_376] : memref<32x128x32xbf16, #tpu.memory_space<vmem>>, vector<1x128x32xbf16>
    %378 = vector.shape_cast %377 : vector<1x128x32xbf16> to vector<128x32xbf16>
    %cst_377 = arith.constant dense<0.000000e+00> : vector<8x32xf32>
    %379 = tpu.matmul %376, %378, %cst_377 {dimension_numbers = #tpu.dot_dimension_numbers<[1], [0], [0], [1], [0, 0, 1, 1], [], []>} : vector<8x128xbf16>, vector<128x32xbf16>, vector<8x32xf32> -> vector<8x32xf32>
    %380 = arith.addf %373, %379 : vector<8x32xf32>
    %c0_378 = arith.constant 0 : index
    %c30 = arith.constant 30 : index
    %c0_379 = arith.constant 0 : index
    %381 = vector.load %arg17[%c0_378, %c30, %c0_379] : memref<8x32x128xf32, #tpu.memory_space<vmem>>, vector<8x1x128xf32>
    %382 = vector.shape_cast %381 : vector<8x1x128xf32> to vector<8x128xf32>
    %383 = arith.truncf %382 : vector<8x128xf32> to vector<8x128xbf16>
    %c30_380 = arith.constant 30 : index
    %c0_381 = arith.constant 0 : index
    %c0_382 = arith.constant 0 : index
    %384 = vector.load %arg8[%c30_380, %c0_381, %c0_382] : memref<32x128x32xbf16, #tpu.memory_space<vmem>>, vector<1x128x32xbf16>
    %385 = vector.shape_cast %384 : vector<1x128x32xbf16> to vector<128x32xbf16>
    %cst_383 = arith.constant dense<0.000000e+00> : vector<8x32xf32>
    %386 = tpu.matmul %383, %385, %cst_383 {dimension_numbers = #tpu.dot_dimension_numbers<[1], [0], [0], [1], [0, 0, 1, 1], [], []>} : vector<8x128xbf16>, vector<128x32xbf16>, vector<8x32xf32> -> vector<8x32xf32>
    %387 = arith.addf %380, %386 : vector<8x32xf32>
    %c0_384 = arith.constant 0 : index
    %c31 = arith.constant 31 : index
    %c0_385 = arith.constant 0 : index
    %388 = vector.load %arg17[%c0_384, %c31, %c0_385] : memref<8x32x128xf32, #tpu.memory_space<vmem>>, vector<8x1x128xf32>
    %389 = vector.shape_cast %388 : vector<8x1x128xf32> to vector<8x128xf32>
    %390 = arith.truncf %389 : vector<8x128xf32> to vector<8x128xbf16>
    %c31_386 = arith.constant 31 : index
    %c0_387 = arith.constant 0 : index
    %c0_388 = arith.constant 0 : index
    %391 = vector.load %arg8[%c31_386, %c0_387, %c0_388] : memref<32x128x32xbf16, #tpu.memory_space<vmem>>, vector<1x128x32xbf16>
    %392 = vector.shape_cast %391 : vector<1x128x32xbf16> to vector<128x32xbf16>
    %cst_389 = arith.constant dense<0.000000e+00> : vector<8x32xf32>
    %393 = tpu.matmul %390, %392, %cst_389 {dimension_numbers = #tpu.dot_dimension_numbers<[1], [0], [0], [1], [0, 0, 1, 1], [], []>} : vector<8x128xbf16>, vector<128x32xbf16>, vector<8x32xf32> -> vector<8x32xf32>
    %394 = arith.addf %387, %393 : vector<8x32xf32>
    %c0_390 = arith.constant 0 : index
    %c0_391 = arith.constant 0 : index
    %395 = vector.load %arg9[%c0_390, %c0_391] : memref<1x32xf32, #tpu.memory_space<vmem>>, vector<1x32xf32>
    %396 = vector.broadcast %395 : vector<1x32xf32> to vector<8x32xf32>
    %397 = arith.addf %394, %396 : vector<8x32xf32>
    %cst_392 = arith.constant 0.000000e+00 : f32
    %398 = vector.broadcast %cst_392 : f32 to vector<8x32xf32>
    %399 = arith.cmpf ogt, %397, %398 : vector<8x32xf32>
    %cst_393 = arith.constant 2.000000e-01 : f32
    %400 = vector.broadcast %cst_393 : f32 to vector<8x32xf32>
    %401 = arith.mulf %400, %397 : vector<8x32xf32>
    %402 = arith.select %399, %397, %401 : vector<8x32xi1>, vector<8x32xf32>
    %c0_394 = arith.constant 0 : index
    %c0_395 = arith.constant 0 : index
    %403 = vector.load %arg10[%c0_394, %c0_395] : memref<1x32xf32, #tpu.memory_space<vmem>>, vector<1x32xf32>
    %404 = vector.broadcast %403 : vector<1x32xf32> to vector<8x32xf32>
    %405 = arith.mulf %402, %404 : vector<8x32xf32>
    %cst_396 = arith.constant dense<0.000000e+00> : vector<8xf32>
    %406 = vector.multi_reduction <add>, %405, %cst_396 [1] : vector<8x32xf32> to vector<8xf32>
    %407 = vector.shape_cast %406 : vector<8xf32> to vector<8x1xf32>
    %c0_397 = arith.constant 0 : index
    %c0_398 = arith.constant 0 : index
    %408 = vector.load %arg11[%c0_397, %c0_398] : memref<1x1xf32, #tpu.memory_space<vmem>>, vector<1x1xf32>
    %409 = vector.broadcast %408 : vector<1x1xf32> to vector<8x1xf32>
    %410 = arith.addf %407, %409 : vector<8x1xf32>
    %c0_399 = arith.constant 0 : index
    %c0_400 = arith.constant 0 : index
    %411 = vector.load %arg12[%c0_399, %c0_400] : memref<8x1xf32, #tpu.memory_space<vmem>>, vector<8x1xf32>
    tpu.vector_store %arg12[%c0_399, %c0_400], %410 {strides = array<i32>} : memref<8x1xf32, #tpu.memory_space<vmem>>, vector<8x1xf32>,
    return
  }
  func.func @transform_0(%arg0: i32) -> (i32, i32, i32) {
    %c0_i32 = arith.constant 0 : i32
    %c0_i32_0 = arith.constant 0 : i32
    %c0_i32_1 = arith.constant 0 : i32
    return %arg0, %c0_i32, %c0_i32_0 : i32, i32, i32
  }
  func.func @transform_1(%arg0: i32) -> (i32, i32, i32) {
    %c0_i32 = arith.constant 0 : i32
    %c0_i32_0 = arith.constant 0 : i32
    %c0_i32_1 = arith.constant 0 : i32
    %c0_i32_2 = arith.constant 0 : i32
    return %c0_i32, %c0_i32_0, %c0_i32_1 : i32, i32, i32
  }
  func.func @transform_2(%arg0: i32) -> (i32, i32, i32) {
    %c0_i32 = arith.constant 0 : i32
    %c0_i32_0 = arith.constant 0 : i32
    %c0_i32_1 = arith.constant 0 : i32
    %c0_i32_2 = arith.constant 0 : i32
    return %c0_i32, %c0_i32_0, %c0_i32_1 : i32, i32, i32
  }
  func.func @transform_3(%arg0: i32) -> (i32, i32) {
    %c0_i32 = arith.constant 0 : i32
    %c0_i32_0 = arith.constant 0 : i32
    %c0_i32_1 = arith.constant 0 : i32
    return %c0_i32, %c0_i32_0 : i32, i32
  }
  func.func @transform_4(%arg0: i32) -> (i32, i32) {
    %c0_i32 = arith.constant 0 : i32
    %c0_i32_0 = arith.constant 0 : i32
    %c0_i32_1 = arith.constant 0 : i32
    return %c0_i32, %c0_i32_0 : i32, i32
  }
  func.func @transform_5(%arg0: i32) -> (i32, i32) {
    %c0_i32 = arith.constant 0 : i32
    %c0_i32_0 = arith.constant 0 : i32
    %c0_i32_1 = arith.constant 0 : i32
    return %c0_i32, %c0_i32_0 : i32, i32
  }
  func.func @transform_6(%arg0: i32) -> (i32, i32) {
    %c0_i32 = arith.constant 0 : i32
    %c0_i32_0 = arith.constant 0 : i32
    %c0_i32_1 = arith.constant 0 : i32
    return %c0_i32, %c0_i32_0 : i32, i32
  }
  func.func @transform_7(%arg0: i32) -> (i32, i32, i32) {
    %c0_i32 = arith.constant 0 : i32
    %c0_i32_0 = arith.constant 0 : i32
    %c0_i32_1 = arith.constant 0 : i32
    %c0_i32_2 = arith.constant 0 : i32
    return %c0_i32, %c0_i32_0, %c0_i32_1 : i32, i32, i32
  }
  func.func @transform_8(%arg0: i32) -> (i32, i32) {
    %c0_i32 = arith.constant 0 : i32
    %c0_i32_0 = arith.constant 0 : i32
    %c0_i32_1 = arith.constant 0 : i32
    return %c0_i32, %c0_i32_0 : i32, i32
  }
  func.func @transform_9(%arg0: i32) -> (i32, i32) {
    %c0_i32 = arith.constant 0 : i32
    %c0_i32_0 = arith.constant 0 : i32
    %c0_i32_1 = arith.constant 0 : i32
    return %c0_i32, %c0_i32_0 : i32, i32
  }
  func.func @transform_10(%arg0: i32) -> (i32, i32) {
    %c0_i32 = arith.constant 0 : i32
    %c0_i32_0 = arith.constant 0 : i32
    %c0_i32_1 = arith.constant 0 : i32
    return %c0_i32, %c0_i32_0 : i32, i32
  }
  func.func @transform_11(%arg0: i32) -> (i32, i32) {
    %c0_i32 = arith.constant 0 : i32
    %c0_i32_0 = arith.constant 0 : i32
    return %arg0, %c0_i32 : i32, i32
  }
}

</mosaic_0001>

<llo_original>
// kernel: discriminator_forward.1
$region0: #{discriminator_forward.1}
  #allocation0 [shape = 'u32[]', space=smem, size = 0x4, offset = 0x4, fixed_abs, tag = 'smem constant byte address 0x4 - core index']
  #allocation1 [shape = 'u32[144,128]{1,0:T(1,128)}', space=vmem, size = 0x12000, scoped, tag = 'internal scratch']
  #allocation2 [shape = 'f32[8,40,64]{2,1,0:T(8,128)}', space=vmem, size = 0x28000, scoped, tag = 'scratch operand']
  #allocation3 [shape = 'f32[8,40,128]{2,1,0:T(8,128)}', space=vmem, size = 0x28000, scoped, tag = 'scratch operand']
  #allocation4 [shape = 'bf16[8,32,576]{2,1,0:T(16,128)(2,1)}', space=vmem, size = 0x50000, scoped, tag = 'scratch operand']
  #allocation5 [shape = 'bf16[8,32,1152]{2,1,0:T(16,128)(2,1)}', space=vmem, size = 0x90000, scoped, tag = 'scratch operand']
  #allocation6 [shape = 'f32[8,32,128]{2,1,0:T(8,128)}', space=vmem, size = 0x20000, scoped, tag = 'scratch operand']
  #allocation7 [shape = 'f32[1,1]{1,0:T(1,128)S(1)}', space=vmem, size = 0x200, scoped, tag = 'scoped memory for discriminator_forward.1']
  %s0 = inlined_call_operand.vmem [shape: f32[8,40,1], index: 0, kind: input, shape index: {}]
  %s1 = inlined_call_operand.vmem [shape: f32[9,1,64], index: 1, kind: input, shape index: {}]
  %s2 = inlined_call_operand.vmem [shape: f32[1,1,64], index: 2, kind: input, shape index: {}]
  %s3 = inlined_call_operand.vmem [shape: bf16[576,128], index: 3, kind: input, shape index: {}]
  %s4 = inlined_call_operand.vmem [shape: f32[1,128], index: 4, kind: input, shape index: {}]
  %s5 = inlined_call_operand.vmem [shape: bf16[1152,128], index: 5, kind: input, shape index: {}]
  %s6 = inlined_call_operand.vmem [shape: f32[1,128], index: 6, kind: input, shape index: {}]
  %s7 = inlined_call_operand.vmem [shape: bf16[32,128,32], index: 7, kind: input, shape index: {}]
  %s8 = inlined_call_operand.vmem [shape: f32[1,32], index: 8, kind: input, shape index: {}]
  %s9 = inlined_call_operand.vmem [shape: f32[1,32], index: 9, kind: input, shape index: {}]
  %s10 = inlined_call_operand.<no memory space> [shape: f32[1,1], index: 10, kind: input, shape index: {}]
  %s11 = inlined_call_operand.vmem [shape: f32[8,1], index: 11, kind: output, shape index: {}]
  %s12 = sld [smem:[#allocation0]]
  $region54: #{discriminator_forward.1} parent=0
    _
  %s14 = ssub.s32 1, %s12
  %s15 = scalar_select 0, %s14, %s12
  %v16 = vstv %s10
  %17 = vst [vmem:[#allocation7] sm:$0x1] %v16
  // Predicated region
  $region2: #{discriminator_forward.1} parent=0 // pred_check
    _
  $region3: #{discriminator_forward.1} parent=0 // pred_check_branch
    %19 = sbr.rel (0) target = $region5
  $region4: #{discriminator_forward.1} parent=0 // pred_region
    _
  $region5: #{discriminator_forward.1} parent=0 // pred_fallthru
    _
  // Predicated region
  $region6: #{discriminator_forward.1} parent=0 // pred_check
    _
  $region7: #{discriminator_forward.1} parent=0 // pred_check_branch
    %21 = sbr.rel (0) target = $region9
  $region8: #{discriminator_forward.1} parent=0 // pred_region
    _
  $region9: #{discriminator_forward.1} parent=0 // pred_fallthru
    _
  // Predicated region
  $region10: #{discriminator_forward.1} parent=0 // pred_check
    _
  $region11: #{discriminator_forward.1} parent=0 // pred_check_branch
    %23 = sbr.rel (0) target = $region13
  $region12: #{discriminator_forward.1} parent=0 // pred_region
    _
  $region13: #{discriminator_forward.1} parent=0 // pred_fallthru
    _
  // Predicated region
  $region14: #{discriminator_forward.1} parent=0 // pred_check
    _
  $region15: #{discriminator_forward.1} parent=0 // pred_check_branch
    %25 = sbr.rel (0) target = $region17
  $region16: #{discriminator_forward.1} parent=0 // pred_region
    _
  $region17: #{discriminator_forward.1} parent=0 // pred_fallthru
    _
  // Predicated region
  $region18: #{discriminator_forward.1} parent=0 // pred_check
    _
  $region19: #{discriminator_forward.1} parent=0 // pred_check_branch
    %27 = sbr.rel (0) target = $region21
  $region20: #{discriminator_forward.1} parent=0 // pred_region
    _
  $region21: #{discriminator_forward.1} parent=0 // pred_fallthru
    _
  // Predicated region
  $region22: #{discriminator_forward.1} parent=0 // pred_check
    _
  $region23: #{discriminator_forward.1} parent=0 // pred_check_branch
    %29 = sbr.rel (0) target = $region25
  $region24: #{discriminator_forward.1} parent=0 // pred_region
    _
  $region25: #{discriminator_forward.1} parent=0 // pred_fallthru
    _
  // Predicated region
  $region26: #{discriminator_forward.1} parent=0 // pred_check
    _
  $region27: #{discriminator_forward.1} parent=0 // pred_check_branch
    %31 = sbr.rel (0) target = $region29
  $region28: #{discriminator_forward.1} parent=0 // pred_region
    _
  $region29: #{discriminator_forward.1} parent=0 // pred_fallthru
    _
  // Predicated region
  $region30: #{discriminator_forward.1} parent=0 // pred_check
    _
  $region31: #{discriminator_forward.1} parent=0 // pred_check_branch
    %33 = sbr.rel (0) target = $region33
  $region32: #{discriminator_forward.1} parent=0 // pred_region
    _
  $region33: #{discriminator_forward.1} parent=0 // pred_fallthru
    _
  // Predicated region
  $region34: #{discriminator_forward.1} parent=0 // pred_check
    _
  $region35: #{discriminator_forward.1} parent=0 // pred_check_branch
    %35 = sbr.rel (0) target = $region37
  $region36: #{discriminator_forward.1} parent=0 // pred_region
    _
  $region37: #{discriminator_forward.1} parent=0 // pred_fallthru
    _
  // Predicated region
  $region38: #{discriminator_forward.1} parent=0 // pred_check
    _
  $region39: #{discriminator_forward.1} parent=0 // pred_check_branch
    %37 = sbr.rel (0) target = $region41
  $region40: #{discriminator_forward.1} parent=0 // pred_region
    _
  $region41: #{discriminator_forward.1} parent=0 // pred_fallthru
    _
  // Predicated region
  $region42: #{discriminator_forward.1} parent=0 // pred_check
    _
  $region43: #{discriminator_forward.1} parent=0 // pred_check_branch
    %39 = sbr.rel (0) target = $region45
  $region44: #{discriminator_forward.1} parent=0 // pred_region
    _
  $region45: #{discriminator_forward.1} parent=0 // pred_fallthru
    _
  %v41 = vld [vmem:[%s0] sm:$0xff]
  %v42 = vld [vmem:[%s0 + $0x8] sm:$0xff]
  %v43 = vld [vmem:[%s0 + $0x10] sm:$0xff]
  %v44 = vld [vmem:[%s0 + $0x18] sm:$0xff]
  %v45 = vld [vmem:[%s0 + $0x28] sm:$0xff]
  %v46 = vld [vmem:[%s0 + $0x30] sm:$0xff]
  %v47 = vld [vmem:[%s0 + $0x38] sm:$0xff]
  %v48 = vld [vmem:[%s0 + $0x40] sm:$0xff]
  %v49 = vld [vmem:[%s0 + $0x50] sm:$0xff]
  %v50 = vld [vmem:[%s0 + $0x58] sm:$0xff]
  %v51 = vld [vmem:[%s0 + $0x60] sm:$0xff]
  %v52 = vld [vmem:[%s0 + $0x68] sm:$0xff]
  %v53 = vld [vmem:[%s0 + $0x78] sm:$0xff]
  %v54 = vld [vmem:[%s0 + $0x80] sm:$0xff]
  %v55 = vld [vmem:[%s0 + $0x88] sm:$0xff]
  %v56 = vld [vmem:[%s0 + $0x90] sm:$0xff]
  %v57 = vld [vmem:[%s0 + $0xa0] sm:$0xff]
  %v58 = vld [vmem:[%s0 + $0xa8] sm:$0xff]
  %v59 = vld [vmem:[%s0 + $0xb0] sm:$0xff]
  %v60 = vld [vmem:[%s0 + $0xb8] sm:$0xff]
  %v61 = vld [vmem:[%s0 + $0xc8] sm:$0xff]
  %v62 = vld [vmem:[%s0 + $0xd0] sm:$0xff]
  %v63 = vld [vmem:[%s0 + $0xd8] sm:$0xff]
  %v64 = vld [vmem:[%s0 + $0xe0] sm:$0xff]
  %v65 = vld [vmem:[%s0 + $0xf0] sm:$0xff]
  %v66 = vld [vmem:[%s0 + $0xf8] sm:$0xff]
  %v67 = vld [vmem:[%s0 + $0x100] sm:$0xff]
  %v68 = vld [vmem:[%s0 + $0x108] sm:$0xff]
  %v69 = vld [vmem:[%s0 + $0x118] sm:$0xff]
  %v70 = vld [vmem:[%s0 + $0x120] sm:$0xff]
  %v71 = vld [vmem:[%s0 + $0x128] sm:$0xff]
  %v72 = vld [vmem:[%s0 + $0x130] sm:$0xff]
  %v73 = vld [vmem:[%s1] sm:$0x1]
  %75 = vset.pattern.permute.xlu0 0
  %76 = vperm.xlu0 %75, %v41
  %v77 = vpop.permute.xlu0 %76
  %80 = vset.pattern.permute.xlu0 0
  %81 = vperm.xlu0 %80, %v42
  %v82 = vpop.permute.xlu0 %81
  %85 = vset.pattern.permute.xlu0 0
  %86 = vperm.xlu0 %85, %v43
  %v87 = vpop.permute.xlu0 %86
  %90 = vset.pattern.permute.xlu0 0
  %91 = vperm.xlu0 %90, %v44
  %v92 = vpop.permute.xlu0 %91
  %95 = vset.pattern.permute.xlu0 0
  %96 = vperm.xlu0 %95, %v45
  %v97 = vpop.permute.xlu0 %96
  %100 = vset.pattern.permute.xlu0 0
  %101 = vperm.xlu0 %100, %v46
  %v102 = vpop.permute.xlu0 %101
  %105 = vset.pattern.permute.xlu0 0
  %106 = vperm.xlu0 %105, %v47
  %v107 = vpop.permute.xlu0 %106
  %110 = vset.pattern.permute.xlu0 0
  %111 = vperm.xlu0 %110, %v48
  %v112 = vpop.permute.xlu0 %111
  %115 = vset.pattern.permute.xlu0 0
  %116 = vperm.xlu0 %115, %v49
  %v117 = vpop.permute.xlu0 %116
  %120 = vset.pattern.permute.xlu0 0
  %121 = vperm.xlu0 %120, %v50
  %v122 = vpop.permute.xlu0 %121
  %125 = vset.pattern.permute.xlu0 0
  %126 = vperm.xlu0 %125, %v51
  %v127 = vpop.permute.xlu0 %126
  %130 = vset.pattern.permute.xlu0 0
  %131 = vperm.xlu0 %130, %v52
  %v132 = vpop.permute.xlu0 %131
  %135 = vset.pattern.permute.xlu0 0
  %136 = vperm.xlu0 %135, %v53
  %v137 = vpop.permute.xlu0 %136
  %140 = vset.pattern.permute.xlu0 0
  %141 = vperm.xlu0 %140, %v54
  %v142 = vpop.permute.xlu0 %141
  %145 = vset.pattern.permute.xlu0 0
  %146 = vperm.xlu0 %145, %v55
  %v147 = vpop.permute.xlu0 %146
  %150 = vset.pattern.permute.xlu0 0
  %151 = vperm.xlu0 %150, %v56
  %v152 = vpop.permute.xlu0 %151
  %155 = vset.pattern.permute.xlu0 0
  %156 = vperm.xlu0 %155, %v57
  %v157 = vpop.permute.xlu0 %156
  %160 = vset.pattern.permute.xlu0 0
  %161 = vperm.xlu0 %160, %v58
  %v162 = vpop.permute.xlu0 %161
  %165 = vset.pattern.permute.xlu0 0
  %166 = vperm.xlu0 %165, %v59
  %v167 = vpop.permute.xlu0 %166
  %170 = vset.pattern.permute.xlu0 0
  %171 = vperm.xlu0 %170, %v60
  %v172 = vpop.permute.xlu0 %171
  %175 = vset.pattern.permute.xlu0 0
  %176 = vperm.xlu0 %175, %v61
  %v177 = vpop.permute.xlu0 %176
  %180 = vset.pattern.permute.xlu0 0
  %181 = vperm.xlu0 %180, %v62
  %v182 = vpop.permute.xlu0 %181
  %185 = vset.pattern.permute.xlu0 0
  %186 = vperm.xlu0 %185, %v63
  %v187 = vpop.permute.xlu0 %186
  %190 = vset.pattern.permute.xlu0 0
  %191 = vperm.xlu0 %190, %v64
  %v192 = vpop.permute.xlu0 %191
  %195 = vset.pattern.permute.xlu0 0
  %196 = vperm.xlu0 %195, %v65
  %v197 = vpop.permute.xlu0 %196
  %200 = vset.pattern.permute.xlu0 0
  %201 = vperm.xlu0 %200, %v66
  %v202 = vpop.permute.xlu0 %201
  %205 = vset.pattern.permute.xlu0 0
  %206 = vperm.xlu0 %205, %v67
  %v207 = vpop.permute.xlu0 %206
  %210 = vset.pattern.permute.xlu0 0
  %211 = vperm.xlu0 %210, %v68
  %v212 = vpop.permute.xlu0 %211
  %215 = vset.pattern.permute.xlu0 0
  %216 = vperm.xlu0 %215, %v69
  %v217 = vpop.permute.xlu0 %216
  %220 = vset.pattern.permute.xlu0 0
  %221 = vperm.xlu0 %220, %v70
  %v222 = vpop.permute.xlu0 %221
  %225 = vset.pattern.permute.xlu0 0
  %226 = vperm.xlu0 %225, %v71
  %v227 = vpop.permute.xlu0 %226
  %230 = vset.pattern.permute.xlu0 0
  %231 = vperm.xlu0 %230, %v72
  %v232 = vpop.permute.xlu0 %231
  %v235 = vlaneseq
  %v236 = vshrl.u32 %v235, 7
  %v237 = vsub.s32 0, %v236
  %v238 = vrot.slane %v73, %v237
  %v240 = vmul.f32 %v77, %v238
  %v241 = vmul.f32 %v82, %v238
  %v242 = vmul.f32 %v87, %v238
  %v243 = vmul.f32 %v92, %v238
  %v244 = vmul.f32 %v97, %v238
  %v245 = vmul.f32 %v102, %v238
  %v246 = vmul.f32 %v107, %v238
  %v247 = vmul.f32 %v112, %v238
  %v248 = vmul.f32 %v117, %v238
  %v249 = vmul.f32 %v122, %v238
  %v250 = vmul.f32 %v127, %v238
  %v251 = vmul.f32 %v132, %v238
  %v252 = vmul.f32 %v137, %v238
  %v253 = vmul.f32 %v142, %v238
  %v254 = vmul.f32 %v147, %v238
  %v255 = vmul.f32 %v152, %v238
  %v256 = vmul.f32 %v157, %v238
  %v257 = vmul.f32 %v162, %v238
  %v258 = vmul.f32 %v167, %v238
  %v259 = vmul.f32 %v172, %v238
  %v260 = vmul.f32 %v177, %v238
  %v261 = vmul.f32 %v182, %v238
  %v262 = vmul.f32 %v187, %v238
  %v263 = vmul.f32 %v192, %v238
  %v264 = vmul.f32 %v197, %v238
  %v265 = vmul.f32 %v202, %v238
  %v266 = vmul.f32 %v207, %v238
  %v267 = vmul.f32 %v212, %v238
  %v268 = vmul.f32 %v217, %v238
  %v269 = vmul.f32 %v222, %v238
  %v270 = vmul.f32 %v227, %v238
  %v271 = vmul.f32 %v232, %v238
  %v272 = vadd.f32 %v240, 0.0
  %v273 = vadd.f32 %v241, 0.0
  %v274 = vadd.f32 %v242, 0.0
  %v275 = vadd.f32 %v243, 0.0
  %v276 = vadd.f32 %v244, 0.0
  %v277 = vadd.f32 %v245, 0.0
  %v278 = vadd.f32 %v246, 0.0
  %v279 = vadd.f32 %v247, 0.0
  %v280 = vadd.f32 %v248, 0.0
  %v281 = vadd.f32 %v249, 0.0
  %v282 = vadd.f32 %v250, 0.0
  %v283 = vadd.f32 %v251, 0.0
  %v284 = vadd.f32 %v252, 0.0
  %v285 = vadd.f32 %v253, 0.0
  %v286 = vadd.f32 %v254, 0.0
  %v287 = vadd.f32 %v255, 0.0
  %v288 = vadd.f32 %v256, 0.0
  %v289 = vadd.f32 %v257, 0.0
  %v290 = vadd.f32 %v258, 0.0
  %v291 = vadd.f32 %v259, 0.0
  %v292 = vadd.f32 %v260, 0.0
  %v293 = vadd.f32 %v261, 0.0
  %v294 = vadd.f32 %v262, 0.0
  %v295 = vadd.f32 %v263, 0.0
  %v296 = vadd.f32 %v264, 0.0
  %v297 = vadd.f32 %v265, 0.0
  %v298 = vadd.f32 %v266, 0.0
  %v299 = vadd.f32 %v267, 0.0
  %v300 = vadd.f32 %v268, 0.0
  %v301 = vadd.f32 %v269, 0.0
  %v302 = vadd.f32 %v270, 0.0
  %v303 = vadd.f32 %v271, 0.0
  %v304 = vld [vmem:[%s0 + $0x1] sm:$0xff]
  %v305 = vld [vmem:[%s0 + $0x9] sm:$0xff]
  %v306 = vld [vmem:[%s0 + $0x11] sm:$0xff]
  %v307 = vld [vmem:[%s0 + $0x19] sm:$0xff]
  %v308 = vld [vmem:[%s0 + $0x29] sm:$0xff]
  %v309 = vld [vmem:[%s0 + $0x31] sm:$0xff]
  %v310 = vld [vmem:[%s0 + $0x39] sm:$0xff]
  %v311 = vld [vmem:[%s0 + $0x41] sm:$0xff]
  %v312 = vld [vmem:[%s0 + $0x51] sm:$0xff]
  %v313 = vld [vmem:[%s0 + $0x59] sm:$0xff]
  %v314 = vld [vmem:[%s0 + $0x61] sm:$0xff]
  %v315 = vld [vmem:[%s0 + $0x69] sm:$0xff]
  %v316 = vld [vmem:[%s0 + $0x79] sm:$0xff]
  %v317 = vld [vmem:[%s0 + $0x81] sm:$0xff]
  %v318 = vld [vmem:[%s0 + $0x89] sm:$0xff]
  %v319 = vld [vmem:[%s0 + $0x91] sm:$0xff]
  %v320 = vld [vmem:[%s0 + $0xa1] sm:$0xff]
  %v321 = vld [vmem:[%s0 + $0xa9] sm:$0xff]
  %v322 = vld [vmem:[%s0 + $0xb1] sm:$0xff]
  %v323 = vld [vmem:[%s0 + $0xb9] sm:$0xff]
  %v324 = vld [vmem:[%s0 + $0xc9] sm:$0xff]
  %v325 = vld [vmem:[%s0 + $0xd1] sm:$0xff]
  %v326 = vld [vmem:[%s0 + $0xd9] sm:$0xff]
  %v327 = vld [vmem:[%s0 + $0xe1] sm:$0xff]
  %v328 = vld [vmem:[%s0 + $0xf1] sm:$0xff]
  %v329 = vld [vmem:[%s0 + $0xf9] sm:$0xff]
  %v330 = vld [vmem:[%s0 + $0x101] sm:$0xff]
  %v331 = vld [vmem:[%s0 + $0x109] sm:$0xff]
  %v332 = vld [vmem:[%s0 + $0x119] sm:$0xff]
  %v333 = vld [vmem:[%s0 + $0x121] sm:$0xff]
  %v334 = vld [vmem:[%s0 + $0x129] sm:$0xff]
  %v335 = vld [vmem:[%s0 + $0x131] sm:$0xff]
  %s336 = scalar_lea.vmem %s1, 1
  %v337 = vld [vmem:[%s336] sm:$0x1]
  %339 = vset.pattern.permute.xlu0 0
  %340 = vperm.xlu0 %339, %v304
  %v341 = vpop.permute.xlu0 %340
  %344 = vset.pattern.permute.xlu0 0
  %345 = vperm.xlu0 %344, %v305
  %v346 = vpop.permute.xlu0 %345
  %349 = vset.pattern.permute.xlu0 0
  %350 = vperm.xlu0 %349, %v306
  %v351 = vpop.permute.xlu0 %350
  %354 = vset.pattern.permute.xlu0 0
  %355 = vperm.xlu0 %354, %v307
  %v356 = vpop.permute.xlu0 %355
  %359 = vset.pattern.permute.xlu0 0
  %360 = vperm.xlu0 %359, %v308
  %v361 = vpop.permute.xlu0 %360
  %364 = vset.pattern.permute.xlu0 0
  %365 = vperm.xlu0 %364, %v309
  %v366 = vpop.permute.xlu0 %365
  %369 = vset.pattern.permute.xlu0 0
  %370 = vperm.xlu0 %369, %v310
  %v371 = vpop.permute.xlu0 %370
  %374 = vset.pattern.permute.xlu0 0
  %375 = vperm.xlu0 %374, %v311
  %v376 = vpop.permute.xlu0 %375
  %379 = vset.pattern.permute.xlu0 0
  %380 = vperm.xlu0 %379, %v312
  %v381 = vpop.permute.xlu0 %380
  %384 = vset.pattern.permute.xlu0 0
  %385 = vperm.xlu0 %384, %v313
  %v386 = vpop.permute.xlu0 %385
  %389 = vset.pattern.permute.xlu0 0
  %390 = vperm.xlu0 %389, %v314
  %v391 = vpop.permute.xlu0 %390
  %394 = vset.pattern.permute.xlu0 0
  %395 = vperm.xlu0 %394, %v315
  %v396 = vpop.permute.xlu0 %395
  %399 = vset.pattern.permute.xlu0 0
  %400 = vperm.xlu0 %399, %v316
  %v401 = vpop.permute.xlu0 %400
  %404 = vset.pattern.permute.xlu0 0
  %405 = vperm.xlu0 %404, %v317
  %v406 = vpop.permute.xlu0 %405
  %409 = vset.pattern.permute.xlu0 0
  %410 = vperm.xlu0 %409, %v318
  %v411 = vpop.permute.xlu0 %410
  %414 = vset.pattern.permute.xlu0 0
  %415 = vperm.xlu0 %414, %v319
  %v416 = vpop.permute.xlu0 %415
  %419 = vset.pattern.permute.xlu0 0
  %420 = vperm.xlu0 %419, %v320
  %v421 = vpop.permute.xlu0 %420
  %424 = vset.pattern.permute.xlu0 0
  %425 = vperm.xlu0 %424, %v321
  %v426 = vpop.permute.xlu0 %425
  %429 = vset.pattern.permute.xlu0 0
  %430 = vperm.xlu0 %429, %v322
  %v431 = vpop.permute.xlu0 %430
  %434 = vset.pattern.permute.xlu0 0
  %435 = vperm.xlu0 %434, %v323
  %v436 = vpop.permute.xlu0 %435
  %439 = vset.pattern.permute.xlu0 0
  %440 = vperm.xlu0 %439, %v324
  %v441 = vpop.permute.xlu0 %440
  %444 = vset.pattern.permute.xlu0 0
  %445 = vperm.xlu0 %444, %v325
  %v446 = vpop.permute.xlu0 %445
  %449 = vset.pattern.permute.xlu0 0
  %450 = vperm.xlu0 %449, %v326
  %v451 = vpop.permute.xlu0 %450
  %454 = vset.pattern.permute.xlu0 0
  %455 = vperm.xlu0 %454, %v327
  %v456 = vpop.permute.xlu0 %455
  %459 = vset.pattern.permute.xlu0 0
  %460 = vperm.xlu0 %459, %v328
  %v461 = vpop.permute.xlu0 %460
  %464 = vset.pattern.permute.xlu0 0
  %465 = vperm.xlu0 %464, %v329
  %v466 = vpop.permute.xlu0 %465
  %469 = vset.pattern.permute.xlu0 0
  %470 = vperm.xlu0 %469, %v330
  %v471 = vpop.permute.xlu0 %470
  %474 = vset.pattern.permute.xlu0 0
  %475 = vperm.xlu0 %474, %v331
  %v476 = vpop.permute.xlu0 %475
  %479 = vset.pattern.permute.xlu0 0
  %480 = vperm.xlu0 %479, %v332
  %v481 = vpop.permute.xlu0 %480
  %484 = vset.pattern.permute.xlu0 0
  %485 = vperm.xlu0 %484, %v333
  %v486 = vpop.permute.xlu0 %485
  %489 = vset.pattern.permute.xlu0 0
  %490 = vperm.xlu0 %489, %v334
  %v491 = vpop.permute.xlu0 %490
  %494 = vset.pattern.permute.xlu0 0
  %495 = vperm.xlu0 %494, %v335
  %v496 = vpop.permute.xlu0 %495
  %v499 = vlaneseq
  %v500 = vshrl.u32 %v499, 7
  %v501 = vsub.s32 0, %v500
  %v502 = vrot.slane %v337, %v501
  %v504 = vmul.f32 %v341, %v502
  %v505 = vmul.f32 %v346, %v502
  %v506 = vmul.f32 %v351, %v502
  %v507 = vmul.f32 %v356, %v502
  %v508 = vmul.f32 %v361, %v502
  %v509 = vmul.f32 %v366, %v502
  %v510 = vmul.f32 %v371, %v502
  %v511 = vmul.f32 %v376, %v502
  %v512 = vmul.f32 %v381, %v502
  %v513 = vmul.f32 %v386, %v502
  %v514 = vmul.f32 %v391, %v502
  %v515 = vmul.f32 %v396, %v502
  %v516 = vmul.f32 %v401, %v502
  %v517 = vmul.f32 %v406, %v502
  %v518 = vmul.f32 %v411, %v502
  %v519 = vmul.f32 %v416, %v502
  %v520 = vmul.f32 %v421, %v502
  %v521 = vmul.f32 %v426, %v502
  %v522 = vmul.f32 %v431, %v502
  %v523 = vmul.f32 %v436, %v502
  %v524 = vmul.f32 %v441, %v502
  %v525 = vmul.f32 %v446, %v502
  %v526 = vmul.f32 %v451, %v502
  %v527 = vmul.f32 %v456, %v502
  %v528 = vmul.f32 %v461, %v502
  %v529 = vmul.f32 %v466, %v502
  %v530 = vmul.f32 %v471, %v502
  %v531 = vmul.f32 %v476, %v502
  %v532 = vmul.f32 %v481, %v502
  %v533 = vmul.f32 %v486, %v502
  %v534 = vmul.f32 %v491, %v502
  %v535 = vmul.f32 %v496, %v502
  %v536 = vadd.f32 %v272, %v504
  %v537 = vadd.f32 %v273, %v505
  %v538 = vadd.f32 %v274, %v506
  %v539 = vadd.f32 %v275, %v507
  %v540 = vadd.f32 %v276, %v508
  %v541 = vadd.f32 %v277, %v509
  %v542 = vadd.f32 %v278, %v510
  %v543 = vadd.f32 %v279, %v511
  %v544 = vadd.f32 %v280, %v512
  %v545 = vadd.f32 %v281, %v513
  %v546 = vadd.f32 %v282, %v514
  %v547 = vadd.f32 %v283, %v515
  %v548 = vadd.f32 %v284, %v516
  %v549 = vadd.f32 %v285, %v517
  %v550 = vadd.f32 %v286, %v518
  %v551 = vadd.f32 %v287, %v519
  %v552 = vadd.f32 %v288, %v520
  %v553 = vadd.f32 %v289, %v521
  %v554 = vadd.f32 %v290, %v522
  %v555 = vadd.f32 %v291, %v523
  %v556 = vadd.f32 %v292, %v524
  %v557 = vadd.f32 %v293, %v525
  %v558 = vadd.f32 %v294, %v526
  %v559 = vadd.f32 %v295, %v527
  %v560 = vadd.f32 %v296, %v528
  %v561 = vadd.f32 %v297, %v529
  %v562 = vadd.f32 %v298, %v530
  %v563 = vadd.f32 %v299, %v531
  %v564 = vadd.f32 %v300, %v532
  %v565 = vadd.f32 %v301, %v533
  %v566 = vadd.f32 %v302, %v534
  %v567 = vadd.f32 %v303, %v535
  %v568 = vld [vmem:[%s0 + $0x2] sm:$0xff]
  %v569 = vld [vmem:[%s0 + $0xa] sm:$0xff]
  %v570 = vld [vmem:[%s0 + $0x12] sm:$0xff]
  %v571 = vld [vmem:[%s0 + $0x1a] sm:$0xff]
  %v572 = vld [vmem:[%s0 + $0x2a] sm:$0xff]
  %v573 = vld [vmem:[%s0 + $0x32] sm:$0xff]
  %v574 = vld [vmem:[%s0 + $0x3a] sm:$0xff]
  %v575 = vld [vmem:[%s0 + $0x42] sm:$0xff]
  %v576 = vld [vmem:[%s0 + $0x52] sm:$0xff]
  %v577 = vld [vmem:[%s0 + $0x5a] sm:$0xff]
  %v578 = vld [vmem:[%s0 + $0x62] sm:$0xff]
  %v579 = vld [vmem:[%s0 + $0x6a] sm:$0xff]
  %v580 = vld [vmem:[%s0 + $0x7a] sm:$0xff]
  %v581 = vld [vmem:[%s0 + $0x82] sm:$0xff]
  %v582 = vld [vmem:[%s0 + $0x8a] sm:$0xff]
  %v583 = vld [vmem:[%s0 + $0x92] sm:$0xff]
  %v584 = vld [vmem:[%s0 + $0xa2] sm:$0xff]
  %v585 = vld [vmem:[%s0 + $0xaa] sm:$0xff]
  %v586 = vld [vmem:[%s0 + $0xb2] sm:$0xff]
  %v587 = vld [vmem:[%s0 + $0xba] sm:$0xff]
  %v588 = vld [vmem:[%s0 + $0xca] sm:$0xff]
  %v589 = vld [vmem:[%s0 + $0xd2] sm:$0xff]
  %v590 = vld [vmem:[%s0 + $0xda] sm:$0xff]
  %v591 = vld [vmem:[%s0 + $0xe2] sm:$0xff]
  %v592 = vld [vmem:[%s0 + $0xf2] sm:$0xff]
  %v593 = vld [vmem:[%s0 + $0xfa] sm:$0xff]
  %v594 = vld [vmem:[%s0 + $0x102] sm:$0xff]
  %v595 = vld [vmem:[%s0 + $0x10a] sm:$0xff]
  %v596 = vld [vmem:[%s0 + $0x11a] sm:$0xff]
  %v597 = vld [vmem:[%s0 + $0x122] sm:$0xff]
  %v598 = vld [vmem:[%s0 + $0x12a] sm:$0xff]
  %v599 = vld [vmem:[%s0 + $0x132] sm:$0xff]
  %s600 = scalar_lea.vmem %s1, 2
  %v601 = vld [vmem:[%s600] sm:$0x1]
  %603 = vset.pattern.permute.xlu0 0
  %604 = vperm.xlu0 %603, %v568
  %v605 = vpop.permute.xlu0 %604
  %608 = vset.pattern.permute.xlu0 0
  %609 = vperm.xlu0 %608, %v569
  %v610 = vpop.permute.xlu0 %609
  %613 = vset.pattern.permute.xlu0 0
  %614 = vperm.xlu0 %613, %v570
  %v615 = vpop.permute.xlu0 %614
  %618 = vset.pattern.permute.xlu0 0
  %619 = vperm.xlu0 %618, %v571
  %v620 = vpop.permute.xlu0 %619
  %623 = vset.pattern.permute.xlu0 0
  %624 = vperm.xlu0 %623, %v572
  %v625 = vpop.permute.xlu0 %624
  %628 = vset.pattern.permute.xlu0 0
  %629 = vperm.xlu0 %628, %v573
  %v630 = vpop.permute.xlu0 %629
  %633 = vset.pattern.permute.xlu0 0
  %634 = vperm.xlu0 %633, %v574
  %v635 = vpop.permute.xlu0 %634
  %638 = vset.pattern.permute.xlu0 0
  %639 = vperm.xlu0 %638, %v575
  %v640 = vpop.permute.xlu0 %639
  %643 = vset.pattern.permute.xlu0 0
  %644 = vperm.xlu0 %643, %v576
  %v645 = vpop.permute.xlu0 %644
  %648 = vset.pattern.permute.xlu0 0
  %649 = vperm.xlu0 %648, %v577
  %v650 = vpop.permute.xlu0 %649
  %653 = vset.pattern.permute.xlu0 0
  %654 = vperm.xlu0 %653, %v578
  %v655 = vpop.permute.xlu0 %654
  %658 = vset.pattern.permute.xlu0 0
  %659 = vperm.xlu0 %658, %v579
  %v660 = vpop.permute.xlu0 %659
  %663 = vset.pattern.permute.xlu0 0
  %664 = vperm.xlu0 %663, %v580
  %v665 = vpop.permute.xlu0 %664
  %668 = vset.pattern.permute.xlu0 0
  %669 = vperm.xlu0 %668, %v581
  %v670 = vpop.permute.xlu0 %669
  %673 = vset.pattern.permute.xlu0 0
  %674 = vperm.xlu0 %673, %v582
  %v675 = vpop.permute.xlu0 %674
  %678 = vset.pattern.permute.xlu0 0
  %679 = vperm.xlu0 %678, %v583
  %v680 = vpop.permute.xlu0 %679
  %683 = vset.pattern.permute.xlu0 0
  %684 = vperm.xlu0 %683, %v584
  %v685 = vpop.permute.xlu0 %684
  %688 = vset.pattern.permute.xlu0 0
  %689 = vperm.xlu0 %688, %v585
  %v690 = vpop.permute.xlu0 %689
  %693 = vset.pattern.permute.xlu0 0
  %694 = vperm.xlu0 %693, %v586
  %v695 = vpop.permute.xlu0 %694
  %698 = vset.pattern.permute.xlu0 0
  %699 = vperm.xlu0 %698, %v587
  %v700 = vpop.permute.xlu0 %699
  %703 = vset.pattern.permute.xlu0 0
  %704 = vperm.xlu0 %703, %v588
  %v705 = vpop.permute.xlu0 %704
  %708 = vset.pattern.permute.xlu0 0
  %709 = vperm.xlu0 %708, %v589
  %v710 = vpop.permute.xlu0 %709
  %713 = vset.pattern.permute.xlu0 0
  %714 = vperm.xlu0 %713, %v590
  %v715 = vpop.permute.xlu0 %714
  %718 = vset.pattern.permute.xlu0 0
  %719 = vperm.xlu0 %718, %v591
  %v720 = vpop.permute.xlu0 %719
  %723 = vset.pattern.permute.xlu0 0
  %724 = vperm.xlu0 %723, %v592
  %v725 = vpop.permute.xlu0 %724
  %728 = vset.pattern.permute.xlu0 0
  %729 = vperm.xlu0 %728, %v593
  %v730 = vpop.permute.xlu0 %729
  %733 = vset.pattern.permute.xlu0 0
  %734 = vperm.xlu0 %733, %v594
  %v735 = vpop.permute.xlu0 %734
  %738 = vset.pattern.permute.xlu0 0
  %739 = vperm.xlu0 %738, %v595
  %v740 = vpop.permute.xlu0 %739
  %743 = vset.pattern.permute.xlu0 0
  %744 = vperm.xlu0 %743, %v596
  %v745 = vpop.permute.xlu0 %744
  %748 = vset.pattern.permute.xlu0 0
  %749 = vperm.xlu0 %748, %v597
  %v750 = vpop.permute.xlu0 %749
  %753 = vset.pattern.permute.xlu0 0
  %754 = vperm.xlu0 %753, %v598
  %v755 = vpop.permute.xlu0 %754
  %758 = vset.pattern.permute.xlu0 0
  %759 = vperm.xlu0 %758, %v599
  %v760 = vpop.permute.xlu0 %759
  %v763 = vlaneseq
  %v764 = vshrl.u32 %v763, 7
  %v765 = vsub.s32 0, %v764
  %v766 = vrot.slane %v601, %v765
  %v768 = vmul.f32 %v605, %v766
  %v769 = vmul.f32 %v610, %v766
  %v770 = vmul.f32 %v615, %v766
  %v771 = vmul.f32 %v620, %v766
  %v772 = vmul.f32 %v625, %v766
  %v773 = vmul.f32 %v630, %v766
  %v774 = vmul.f32 %v635, %v766
  %v775 = vmul.f32 %v640, %v766
  %v776 = vmul.f32 %v645, %v766
  %v777 = vmul.f32 %v650, %v766
  %v778 = vmul.f32 %v655, %v766
  %v779 = vmul.f32 %v660, %v766
  %v780 = vmul.f32 %v665, %v766
  %v781 = vmul.f32 %v670, %v766
  %v782 = vmul.f32 %v675, %v766
  %v783 = vmul.f32 %v680, %v766
  %v784 = vmul.f32 %v685, %v766
  %v785 = vmul.f32 %v690, %v766
  %v786 = vmul.f32 %v695, %v766
  %v787 = vmul.f32 %v700, %v766
  %v788 = vmul.f32 %v705, %v766
  %v789 = vmul.f32 %v710, %v766
  %v790 = vmul.f32 %v715, %v766
  %v791 = vmul.f32 %v720, %v766
  %v792 = vmul.f32 %v725, %v766
  %v793 = vmul.f32 %v730, %v766
  %v794 = vmul.f32 %v735, %v766
  %v795 = vmul.f32 %v740, %v766
  %v796 = vmul.f32 %v745, %v766
  %v797 = vmul.f32 %v750, %v766
  %v798 = vmul.f32 %v755, %v766
  %v799 = vmul.f32 %v760, %v766
  %v800 = vadd.f32 %v536, %v768
  %v801 = vadd.f32 %v537, %v769
  %v802 = vadd.f32 %v538, %v770
  %v803 = vadd.f32 %v539, %v771
  %v804 = vadd.f32 %v540, %v772
  %v805 = vadd.f32 %v541, %v773
  %v806 = vadd.f32 %v542, %v774
  %v807 = vadd.f32 %v543, %v775
  %v808 = vadd.f32 %v544, %v776
  %v809 = vadd.f32 %v545, %v777
  %v810 = vadd.f32 %v546, %v778
  %v811 = vadd.f32 %v547, %v779
  %v812 = vadd.f32 %v548, %v780
  %v813 = vadd.f32 %v549, %v781
  %v814 = vadd.f32 %v550, %v782
  %v815 = vadd.f32 %v551, %v783
  %v816 = vadd.f32 %v552, %v784
  %v817 = vadd.f32 %v553, %v785
  %v818 = vadd.f32 %v554, %v786
  %v819 = vadd.f32 %v555, %v787
  %v820 = vadd.f32 %v556, %v788
  %v821 = vadd.f32 %v557, %v789
  %v822 = vadd.f32 %v558, %v790
  %v823 = vadd.f32 %v559, %v791
  %v824 = vadd.f32 %v560, %v792
  %v825 = vadd.f32 %v561, %v793
  %v826 = vadd.f32 %v562, %v794
  %v827 = vadd.f32 %v563, %v795
  %v828 = vadd.f32 %v564, %v796
  %v829 = vadd.f32 %v565, %v797
  %v830 = vadd.f32 %v566, %v798
  %v831 = vadd.f32 %v567, %v799
  %v832 = vld [vmem:[%s0 + $0x3] sm:$0xff]
  %v833 = vld [vmem:[%s0 + $0xb] sm:$0xff]
  %v834 = vld [vmem:[%s0 + $0x13] sm:$0xff]
  %v835 = vld [vmem:[%s0 + $0x1b] sm:$0xff]
  %v836 = vld [vmem:[%s0 + $0x2b] sm:$0xff]
  %v837 = vld [vmem:[%s0 + $0x33] sm:$0xff]
  %v838 = vld [vmem:[%s0 + $0x3b] sm:$0xff]
  %v839 = vld [vmem:[%s0 + $0x43] sm:$0xff]
  %v840 = vld [vmem:[%s0 + $0x53] sm:$0xff]
  %v841 = vld [vmem:[%s0 + $0x5b] sm:$0xff]
  %v842 = vld [vmem:[%s0 + $0x63] sm:$0xff]
  %v843 = vld [vmem:[%s0 + $0x6b] sm:$0xff]
  %v844 = vld [vmem:[%s0 + $0x7b] sm:$0xff]
  %v845 = vld [vmem:[%s0 + $0x83] sm:$0xff]
  %v846 = vld [vmem:[%s0 + $0x8b] sm:$0xff]
  %v847 = vld [vmem:[%s0 + $0x93] sm:$0xff]
  %v848 = vld [vmem:[%s0 + $0xa3] sm:$0xff]
  %v849 = vld [vmem:[%s0 + $0xab] sm:$0xff]
  %v850 = vld [vmem:[%s0 + $0xb3] sm:$0xff]
  %v851 = vld [vmem:[%s0 + $0xbb] sm:$0xff]
  %v852 = vld [vmem:[%s0 + $0xcb] sm:$0xff]
  %v853 = vld [vmem:[%s0 + $0xd3] sm:$0xff]
  %v854 = vld [vmem:[%s0 + $0xdb] sm:$0xff]
  %v855 = vld [vmem:[%s0 + $0xe3] sm:$0xff]
  %v856 = vld [vmem:[%s0 + $0xf3] sm:$0xff]
  %v857 = vld [vmem:[%s0 + $0xfb] sm:$0xff]
  %v858 = vld [vmem:[%s0 + $0x103] sm:$0xff]
  %v859 = vld [vmem:[%s0 + $0x10b] sm:$0xff]
  %v860 = vld [vmem:[%s0 + $0x11b] sm:$0xff]
  %v861 = vld [vmem:[%s0 + $0x123] sm:$0xff]
  %v862 = vld [vmem:[%s0 + $0x12b] sm:$0xff]
  %v863 = vld [vmem:[%s0 + $0x133] sm:$0xff]
  %s864 = scalar_lea.vmem %s1, 3
  %v865 = vld [vmem:[%s864] sm:$0x1]
  %867 = vset.pattern.permute.xlu0 0
  %868 = vperm.xlu0 %867, %v832
  %v869 = vpop.permute.xlu0 %868
  %872 = vset.pattern.permute.xlu0 0
  %873 = vperm.xlu0 %872, %v833
  %v874 = vpop.permute.xlu0 %873
  %877 = vset.pattern.permute.xlu0 0
  %878 = vperm.xlu0 %877, %v834
  %v879 = vpop.permute.xlu0 %878
  %882 = vset.pattern.permute.xlu0 0
  %883 = vperm.xlu0 %882, %v835
  %v884 = vpop.permute.xlu0 %883
  %887 = vset.pattern.permute.xlu0 0
  %888 = vperm.xlu0 %887, %v836
  %v889 = vpop.permute.xlu0 %888
  %892 = vset.pattern.permute.xlu0 0
  %893 = vperm.xlu0 %892, %v837
  %v894 = vpop.permute.xlu0 %893
  %897 = vset.pattern.permute.xlu0 0
  %898 = vperm.xlu0 %897, %v838
  %v899 = vpop.permute.xlu0 %898
  %902 = vset.pattern.permute.xlu0 0
  %903 = vperm.xlu0 %902, %v839
  %v904 = vpop.permute.xlu0 %903
  %907 = vset.pattern.permute.xlu0 0
  %908 = vperm.xlu0 %907, %v840
  %v909 = vpop.permute.xlu0 %908
  %912 = vset.pattern.permute.xlu0 0
  %913 = vperm.xlu0 %912, %v841
  %v914 = vpop.permute.xlu0 %913
  %917 = vset.pattern.permute.xlu0 0
  %918 = vperm.xlu0 %917, %v842
  %v919 = vpop.permute.xlu0 %918
  %922 = vset.pattern.permute.xlu0 0
  %923 = vperm.xlu0 %922, %v843
  %v924 = vpop.permute.xlu0 %923
  %927 = vset.pattern.permute.xlu0 0
  %928 = vperm.xlu0 %927, %v844
  %v929 = vpop.permute.xlu0 %928
  %932 = vset.pattern.permute.xlu0 0
  %933 = vperm.xlu0 %932, %v845
  %v934 = vpop.permute.xlu0 %933
  %937 = vset.pattern.permute.xlu0 0
  %938 = vperm.xlu0 %937, %v846
  %v939 = vpop.permute.xlu0 %938
  %942 = vset.pattern.permute.xlu0 0
  %943 = vperm.xlu0 %942, %v847
  %v944 = vpop.permute.xlu0 %943
  %947 = vset.pattern.permute.xlu0 0
  %948 = vperm.xlu0 %947, %v848
  %v949 = vpop.permute.xlu0 %948
  %952 = vset.pattern.permute.xlu0 0
  %953 = vperm.xlu0 %952, %v849
  %v954 = vpop.permute.xlu0 %953
  %957 = vset.pattern.permute.xlu0 0
  %958 = vperm.xlu0 %957, %v850
  %v959 = vpop.permute.xlu0 %958
  %962 = vset.pattern.permute.xlu0 0
  %963 = vperm.xlu0 %962, %v851
  %v964 = vpop.permute.xlu0 %963
  %967 = vset.pattern.permute.xlu0 0
  %968 = vperm.xlu0 %967, %v852
  %v969 = vpop.permute.xlu0 %968
  %972 = vset.pattern.permute.xlu0 0
  %973 = vperm.xlu0 %972, %v853
  %v974 = vpop.permute.xlu0 %973
  %977 = vset.pattern.permute.xlu0 0
  %978 = vperm.xlu0 %977, %v854
  %v979 = vpop.permute.xlu0 %978
  %982 = vset.pattern.permute.xlu0 0
  %983 = vperm.xlu0 %982, %v855
  %v984 = vpop.permute.xlu0 %983
  %987 = vset.pattern.permute.xlu0 0
  %988 = vperm.xlu0 %987, %v856
  %v989 = vpop.permute.xlu0 %988
  %992 = vset.pattern.permute.xlu0 0
  %993 = vperm.xlu0 %992, %v857
  %v994 = vpop.permute.xlu0 %993
  %997 = vset.pattern.permute.xlu0 0
  %998 = vperm.xlu0 %997, %v858
  %v999 = vpop.permute.xlu0 %998
  %1002 = vset.pattern.permute.xlu0 0
  %1003 = vperm.xlu0 %1002, %v859
  %v1004 = vpop.permute.xlu0 %1003
  %1007 = vset.pattern.permute.xlu0 0
  %1008 = vperm.xlu0 %1007, %v860
  %v1009 = vpop.permute.xlu0 %1008
  %1012 = vset.pattern.permute.xlu0 0
  %1013 = vperm.xlu0 %1012, %v861
  %v1014 = vpop.permute.xlu0 %1013
  %1017 = vset.pattern.permute.xlu0 0
  %1018 = vperm.xlu0 %1017, %v862
  %v1019 = vpop.permute.xlu0 %1018
  %1022 = vset.pattern.permute.xlu0 0
  %1023 = vperm.xlu0 %1022, %v863
  %v1024 = vpop.permute.xlu0 %1023
  %v1027 = vlaneseq
  %v1028 = vshrl.u32 %v1027, 7
  %v1029 = vsub.s32 0, %v1028
  %v1030 = vrot.slane %v865, %v1029
  %v1032 = vmul.f32 %v869, %v1030
  %v1033 = vmul.f32 %v874, %v1030
  %v1034 = vmul.f32 %v879, %v1030
  %v1035 = vmul.f32 %v884, %v1030
  %v1036 = vmul.f32 %v889, %v1030
  %v1037 = vmul.f32 %v894, %v1030
  %v1038 = vmul.f32 %v899, %v1030
  %v1039 = vmul.f32 %v904, %v1030
  %v1040 = vmul.f32 %v909, %v1030
  %v1041 = vmul.f32 %v914, %v1030
  %v1042 = vmul.f32 %v919, %v1030
  %v1043 = vmul.f32 %v924, %v1030
  %v1044 = vmul.f32 %v929, %v1030
  %v1045 = vmul.f32 %v934, %v1030
  %v1046 = vmul.f32 %v939, %v1030
  %v1047 = vmul.f32 %v944, %v1030
  %v1048 = vmul.f32 %v949, %v1030
  %v1049 = vmul.f32 %v954, %v1030
  %v1050 = vmul.f32 %v959, %v1030
  %v1051 = vmul.f32 %v964, %v1030
  %v1052 = vmul.f32 %v969, %v1030
  %v1053 = vmul.f32 %v974, %v1030
  %v1054 = vmul.f32 %v979, %v1030
  %v1055 = vmul.f32 %v984, %v1030
  %v1056 = vmul.f32 %v989, %v1030
  %v1057 = vmul.f32 %v994, %v1030
  %v1058 = vmul.f32 %v999, %v1030
  %v1059 = vmul.f32 %v1004, %v1030
  %v1060 = vmul.f32 %v1009, %v1030
  %v1061 = vmul.f32 %v1014, %v1030
  %v1062 = vmul.f32 %v1019, %v1030
  %v1063 = vmul.f32 %v1024, %v1030
  %v1064 = vadd.f32 %v800, %v1032
  %v1065 = vadd.f32 %v801, %v1033
  %v1066 = vadd.f32 %v802, %v1034
  %v1067 = vadd.f32 %v803, %v1035
  %v1068 = vadd.f32 %v804, %v1036
  %v1069 = vadd.f32 %v805, %v1037
  %v1070 = vadd.f32 %v806, %v1038
  %v1071 = vadd.f32 %v807, %v1039
  %v1072 = vadd.f32 %v808, %v1040
  %v1073 = vadd.f32 %v809, %v1041
  %v1074 = vadd.f32 %v810, %v1042
  %v1075 = vadd.f32 %v811, %v1043
  %v1076 = vadd.f32 %v812, %v1044
  %v1077 = vadd.f32 %v813, %v1045
  %v1078 = vadd.f32 %v814, %v1046
  %v1079 = vadd.f32 %v815, %v1047
  %v1080 = vadd.f32 %v816, %v1048
  %v1081 = vadd.f32 %v817, %v1049
  %v1082 = vadd.f32 %v818, %v1050
  %v1083 = vadd.f32 %v819, %v1051
  %v1084 = vadd.f32 %v820, %v1052
  %v1085 = vadd.f32 %v821, %v1053
  %v1086 = vadd.f32 %v822, %v1054
  %v1087 = vadd.f32 %v823, %v1055
  %v1088 = vadd.f32 %v824, %v1056
  %v1089 = vadd.f32 %v825, %v1057
  %v1090 = vadd.f32 %v826, %v1058
  %v1091 = vadd.f32 %v827, %v1059
  %v1092 = vadd.f32 %v828, %v1060
  %v1093 = vadd.f32 %v829, %v1061
  %v1094 = vadd.f32 %v830, %v1062
  %v1095 = vadd.f32 %v831, %v1063
  %v1096 = vld [vmem:[%s0 + $0x4] sm:$0xff]
  %v1097 = vld [vmem:[%s0 + $0xc] sm:$0xff]
  %v1098 = vld [vmem:[%s0 + $0x14] sm:$0xff]
  %v1099 = vld [vmem:[%s0 + $0x1c] sm:$0xff]
  %v1100 = vld [vmem:[%s0 + $0x2c] sm:$0xff]
  %v1101 = vld [vmem:[%s0 + $0x34] sm:$0xff]
  %v1102 = vld [vmem:[%s0 + $0x3c] sm:$0xff]
  %v1103 = vld [vmem:[%s0 + $0x44] sm:$0xff]
  %v1104 = vld [vmem:[%s0 + $0x54] sm:$0xff]
  %v1105 = vld [vmem:[%s0 + $0x5c] sm:$0xff]
  %v1106 = vld [vmem:[%s0 + $0x64] sm:$0xff]
  %v1107 = vld [vmem:[%s0 + $0x6c] sm:$0xff]
  %v1108 = vld [vmem:[%s0 + $0x7c] sm:$0xff]
  %v1109 = vld [vmem:[%s0 + $0x84] sm:$0xff]
  %v1110 = vld [vmem:[%s0 + $0x8c] sm:$0xff]
  %v1111 = vld [vmem:[%s0 + $0x94] sm:$0xff]
  %v1112 = vld [vmem:[%s0 + $0xa4] sm:$0xff]
  %v1113 = vld [vmem:[%s0 + $0xac] sm:$0xff]
  %v1114 = vld [vmem:[%s0 + $0xb4] sm:$0xff]
  %v1115 = vld [vmem:[%s0 + $0xbc] sm:$0xff]
  %v1116 = vld [vmem:[%s0 + $0xcc] sm:$0xff]
  %v1117 = vld [vmem:[%s0 + $0xd4] sm:$0xff]
  %v1118 = vld [vmem:[%s0 + $0xdc] sm:$0xff]
  %v1119 = vld [vmem:[%s0 + $0xe4] sm:$0xff]
  %v1120 = vld [vmem:[%s0 + $0xf4] sm:$0xff]
  %v1121 = vld [vmem:[%s0 + $0xfc] sm:$0xff]
  %v1122 = vld [vmem:[%s0 + $0x104] sm:$0xff]
  %v1123 = vld [vmem:[%s0 + $0x10c] sm:$0xff]
  %v1124 = vld [vmem:[%s0 + $0x11c] sm:$0xff]
  %v1125 = vld [vmem:[%s0 + $0x124] sm:$0xff]
  %v1126 = vld [vmem:[%s0 + $0x12c] sm:$0xff]
  %v1127 = vld [vmem:[%s0 + $0x134] sm:$0xff]
  %s1128 = scalar_lea.vmem %s1, 4
  %v1129 = vld [vmem:[%s1128] sm:$0x1]
  %1131 = vset.pattern.permute.xlu0 0
  %1132 = vperm.xlu0 %1131, %v1096
  %v1133 = vpop.permute.xlu0 %1132
  %1136 = vset.pattern.permute.xlu0 0
  %1137 = vperm.xlu0 %1136, %v1097
  %v1138 = vpop.permute.xlu0 %1137
  %1141 = vset.pattern.permute.xlu0 0
  %1142 = vperm.xlu0 %1141, %v1098
  %v1143 = vpop.permute.xlu0 %1142
  %1146 = vset.pattern.permute.xlu0 0
  %1147 = vperm.xlu0 %1146, %v1099
  %v1148 = vpop.permute.xlu0 %1147
  %1151 = vset.pattern.permute.xlu0 0
  %1152 = vperm.xlu0 %1151, %v1100
  %v1153 = vpop.permute.xlu0 %1152
  %1156 = vset.pattern.permute.xlu0 0
  %1157 = vperm.xlu0 %1156, %v1101
  %v1158 = vpop.permute.xlu0 %1157
  %1161 = vset.pattern.permute.xlu0 0
  %1162 = vperm.xlu0 %1161, %v1102
  %v1163 = vpop.permute.xlu0 %1162
  %1166 = vset.pattern.permute.xlu0 0
  %1167 = vperm.xlu0 %1166, %v1103
  %v1168 = vpop.permute.xlu0 %1167
  %1171 = vset.pattern.permute.xlu0 0
  %1172 = vperm.xlu0 %1171, %v1104
  %v1173 = vpop.permute.xlu0 %1172
  %1176 = vset.pattern.permute.xlu0 0
  %1177 = vperm.xlu0 %1176, %v1105
  %v1178 = vpop.permute.xlu0 %1177
  %1181 = vset.pattern.permute.xlu0 0
  %1182 = vperm.xlu0 %1181, %v1106
  %v1183 = vpop.permute.xlu0 %1182
  %1186 = vset.pattern.permute.xlu0 0
  %1187 = vperm.xlu0 %1186, %v1107
  %v1188 = vpop.permute.xlu0 %1187
  %1191 = vset.pattern.permute.xlu0 0
  %1192 = vperm.xlu0 %1191, %v1108
  %v1193 = vpop.permute.xlu0 %1192
  %1196 = vset.pattern.permute.xlu0 0
  %1197 = vperm.xlu0 %1196, %v1109
  %v1198 = vpop.permute.xlu0 %1197
  %1201 = vset.pattern.permute.xlu0 0
  %1202 = vperm.xlu0 %1201, %v1110
  %v1203 = vpop.permute.xlu0 %1202
  %1206 = vset.pattern.permute.xlu0 0
  %1207 = vperm.xlu0 %1206, %v1111
  %v1208 = vpop.permute.xlu0 %1207
  %1211 = vset.pattern.permute.xlu0 0
  %1212 = vperm.xlu0 %1211, %v1112
  %v1213 = vpop.permute.xlu0 %1212
  %1216 = vset.pattern.permute.xlu0 0
  %1217 = vperm.xlu0 %1216, %v1113
  %v1218 = vpop.permute.xlu0 %1217
  %1221 = vset.pattern.permute.xlu0 0
  %1222 = vperm.xlu0 %1221, %v1114
  %v1223 = vpop.permute.xlu0 %1222
  %1226 = vset.pattern.permute.xlu0 0
  %1227 = vperm.xlu0 %1226, %v1115
  %v1228 = vpop.permute.xlu0 %1227
  %1231 = vset.pattern.permute.xlu0 0
  %1232 = vperm.xlu0 %1231, %v1116
  %v1233 = vpop.permute.xlu0 %1232
  %1236 = vset.pattern.permute.xlu0 0
  %1237 = vperm.xlu0 %1236, %v1117
  %v1238 = vpop.permute.xlu0 %1237
  %1241 = vset.pattern.permute.xlu0 0
  %1242 = vperm.xlu0 %1241, %v1118
  %v1243 = vpop.permute.xlu0 %1242
  %1246 = vset.pattern.permute.xlu0 0
  %1247 = vperm.xlu0 %1246, %v1119
  %v1248 = vpop.permute.xlu0 %1247
  %1251 = vset.pattern.permute.xlu0 0
  %1252 = vperm.xlu0 %1251, %v1120
  %v1253 = vpop.permute.xlu0 %1252
  %1256 = vset.pattern.permute.xlu0 0
  %1257 = vperm.xlu0 %1256, %v1121
  %v1258 = vpop.permute.xlu0 %1257
  %1261 = vset.pattern.permute.xlu0 0
  %1262 = vperm.xlu0 %1261, %v1122
  %v1263 = vpop.permute.xlu0 %1262
  %1266 = vset.pattern.permute.xlu0 0
  %1267 = vperm.xlu0 %1266, %v1123
  %v1268 = vpop.permute.xlu0 %1267
  %1271 = vset.pattern.permute.xlu0 0
  %1272 = vperm.xlu0 %1271, %v1124
  %v1273 = vpop.permute.xlu0 %1272
  %1276 = vset.pattern.permute.xlu0 0
  %1277 = vperm.xlu0 %1276, %v1125
  %v1278 = vpop.permute.xlu0 %1277
  %1281 = vset.pattern.permute.xlu0 0
  %1282 = vperm.xlu0 %1281, %v1126
  %v1283 = vpop.permute.xlu0 %1282
  %1286 = vset.pattern.permute.xlu0 0
  %1287 = vperm.xlu0 %1286, %v1127
  %v1288 = vpop.permute.xlu0 %1287
  %v1291 = vlaneseq
  %v1292 = vshrl.u32 %v1291, 7
  %v1293 = vsub.s32 0, %v1292
  %v1294 = vrot.slane %v1129, %v1293
  %v1296 = vmul.f32 %v1133, %v1294
  %v1297 = vmul.f32 %v1138, %v1294
  %v1298 = vmul.f32 %v1143, %v1294
  %v1299 = vmul.f32 %v1148, %v1294
  %v1300 = vmul.f32 %v1153, %v1294
  %v1301 = vmul.f32 %v1158, %v1294
  %v1302 = vmul.f32 %v1163, %v1294
  %v1303 = vmul.f32 %v1168, %v1294
  %v1304 = vmul.f32 %v1173, %v1294
  %v1305 = vmul.f32 %v1178, %v1294
  %v1306 = vmul.f32 %v1183, %v1294
  %v1307 = vmul.f32 %v1188, %v1294
  %v1308 = vmul.f32 %v1193, %v1294
  %v1309 = vmul.f32 %v1198, %v1294
  %v1310 = vmul.f32 %v1203, %v1294
  %v1311 = vmul.f32 %v1208, %v1294
  %v1312 = vmul.f32 %v1213, %v1294
  %v1313 = vmul.f32 %v1218, %v1294
  %v1314 = vmul.f32 %v1223, %v1294
  %v1315 = vmul.f32 %v1228, %v1294
  %v1316 = vmul.f32 %v1233, %v1294
  %v1317 = vmul.f32 %v1238, %v1294
  %v1318 = vmul.f32 %v1243, %v1294
  %v1319 = vmul.f32 %v1248, %v1294
  %v1320 = vmul.f32 %v1253, %v1294
  %v1321 = vmul.f32 %v1258, %v1294
  %v1322 = vmul.f32 %v1263, %v1294
  %v1323 = vmul.f32 %v1268, %v1294
  %v1324 = vmul.f32 %v1273, %v1294
  %v1325 = vmul.f32 %v1278, %v1294
  %v1326 = vmul.f32 %v1283, %v1294
  %v1327 = vmul.f32 %v1288, %v1294
  %v1328 = vadd.f32 %v1064, %v1296
  %v1329 = vadd.f32 %v1065, %v1297
  %v1330 = vadd.f32 %v1066, %v1298
  %v1331 = vadd.f32 %v1067, %v1299
  %v1332 = vadd.f32 %v1068, %v1300
  %v1333 = vadd.f32 %v1069, %v1301
  %v1334 = vadd.f32 %v1070, %v1302
  %v1335 = vadd.f32 %v1071, %v1303
  %v1336 = vadd.f32 %v1072, %v1304
  %v1337 = vadd.f32 %v1073, %v1305
  %v1338 = vadd.f32 %v1074, %v1306
  %v1339 = vadd.f32 %v1075, %v1307
  %v1340 = vadd.f32 %v1076, %v1308
  %v1341 = vadd.f32 %v1077, %v1309
  %v1342 = vadd.f32 %v1078, %v1310
  %v1343 = vadd.f32 %v1079, %v1311
  %v1344 = vadd.f32 %v1080, %v1312
  %v1345 = vadd.f32 %v1081, %v1313
  %v1346 = vadd.f32 %v1082, %v1314
  %v1347 = vadd.f32 %v1083, %v1315
  %v1348 = vadd.f32 %v1084, %v1316
  %v1349 = vadd.f32 %v1085, %v1317
  %v1350 = vadd.f32 %v1086, %v1318
  %v1351 = vadd.f32 %v1087, %v1319
  %v1352 = vadd.f32 %v1088, %v1320
  %v1353 = vadd.f32 %v1089, %v1321
  %v1354 = vadd.f32 %v1090, %v1322
  %v1355 = vadd.f32 %v1091, %v1323
  %v1356 = vadd.f32 %v1092, %v1324
  %v1357 = vadd.f32 %v1093, %v1325
  %v1358 = vadd.f32 %v1094, %v1326
  %v1359 = vadd.f32 %v1095, %v1327
  %v1360 = vld [vmem:[%s0 + $0x5] sm:$0xff]
  %v1361 = vld [vmem:[%s0 + $0xd] sm:$0xff]
  %v1362 = vld [vmem:[%s0 + $0x15] sm:$0xff]
  %v1363 = vld [vmem:[%s0 + $0x1d] sm:$0xff]
  %v1364 = vld [vmem:[%s0 + $0x2d] sm:$0xff]
  %v1365 = vld [vmem:[%s0 + $0x35] sm:$0xff]
  %v1366 = vld [vmem:[%s0 + $0x3d] sm:$0xff]
  %v1367 = vld [vmem:[%s0 + $0x45] sm:$0xff]
  %v1368 = vld [vmem:[%s0 + $0x55] sm:$0xff]
  %v1369 = vld [vmem:[%s0 + $0x5d] sm:$0xff]
  %v1370 = vld [vmem:[%s0 + $0x65] sm:$0xff]
  %v1371 = vld [vmem:[%s0 + $0x6d] sm:$0xff]
  %v1372 = vld [vmem:[%s0 + $0x7d] sm:$0xff]
  %v1373 = vld [vmem:[%s0 + $0x85] sm:$0xff]
  %v1374 = vld [vmem:[%s0 + $0x8d] sm:$0xff]
  %v1375 = vld [vmem:[%s0 + $0x95] sm:$0xff]
  %v1376 = vld [vmem:[%s0 + $0xa5] sm:$0xff]
  %v1377 = vld [vmem:[%s0 + $0xad] sm:$0xff]
  %v1378 = vld [vmem:[%s0 + $0xb5] sm:$0xff]
  %v1379 = vld [vmem:[%s0 + $0xbd] sm:$0xff]
  %v1380 = vld [vmem:[%s0 + $0xcd] sm:$0xff]
  %v1381 = vld [vmem:[%s0 + $0xd5] sm:$0xff]
  %v1382 = vld [vmem:[%s0 + $0xdd] sm:$0xff]
  %v1383 = vld [vmem:[%s0 + $0xe5] sm:$0xff]
  %v1384 = vld [vmem:[%s0 + $0xf5] sm:$0xff]
  %v1385 = vld [vmem:[%s0 + $0xfd] sm:$0xff]
  %v1386 = vld [vmem:[%s0 + $0x105] sm:$0xff]
  %v1387 = vld [vmem:[%s0 + $0x10d] sm:$0xff]
  %v1388 = vld [vmem:[%s0 + $0x11d] sm:$0xff]
  %v1389 = vld [vmem:[%s0 + $0x125] sm:$0xff]
  %v1390 = vld [vmem:[%s0 + $0x12d] sm:$0xff]
  %v1391 = vld [vmem:[%s0 + $0x135] sm:$0xff]
  %s1392 = scalar_lea.vmem %s1, 5
  %v1393 = vld [vmem:[%s1392] sm:$0x1]
  %1395 = vset.pattern.permute.xlu0 0
  %1396 = vperm.xlu0 %1395, %v1360
  %v1397 = vpop.permute.xlu0 %1396
  %1400 = vset.pattern.permute.xlu0 0
  %1401 = vperm.xlu0 %1400, %v1361
  %v1402 = vpop.permute.xlu0 %1401
  %1405 = vset.pattern.permute.xlu0 0
  %1406 = vperm.xlu0 %1405, %v1362
  %v1407 = vpop.permute.xlu0 %1406
  %1410 = vset.pattern.permute.xlu0 0
  %1411 = vperm.xlu0 %1410, %v1363
  %v1412 = vpop.permute.xlu0 %1411
  %1415 = vset.pattern.permute.xlu0 0
  %1416 = vperm.xlu0 %1415, %v1364
  %v1417 = vpop.permute.xlu0 %1416
  %1420 = vset.pattern.permute.xlu0 0
  %1421 = vperm.xlu0 %1420, %v1365
  %v1422 = vpop.permute.xlu0 %1421
  %1425 = vset.pattern.permute.xlu0 0
  %1426 = vperm.xlu0 %1425, %v1366
  %v1427 = vpop.permute.xlu0 %1426
  %1430 = vset.pattern.permute.xlu0 0
  %1431 = vperm.xlu0 %1430, %v1367
  %v1432 = vpop.permute.xlu0 %1431
  %1435 = vset.pattern.permute.xlu0 0
  %1436 = vperm.xlu0 %1435, %v1368
  %v1437 = vpop.permute.xlu0 %1436
  %1440 = vset.pattern.permute.xlu0 0
  %1441 = vperm.xlu0 %1440, %v1369
  %v1442 = vpop.permute.xlu0 %1441
  %1445 = vset.pattern.permute.xlu0 0
  %1446 = vperm.xlu0 %1445, %v1370
  %v1447 = vpop.permute.xlu0 %1446
  %1450 = vset.pattern.permute.xlu0 0
  %1451 = vperm.xlu0 %1450, %v1371
  %v1452 = vpop.permute.xlu0 %1451
  %1455 = vset.pattern.permute.xlu0 0
  %1456 = vperm.xlu0 %1455, %v1372
  %v1457 = vpop.permute.xlu0 %1456
  %1460 = vset.pattern.permute.xlu0 0
  %1461 = vperm.xlu0 %1460, %v1373
  %v1462 = vpop.permute.xlu0 %1461
  %1465 = vset.pattern.permute.xlu0 0
  %1466 = vperm.xlu0 %1465, %v1374
  %v1467 = vpop.permute.xlu0 %1466
  %1470 = vset.pattern.permute.xlu0 0
  %1471 = vperm.xlu0 %1470, %v1375
  %v1472 = vpop.permute.xlu0 %1471
  %1475 = vset.pattern.permute.xlu0 0
  %1476 = vperm.xlu0 %1475, %v1376
  %v1477 = vpop.permute.xlu0 %1476
  %1480 = vset.pattern.permute.xlu0 0
  %1481 = vperm.xlu0 %1480, %v1377
  %v1482 = vpop.permute.xlu0 %1481
  %1485 = vset.pattern.permute.xlu0 0
  %1486 = vperm.xlu0 %1485, %v1378
  %v1487 = vpop.permute.xlu0 %1486
  %1490 = vset.pattern.permute.xlu0 0
  %1491 = vperm.xlu0 %1490, %v1379
  %v1492 = vpop.permute.xlu0 %1491
  %1495 = vset.pattern.permute.xlu0 0
  %1496 = vperm.xlu0 %1495, %v1380
  %v1497 = vpop.permute.xlu0 %1496
  %1500 = vset.pattern.permute.xlu0 0
  %1501 = vperm.xlu0 %1500, %v1381
  %v1502 = vpop.permute.xlu0 %1501
  %1505 = vset.pattern.permute.xlu0 0
  %1506 = vperm.xlu0 %1505, %v1382
  %v1507 = vpop.permute.xlu0 %1506
  %1510 = vset.pattern.permute.xlu0 0
  %1511 = vperm.xlu0 %1510, %v1383
  %v1512 = vpop.permute.xlu0 %1511
  %1515 = vset.pattern.permute.xlu0 0
  %1516 = vperm.xlu0 %1515, %v1384
  %v1517 = vpop.permute.xlu0 %1516
  %1520 = vset.pattern.permute.xlu0 0
  %1521 = vperm.xlu0 %1520, %v1385
  %v1522 = vpop.permute.xlu0 %1521
  %1525 = vset.pattern.permute.xlu0 0
  %1526 = vperm.xlu0 %1525, %v1386
  %v1527 = vpop.permute.xlu0 %1526
  %1530 = vset.pattern.permute.xlu0 0
  %1531 = vperm.xlu0 %1530, %v1387
  %v1532 = vpop.permute.xlu0 %1531
  %1535 = vset.pattern.permute.xlu0 0
  %1536 = vperm.xlu0 %1535, %v1388
  %v1537 = vpop.permute.xlu0 %1536
  %1540 = vset.pattern.permute.xlu0 0
  %1541 = vperm.xlu0 %1540, %v1389
  %v1542 = vpop.permute.xlu0 %1541
  %1545 = vset.pattern.permute.xlu0 0
  %1546 = vperm.xlu0 %1545, %v1390
  %v1547 = vpop.permute.xlu0 %1546
  %1550 = vset.pattern.permute.xlu0 0
  %1551 = vperm.xlu0 %1550, %v1391
  %v1552 = vpop.permute.xlu0 %1551
  %v1555 = vlaneseq
  %v1556 = vshrl.u32 %v1555, 7
  %v1557 = vsub.s32 0, %v1556
  %v1558 = vrot.slane %v1393, %v1557
  %v1560 = vmul.f32 %v1397, %v1558
  %v1561 = vmul.f32 %v1402, %v1558
  %v1562 = vmul.f32 %v1407, %v1558
  %v1563 = vmul.f32 %v1412, %v1558
  %v1564 = vmul.f32 %v1417, %v1558
  %v1565 = vmul.f32 %v1422, %v1558
  %v1566 = vmul.f32 %v1427, %v1558
  %v1567 = vmul.f32 %v1432, %v1558
  %v1568 = vmul.f32 %v1437, %v1558
  %v1569 = vmul.f32 %v1442, %v1558
  %v1570 = vmul.f32 %v1447, %v1558
  %v1571 = vmul.f32 %v1452, %v1558
  %v1572 = vmul.f32 %v1457, %v1558
  %v1573 = vmul.f32 %v1462, %v1558
  %v1574 = vmul.f32 %v1467, %v1558
  %v1575 = vmul.f32 %v1472, %v1558
  %v1576 = vmul.f32 %v1477, %v1558
  %v1577 = vmul.f32 %v1482, %v1558
  %v1578 = vmul.f32 %v1487, %v1558
  %v1579 = vmul.f32 %v1492, %v1558
  %v1580 = vmul.f32 %v1497, %v1558
  %v1581 = vmul.f32 %v1502, %v1558
  %v1582 = vmul.f32 %v1507, %v1558
  %v1583 = vmul.f32 %v1512, %v1558
  %v1584 = vmul.f32 %v1517, %v1558
  %v1585 = vmul.f32 %v1522, %v1558
  %v1586 = vmul.f32 %v1527, %v1558
  %v1587 = vmul.f32 %v1532, %v1558
  %v1588 = vmul.f32 %v1537, %v1558
  %v1589 = vmul.f32 %v1542, %v1558
  %v1590 = vmul.f32 %v1547, %v1558
  %v1591 = vmul.f32 %v1552, %v1558
  %v1592 = vadd.f32 %v1328, %v1560
  %v1593 = vadd.f32 %v1329, %v1561
  %v1594 = vadd.f32 %v1330, %v1562
  %v1595 = vadd.f32 %v1331, %v1563
  %v1596 = vadd.f32 %v1332, %v1564
  %v1597 = vadd.f32 %v1333, %v1565
  %v1598 = vadd.f32 %v1334, %v1566
  %v1599 = vadd.f32 %v1335, %v1567
  %v1600 = vadd.f32 %v1336, %v1568
  %v1601 = vadd.f32 %v1337, %v1569
  %v1602 = vadd.f32 %v1338, %v1570
  %v1603 = vadd.f32 %v1339, %v1571
  %v1604 = vadd.f32 %v1340, %v1572
  %v1605 = vadd.f32 %v1341, %v1573
  %v1606 = vadd.f32 %v1342, %v1574
  %v1607 = vadd.f32 %v1343, %v1575
  %v1608 = vadd.f32 %v1344, %v1576
  %v1609 = vadd.f32 %v1345, %v1577
  %v1610 = vadd.f32 %v1346, %v1578
  %v1611 = vadd.f32 %v1347, %v1579
  %v1612 = vadd.f32 %v1348, %v1580
  %v1613 = vadd.f32 %v1349, %v1581
  %v1614 = vadd.f32 %v1350, %v1582
  %v1615 = vadd.f32 %v1351, %v1583
  %v1616 = vadd.f32 %v1352, %v1584
  %v1617 = vadd.f32 %v1353, %v1585
  %v1618 = vadd.f32 %v1354, %v1586
  %v1619 = vadd.f32 %v1355, %v1587
  %v1620 = vadd.f32 %v1356, %v1588
  %v1621 = vadd.f32 %v1357, %v1589
  %v1622 = vadd.f32 %v1358, %v1590
  %v1623 = vadd.f32 %v1359, %v1591
  %v1624 = vld [vmem:[%s0 + $0x6] sm:$0xff]
  %v1625 = vld [vmem:[%s0 + $0xe] sm:$0xff]
  %v1626 = vld [vmem:[%s0 + $0x16] sm:$0xff]
  %v1627 = vld [vmem:[%s0 + $0x1e] sm:$0xff]
  %v1628 = vld [vmem:[%s0 + $0x2e] sm:$0xff]
  %v1629 = vld [vmem:[%s0 + $0x36] sm:$0xff]
  %v1630 = vld [vmem:[%s0 + $0x3e] sm:$0xff]
  %v1631 = vld [vmem:[%s0 + $0x46] sm:$0xff]
  %v1632 = vld [vmem:[%s0 + $0x56] sm:$0xff]
  %v1633 = vld [vmem:[%s0 + $0x5e] sm:$0xff]
  %v1634 = vld [vmem:[%s0 + $0x66] sm:$0xff]
  %v1635 = vld [vmem:[%s0 + $0x6e] sm:$0xff]
  %v1636 = vld [vmem:[%s0 + $0x7e] sm:$0xff]
  %v1637 = vld [vmem:[%s0 + $0x86] sm:$0xff]
  %v1638 = vld [vmem:[%s0 + $0x8e] sm:$0xff]
  %v1639 = vld [vmem:[%s0 + $0x96] sm:$0xff]
  %v1640 = vld [vmem:[%s0 + $0xa6] sm:$0xff]
  %v1641 = vld [vmem:[%s0 + $0xae] sm:$0xff]
  %v1642 = vld [vmem:[%s0 + $0xb6] sm:$0xff]
  %v1643 = vld [vmem:[%s0 + $0xbe] sm:$0xff]
  %v1644 = vld [vmem:[%s0 + $0xce] sm:$0xff]
  %v1645 = vld [vmem:[%s0 + $0xd6] sm:$0xff]
  %v1646 = vld [vmem:[%s0 + $0xde] sm:$0xff]
  %v1647 = vld [vmem:[%s0 + $0xe6] sm:$0xff]
  %v1648 = vld [vmem:[%s0 + $0xf6] sm:$0xff]
  %v1649 = vld [vmem:[%s0 + $0xfe] sm:$0xff]
  %v1650 = vld [vmem:[%s0 + $0x106] sm:$0xff]
  %v1651 = vld [vmem:[%s0 + $0x10e] sm:$0xff]
  %v1652 = vld [vmem:[%s0 + $0x11e] sm:$0xff]
  %v1653 = vld [vmem:[%s0 + $0x126] sm:$0xff]
  %v1654 = vld [vmem:[%s0 + $0x12e] sm:$0xff]
  %v1655 = vld [vmem:[%s0 + $0x136] sm:$0xff]
  %s1656 = scalar_lea.vmem %s1, 6
  %v1657 = vld [vmem:[%s1656] sm:$0x1]
  %1659 = vset.pattern.permute.xlu0 0
  %1660 = vperm.xlu0 %1659, %v1624
  %v1661 = vpop.permute.xlu0 %1660
  %1664 = vset.pattern.permute.xlu0 0
  %1665 = vperm.xlu0 %1664, %v1625
  %v1666 = vpop.permute.xlu0 %1665
  %1669 = vset.pattern.permute.xlu0 0
  %1670 = vperm.xlu0 %1669, %v1626
  %v1671 = vpop.permute.xlu0 %1670
  %1674 = vset.pattern.permute.xlu0 0
  %1675 = vperm.xlu0 %1674, %v1627
  %v1676 = vpop.permute.xlu0 %1675
  %1679 = vset.pattern.permute.xlu0 0
  %1680 = vperm.xlu0 %1679, %v1628
  %v1681 = vpop.permute.xlu0 %1680
  %1684 = vset.pattern.permute.xlu0 0
  %1685 = vperm.xlu0 %1684, %v1629
  %v1686 = vpop.permute.xlu0 %1685
  %1689 = vset.pattern.permute.xlu0 0
  %1690 = vperm.xlu0 %1689, %v1630
  %v1691 = vpop.permute.xlu0 %1690
  %1694 = vset.pattern.permute.xlu0 0
  %1695 = vperm.xlu0 %1694, %v1631
  %v1696 = vpop.permute.xlu0 %1695
  %1699 = vset.pattern.permute.xlu0 0
  %1700 = vperm.xlu0 %1699, %v1632
  %v1701 = vpop.permute.xlu0 %1700
  %1704 = vset.pattern.permute.xlu0 0
  %1705 = vperm.xlu0 %1704, %v1633
  %v1706 = vpop.permute.xlu0 %1705
  %1709 = vset.pattern.permute.xlu0 0
  %1710 = vperm.xlu0 %1709, %v1634
  %v1711 = vpop.permute.xlu0 %1710
  %1714 = vset.pattern.permute.xlu0 0
  %1715 = vperm.xlu0 %1714, %v1635
  %v1716 = vpop.permute.xlu0 %1715
  %1719 = vset.pattern.permute.xlu0 0
  %1720 = vperm.xlu0 %1719, %v1636
  %v1721 = vpop.permute.xlu0 %1720
  %1724 = vset.pattern.permute.xlu0 0
  %1725 = vperm.xlu0 %1724, %v1637
  %v1726 = vpop.permute.xlu0 %1725
  %1729 = vset.pattern.permute.xlu0 0
  %1730 = vperm.xlu0 %1729, %v1638
  %v1731 = vpop.permute.xlu0 %1730
  %1734 = vset.pattern.permute.xlu0 0
  %1735 = vperm.xlu0 %1734, %v1639
  %v1736 = vpop.permute.xlu0 %1735
  %1739 = vset.pattern.permute.xlu0 0
  %1740 = vperm.xlu0 %1739, %v1640
  %v1741 = vpop.permute.xlu0 %1740
  %1744 = vset.pattern.permute.xlu0 0
  %1745 = vperm.xlu0 %1744, %v1641
  %v1746 = vpop.permute.xlu0 %1745
  %1749 = vset.pattern.permute.xlu0 0
  %1750 = vperm.xlu0 %1749, %v1642
  %v1751 = vpop.permute.xlu0 %1750
  %1754 = vset.pattern.permute.xlu0 0
  %1755 = vperm.xlu0 %1754, %v1643
  %v1756 = vpop.permute.xlu0 %1755
  %1759 = vset.pattern.permute.xlu0 0
  %1760 = vperm.xlu0 %1759, %v1644
  %v1761 = vpop.permute.xlu0 %1760
  %1764 = vset.pattern.permute.xlu0 0
  %1765 = vperm.xlu0 %1764, %v1645
  %v1766 = vpop.permute.xlu0 %1765
  %1769 = vset.pattern.permute.xlu0 0
  %1770 = vperm.xlu0 %1769, %v1646
  %v1771 = vpop.permute.xlu0 %1770
  %1774 = vset.pattern.permute.xlu0 0
  %1775 = vperm.xlu0 %1774, %v1647
  %v1776 = vpop.permute.xlu0 %1775
  %1779 = vset.pattern.permute.xlu0 0
  %1780 = vperm.xlu0 %1779, %v1648
  %v1781 = vpop.permute.xlu0 %1780
  %1784 = vset.pattern.permute.xlu0 0
  %1785 = vperm.xlu0 %1784, %v1649
  %v1786 = vpop.permute.xlu0 %1785
  %1789 = vset.pattern.permute.xlu0 0
  %1790 = vperm.xlu0 %1789, %v1650
  %v1791 = vpop.permute.xlu0 %1790
  %1794 = vset.pattern.permute.xlu0 0
  %1795 = vperm.xlu0 %1794, %v1651
  %v1796 = vpop.permute.xlu0 %1795
  %1799 = vset.pattern.permute.xlu0 0
  %1800 = vperm.xlu0 %1799, %v1652
  %v1801 = vpop.permute.xlu0 %1800
  %1804 = vset.pattern.permute.xlu0 0
  %1805 = vperm.xlu0 %1804, %v1653
  %v1806 = vpop.permute.xlu0 %1805
  %1809 = vset.pattern.permute.xlu0 0
  %1810 = vperm.xlu0 %1809, %v1654
  %v1811 = vpop.permute.xlu0 %1810
  %1814 = vset.pattern.permute.xlu0 0
  %1815 = vperm.xlu0 %1814, %v1655
  %v1816 = vpop.permute.xlu0 %1815
  %v1819 = vlaneseq
  %v1820 = vshrl.u32 %v1819, 7
  %v1821 = vsub.s32 0, %v1820
  %v1822 = vrot.slane %v1657, %v1821
  %v1824 = vmul.f32 %v1661, %v1822
  %v1825 = vmul.f32 %v1666, %v1822
  %v1826 = vmul.f32 %v1671, %v1822
  %v1827 = vmul.f32 %v1676, %v1822
  %v1828 = vmul.f32 %v1681, %v1822
  %v1829 = vmul.f32 %v1686, %v1822
  %v1830 = vmul.f32 %v1691, %v1822
  %v1831 = vmul.f32 %v1696, %v1822
  %v1832 = vmul.f32 %v1701, %v1822
  %v1833 = vmul.f32 %v1706, %v1822
  %v1834 = vmul.f32 %v1711, %v1822
  %v1835 = vmul.f32 %v1716, %v1822
  %v1836 = vmul.f32 %v1721, %v1822
  %v1837 = vmul.f32 %v1726, %v1822
  %v1838 = vmul.f32 %v1731, %v1822
  %v1839 = vmul.f32 %v1736, %v1822
  %v1840 = vmul.f32 %v1741, %v1822
  %v1841 = vmul.f32 %v1746, %v1822
  %v1842 = vmul.f32 %v1751, %v1822
  %v1843 = vmul.f32 %v1756, %v1822
  %v1844 = vmul.f32 %v1761, %v1822
  %v1845 = vmul.f32 %v1766, %v1822
  %v1846 = vmul.f32 %v1771, %v1822
  %v1847 = vmul.f32 %v1776, %v1822
  %v1848 = vmul.f32 %v1781, %v1822
  %v1849 = vmul.f32 %v1786, %v1822
  %v1850 = vmul.f32 %v1791, %v1822
  %v1851 = vmul.f32 %v1796, %v1822
  %v1852 = vmul.f32 %v1801, %v1822
  %v1853 = vmul.f32 %v1806, %v1822
  %v1854 = vmul.f32 %v1811, %v1822
  %v1855 = vmul.f32 %v1816, %v1822
  %v1856 = vadd.f32 %v1592, %v1824
  %v1857 = vadd.f32 %v1593, %v1825
  %v1858 = vadd.f32 %v1594, %v1826
  %v1859 = vadd.f32 %v1595, %v1827
  %v1860 = vadd.f32 %v1596, %v1828
  %v1861 = vadd.f32 %v1597, %v1829
  %v1862 = vadd.f32 %v1598, %v1830
  %v1863 = vadd.f32 %v1599, %v1831
  %v1864 = vadd.f32 %v1600, %v1832
  %v1865 = vadd.f32 %v1601, %v1833
  %v1866 = vadd.f32 %v1602, %v1834
  %v1867 = vadd.f32 %v1603, %v1835
  %v1868 = vadd.f32 %v1604, %v1836
  %v1869 = vadd.f32 %v1605, %v1837
  %v1870 = vadd.f32 %v1606, %v1838
  %v1871 = vadd.f32 %v1607, %v1839
  %v1872 = vadd.f32 %v1608, %v1840
  %v1873 = vadd.f32 %v1609, %v1841
  %v1874 = vadd.f32 %v1610, %v1842
  %v1875 = vadd.f32 %v1611, %v1843
  %v1876 = vadd.f32 %v1612, %v1844
  %v1877 = vadd.f32 %v1613, %v1845
  %v1878 = vadd.f32 %v1614, %v1846
  %v1879 = vadd.f32 %v1615, %v1847
  %v1880 = vadd.f32 %v1616, %v1848
  %v1881 = vadd.f32 %v1617, %v1849
  %v1882 = vadd.f32 %v1618, %v1850
  %v1883 = vadd.f32 %v1619, %v1851
  %v1884 = vadd.f32 %v1620, %v1852
  %v1885 = vadd.f32 %v1621, %v1853
  %v1886 = vadd.f32 %v1622, %v1854
  %v1887 = vadd.f32 %v1623, %v1855
  %v1888 = vld [vmem:[%s0 + $0x7] sm:$0xff]
  %v1889 = vld [vmem:[%s0 + $0xf] sm:$0xff]
  %v1890 = vld [vmem:[%s0 + $0x17] sm:$0xff]
  %v1891 = vld [vmem:[%s0 + $0x1f] sm:$0xff]
  %v1892 = vld [vmem:[%s0 + $0x2f] sm:$0xff]
  %v1893 = vld [vmem:[%s0 + $0x37] sm:$0xff]
  %v1894 = vld [vmem:[%s0 + $0x3f] sm:$0xff]
  %v1895 = vld [vmem:[%s0 + $0x47] sm:$0xff]
  %v1896 = vld [vmem:[%s0 + $0x57] sm:$0xff]
  %v1897 = vld [vmem:[%s0 + $0x5f] sm:$0xff]
  %v1898 = vld [vmem:[%s0 + $0x67] sm:$0xff]
  %v1899 = vld [vmem:[%s0 + $0x6f] sm:$0xff]
  %v1900 = vld [vmem:[%s0 + $0x7f] sm:$0xff]
  %v1901 = vld [vmem:[%s0 + $0x87] sm:$0xff]
  %v1902 = vld [vmem:[%s0 + $0x8f] sm:$0xff]
  %v1903 = vld [vmem:[%s0 + $0x97] sm:$0xff]
  %v1904 = vld [vmem:[%s0 + $0xa7] sm:$0xff]
  %v1905 = vld [vmem:[%s0 + $0xaf] sm:$0xff]
  %v1906 = vld [vmem:[%s0 + $0xb7] sm:$0xff]
  %v1907 = vld [vmem:[%s0 + $0xbf] sm:$0xff]
  %v1908 = vld [vmem:[%s0 + $0xcf] sm:$0xff]
  %v1909 = vld [vmem:[%s0 + $0xd7] sm:$0xff]
  %v1910 = vld [vmem:[%s0 + $0xdf] sm:$0xff]
  %v1911 = vld [vmem:[%s0 + $0xe7] sm:$0xff]
  %v1912 = vld [vmem:[%s0 + $0xf7] sm:$0xff]
  %v1913 = vld [vmem:[%s0 + $0xff] sm:$0xff]
  %v1914 = vld [vmem:[%s0 + $0x107] sm:$0xff]
  %v1915 = vld [vmem:[%s0 + $0x10f] sm:$0xff]
  %v1916 = vld [vmem:[%s0 + $0x11f] sm:$0xff]
  %v1917 = vld [vmem:[%s0 + $0x127] sm:$0xff]
  %v1918 = vld [vmem:[%s0 + $0x12f] sm:$0xff]
  %v1919 = vld [vmem:[%s0 + $0x137] sm:$0xff]
  %s1920 = scalar_lea.vmem %s1, 7
  %v1921 = vld [vmem:[%s1920] sm:$0x1]
  %1923 = vset.pattern.permute.xlu0 0
  %1924 = vperm.xlu0 %1923, %v1888
  %v1925 = vpop.permute.xlu0 %1924
  %1928 = vset.pattern.permute.xlu0 0
  %1929 = vperm.xlu0 %1928, %v1889
  %v1930 = vpop.permute.xlu0 %1929
  %1933 = vset.pattern.permute.xlu0 0
  %1934 = vperm.xlu0 %1933, %v1890
  %v1935 = vpop.permute.xlu0 %1934
  %1938 = vset.pattern.permute.xlu0 0
  %1939 = vperm.xlu0 %1938, %v1891
  %v1940 = vpop.permute.xlu0 %1939
  %1943 = vset.pattern.permute.xlu0 0
  %1944 = vperm.xlu0 %1943, %v1892
  %v1945 = vpop.permute.xlu0 %1944
  %1948 = vset.pattern.permute.xlu0 0
  %1949 = vperm.xlu0 %1948, %v1893
  %v1950 = vpop.permute.xlu0 %1949
  %1953 = vset.pattern.permute.xlu0 0
  %1954 = vperm.xlu0 %1953, %v1894
  %v1955 = vpop.permute.xlu0 %1954
  %1958 = vset.pattern.permute.xlu0 0
  %1959 = vperm.xlu0 %1958, %v1895
  %v1960 = vpop.permute.xlu0 %1959
  %1963 = vset.pattern.permute.xlu0 0
  %1964 = vperm.xlu0 %1963, %v1896
  %v1965 = vpop.permute.xlu0 %1964
  %1968 = vset.pattern.permute.xlu0 0
  %1969 = vperm.xlu0 %1968, %v1897
  %v1970 = vpop.permute.xlu0 %1969
  %1973 = vset.pattern.permute.xlu0 0
  %1974 = vperm.xlu0 %1973, %v1898
  %v1975 = vpop.permute.xlu0 %1974
  %1978 = vset.pattern.permute.xlu0 0
  %1979 = vperm.xlu0 %1978, %v1899
  %v1980 = vpop.permute.xlu0 %1979
  %1983 = vset.pattern.permute.xlu0 0
  %1984 = vperm.xlu0 %1983, %v1900
  %v1985 = vpop.permute.xlu0 %1984
  %1988 = vset.pattern.permute.xlu0 0
  %1989 = vperm.xlu0 %1988, %v1901
  %v1990 = vpop.permute.xlu0 %1989
  %1993 = vset.pattern.permute.xlu0 0
  %1994 = vperm.xlu0 %1993, %v1902
  %v1995 = vpop.permute.xlu0 %1994
  %1998 = vset.pattern.permute.xlu0 0
  %1999 = vperm.xlu0 %1998, %v1903
  %v2000 = vpop.permute.xlu0 %1999
  %2003 = vset.pattern.permute.xlu0 0
  %2004 = vperm.xlu0 %2003, %v1904
  %v2005 = vpop.permute.xlu0 %2004
  %2008 = vset.pattern.permute.xlu0 0
  %2009 = vperm.xlu0 %2008, %v1905
  %v2010 = vpop.permute.xlu0 %2009
  %2013 = vset.pattern.permute.xlu0 0
  %2014 = vperm.xlu0 %2013, %v1906
  %v2015 = vpop.permute.xlu0 %2014
  %2018 = vset.pattern.permute.xlu0 0
  %2019 = vperm.xlu0 %2018, %v1907
  %v2020 = vpop.permute.xlu0 %2019
  %2023 = vset.pattern.permute.xlu0 0
  %2024 = vperm.xlu0 %2023, %v1908
  %v2025 = vpop.permute.xlu0 %2024
  %2028 = vset.pattern.permute.xlu0 0
  %2029 = vperm.xlu0 %2028, %v1909
  %v2030 = vpop.permute.xlu0 %2029
  %2033 = vset.pattern.permute.xlu0 0
  %2034 = vperm.xlu0 %2033, %v1910
  %v2035 = vpop.permute.xlu0 %2034
  %2038 = vset.pattern.permute.xlu0 0
  %2039 = vperm.xlu0 %2038, %v1911
  %v2040 = vpop.permute.xlu0 %2039
  %2043 = vset.pattern.permute.xlu0 0
  %2044 = vperm.xlu0 %2043, %v1912
  %v2045 = vpop.permute.xlu0 %2044
  %2048 = vset.pattern.permute.xlu0 0
  %2049 = vperm.xlu0 %2048, %v1913
  %v2050 = vpop.permute.xlu0 %2049
  %2053 = vset.pattern.permute.xlu0 0
  %2054 = vperm.xlu0 %2053, %v1914
  %v2055 = vpop.permute.xlu0 %2054
  %2058 = vset.pattern.permute.xlu0 0
  %2059 = vperm.xlu0 %2058, %v1915
  %v2060 = vpop.permute.xlu0 %2059
  %2063 = vset.pattern.permute.xlu0 0
  %2064 = vperm.xlu0 %2063, %v1916
  %v2065 = vpop.permute.xlu0 %2064
  %2068 = vset.pattern.permute.xlu0 0
  %2069 = vperm.xlu0 %2068, %v1917
  %v2070 = vpop.permute.xlu0 %2069
  %2073 = vset.pattern.permute.xlu0 0
  %2074 = vperm.xlu0 %2073, %v1918
  %v2075 = vpop.permute.xlu0 %2074
  %2078 = vset.pattern.permute.xlu0 0
  %2079 = vperm.xlu0 %2078, %v1919
  %v2080 = vpop.permute.xlu0 %2079
  %v2083 = vlaneseq
  %v2084 = vshrl.u32 %v2083, 7
  %v2085 = vsub.s32 0, %v2084
  %v2086 = vrot.slane %v1921, %v2085
  %v2088 = vmul.f32 %v1925, %v2086
  %v2089 = vmul.f32 %v1930, %v2086
  %v2090 = vmul.f32 %v1935, %v2086
  %v2091 = vmul.f32 %v1940, %v2086
  %v2092 = vmul.f32 %v1945, %v2086
  %v2093 = vmul.f32 %v1950, %v2086
  %v2094 = vmul.f32 %v1955, %v2086
  %v2095 = vmul.f32 %v1960, %v2086
  %v2096 = vmul.f32 %v1965, %v2086
  %v2097 = vmul.f32 %v1970, %v2086
  %v2098 = vmul.f32 %v1975, %v2086
  %v2099 = vmul.f32 %v1980, %v2086
  %v2100 = vmul.f32 %v1985, %v2086
  %v2101 = vmul.f32 %v1990, %v2086
  %v2102 = vmul.f32 %v1995, %v2086
  %v2103 = vmul.f32 %v2000, %v2086
  %v2104 = vmul.f32 %v2005, %v2086
  %v2105 = vmul.f32 %v2010, %v2086
  %v2106 = vmul.f32 %v2015, %v2086
  %v2107 = vmul.f32 %v2020, %v2086
  %v2108 = vmul.f32 %v2025, %v2086
  %v2109 = vmul.f32 %v2030, %v2086
  %v2110 = vmul.f32 %v2035, %v2086
  %v2111 = vmul.f32 %v2040, %v2086
  %v2112 = vmul.f32 %v2045, %v2086
  %v2113 = vmul.f32 %v2050, %v2086
  %v2114 = vmul.f32 %v2055, %v2086
  %v2115 = vmul.f32 %v2060, %v2086
  %v2116 = vmul.f32 %v2065, %v2086
  %v2117 = vmul.f32 %v2070, %v2086
  %v2118 = vmul.f32 %v2075, %v2086
  %v2119 = vmul.f32 %v2080, %v2086
  %v2120 = vadd.f32 %v1856, %v2088
  %v2121 = vadd.f32 %v1857, %v2089
  %v2122 = vadd.f32 %v1858, %v2090
  %v2123 = vadd.f32 %v1859, %v2091
  %v2124 = vadd.f32 %v1860, %v2092
  %v2125 = vadd.f32 %v1861, %v2093
  %v2126 = vadd.f32 %v1862, %v2094
  %v2127 = vadd.f32 %v1863, %v2095
  %v2128 = vadd.f32 %v1864, %v2096
  %v2129 = vadd.f32 %v1865, %v2097
  %v2130 = vadd.f32 %v1866, %v2098
  %v2131 = vadd.f32 %v1867, %v2099
  %v2132 = vadd.f32 %v1868, %v2100
  %v2133 = vadd.f32 %v1869, %v2101
  %v2134 = vadd.f32 %v1870, %v2102
  %v2135 = vadd.f32 %v1871, %v2103
  %v2136 = vadd.f32 %v1872, %v2104
  %v2137 = vadd.f32 %v1873, %v2105
  %v2138 = vadd.f32 %v1874, %v2106
  %v2139 = vadd.f32 %v1875, %v2107
  %v2140 = vadd.f32 %v1876, %v2108
  %v2141 = vadd.f32 %v1877, %v2109
  %v2142 = vadd.f32 %v1878, %v2110
  %v2143 = vadd.f32 %v1879, %v2111
  %v2144 = vadd.f32 %v1880, %v2112
  %v2145 = vadd.f32 %v1881, %v2113
  %v2146 = vadd.f32 %v1882, %v2114
  %v2147 = vadd.f32 %v1883, %v2115
  %v2148 = vadd.f32 %v1884, %v2116
  %v2149 = vadd.f32 %v1885, %v2117
  %v2150 = vadd.f32 %v1886, %v2118
  %v2151 = vadd.f32 %v1887, %v2119
  %v2152 = vld [vmem:[%s0 + $0x8] sm:$0xff]
  %v2153 = vld [vmem:[%s0 + $0x10] sm:$0xff]
  %v2154 = vld [vmem:[%s0 + $0x18] sm:$0xff]
  %v2155 = vld [vmem:[%s0 + $0x20] sm:$0xff]
  %v2156 = vld [vmem:[%s0 + $0x30] sm:$0xff]
  %v2157 = vld [vmem:[%s0 + $0x38] sm:$0xff]
  %v2158 = vld [vmem:[%s0 + $0x40] sm:$0xff]
  %v2159 = vld [vmem:[%s0 + $0x48] sm:$0xff]
  %v2160 = vld [vmem:[%s0 + $0x58] sm:$0xff]
  %v2161 = vld [vmem:[%s0 + $0x60] sm:$0xff]
  %v2162 = vld [vmem:[%s0 + $0x68] sm:$0xff]
  %v2163 = vld [vmem:[%s0 + $0x70] sm:$0xff]
  %v2164 = vld [vmem:[%s0 + $0x80] sm:$0xff]
  %v2165 = vld [vmem:[%s0 + $0x88] sm:$0xff]
  %v2166 = vld [vmem:[%s0 + $0x90] sm:$0xff]
  %v2167 = vld [vmem:[%s0 + $0x98] sm:$0xff]
  %v2168 = vld [vmem:[%s0 + $0xa8] sm:$0xff]
  %v2169 = vld [vmem:[%s0 + $0xb0] sm:$0xff]
  %v2170 = vld [vmem:[%s0 + $0xb8] sm:$0xff]
  %v2171 = vld [vmem:[%s0 + $0xc0] sm:$0xff]
  %v2172 = vld [vmem:[%s0 + $0xd0] sm:$0xff]
  %v2173 = vld [vmem:[%s0 + $0xd8] sm:$0xff]
  %v2174 = vld [vmem:[%s0 + $0xe0] sm:$0xff]
  %v2175 = vld [vmem:[%s0 + $0xe8] sm:$0xff]
  %v2176 = vld [vmem:[%s0 + $0xf8] sm:$0xff]
  %v2177 = vld [vmem:[%s0 + $0x100] sm:$0xff]
  %v2178 = vld [vmem:[%s0 + $0x108] sm:$0xff]
  %v2179 = vld [vmem:[%s0 + $0x110] sm:$0xff]
  %v2180 = vld [vmem:[%s0 + $0x120] sm:$0xff]
  %v2181 = vld [vmem:[%s0 + $0x128] sm:$0xff]
  %v2182 = vld [vmem:[%s0 + $0x130] sm:$0xff]
  %v2183 = vld [vmem:[%s0 + $0x138] sm:$0xff]
  %s2184 = scalar_lea.vmem %s1, 8
  %v2185 = vld [vmem:[%s2184] sm:$0x1]
  %2187 = vset.pattern.permute.xlu0 0
  %2188 = vperm.xlu0 %2187, %v2152
  %v2189 = vpop.permute.xlu0 %2188
  %2192 = vset.pattern.permute.xlu0 0
  %2193 = vperm.xlu0 %2192, %v2153
  %v2194 = vpop.permute.xlu0 %2193
  %2197 = vset.pattern.permute.xlu0 0
  %2198 = vperm.xlu0 %2197, %v2154
  %v2199 = vpop.permute.xlu0 %2198
  %2202 = vset.pattern.permute.xlu0 0
  %2203 = vperm.xlu0 %2202, %v2155
  %v2204 = vpop.permute.xlu0 %2203
  %2207 = vset.pattern.permute.xlu0 0
  %2208 = vperm.xlu0 %2207, %v2156
  %v2209 = vpop.permute.xlu0 %2208
  %2212 = vset.pattern.permute.xlu0 0
  %2213 = vperm.xlu0 %2212, %v2157
  %v2214 = vpop.permute.xlu0 %2213
  %2217 = vset.pattern.permute.xlu0 0
  %2218 = vperm.xlu0 %2217, %v2158
  %v2219 = vpop.permute.xlu0 %2218
  %2222 = vset.pattern.permute.xlu0 0
  %2223 = vperm.xlu0 %2222, %v2159
  %v2224 = vpop.permute.xlu0 %2223
  %2227 = vset.pattern.permute.xlu0 0
  %2228 = vperm.xlu0 %2227, %v2160
  %v2229 = vpop.permute.xlu0 %2228
  %2232 = vset.pattern.permute.xlu0 0
  %2233 = vperm.xlu0 %2232, %v2161
  %v2234 = vpop.permute.xlu0 %2233
  %2237 = vset.pattern.permute.xlu0 0
  %2238 = vperm.xlu0 %2237, %v2162
  %v2239 = vpop.permute.xlu0 %2238
  %2242 = vset.pattern.permute.xlu0 0
  %2243 = vperm.xlu0 %2242, %v2163
  %v2244 = vpop.permute.xlu0 %2243
  %2247 = vset.pattern.permute.xlu0 0
  %2248 = vperm.xlu0 %2247, %v2164
  %v2249 = vpop.permute.xlu0 %2248
  %2252 = vset.pattern.permute.xlu0 0
  %2253 = vperm.xlu0 %2252, %v2165
  %v2254 = vpop.permute.xlu0 %2253
  %2257 = vset.pattern.permute.xlu0 0
  %2258 = vperm.xlu0 %2257, %v2166
  %v2259 = vpop.permute.xlu0 %2258
  %2262 = vset.pattern.permute.xlu0 0
  %2263 = vperm.xlu0 %2262, %v2167
  %v2264 = vpop.permute.xlu0 %2263
  %2267 = vset.pattern.permute.xlu0 0
  %2268 = vperm.xlu0 %2267, %v2168
  %v2269 = vpop.permute.xlu0 %2268
  %2272 = vset.pattern.permute.xlu0 0
  %2273 = vperm.xlu0 %2272, %v2169
  %v2274 = vpop.permute.xlu0 %2273
  %2277 = vset.pattern.permute.xlu0 0
  %2278 = vperm.xlu0 %2277, %v2170
  %v2279 = vpop.permute.xlu0 %2278
  %2282 = vset.pattern.permute.xlu0 0
  %2283 = vperm.xlu0 %2282, %v2171
  %v2284 = vpop.permute.xlu0 %2283
  %2287 = vset.pattern.permute.xlu0 0
  %2288 = vperm.xlu0 %2287, %v2172
  %v2289 = vpop.permute.xlu0 %2288
  %2292 = vset.pattern.permute.xlu0 0
  %2293 = vperm.xlu0 %2292, %v2173
  %v2294 = vpop.permute.xlu0 %2293
  %2297 = vset.pattern.permute.xlu0 0
  %2298 = vperm.xlu0 %2297, %v2174
  %v2299 = vpop.permute.xlu0 %2298
  %2302 = vset.pattern.permute.xlu0 0
  %2303 = vperm.xlu0 %2302, %v2175
  %v2304 = vpop.permute.xlu0 %2303
  %2307 = vset.pattern.permute.xlu0 0
  %2308 = vperm.xlu0 %2307, %v2176
  %v2309 = vpop.permute.xlu0 %2308
  %2312 = vset.pattern.permute.xlu0 0
  %2313 = vperm.xlu0 %2312, %v2177
  %v2314 = vpop.permute.xlu0 %2313
  %2317 = vset.pattern.permute.xlu0 0
  %2318 = vperm.xlu0 %2317, %v2178
  %v2319 = vpop.permute.xlu0 %2318
  %2322 = vset.pattern.permute.xlu0 0
  %2323 = vperm.xlu0 %2322, %v2179
  %v2324 = vpop.permute.xlu0 %2323
  %2327 = vset.pattern.permute.xlu0 0
  %2328 = vperm.xlu0 %2327, %v2180
  %v2329 = vpop.permute.xlu0 %2328
  %2332 = vset.pattern.permute.xlu0 0
  %2333 = vperm.xlu0 %2332, %v2181
  %v2334 = vpop.permute.xlu0 %2333
  %2337 = vset.pattern.permute.xlu0 0
  %2338 = vperm.xlu0 %2337, %v2182
  %v2339 = vpop.permute.xlu0 %2338
  %2342 = vset.pattern.permute.xlu0 0
  %2343 = vperm.xlu0 %2342, %v2183
  %v2344 = vpop.permute.xlu0 %2343
  %v2347 = vlaneseq
  %v2348 = vshrl.u32 %v2347, 7
  %v2349 = vsub.s32 0, %v2348
  %v2350 = vrot.slane %v2185, %v2349
  %v2352 = vmul.f32 %v2189, %v2350
  %v2353 = vmul.f32 %v2194, %v2350
  %v2354 = vmul.f32 %v2199, %v2350
  %v2355 = vmul.f32 %v2204, %v2350
  %v2356 = vmul.f32 %v2209, %v2350
  %v2357 = vmul.f32 %v2214, %v2350
  %v2358 = vmul.f32 %v2219, %v2350
  %v2359 = vmul.f32 %v2224, %v2350
  %v2360 = vmul.f32 %v2229, %v2350
  %v2361 = vmul.f32 %v2234, %v2350
  %v2362 = vmul.f32 %v2239, %v2350
  %v2363 = vmul.f32 %v2244, %v2350
  %v2364 = vmul.f32 %v2249, %v2350
  %v2365 = vmul.f32 %v2254, %v2350
  %v2366 = vmul.f32 %v2259, %v2350
  %v2367 = vmul.f32 %v2264, %v2350
  %v2368 = vmul.f32 %v2269, %v2350
  %v2369 = vmul.f32 %v2274, %v2350
  %v2370 = vmul.f32 %v2279, %v2350
  %v2371 = vmul.f32 %v2284, %v2350
  %v2372 = vmul.f32 %v2289, %v2350
  %v2373 = vmul.f32 %v2294, %v2350
  %v2374 = vmul.f32 %v2299, %v2350
  %v2375 = vmul.f32 %v2304, %v2350
  %v2376 = vmul.f32 %v2309, %v2350
  %v2377 = vmul.f32 %v2314, %v2350
  %v2378 = vmul.f32 %v2319, %v2350
  %v2379 = vmul.f32 %v2324, %v2350
  %v2380 = vmul.f32 %v2329, %v2350
  %v2381 = vmul.f32 %v2334, %v2350
  %v2382 = vmul.f32 %v2339, %v2350
  %v2383 = vmul.f32 %v2344, %v2350
  %v2384 = vadd.f32 %v2120, %v2352
  %v2385 = vadd.f32 %v2121, %v2353
  %v2386 = vadd.f32 %v2122, %v2354
  %v2387 = vadd.f32 %v2123, %v2355
  %v2388 = vadd.f32 %v2124, %v2356
  %v2389 = vadd.f32 %v2125, %v2357
  %v2390 = vadd.f32 %v2126, %v2358
  %v2391 = vadd.f32 %v2127, %v2359
  %v2392 = vadd.f32 %v2128, %v2360
  %v2393 = vadd.f32 %v2129, %v2361
  %v2394 = vadd.f32 %v2130, %v2362
  %v2395 = vadd.f32 %v2131, %v2363
  %v2396 = vadd.f32 %v2132, %v2364
  %v2397 = vadd.f32 %v2133, %v2365
  %v2398 = vadd.f32 %v2134, %v2366
  %v2399 = vadd.f32 %v2135, %v2367
  %v2400 = vadd.f32 %v2136, %v2368
  %v2401 = vadd.f32 %v2137, %v2369
  %v2402 = vadd.f32 %v2138, %v2370
  %v2403 = vadd.f32 %v2139, %v2371
  %v2404 = vadd.f32 %v2140, %v2372
  %v2405 = vadd.f32 %v2141, %v2373
  %v2406 = vadd.f32 %v2142, %v2374
  %v2407 = vadd.f32 %v2143, %v2375
  %v2408 = vadd.f32 %v2144, %v2376
  %v2409 = vadd.f32 %v2145, %v2377
  %v2410 = vadd.f32 %v2146, %v2378
  %v2411 = vadd.f32 %v2147, %v2379
  %v2412 = vadd.f32 %v2148, %v2380
  %v2413 = vadd.f32 %v2149, %v2381
  %v2414 = vadd.f32 %v2150, %v2382
  %v2415 = vadd.f32 %v2151, %v2383
  %v2416 = vld [vmem:[%s2] sm:$0x1]
  %v2418 = vlaneseq
  %v2419 = vshrl.u32 %v2418, 7
  %v2420 = vsub.s32 0, %v2419
  %v2421 = vrot.slane %v2416, %v2420
  %v2423 = vadd.f32 %v2384, %v2421
  %v2424 = vadd.f32 %v2385, %v2421
  %v2425 = vadd.f32 %v2386, %v2421
  %v2426 = vadd.f32 %v2387, %v2421
  %v2427 = vadd.f32 %v2388, %v2421
  %v2428 = vadd.f32 %v2389, %v2421
  %v2429 = vadd.f32 %v2390, %v2421
  %v2430 = vadd.f32 %v2391, %v2421
  %v2431 = vadd.f32 %v2392, %v2421
  %v2432 = vadd.f32 %v2393, %v2421
  %v2433 = vadd.f32 %v2394, %v2421
  %v2434 = vadd.f32 %v2395, %v2421
  %v2435 = vadd.f32 %v2396, %v2421
  %v2436 = vadd.f32 %v2397, %v2421
  %v2437 = vadd.f32 %v2398, %v2421
  %v2438 = vadd.f32 %v2399, %v2421
  %v2439 = vadd.f32 %v2400, %v2421
  %v2440 = vadd.f32 %v2401, %v2421
  %v2441 = vadd.f32 %v2402, %v2421
  %v2442 = vadd.f32 %v2403, %v2421
  %v2443 = vadd.f32 %v2404, %v2421
  %v2444 = vadd.f32 %v2405, %v2421
  %v2445 = vadd.f32 %v2406, %v2421
  %v2446 = vadd.f32 %v2407, %v2421
  %v2447 = vadd.f32 %v2408, %v2421
  %v2448 = vadd.f32 %v2409, %v2421
  %v2449 = vadd.f32 %v2410, %v2421
  %v2450 = vadd.f32 %v2411, %v2421
  %v2451 = vadd.f32 %v2412, %v2421
  %v2452 = vadd.f32 %v2413, %v2421
  %v2453 = vadd.f32 %v2414, %v2421
  %v2454 = vadd.f32 %v2415, %v2421
  %vm2455 = vcmp.gt.f32.partialorder %v2423, 0.0
  %vm2456 = vcmp.gt.f32.partialorder %v2424, 0.0
  %vm2457 = vcmp.gt.f32.partialorder %v2425, 0.0
  %vm2458 = vcmp.gt.f32.partialorder %v2426, 0.0
  %vm2459 = vcmp.gt.f32.partialorder %v2427, 0.0
  %vm2460 = vcmp.gt.f32.partialorder %v2428, 0.0
  %vm2461 = vcmp.gt.f32.partialorder %v2429, 0.0
  %vm2462 = vcmp.gt.f32.partialorder %v2430, 0.0
  %vm2463 = vcmp.gt.f32.partialorder %v2431, 0.0
  %vm2464 = vcmp.gt.f32.partialorder %v2432, 0.0
  %vm2465 = vcmp.gt.f32.partialorder %v2433, 0.0
  %vm2466 = vcmp.gt.f32.partialorder %v2434, 0.0
  %vm2467 = vcmp.gt.f32.partialorder %v2435, 0.0
  %vm2468 = vcmp.gt.f32.partialorder %v2436, 0.0
  %vm2469 = vcmp.gt.f32.partialorder %v2437, 0.0
  %vm2470 = vcmp.gt.f32.partialorder %v2438, 0.0
  %vm2471 = vcmp.gt.f32.partialorder %v2439, 0.0
  %vm2472 = vcmp.gt.f32.partialorder %v2440, 0.0
  %vm2473 = vcmp.gt.f32.partialorder %v2441, 0.0
  %vm2474 = vcmp.gt.f32.partialorder %v2442, 0.0
  %vm2475 = vcmp.gt.f32.partialorder %v2443, 0.0
  %vm2476 = vcmp.gt.f32.partialorder %v2444, 0.0
  %vm2477 = vcmp.gt.f32.partialorder %v2445, 0.0
  %vm2478 = vcmp.gt.f32.partialorder %v2446, 0.0
  %vm2479 = vcmp.gt.f32.partialorder %v2447, 0.0
  %vm2480 = vcmp.gt.f32.partialorder %v2448, 0.0
  %vm2481 = vcmp.gt.f32.partialorder %v2449, 0.0
  %vm2482 = vcmp.gt.f32.partialorder %v2450, 0.0
  %vm2483 = vcmp.gt.f32.partialorder %v2451, 0.0
  %vm2484 = vcmp.gt.f32.partialorder %v2452, 0.0
  %vm2485 = vcmp.gt.f32.partialorder %v2453, 0.0
  %vm2486 = vcmp.gt.f32.partialorder %v2454, 0.0
  %v2487 = vmul.f32 %v2423, 0.2
  %v2488 = vmul.f32 %v2424, 0.2
  %v2489 = vmul.f32 %v2425, 0.2
  %v2490 = vmul.f32 %v2426, 0.2
  %v2491 = vmul.f32 %v2427, 0.2
  %v2492 = vmul.f32 %v2428, 0.2
  %v2493 = vmul.f32 %v2429, 0.2
  %v2494 = vmul.f32 %v2430, 0.2
  %v2495 = vmul.f32 %v2431, 0.2
  %v2496 = vmul.f32 %v2432, 0.2
  %v2497 = vmul.f32 %v2433, 0.2
  %v2498 = vmul.f32 %v2434, 0.2
  %v2499 = vmul.f32 %v2435, 0.2
  %v2500 = vmul.f32 %v2436, 0.2
  %v2501 = vmul.f32 %v2437, 0.2
  %v2502 = vmul.f32 %v2438, 0.2
  %v2503 = vmul.f32 %v2439, 0.2
  %v2504 = vmul.f32 %v2440, 0.2
  %v2505 = vmul.f32 %v2441, 0.2
  %v2506 = vmul.f32 %v2442, 0.2
  %v2507 = vmul.f32 %v2443, 0.2
  %v2508 = vmul.f32 %v2444, 0.2
  %v2509 = vmul.f32 %v2445, 0.2
  %v2510 = vmul.f32 %v2446, 0.2
  %v2511 = vmul.f32 %v2447, 0.2
  %v2512 = vmul.f32 %v2448, 0.2
  %v2513 = vmul.f32 %v2449, 0.2
  %v2514 = vmul.f32 %v2450, 0.2
  %v2515 = vmul.f32 %v2451, 0.2
  %v2516 = vmul.f32 %v2452, 0.2
  %v2517 = vmul.f32 %v2453, 0.2
  %v2518 = vmul.f32 %v2454, 0.2
  %v2519 = vsel %vm2455, %v2423, %v2487
  %v2520 = vsel %vm2456, %v2424, %v2488
  %v2521 = vsel %vm2457, %v2425, %v2489
  %v2522 = vsel %vm2458, %v2426, %v2490
  %v2523 = vsel %vm2459, %v2427, %v2491
  %v2524 = vsel %vm2460, %v2428, %v2492
  %v2525 = vsel %vm2461, %v2429, %v2493
  %v2526 = vsel %vm2462, %v2430, %v2494
  %v2527 = vsel %vm2463, %v2431, %v2495
  %v2528 = vsel %vm2464, %v2432, %v2496
  %v2529 = vsel %vm2465, %v2433, %v2497
  %v2530 = vsel %vm2466, %v2434, %v2498
  %v2531 = vsel %vm2467, %v2435, %v2499
  %v2532 = vsel %vm2468, %v2436, %v2500
  %v2533 = vsel %vm2469, %v2437, %v2501
  %v2534 = vsel %vm2470, %v2438, %v2502
  %v2535 = vsel %vm2471, %v2439, %v2503
  %v2536 = vsel %vm2472, %v2440, %v2504
  %v2537 = vsel %vm2473, %v2441, %v2505
  %v2538 = vsel %vm2474, %v2442, %v2506
  %v2539 = vsel %vm2475, %v2443, %v2507
  %v2540 = vsel %vm2476, %v2444, %v2508
  %v2541 = vsel %vm2477, %v2445, %v2509
  %v2542 = vsel %vm2478, %v2446, %v2510
  %v2543 = vsel %vm2479, %v2447, %v2511
  %v2544 = vsel %vm2480, %v2448, %v2512
  %v2545 = vsel %vm2481, %v2449, %v2513
  %v2546 = vsel %vm2482, %v2450, %v2514
  %v2547 = vsel %vm2483, %v2451, %v2515
  %v2548 = vsel %vm2484, %v2452, %v2516
  %v2549 = vsel %vm2485, %v2453, %v2517
  %v2550 = vsel %vm2486, %v2454, %v2518
  %vm2551 = vcmask 519168
  %2552 = vst.msk [vmem:[#allocation2] sm:$0xf] %vm2551, 0.0
  %2553 = vst.msk [vmem:[#allocation2 + $0x28] sm:$0xf] %vm2551, 0.0
  %2554 = vst.msk [vmem:[#allocation2 + $0x50] sm:$0xf] %vm2551, 0.0
  %2555 = vst.msk [vmem:[#allocation2 + $0x78] sm:$0xf] %vm2551, 0.0
  %2556 = vst.msk [vmem:[#allocation2 + $0xa0] sm:$0xf] %vm2551, 0.0
  %2557 = vst.msk [vmem:[#allocation2 + $0xc8] sm:$0xf] %vm2551, 0.0
  %2558 = vst.msk [vmem:[#allocation2 + $0xf0] sm:$0xf] %vm2551, 0.0
  %2559 = vst.msk [vmem:[#allocation2 + $0x118] sm:$0xf] %vm2551, 0.0
  %2560 = vst.msk [vmem:[#allocation2 + $0x24] sm:$0xf] %vm2551, 0.0
  %2561 = vst.msk [vmem:[#allocation2 + $0x4c] sm:$0xf] %vm2551, 0.0
  %2562 = vst.msk [vmem:[#allocation2 + $0x74] sm:$0xf] %vm2551, 0.0
  %2563 = vst.msk [vmem:[#allocation2 + $0x9c] sm:$0xf] %vm2551, 0.0
  %2564 = vst.msk [vmem:[#allocation2 + $0xc4] sm:$0xf] %vm2551, 0.0
  %2565 = vst.msk [vmem:[#allocation2 + $0xec] sm:$0xf] %vm2551, 0.0
  %2566 = vst.msk [vmem:[#allocation2 + $0x114] sm:$0xf] %vm2551, 0.0
  %2567 = vst.msk [vmem:[#allocation2 + $0x13c] sm:$0xf] %vm2551, 0.0
  %vm2568 = vcmask 523264
  %2569 = vst.msk [vmem:[#allocation2 + $0x4] sm:$0xff] %vm2568, %v2519
  %2570 = vst.msk [vmem:[#allocation2 + $0xc] sm:$0xff] %vm2568, %v2520
  %2571 = vst.msk [vmem:[#allocation2 + $0x14] sm:$0xff] %vm2568, %v2521
  %2572 = vst.msk [vmem:[#allocation2 + $0x1c] sm:$0xff] %vm2568, %v2522
  %2573 = vst.msk [vmem:[#allocation2 + $0x2c] sm:$0xff] %vm2568, %v2523
  %2574 = vst.msk [vmem:[#allocation2 + $0x34] sm:$0xff] %vm2568, %v2524
  %2575 = vst.msk [vmem:[#allocation2 + $0x3c] sm:$0xff] %vm2568, %v2525
  %2576 = vst.msk [vmem:[#allocation2 + $0x44] sm:$0xff] %vm2568, %v2526
  %2577 = vst.msk [vmem:[#allocation2 + $0x54] sm:$0xff] %vm2568, %v2527
  %2578 = vst.msk [vmem:[#allocation2 + $0x5c] sm:$0xff] %vm2568, %v2528
  %2579 = vst.msk [vmem:[#allocation2 + $0x64] sm:$0xff] %vm2568, %v2529
  %2580 = vst.msk [vmem:[#allocation2 + $0x6c] sm:$0xff] %vm2568, %v2530
  %2581 = vst.msk [vmem:[#allocation2 + $0x7c] sm:$0xff] %vm2568, %v2531
  %2582 = vst.msk [vmem:[#allocation2 + $0x84] sm:$0xff] %vm2568, %v2532
  %2583 = vst.msk [vmem:[#allocation2 + $0x8c] sm:$0xff] %vm2568, %v2533
  %2584 = vst.msk [vmem:[#allocation2 + $0x94] sm:$0xff] %vm2568, %v2534
  %2585 = vst.msk [vmem:[#allocation2 + $0xa4] sm:$0xff] %vm2568, %v2535
  %2586 = vst.msk [vmem:[#allocation2 + $0xac] sm:$0xff] %vm2568, %v2536
  %2587 = vst.msk [vmem:[#allocation2 + $0xb4] sm:$0xff] %vm2568, %v2537
  %2588 = vst.msk [vmem:[#allocation2 + $0xbc] sm:$0xff] %vm2568, %v2538
  %2589 = vst.msk [vmem:[#allocation2 + $0xcc] sm:$0xff] %vm2568, %v2539
  %2590 = vst.msk [vmem:[#allocation2 + $0xd4] sm:$0xff] %vm2568, %v2540
  %2591 = vst.msk [vmem:[#allocation2 + $0xdc] sm:$0xff] %vm2568, %v2541
  %2592 = vst.msk [vmem:[#allocation2 + $0xe4] sm:$0xff] %vm2568, %v2542
  %2593 = vst.msk [vmem:[#allocation2 + $0xf4] sm:$0xff] %vm2568, %v2543
  %2594 = vst.msk [vmem:[#allocation2 + $0xfc] sm:$0xff] %vm2568, %v2544
  %2595 = vst.msk [vmem:[#allocation2 + $0x104] sm:$0xff] %vm2568, %v2545
  %2596 = vst.msk [vmem:[#allocation2 + $0x10c] sm:$0xff] %vm2568, %v2546
  %2597 = vst.msk [vmem:[#allocation2 + $0x11c] sm:$0xff] %vm2568, %v2547
  %2598 = vst.msk [vmem:[#allocation2 + $0x124] sm:$0xff] %vm2568, %v2548
  %2599 = vst.msk [vmem:[#allocation2 + $0x12c] sm:$0xff] %vm2568, %v2549
  %2600 = vst.msk [vmem:[#allocation2 + $0x134] sm:$0xff] %vm2568, %v2550
  %v2601 = vld [vmem:[#allocation2] sm:$0xff]
  %v2602 = vld [vmem:[#allocation2 + $0x8] sm:$0xff]
  %v2603 = vld [vmem:[#allocation2 + $0x10] sm:$0xff]
  %v2604 = vld [vmem:[#allocation2 + $0x18] sm:$0xff]
  %v2605 = vld [vmem:[#allocation2 + $0x28] sm:$0xff]
  %v2606 = vld [vmem:[#allocation2 + $0x30] sm:$0xff]
  %v2607 = vld [vmem:[#allocation2 + $0x38] sm:$0xff]
  %v2608 = vld [vmem:[#allocation2 + $0x40] sm:$0xff]
  %v2609 = vld [vmem:[#allocation2 + $0x50] sm:$0xff]
  %v2610 = vld [vmem:[#allocation2 + $0x58] sm:$0xff]
  %v2611 = vld [vmem:[#allocation2 + $0x60] sm:$0xff]
  %v2612 = vld [vmem:[#allocation2 + $0x68] sm:$0xff]
  %v2613 = vld [vmem:[#allocation2 + $0x78] sm:$0xff]
  %v2614 = vld [vmem:[#allocation2 + $0x80] sm:$0xff]
  %v2615 = vld [vmem:[#allocation2 + $0x88] sm:$0xff]
  %v2616 = vld [vmem:[#allocation2 + $0x90] sm:$0xff]
  %v2617 = vld [vmem:[#allocation2 + $0xa0] sm:$0xff]
  %v2618 = vld [vmem:[#allocation2 + $0xa8] sm:$0xff]
  %v2619 = vld [vmem:[#allocation2 + $0xb0] sm:$0xff]
  %v2620 = vld [vmem:[#allocation2 + $0xb8] sm:$0xff]
  %v2621 = vld [vmem:[#allocation2 + $0xc8] sm:$0xff]
  %v2622 = vld [vmem:[#allocation2 + $0xd0] sm:$0xff]
  %v2623 = vld [vmem:[#allocation2 + $0xd8] sm:$0xff]
  %v2624 = vld [vmem:[#allocation2 + $0xe0] sm:$0xff]
  %v2625 = vld [vmem:[#allocation2 + $0xf0] sm:$0xff]
  %v2626 = vld [vmem:[#allocation2 + $0xf8] sm:$0xff]
  %v2627 = vld [vmem:[#allocation2 + $0x100] sm:$0xff]
  %v2628 = vld [vmem:[#allocation2 + $0x108] sm:$0xff]
  %v2629 = vld [vmem:[#allocation2 + $0x118] sm:$0xff]
  %v2630 = vld [vmem:[#allocation2 + $0x120] sm:$0xff]
  %v2631 = vld [vmem:[#allocation2 + $0x128] sm:$0xff]
  %v2632 = vld [vmem:[#allocation2 + $0x130] sm:$0xff]
  %v2633 = vpack.c.bf16 %v2602, %v2601
  %v2634 = vpack.c.bf16 %v2604, %v2603
  %v2635 = vpack.c.bf16 %v2606, %v2605
  %v2636 = vpack.c.bf16 %v2608, %v2607
  %v2637 = vpack.c.bf16 %v2610, %v2609
  %v2638 = vpack.c.bf16 %v2612, %v2611
  %v2639 = vpack.c.bf16 %v2614, %v2613
  %v2640 = vpack.c.bf16 %v2616, %v2615
  %v2641 = vpack.c.bf16 %v2618, %v2617
  %v2642 = vpack.c.bf16 %v2620, %v2619
  %v2643 = vpack.c.bf16 %v2622, %v2621
  %v2644 = vpack.c.bf16 %v2624, %v2623
  %v2645 = vpack.c.bf16 %v2626, %v2625
  %v2646 = vpack.c.bf16 %v2628, %v2627
  %v2647 = vpack.c.bf16 %v2630, %v2629
  %v2648 = vpack.c.bf16 %v2632, %v2631
  %2649 = vst.msk [vmem:[#allocation4] sm:$0xff] %vm2568, %v2633
  %2650 = vst.msk [vmem:[#allocation4 + $0x28] sm:$0xff] %vm2568, %v2634
  %2651 = vst.msk [vmem:[#allocation4 + $0x50] sm:$0xff] %vm2568, %v2635
  %2652 = vst.msk [vmem:[#allocation4 + $0x78] sm:$0xff] %vm2568, %v2636
  %2653 = vst.msk [vmem:[#allocation4 + $0xa0] sm:$0xff] %vm2568, %v2637
  %2654 = vst.msk [vmem:[#allocation4 + $0xc8] sm:$0xff] %vm2568, %v2638
  %2655 = vst.msk [vmem:[#allocation4 + $0xf0] sm:$0xff] %vm2568, %v2639
  %2656 = vst.msk [vmem:[#allocation4 + $0x118] sm:$0xff] %vm2568, %v2640
  %2657 = vst.msk [vmem:[#allocation4 + $0x140] sm:$0xff] %vm2568, %v2641
  %2658 = vst.msk [vmem:[#allocation4 + $0x168] sm:$0xff] %vm2568, %v2642
  %2659 = vst.msk [vmem:[#allocation4 + $0x190] sm:$0xff] %vm2568, %v2643
  %2660 = vst.msk [vmem:[#allocation4 + $0x1b8] sm:$0xff] %vm2568, %v2644
  %2661 = vst.msk [vmem:[#allocation4 + $0x1e0] sm:$0xff] %vm2568, %v2645
  %2662 = vst.msk [vmem:[#allocation4 + $0x208] sm:$0xff] %vm2568, %v2646
  %2663 = vst.msk [vmem:[#allocation4 + $0x230] sm:$0xff] %vm2568, %v2647
  %2664 = vst.msk [vmem:[#allocation4 + $0x258] sm:$0xff] %vm2568, %v2648
  %v2665 = vld [vmem:[#allocation2 + $0x1] sm:$0xff]
  %v2666 = vld [vmem:[#allocation2 + $0x9] sm:$0xff]
  %v2667 = vld [vmem:[#allocation2 + $0x11] sm:$0xff]
  %v2668 = vld [vmem:[#allocation2 + $0x19] sm:$0xff]
  %v2669 = vld [vmem:[#allocation2 + $0x29] sm:$0xff]
  %v2670 = vld [vmem:[#allocation2 + $0x31] sm:$0xff]
  %v2671 = vld [vmem:[#allocation2 + $0x39] sm:$0xff]
  %v2672 = vld [vmem:[#allocation2 + $0x41] sm:$0xff]
  %v2673 = vld [vmem:[#allocation2 + $0x51] sm:$0xff]
  %v2674 = vld [vmem:[#allocation2 + $0x59] sm:$0xff]
  %v2675 = vld [vmem:[#allocation2 + $0x61] sm:$0xff]
  %v2676 = vld [vmem:[#allocation2 + $0x69] sm:$0xff]
  %v2677 = vld [vmem:[#allocation2 + $0x79] sm:$0xff]
  %v2678 = vld [vmem:[#allocation2 + $0x81] sm:$0xff]
  %v2679 = vld [vmem:[#allocation2 + $0x89] sm:$0xff]
  %v2680 = vld [vmem:[#allocation2 + $0x91] sm:$0xff]
  %v2681 = vld [vmem:[#allocation2 + $0xa1] sm:$0xff]
  %v2682 = vld [vmem:[#allocation2 + $0xa9] sm:$0xff]
  %v2683 = vld [vmem:[#allocation2 + $0xb1] sm:$0xff]
  %v2684 = vld [vmem:[#allocation2 + $0xb9] sm:$0xff]
  %v2685 = vld [vmem:[#allocation2 + $0xc9] sm:$0xff]
  %v2686 = vld [vmem:[#allocation2 + $0xd1] sm:$0xff]
  %v2687 = vld [vmem:[#allocation2 + $0xd9] sm:$0xff]
  %v2688 = vld [vmem:[#allocation2 + $0xe1] sm:$0xff]
  %v2689 = vld [vmem:[#allocation2 + $0xf1] sm:$0xff]
  %v2690 = vld [vmem:[#allocation2 + $0xf9] sm:$0xff]
  %v2691 = vld [vmem:[#allocation2 + $0x101] sm:$0xff]
  %v2692 = vld [vmem:[#allocation2 + $0x109] sm:$0xff]
  %v2693 = vld [vmem:[#allocation2 + $0x119] sm:$0xff]
  %v2694 = vld [vmem:[#allocation2 + $0x121] sm:$0xff]
  %v2695 = vld [vmem:[#allocation2 + $0x129] sm:$0xff]
  %v2696 = vld [vmem:[#allocation2 + $0x131] sm:$0xff]
  %v2697 = vpack.c.bf16 %v2666, %v2665
  %v2698 = vpack.c.bf16 %v2668, %v2667
  %v2699 = vpack.c.bf16 %v2670, %v2669
  %v2700 = vpack.c.bf16 %v2672, %v2671
  %v2701 = vpack.c.bf16 %v2674, %v2673
  %v2702 = vpack.c.bf16 %v2676, %v2675
  %v2703 = vpack.c.bf16 %v2678, %v2677
  %v2704 = vpack.c.bf16 %v2680, %v2679
  %v2705 = vpack.c.bf16 %v2682, %v2681
  %v2706 = vpack.c.bf16 %v2684, %v2683
  %v2707 = vpack.c.bf16 %v2686, %v2685
  %v2708 = vpack.c.bf16 %v2688, %v2687
  %v2709 = vpack.c.bf16 %v2690, %v2689
  %v2710 = vpack.c.bf16 %v2692, %v2691
  %v2711 = vpack.c.bf16 %v2694, %v2693
  %v2712 = vpack.c.bf16 %v2696, %v2695
  %2729 = vrot.lane.b32.xlu0 %v2697, 64
  %v2730 = vpop.permute.xlu0 %2729
  %2731 = vrot.lane.b32.xlu0 %v2698, 64
  %v2732 = vpop.permute.xlu0 %2731
  %2733 = vrot.lane.b32.xlu0 %v2699, 64
  %v2734 = vpop.permute.xlu0 %2733
  %2735 = vrot.lane.b32.xlu0 %v2700, 64
  %v2736 = vpop.permute.xlu0 %2735
  %2737 = vrot.lane.b32.xlu0 %v2701, 64
  %v2738 = vpop.permute.xlu0 %2737
  %2739 = vrot.lane.b32.xlu0 %v2702, 64
  %v2740 = vpop.permute.xlu0 %2739
  %2741 = vrot.lane.b32.xlu0 %v2703, 64
  %v2742 = vpop.permute.xlu0 %2741
  %2743 = vrot.lane.b32.xlu0 %v2704, 64
  %v2744 = vpop.permute.xlu0 %2743
  %2745 = vrot.lane.b32.xlu0 %v2705, 64
  %v2746 = vpop.permute.xlu0 %2745
  %2747 = vrot.lane.b32.xlu0 %v2706, 64
  %v2748 = vpop.permute.xlu0 %2747
  %2749 = vrot.lane.b32.xlu0 %v2707, 64
  %v2750 = vpop.permute.xlu0 %2749
  %2751 = vrot.lane.b32.xlu0 %v2708, 64
  %v2752 = vpop.permute.xlu0 %2751
  %2753 = vrot.lane.b32.xlu0 %v2709, 64
  %v2754 = vpop.permute.xlu0 %2753
  %2755 = vrot.lane.b32.xlu0 %v2710, 64
  %v2756 = vpop.permute.xlu0 %2755
  %2757 = vrot.lane.b32.xlu0 %v2711, 64
  %v2758 = vpop.permute.xlu0 %2757
  %2759 = vrot.lane.b32.xlu0 %v2712, 64
  %v2760 = vpop.permute.xlu0 %2759
  %vm2777 = vcmask 1048064
  %2778 = vst.msk [vmem:[#allocation4] sm:$0xff] %vm2777, %v2730
  %2779 = vst.msk [vmem:[#allocation4 + $0x28] sm:$0xff] %vm2777, %v2732
  %2780 = vst.msk [vmem:[#allocation4 + $0x50] sm:$0xff] %vm2777, %v2734
  %2781 = vst.msk [vmem:[#allocation4 + $0x78] sm:$0xff] %vm2777, %v2736
  %2782 = vst.msk [vmem:[#allocation4 + $0xa0] sm:$0xff] %vm2777, %v2738
  %2783 = vst.msk [vmem:[#allocation4 + $0xc8] sm:$0xff] %vm2777, %v2740
  %2784 = vst.msk [vmem:[#allocation4 + $0xf0] sm:$0xff] %vm2777, %v2742
  %2785 = vst.msk [vmem:[#allocation4 + $0x118] sm:$0xff] %vm2777, %v2744
  %2786 = vst.msk [vmem:[#allocation4 + $0x140] sm:$0xff] %vm2777, %v2746
  %2787 = vst.msk [vmem:[#allocation4 + $0x168] sm:$0xff] %vm2777, %v2748
  %2788 = vst.msk [vmem:[#allocation4 + $0x190] sm:$0xff] %vm2777, %v2750
  %2789 = vst.msk [vmem:[#allocation4 + $0x1b8] sm:$0xff] %vm2777, %v2752
  %2790 = vst.msk [vmem:[#allocation4 + $0x1e0] sm:$0xff] %vm2777, %v2754
  %2791 = vst.msk [vmem:[#allocation4 + $0x208] sm:$0xff] %vm2777, %v2756
  %2792 = vst.msk [vmem:[#allocation4 + $0x230] sm:$0xff] %vm2777, %v2758
  %2793 = vst.msk [vmem:[#allocation4 + $0x258] sm:$0xff] %vm2777, %v2760
  %v2794 = vld [vmem:[#allocation2 + $0x2] sm:$0xff]
  %v2795 = vld [vmem:[#allocation2 + $0xa] sm:$0xff]
  %v2796 = vld [vmem:[#allocation2 + $0x12] sm:$0xff]
  %v2797 = vld [vmem:[#allocation2 + $0x1a] sm:$0xff]
  %v2798 = vld [vmem:[#allocation2 + $0x2a] sm:$0xff]
  %v2799 = vld [vmem:[#allocation2 + $0x32] sm:$0xff]
  %v2800 = vld [vmem:[#allocation2 + $0x3a] sm:$0xff]
  %v2801 = vld [vmem:[#allocation2 + $0x42] sm:$0xff]
  %v2802 = vld [vmem:[#allocation2 + $0x52] sm:$0xff]
  %v2803 = vld [vmem:[#allocation2 + $0x5a] sm:$0xff]
  %v2804 = vld [vmem:[#allocation2 + $0x62] sm:$0xff]
  %v2805 = vld [vmem:[#allocation2 + $0x6a] sm:$0xff]
  %v2806 = vld [vmem:[#allocation2 + $0x7a] sm:$0xff]
  %v2807 = vld [vmem:[#allocation2 + $0x82] sm:$0xff]
  %v2808 = vld [vmem:[#allocation2 + $0x8a] sm:$0xff]
  %v2809 = vld [vmem:[#allocation2 + $0x92] sm:$0xff]
  %v2810 = vld [vmem:[#allocation2 + $0xa2] sm:$0xff]
  %v2811 = vld [vmem:[#allocation2 + $0xaa] sm:$0xff]
  %v2812 = vld [vmem:[#allocation2 + $0xb2] sm:$0xff]
  %v2813 = vld [vmem:[#allocation2 + $0xba] sm:$0xff]
  %v2814 = vld [vmem:[#allocation2 + $0xca] sm:$0xff]
  %v2815 = vld [vmem:[#allocation2 + $0xd2] sm:$0xff]
  %v2816 = vld [vmem:[#allocation2 + $0xda] sm:$0xff]
  %v2817 = vld [vmem:[#allocation2 + $0xe2] sm:$0xff]
  %v2818 = vld [vmem:[#allocation2 + $0xf2] sm:$0xff]
  %v2819 = vld [vmem:[#allocation2 + $0xfa] sm:$0xff]
  %v2820 = vld [vmem:[#allocation2 + $0x102] sm:$0xff]
  %v2821 = vld [vmem:[#allocation2 + $0x10a] sm:$0xff]
  %v2822 = vld [vmem:[#allocation2 + $0x11a] sm:$0xff]
  %v2823 = vld [vmem:[#allocation2 + $0x122] sm:$0xff]
  %v2824 = vld [vmem:[#allocation2 + $0x12a] sm:$0xff]
  %v2825 = vld [vmem:[#allocation2 + $0x132] sm:$0xff]
  %v2826 = vpack.c.bf16 %v2795, %v2794
  %v2827 = vpack.c.bf16 %v2797, %v2796
  %v2828 = vpack.c.bf16 %v2799, %v2798
  %v2829 = vpack.c.bf16 %v2801, %v2800
  %v2830 = vpack.c.bf16 %v2803, %v2802
  %v2831 = vpack.c.bf16 %v2805, %v2804
  %v2832 = vpack.c.bf16 %v2807, %v2806
  %v2833 = vpack.c.bf16 %v2809, %v2808
  %v2834 = vpack.c.bf16 %v2811, %v2810
  %v2835 = vpack.c.bf16 %v2813, %v2812
  %v2836 = vpack.c.bf16 %v2815, %v2814
  %v2837 = vpack.c.bf16 %v2817, %v2816
  %v2838 = vpack.c.bf16 %v2819, %v2818
  %v2839 = vpack.c.bf16 %v2821, %v2820
  %v2840 = vpack.c.bf16 %v2823, %v2822
  %v2841 = vpack.c.bf16 %v2825, %v2824
  %2842 = vst.msk [vmem:[#allocation4 + $0x8] sm:$0xff] %vm2568, %v2826
  %2843 = vst.msk [vmem:[#allocation4 + $0x30] sm:$0xff] %vm2568, %v2827
  %2844 = vst.msk [vmem:[#allocation4 + $0x58] sm:$0xff] %vm2568, %v2828
  %2845 = vst.msk [vmem:[#allocation4 + $0x80] sm:$0xff] %vm2568, %v2829
  %2846 = vst.msk [vmem:[#allocation4 + $0xa8] sm:$0xff] %vm2568, %v2830
  %2847 = vst.msk [vmem:[#allocation4 + $0xd0] sm:$0xff] %vm2568, %v2831
  %2848 = vst.msk [vmem:[#allocation4 + $0xf8] sm:$0xff] %vm2568, %v2832
  %2849 = vst.msk [vmem:[#allocation4 + $0x120] sm:$0xff] %vm2568, %v2833
  %2850 = vst.msk [vmem:[#allocation4 + $0x148] sm:$0xff] %vm2568, %v2834
  %2851 = vst.msk [vmem:[#allocation4 + $0x170] sm:$0xff] %vm2568, %v2835
  %2852 = vst.msk [vmem:[#allocation4 + $0x198] sm:$0xff] %vm2568, %v2836
  %2853 = vst.msk [vmem:[#allocation4 + $0x1c0] sm:$0xff] %vm2568, %v2837
  %2854 = vst.msk [vmem:[#allocation4 + $0x1e8] sm:$0xff] %vm2568, %v2838
  %2855 = vst.msk [vmem:[#allocation4 + $0x210] sm:$0xff] %vm2568, %v2839
  %2856 = vst.msk [vmem:[#allocation4 + $0x238] sm:$0xff] %vm2568, %v2840
  %2857 = vst.msk [vmem:[#allocation4 + $0x260] sm:$0xff] %vm2568, %v2841
  %v2858 = vld [vmem:[#allocation2 + $0x3] sm:$0xff]
  %v2859 = vld [vmem:[#allocation2 + $0xb] sm:$0xff]
  %v2860 = vld [vmem:[#allocation2 + $0x13] sm:$0xff]
  %v2861 = vld [vmem:[#allocation2 + $0x1b] sm:$0xff]
  %v2862 = vld [vmem:[#allocation2 + $0x2b] sm:$0xff]
  %v2863 = vld [vmem:[#allocation2 + $0x33] sm:$0xff]
  %v2864 = vld [vmem:[#allocation2 + $0x3b] sm:$0xff]
  %v2865 = vld [vmem:[#allocation2 + $0x43] sm:$0xff]
  %v2866 = vld [vmem:[#allocation2 + $0x53] sm:$0xff]
  %v2867 = vld [vmem:[#allocation2 + $0x5b] sm:$0xff]
  %v2868 = vld [vmem:[#allocation2 + $0x63] sm:$0xff]
  %v2869 = vld [vmem:[#allocation2 + $0x6b] sm:$0xff]
  %v2870 = vld [vmem:[#allocation2 + $0x7b] sm:$0xff]
  %v2871 = vld [vmem:[#allocation2 + $0x83] sm:$0xff]
  %v2872 = vld [vmem:[#allocation2 + $0x8b] sm:$0xff]
  %v2873 = vld [vmem:[#allocation2 + $0x93] sm:$0xff]
  %v2874 = vld [vmem:[#allocation2 + $0xa3] sm:$0xff]
  %v2875 = vld [vmem:[#allocation2 + $0xab] sm:$0xff]
  %v2876 = vld [vmem:[#allocation2 + $0xb3] sm:$0xff]
  %v2877 = vld [vmem:[#allocation2 + $0xbb] sm:$0xff]
  %v2878 = vld [vmem:[#allocation2 + $0xcb] sm:$0xff]
  %v2879 = vld [vmem:[#allocation2 + $0xd3] sm:$0xff]
  %v2880 = vld [vmem:[#allocation2 + $0xdb] sm:$0xff]
  %v2881 = vld [vmem:[#allocation2 + $0xe3] sm:$0xff]
  %v2882 = vld [vmem:[#allocation2 + $0xf3] sm:$0xff]
  %v2883 = vld [vmem:[#allocation2 + $0xfb] sm:$0xff]
  %v2884 = vld [vmem:[#allocation2 + $0x103] sm:$0xff]
  %v2885 = vld [vmem:[#allocation2 + $0x10b] sm:$0xff]
  %v2886 = vld [vmem:[#allocation2 + $0x11b] sm:$0xff]
  %v2887 = vld [vmem:[#allocation2 + $0x123] sm:$0xff]
  %v2888 = vld [vmem:[#allocation2 + $0x12b] sm:$0xff]
  %v2889 = vld [vmem:[#allocation2 + $0x133] sm:$0xff]
  %v2890 = vpack.c.bf16 %v2859, %v2858
  %v2891 = vpack.c.bf16 %v2861, %v2860
  %v2892 = vpack.c.bf16 %v2863, %v2862
  %v2893 = vpack.c.bf16 %v2865, %v2864
  %v2894 = vpack.c.bf16 %v2867, %v2866
  %v2895 = vpack.c.bf16 %v2869, %v2868
  %v2896 = vpack.c.bf16 %v2871, %v2870
  %v2897 = vpack.c.bf16 %v2873, %v2872
  %v2898 = vpack.c.bf16 %v2875, %v2874
  %v2899 = vpack.c.bf16 %v2877, %v2876
  %v2900 = vpack.c.bf16 %v2879, %v2878
  %v2901 = vpack.c.bf16 %v2881, %v2880
  %v2902 = vpack.c.bf16 %v2883, %v2882
  %v2903 = vpack.c.bf16 %v2885, %v2884
  %v2904 = vpack.c.bf16 %v2887, %v2886
  %v2905 = vpack.c.bf16 %v2889, %v2888
  %2922 = vrot.lane.b32.xlu0 %v2890, 64
  %v2923 = vpop.permute.xlu0 %2922
  %2924 = vrot.lane.b32.xlu0 %v2891, 64
  %v2925 = vpop.permute.xlu0 %2924
  %2926 = vrot.lane.b32.xlu0 %v2892, 64
  %v2927 = vpop.permute.xlu0 %2926
  %2928 = vrot.lane.b32.xlu0 %v2893, 64
  %v2929 = vpop.permute.xlu0 %2928
  %2930 = vrot.lane.b32.xlu0 %v2894, 64
  %v2931 = vpop.permute.xlu0 %2930
  %2932 = vrot.lane.b32.xlu0 %v2895, 64
  %v2933 = vpop.permute.xlu0 %2932
  %2934 = vrot.lane.b32.xlu0 %v2896, 64
  %v2935 = vpop.permute.xlu0 %2934
  %2936 = vrot.lane.b32.xlu0 %v2897, 64
  %v2937 = vpop.permute.xlu0 %2936
  %2938 = vrot.lane.b32.xlu0 %v2898, 64
  %v2939 = vpop.permute.xlu0 %2938
  %2940 = vrot.lane.b32.xlu0 %v2899, 64
  %v2941 = vpop.permute.xlu0 %2940
  %2942 = vrot.lane.b32.xlu0 %v2900, 64
  %v2943 = vpop.permute.xlu0 %2942
  %2944 = vrot.lane.b32.xlu0 %v2901, 64
  %v2945 = vpop.permute.xlu0 %2944
  %2946 = vrot.lane.b32.xlu0 %v2902, 64
  %v2947 = vpop.permute.xlu0 %2946
  %2948 = vrot.lane.b32.xlu0 %v2903, 64
  %v2949 = vpop.permute.xlu0 %2948
  %2950 = vrot.lane.b32.xlu0 %v2904, 64
  %v2951 = vpop.permute.xlu0 %2950
  %2952 = vrot.lane.b32.xlu0 %v2905, 64
  %v2953 = vpop.permute.xlu0 %2952
  %2970 = vst.msk [vmem:[#allocation4 + $0x8] sm:$0xff] %vm2777, %v2923
  %2971 = vst.msk [vmem:[#allocation4 + $0x30] sm:$0xff] %vm2777, %v2925
  %2972 = vst.msk [vmem:[#allocation4 + $0x58] sm:$0xff] %vm2777, %v2927
  %2973 = vst.msk [vmem:[#allocation4 + $0x80] sm:$0xff] %vm2777, %v2929
  %2974 = vst.msk [vmem:[#allocation4 + $0xa8] sm:$0xff] %vm2777, %v2931
  %2975 = vst.msk [vmem:[#allocation4 + $0xd0] sm:$0xff] %vm2777, %v2933
  %2976 = vst.msk [vmem:[#allocation4 + $0xf8] sm:$0xff] %vm2777, %v2935
  %2977 = vst.msk [vmem:[#allocation4 + $0x120] sm:$0xff] %vm2777, %v2937
  %2978 = vst.msk [vmem:[#allocation4 + $0x148] sm:$0xff] %vm2777, %v2939
  %2979 = vst.msk [vmem:[#allocation4 + $0x170] sm:$0xff] %vm2777, %v2941
  %2980 = vst.msk [vmem:[#allocation4 + $0x198] sm:$0xff] %vm2777, %v2943
  %2981 = vst.msk [vmem:[#allocation4 + $0x1c0] sm:$0xff] %vm2777, %v2945
  %2982 = vst.msk [vmem:[#allocation4 + $0x1e8] sm:$0xff] %vm2777, %v2947
  %2983 = vst.msk [vmem:[#allocation4 + $0x210] sm:$0xff] %vm2777, %v2949
  %2984 = vst.msk [vmem:[#allocation4 + $0x238] sm:$0xff] %vm2777, %v2951
  %2985 = vst.msk [vmem:[#allocation4 + $0x260] sm:$0xff] %vm2777, %v2953
  %v2986 = vld [vmem:[#allocation2 + $0x4] sm:$0xff]
  %v2987 = vld [vmem:[#allocation2 + $0xc] sm:$0xff]
  %v2988 = vld [vmem:[#allocation2 + $0x14] sm:$0xff]
  %v2989 = vld [vmem:[#allocation2 + $0x1c] sm:$0xff]
  %v2990 = vld [vmem:[#allocation2 + $0x2c] sm:$0xff]
  %v2991 = vld [vmem:[#allocation2 + $0x34] sm:$0xff]
  %v2992 = vld [vmem:[#allocation2 + $0x3c] sm:$0xff]
  %v2993 = vld [vmem:[#allocation2 + $0x44] sm:$0xff]
  %v2994 = vld [vmem:[#allocation2 + $0x54] sm:$0xff]
  %v2995 = vld [vmem:[#allocation2 + $0x5c] sm:$0xff]
  %v2996 = vld [vmem:[#allocation2 + $0x64] sm:$0xff]
  %v2997 = vld [vmem:[#allocation2 + $0x6c] sm:$0xff]
  %v2998 = vld [vmem:[#allocation2 + $0x7c] sm:$0xff]
  %v2999 = vld [vmem:[#allocation2 + $0x84] sm:$0xff]
  %v3000 = vld [vmem:[#allocation2 + $0x8c] sm:$0xff]
  %v3001 = vld [vmem:[#allocation2 + $0x94] sm:$0xff]
  %v3002 = vld [vmem:[#allocation2 + $0xa4] sm:$0xff]
  %v3003 = vld [vmem:[#allocation2 + $0xac] sm:$0xff]
  %v3004 = vld [vmem:[#allocation2 + $0xb4] sm:$0xff]
  %v3005 = vld [vmem:[#allocation2 + $0xbc] sm:$0xff]
  %v3006 = vld [vmem:[#allocation2 + $0xcc] sm:$0xff]
  %v3007 = vld [vmem:[#allocation2 + $0xd4] sm:$0xff]
  %v3008 = vld [vmem:[#allocation2 + $0xdc] sm:$0xff]
  %v3009 = vld [vmem:[#allocation2 + $0xe4] sm:$0xff]
  %v3010 = vld [vmem:[#allocation2 + $0xf4] sm:$0xff]
  %v3011 = vld [vmem:[#allocation2 + $0xfc] sm:$0xff]
  %v3012 = vld [vmem:[#allocation2 + $0x104] sm:$0xff]
  %v3013 = vld [vmem:[#allocation2 + $0x10c] sm:$0xff]
  %v3014 = vld [vmem:[#allocation2 + $0x11c] sm:$0xff]
  %v3015 = vld [vmem:[#allocation2 + $0x124] sm:$0xff]
  %v3016 = vld [vmem:[#allocation2 + $0x12c] sm:$0xff]
  %v3017 = vld [vmem:[#allocation2 + $0x134] sm:$0xff]
  %v3018 = vpack.c.bf16 %v2987, %v2986
  %v3019 = vpack.c.bf16 %v2989, %v2988
  %v3020 = vpack.c.bf16 %v2991, %v2990
  %v3021 = vpack.c.bf16 %v2993, %v2992
  %v3022 = vpack.c.bf16 %v2995, %v2994
  %v3023 = vpack.c.bf16 %v2997, %v2996
  %v3024 = vpack.c.bf16 %v2999, %v2998
  %v3025 = vpack.c.bf16 %v3001, %v3000
  %v3026 = vpack.c.bf16 %v3003, %v3002
  %v3027 = vpack.c.bf16 %v3005, %v3004
  %v3028 = vpack.c.bf16 %v3007, %v3006
  %v3029 = vpack.c.bf16 %v3009, %v3008
  %v3030 = vpack.c.bf16 %v3011, %v3010
  %v3031 = vpack.c.bf16 %v3013, %v3012
  %v3032 = vpack.c.bf16 %v3015, %v3014
  %v3033 = vpack.c.bf16 %v3017, %v3016
  %3034 = vst.msk [vmem:[#allocation4 + $0x10] sm:$0xff] %vm2568, %v3018
  %3035 = vst.msk [vmem:[#allocation4 + $0x38] sm:$0xff] %vm2568, %v3019
  %3036 = vst.msk [vmem:[#allocation4 + $0x60] sm:$0xff] %vm2568, %v3020
  %3037 = vst.msk [vmem:[#allocation4 + $0x88] sm:$0xff] %vm2568, %v3021
  %3038 = vst.msk [vmem:[#allocation4 + $0xb0] sm:$0xff] %vm2568, %v3022
  %3039 = vst.msk [vmem:[#allocation4 + $0xd8] sm:$0xff] %vm2568, %v3023
  %3040 = vst.msk [vmem:[#allocation4 + $0x100] sm:$0xff] %vm2568, %v3024
  %3041 = vst.msk [vmem:[#allocation4 + $0x128] sm:$0xff] %vm2568, %v3025
  %3042 = vst.msk [vmem:[#allocation4 + $0x150] sm:$0xff] %vm2568, %v3026
  %3043 = vst.msk [vmem:[#allocation4 + $0x178] sm:$0xff] %vm2568, %v3027
  %3044 = vst.msk [vmem:[#allocation4 + $0x1a0] sm:$0xff] %vm2568, %v3028
  %3045 = vst.msk [vmem:[#allocation4 + $0x1c8] sm:$0xff] %vm2568, %v3029
  %3046 = vst.msk [vmem:[#allocation4 + $0x1f0] sm:$0xff] %vm2568, %v3030
  %3047 = vst.msk [vmem:[#allocation4 + $0x218] sm:$0xff] %vm2568, %v3031
  %3048 = vst.msk [vmem:[#allocation4 + $0x240] sm:$0xff] %vm2568, %v3032
  %3049 = vst.msk [vmem:[#allocation4 + $0x268] sm:$0xff] %vm2568, %v3033
  %v3050 = vld [vmem:[#allocation2 + $0x5] sm:$0xff]
  %v3051 = vld [vmem:[#allocation2 + $0xd] sm:$0xff]
  %v3052 = vld [vmem:[#allocation2 + $0x15] sm:$0xff]
  %v3053 = vld [vmem:[#allocation2 + $0x1d] sm:$0xff]
  %v3054 = vld [vmem:[#allocation2 + $0x2d] sm:$0xff]
  %v3055 = vld [vmem:[#allocation2 + $0x35] sm:$0xff]
  %v3056 = vld [vmem:[#allocation2 + $0x3d] sm:$0xff]
  %v3057 = vld [vmem:[#allocation2 + $0x45] sm:$0xff]
  %v3058 = vld [vmem:[#allocation2 + $0x55] sm:$0xff]
  %v3059 = vld [vmem:[#allocation2 + $0x5d] sm:$0xff]
  %v3060 = vld [vmem:[#allocation2 + $0x65] sm:$0xff]
  %v3061 = vld [vmem:[#allocation2 + $0x6d] sm:$0xff]
  %v3062 = vld [vmem:[#allocation2 + $0x7d] sm:$0xff]
  %v3063 = vld [vmem:[#allocation2 + $0x85] sm:$0xff]
  %v3064 = vld [vmem:[#allocation2 + $0x8d] sm:$0xff]
  %v3065 = vld [vmem:[#allocation2 + $0x95] sm:$0xff]
  %v3066 = vld [vmem:[#allocation2 + $0xa5] sm:$0xff]
  %v3067 = vld [vmem:[#allocation2 + $0xad] sm:$0xff]
  %v3068 = vld [vmem:[#allocation2 + $0xb5] sm:$0xff]
  %v3069 = vld [vmem:[#allocation2 + $0xbd] sm:$0xff]
  %v3070 = vld [vmem:[#allocation2 + $0xcd] sm:$0xff]
  %v3071 = vld [vmem:[#allocation2 + $0xd5] sm:$0xff]
  %v3072 = vld [vmem:[#allocation2 + $0xdd] sm:$0xff]
  %v3073 = vld [vmem:[#allocation2 + $0xe5] sm:$0xff]
  %v3074 = vld [vmem:[#allocation2 + $0xf5] sm:$0xff]
  %v3075 = vld [vmem:[#allocation2 + $0xfd] sm:$0xff]
  %v3076 = vld [vmem:[#allocation2 + $0x105] sm:$0xff]
  %v3077 = vld [vmem:[#allocation2 + $0x10d] sm:$0xff]
  %v3078 = vld [vmem:[#allocation2 + $0x11d] sm:$0xff]
  %v3079 = vld [vmem:[#allocation2 + $0x125] sm:$0xff]
  %v3080 = vld [vmem:[#allocation2 + $0x12d] sm:$0xff]
  %v3081 = vld [vmem:[#allocation2 + $0x135] sm:$0xff]
  %v3082 = vpack.c.bf16 %v3051, %v3050
  %v3083 = vpack.c.bf16 %v3053, %v3052
  %v3084 = vpack.c.bf16 %v3055, %v3054
  %v3085 = vpack.c.bf16 %v3057, %v3056
  %v3086 = vpack.c.bf16 %v3059, %v3058
  %v3087 = vpack.c.bf16 %v3061, %v3060
  %v3088 = vpack.c.bf16 %v3063, %v3062
  %v3089 = vpack.c.bf16 %v3065, %v3064
  %v3090 = vpack.c.bf16 %v3067, %v3066
  %v3091 = vpack.c.bf16 %v3069, %v3068
  %v3092 = vpack.c.bf16 %v3071, %v3070
  %v3093 = vpack.c.bf16 %v3073, %v3072
  %v3094 = vpack.c.bf16 %v3075, %v3074
  %v3095 = vpack.c.bf16 %v3077, %v3076
  %v3096 = vpack.c.bf16 %v3079, %v3078
  %v3097 = vpack.c.bf16 %v3081, %v3080
  %3114 = vrot.lane.b32.xlu0 %v3082, 64
  %v3115 = vpop.permute.xlu0 %3114
  %3116 = vrot.lane.b32.xlu0 %v3083, 64
  %v3117 = vpop.permute.xlu0 %3116
  %3118 = vrot.lane.b32.xlu0 %v3084, 64
  %v3119 = vpop.permute.xlu0 %3118
  %3120 = vrot.lane.b32.xlu0 %v3085, 64
  %v3121 = vpop.permute.xlu0 %3120
  %3122 = vrot.lane.b32.xlu0 %v3086, 64
  %v3123 = vpop.permute.xlu0 %3122
  %3124 = vrot.lane.b32.xlu0 %v3087, 64
  %v3125 = vpop.permute.xlu0 %3124
  %3126 = vrot.lane.b32.xlu0 %v3088, 64
  %v3127 = vpop.permute.xlu0 %3126
  %3128 = vrot.lane.b32.xlu0 %v3089, 64
  %v3129 = vpop.permute.xlu0 %3128
  %3130 = vrot.lane.b32.xlu0 %v3090, 64
  %v3131 = vpop.permute.xlu0 %3130
  %3132 = vrot.lane.b32.xlu0 %v3091, 64
  %v3133 = vpop.permute.xlu0 %3132
  %3134 = vrot.lane.b32.xlu0 %v3092, 64
  %v3135 = vpop.permute.xlu0 %3134
  %3136 = vrot.lane.b32.xlu0 %v3093, 64
  %v3137 = vpop.permute.xlu0 %3136
  %3138 = vrot.lane.b32.xlu0 %v3094, 64
  %v3139 = vpop.permute.xlu0 %3138
  %3140 = vrot.lane.b32.xlu0 %v3095, 64
  %v3141 = vpop.permute.xlu0 %3140
  %3142 = vrot.lane.b32.xlu0 %v3096, 64
  %v3143 = vpop.permute.xlu0 %3142
  %3144 = vrot.lane.b32.xlu0 %v3097, 64
  %v3145 = vpop.permute.xlu0 %3144
  %3162 = vst.msk [vmem:[#allocation4 + $0x10] sm:$0xff] %vm2777, %v3115
  %3163 = vst.msk [vmem:[#allocation4 + $0x38] sm:$0xff] %vm2777, %v3117
  %3164 = vst.msk [vmem:[#allocation4 + $0x60] sm:$0xff] %vm2777, %v3119
  %3165 = vst.msk [vmem:[#allocation4 + $0x88] sm:$0xff] %vm2777, %v3121
  %3166 = vst.msk [vmem:[#allocation4 + $0xb0] sm:$0xff] %vm2777, %v3123
  %3167 = vst.msk [vmem:[#allocation4 + $0xd8] sm:$0xff] %vm2777, %v3125
  %3168 = vst.msk [vmem:[#allocation4 + $0x100] sm:$0xff] %vm2777, %v3127
  %3169 = vst.msk [vmem:[#allocation4 + $0x128] sm:$0xff] %vm2777, %v3129
  %3170 = vst.msk [vmem:[#allocation4 + $0x150] sm:$0xff] %vm2777, %v3131
  %3171 = vst.msk [vmem:[#allocation4 + $0x178] sm:$0xff] %vm2777, %v3133
  %3172 = vst.msk [vmem:[#allocation4 + $0x1a0] sm:$0xff] %vm2777, %v3135
  %3173 = vst.msk [vmem:[#allocation4 + $0x1c8] sm:$0xff] %vm2777, %v3137
  %3174 = vst.msk [vmem:[#allocation4 + $0x1f0] sm:$0xff] %vm2777, %v3139
  %3175 = vst.msk [vmem:[#allocation4 + $0x218] sm:$0xff] %vm2777, %v3141
  %3176 = vst.msk [vmem:[#allocation4 + $0x240] sm:$0xff] %vm2777, %v3143
  %3177 = vst.msk [vmem:[#allocation4 + $0x268] sm:$0xff] %vm2777, %v3145
  %v3178 = vld [vmem:[#allocation2 + $0x6] sm:$0xff]
  %v3179 = vld [vmem:[#allocation2 + $0xe] sm:$0xff]
  %v3180 = vld [vmem:[#allocation2 + $0x16] sm:$0xff]
  %v3181 = vld [vmem:[#allocation2 + $0x1e] sm:$0xff]
  %v3182 = vld [vmem:[#allocation2 + $0x2e] sm:$0xff]
  %v3183 = vld [vmem:[#allocation2 + $0x36] sm:$0xff]
  %v3184 = vld [vmem:[#allocation2 + $0x3e] sm:$0xff]
  %v3185 = vld [vmem:[#allocation2 + $0x46] sm:$0xff]
  %v3186 = vld [vmem:[#allocation2 + $0x56] sm:$0xff]
  %v3187 = vld [vmem:[#allocation2 + $0x5e] sm:$0xff]
  %v3188 = vld [vmem:[#allocation2 + $0x66] sm:$0xff]
  %v3189 = vld [vmem:[#allocation2 + $0x6e] sm:$0xff]
  %v3190 = vld [vmem:[#allocation2 + $0x7e] sm:$0xff]
  %v3191 = vld [vmem:[#allocation2 + $0x86] sm:$0xff]
  %v3192 = vld [vmem:[#allocation2 + $0x8e] sm:$0xff]
  %v3193 = vld [vmem:[#allocation2 + $0x96] sm:$0xff]
  %v3194 = vld [vmem:[#allocation2 + $0xa6] sm:$0xff]
  %v3195 = vld [vmem:[#allocation2 + $0xae] sm:$0xff]
  %v3196 = vld [vmem:[#allocation2 + $0xb6] sm:$0xff]
  %v3197 = vld [vmem:[#allocation2 + $0xbe] sm:$0xff]
  %v3198 = vld [vmem:[#allocation2 + $0xce] sm:$0xff]
  %v3199 = vld [vmem:[#allocation2 + $0xd6] sm:$0xff]
  %v3200 = vld [vmem:[#allocation2 + $0xde] sm:$0xff]
  %v3201 = vld [vmem:[#allocation2 + $0xe6] sm:$0xff]
  %v3202 = vld [vmem:[#allocation2 + $0xf6] sm:$0xff]
  %v3203 = vld [vmem:[#allocation2 + $0xfe] sm:$0xff]
  %v3204 = vld [vmem:[#allocation2 + $0x106] sm:$0xff]
  %v3205 = vld [vmem:[#allocation2 + $0x10e] sm:$0xff]
  %v3206 = vld [vmem:[#allocation2 + $0x11e] sm:$0xff]
  %v3207 = vld [vmem:[#allocation2 + $0x126] sm:$0xff]
  %v3208 = vld [vmem:[#allocation2 + $0x12e] sm:$0xff]
  %v3209 = vld [vmem:[#allocation2 + $0x136] sm:$0xff]
  %v3210 = vpack.c.bf16 %v3179, %v3178
  %v3211 = vpack.c.bf16 %v3181, %v3180
  %v3212 = vpack.c.bf16 %v3183, %v3182
  %v3213 = vpack.c.bf16 %v3185, %v3184
  %v3214 = vpack.c.bf16 %v3187, %v3186
  %v3215 = vpack.c.bf16 %v3189, %v3188
  %v3216 = vpack.c.bf16 %v3191, %v3190
  %v3217 = vpack.c.bf16 %v3193, %v3192
  %v3218 = vpack.c.bf16 %v3195, %v3194
  %v3219 = vpack.c.bf16 %v3197, %v3196
  %v3220 = vpack.c.bf16 %v3199, %v3198
  %v3221 = vpack.c.bf16 %v3201, %v3200
  %v3222 = vpack.c.bf16 %v3203, %v3202
  %v3223 = vpack.c.bf16 %v3205, %v3204
  %v3224 = vpack.c.bf16 %v3207, %v3206
  %v3225 = vpack.c.bf16 %v3209, %v3208
  %3226 = vst.msk [vmem:[#allocation4 + $0x18] sm:$0xff] %vm2568, %v3210
  %3227 = vst.msk [vmem:[#allocation4 + $0x40] sm:$0xff] %vm2568, %v3211
  %3228 = vst.msk [vmem:[#allocation4 + $0x68] sm:$0xff] %vm2568, %v3212
  %3229 = vst.msk [vmem:[#allocation4 + $0x90] sm:$0xff] %vm2568, %v3213
  %3230 = vst.msk [vmem:[#allocation4 + $0xb8] sm:$0xff] %vm2568, %v3214
  %3231 = vst.msk [vmem:[#allocation4 + $0xe0] sm:$0xff] %vm2568, %v3215
  %3232 = vst.msk [vmem:[#allocation4 + $0x108] sm:$0xff] %vm2568, %v3216
  %3233 = vst.msk [vmem:[#allocation4 + $0x130] sm:$0xff] %vm2568, %v3217
  %3234 = vst.msk [vmem:[#allocation4 + $0x158] sm:$0xff] %vm2568, %v3218
  %3235 = vst.msk [vmem:[#allocation4 + $0x180] sm:$0xff] %vm2568, %v3219
  %3236 = vst.msk [vmem:[#allocation4 + $0x1a8] sm:$0xff] %vm2568, %v3220
  %3237 = vst.msk [vmem:[#allocation4 + $0x1d0] sm:$0xff] %vm2568, %v3221
  %3238 = vst.msk [vmem:[#allocation4 + $0x1f8] sm:$0xff] %vm2568, %v3222
  %3239 = vst.msk [vmem:[#allocation4 + $0x220] sm:$0xff] %vm2568, %v3223
  %3240 = vst.msk [vmem:[#allocation4 + $0x248] sm:$0xff] %vm2568, %v3224
  %3241 = vst.msk [vmem:[#allocation4 + $0x270] sm:$0xff] %vm2568, %v3225
  %v3242 = vld [vmem:[#allocation2 + $0x7] sm:$0xff]
  %v3243 = vld [vmem:[#allocation2 + $0xf] sm:$0xff]
  %v3244 = vld [vmem:[#allocation2 + $0x17] sm:$0xff]
  %v3245 = vld [vmem:[#allocation2 + $0x1f] sm:$0xff]
  %v3246 = vld [vmem:[#allocation2 + $0x2f] sm:$0xff]
  %v3247 = vld [vmem:[#allocation2 + $0x37] sm:$0xff]
  %v3248 = vld [vmem:[#allocation2 + $0x3f] sm:$0xff]
  %v3249 = vld [vmem:[#allocation2 + $0x47] sm:$0xff]
  %v3250 = vld [vmem:[#allocation2 + $0x57] sm:$0xff]
  %v3251 = vld [vmem:[#allocation2 + $0x5f] sm:$0xff]
  %v3252 = vld [vmem:[#allocation2 + $0x67] sm:$0xff]
  %v3253 = vld [vmem:[#allocation2 + $0x6f] sm:$0xff]
  %v3254 = vld [vmem:[#allocation2 + $0x7f] sm:$0xff]
  %v3255 = vld [vmem:[#allocation2 + $0x87] sm:$0xff]
  %v3256 = vld [vmem:[#allocation2 + $0x8f] sm:$0xff]
  %v3257 = vld [vmem:[#allocation2 + $0x97] sm:$0xff]
  %v3258 = vld [vmem:[#allocation2 + $0xa7] sm:$0xff]
  %v3259 = vld [vmem:[#allocation2 + $0xaf] sm:$0xff]
  %v3260 = vld [vmem:[#allocation2 + $0xb7] sm:$0xff]
  %v3261 = vld [vmem:[#allocation2 + $0xbf] sm:$0xff]
  %v3262 = vld [vmem:[#allocation2 + $0xcf] sm:$0xff]
  %v3263 = vld [vmem:[#allocation2 + $0xd7] sm:$0xff]
  %v3264 = vld [vmem:[#allocation2 + $0xdf] sm:$0xff]
  %v3265 = vld [vmem:[#allocation2 + $0xe7] sm:$0xff]
  %v3266 = vld [vmem:[#allocation2 + $0xf7] sm:$0xff]
  %v3267 = vld [vmem:[#allocation2 + $0xff] sm:$0xff]
  %v3268 = vld [vmem:[#allocation2 + $0x107] sm:$0xff]
  %v3269 = vld [vmem:[#allocation2 + $0x10f] sm:$0xff]
  %v3270 = vld [vmem:[#allocation2 + $0x11f] sm:$0xff]
  %v3271 = vld [vmem:[#allocation2 + $0x127] sm:$0xff]
  %v3272 = vld [vmem:[#allocation2 + $0x12f] sm:$0xff]
  %v3273 = vld [vmem:[#allocation2 + $0x137] sm:$0xff]
  %v3274 = vpack.c.bf16 %v3243, %v3242
  %v3275 = vpack.c.bf16 %v3245, %v3244
  %v3276 = vpack.c.bf16 %v3247, %v3246
  %v3277 = vpack.c.bf16 %v3249, %v3248
  %v3278 = vpack.c.bf16 %v3251, %v3250
  %v3279 = vpack.c.bf16 %v3253, %v3252
  %v3280 = vpack.c.bf16 %v3255, %v3254
  %v3281 = vpack.c.bf16 %v3257, %v3256
  %v3282 = vpack.c.bf16 %v3259, %v3258
  %v3283 = vpack.c.bf16 %v3261, %v3260
  %v3284 = vpack.c.bf16 %v3263, %v3262
  %v3285 = vpack.c.bf16 %v3265, %v3264
  %v3286 = vpack.c.bf16 %v3267, %v3266
  %v3287 = vpack.c.bf16 %v3269, %v3268
  %v3288 = vpack.c.bf16 %v3271, %v3270
  %v3289 = vpack.c.bf16 %v3273, %v3272
  %3306 = vrot.lane.b32.xlu0 %v3274, 64
  %v3307 = vpop.permute.xlu0 %3306
  %3308 = vrot.lane.b32.xlu0 %v3275, 64
  %v3309 = vpop.permute.xlu0 %3308
  %3310 = vrot.lane.b32.xlu0 %v3276, 64
  %v3311 = vpop.permute.xlu0 %3310
  %3312 = vrot.lane.b32.xlu0 %v3277, 64
  %v3313 = vpop.permute.xlu0 %3312
  %3314 = vrot.lane.b32.xlu0 %v3278, 64
  %v3315 = vpop.permute.xlu0 %3314
  %3316 = vrot.lane.b32.xlu0 %v3279, 64
  %v3317 = vpop.permute.xlu0 %3316
  %3318 = vrot.lane.b32.xlu0 %v3280, 64
  %v3319 = vpop.permute.xlu0 %3318
  %3320 = vrot.lane.b32.xlu0 %v3281, 64
  %v3321 = vpop.permute.xlu0 %3320
  %3322 = vrot.lane.b32.xlu0 %v3282, 64
  %v3323 = vpop.permute.xlu0 %3322
  %3324 = vrot.lane.b32.xlu0 %v3283, 64
  %v3325 = vpop.permute.xlu0 %3324
  %3326 = vrot.lane.b32.xlu0 %v3284, 64
  %v3327 = vpop.permute.xlu0 %3326
  %3328 = vrot.lane.b32.xlu0 %v3285, 64
  %v3329 = vpop.permute.xlu0 %3328
  %3330 = vrot.lane.b32.xlu0 %v3286, 64
  %v3331 = vpop.permute.xlu0 %3330
  %3332 = vrot.lane.b32.xlu0 %v3287, 64
  %v3333 = vpop.permute.xlu0 %3332
  %3334 = vrot.lane.b32.xlu0 %v3288, 64
  %v3335 = vpop.permute.xlu0 %3334
  %3336 = vrot.lane.b32.xlu0 %v3289, 64
  %v3337 = vpop.permute.xlu0 %3336
  %3354 = vst.msk [vmem:[#allocation4 + $0x18] sm:$0xff] %vm2777, %v3307
  %3355 = vst.msk [vmem:[#allocation4 + $0x40] sm:$0xff] %vm2777, %v3309
  %3356 = vst.msk [vmem:[#allocation4 + $0x68] sm:$0xff] %vm2777, %v3311
  %3357 = vst.msk [vmem:[#allocation4 + $0x90] sm:$0xff] %vm2777, %v3313
  %3358 = vst.msk [vmem:[#allocation4 + $0xb8] sm:$0xff] %vm2777, %v3315
  %3359 = vst.msk [vmem:[#allocation4 + $0xe0] sm:$0xff] %vm2777, %v3317
  %3360 = vst.msk [vmem:[#allocation4 + $0x108] sm:$0xff] %vm2777, %v3319
  %3361 = vst.msk [vmem:[#allocation4 + $0x130] sm:$0xff] %vm2777, %v3321
  %3362 = vst.msk [vmem:[#allocation4 + $0x158] sm:$0xff] %vm2777, %v3323
  %3363 = vst.msk [vmem:[#allocation4 + $0x180] sm:$0xff] %vm2777, %v3325
  %3364 = vst.msk [vmem:[#allocation4 + $0x1a8] sm:$0xff] %vm2777, %v3327
  %3365 = vst.msk [vmem:[#allocation4 + $0x1d0] sm:$0xff] %vm2777, %v3329
  %3366 = vst.msk [vmem:[#allocation4 + $0x1f8] sm:$0xff] %vm2777, %v3331
  %3367 = vst.msk [vmem:[#allocation4 + $0x220] sm:$0xff] %vm2777, %v3333
  %3368 = vst.msk [vmem:[#allocation4 + $0x248] sm:$0xff] %vm2777, %v3335
  %3369 = vst.msk [vmem:[#allocation4 + $0x270] sm:$0xff] %vm2777, %v3337
  %v3370 = vld [vmem:[#allocation2 + $0x8] sm:$0xff]
  %v3371 = vld [vmem:[#allocation2 + $0x10] sm:$0xff]
  %v3372 = vld [vmem:[#allocation2 + $0x18] sm:$0xff]
  %v3373 = vld [vmem:[#allocation2 + $0x20] sm:$0xff]
  %v3374 = vld [vmem:[#allocation2 + $0x30] sm:$0xff]
  %v3375 = vld [vmem:[#allocation2 + $0x38] sm:$0xff]
  %v3376 = vld [vmem:[#allocation2 + $0x40] sm:$0xff]
  %v3377 = vld [vmem:[#allocation2 + $0x48] sm:$0xff]
  %v3378 = vld [vmem:[#allocation2 + $0x58] sm:$0xff]
  %v3379 = vld [vmem:[#allocation2 + $0x60] sm:$0xff]
  %v3380 = vld [vmem:[#allocation2 + $0x68] sm:$0xff]
  %v3381 = vld [vmem:[#allocation2 + $0x70] sm:$0xff]
  %v3382 = vld [vmem:[#allocation2 + $0x80] sm:$0xff]
  %v3383 = vld [vmem:[#allocation2 + $0x88] sm:$0xff]
  %v3384 = vld [vmem:[#allocation2 + $0x90] sm:$0xff]
  %v3385 = vld [vmem:[#allocation2 + $0x98] sm:$0xff]
  %v3386 = vld [vmem:[#allocation2 + $0xa8] sm:$0xff]
  %v3387 = vld [vmem:[#allocation2 + $0xb0] sm:$0xff]
  %v3388 = vld [vmem:[#allocation2 + $0xb8] sm:$0xff]
  %v3389 = vld [vmem:[#allocation2 + $0xc0] sm:$0xff]
  %v3390 = vld [vmem:[#allocation2 + $0xd0] sm:$0xff]
  %v3391 = vld [vmem:[#allocation2 + $0xd8] sm:$0xff]
  %v3392 = vld [vmem:[#allocation2 + $0xe0] sm:$0xff]
  %v3393 = vld [vmem:[#allocation2 + $0xe8] sm:$0xff]
  %v3394 = vld [vmem:[#allocation2 + $0xf8] sm:$0xff]
  %v3395 = vld [vmem:[#allocation2 + $0x100] sm:$0xff]
  %v3396 = vld [vmem:[#allocation2 + $0x108] sm:$0xff]
  %v3397 = vld [vmem:[#allocation2 + $0x110] sm:$0xff]
  %v3398 = vld [vmem:[#allocation2 + $0x120] sm:$0xff]
  %v3399 = vld [vmem:[#allocation2 + $0x128] sm:$0xff]
  %v3400 = vld [vmem:[#allocation2 + $0x130] sm:$0xff]
  %v3401 = vld [vmem:[#allocation2 + $0x138] sm:$0xff]
  %v3402 = vpack.c.bf16 %v3371, %v3370
  %v3403 = vpack.c.bf16 %v3373, %v3372
  %v3404 = vpack.c.bf16 %v3375, %v3374
  %v3405 = vpack.c.bf16 %v3377, %v3376
  %v3406 = vpack.c.bf16 %v3379, %v3378
  %v3407 = vpack.c.bf16 %v3381, %v3380
  %v3408 = vpack.c.bf16 %v3383, %v3382
  %v3409 = vpack.c.bf16 %v3385, %v3384
  %v3410 = vpack.c.bf16 %v3387, %v3386
  %v3411 = vpack.c.bf16 %v3389, %v3388
  %v3412 = vpack.c.bf16 %v3391, %v3390
  %v3413 = vpack.c.bf16 %v3393, %v3392
  %v3414 = vpack.c.bf16 %v3395, %v3394
  %v3415 = vpack.c.bf16 %v3397, %v3396
  %v3416 = vpack.c.bf16 %v3399, %v3398
  %v3417 = vpack.c.bf16 %v3401, %v3400
  %3418 = vst.msk [vmem:[#allocation4 + $0x20] sm:$0xff] %vm2568, %v3402
  %3419 = vst.msk [vmem:[#allocation4 + $0x48] sm:$0xff] %vm2568, %v3403
  %3420 = vst.msk [vmem:[#allocation4 + $0x70] sm:$0xff] %vm2568, %v3404
  %3421 = vst.msk [vmem:[#allocation4 + $0x98] sm:$0xff] %vm2568, %v3405
  %3422 = vst.msk [vmem:[#allocation4 + $0xc0] sm:$0xff] %vm2568, %v3406
  %3423 = vst.msk [vmem:[#allocation4 + $0xe8] sm:$0xff] %vm2568, %v3407
  %3424 = vst.msk [vmem:[#allocation4 + $0x110] sm:$0xff] %vm2568, %v3408
  %3425 = vst.msk [vmem:[#allocation4 + $0x138] sm:$0xff] %vm2568, %v3409
  %3426 = vst.msk [vmem:[#allocation4 + $0x160] sm:$0xff] %vm2568, %v3410
  %3427 = vst.msk [vmem:[#allocation4 + $0x188] sm:$0xff] %vm2568, %v3411
  %3428 = vst.msk [vmem:[#allocation4 + $0x1b0] sm:$0xff] %vm2568, %v3412
  %3429 = vst.msk [vmem:[#allocation4 + $0x1d8] sm:$0xff] %vm2568, %v3413
  %3430 = vst.msk [vmem:[#allocation4 + $0x200] sm:$0xff] %vm2568, %v3414
  %3431 = vst.msk [vmem:[#allocation4 + $0x228] sm:$0xff] %vm2568, %v3415
  %3432 = vst.msk [vmem:[#allocation4 + $0x250] sm:$0xff] %vm2568, %v3416
  %3433 = vst.msk [vmem:[#allocation4 + $0x278] sm:$0xff] %vm2568, %v3417
  %v3434 = vld [vmem:[#allocation4] sm:$0xff]
  %v3435 = vld [vmem:[#allocation4 + $0x8] sm:$0xff]
  %v3436 = vld [vmem:[#allocation4 + $0x10] sm:$0xff]
  %v3437 = vld [vmem:[#allocation4 + $0x18] sm:$0xff]
  %v3438 = vld [vmem:[#allocation4 + $0x20] sm:$0xff]
  %v3439 = vld [vmem:[#allocation4 + $0x28] sm:$0xff]
  %v3440 = vld [vmem:[#allocation4 + $0x30] sm:$0xff]
  %v3441 = vld [vmem:[#allocation4 + $0x38] sm:$0xff]
  %v3442 = vld [vmem:[#allocation4 + $0x40] sm:$0xff]
  %v3443 = vld [vmem:[#allocation4 + $0x48] sm:$0xff]
  %v3444 = vld [vmem:[#allocation4 + $0x50] sm:$0xff]
  %v3445 = vld [vmem:[#allocation4 + $0x58] sm:$0xff]
  %v3446 = vld [vmem:[#allocation4 + $0x60] sm:$0xff]
  %v3447 = vld [vmem:[#allocation4 + $0x68] sm:$0xff]
  %v3448 = vld [vmem:[#allocation4 + $0x70] sm:$0xff]
  %v3449 = vld [vmem:[#allocation4 + $0x78] sm:$0xff]
  %v3450 = vld [vmem:[#allocation4 + $0x80] sm:$0xff]
  %v3451 = vld [vmem:[#allocation4 + $0x88] sm:$0xff]
  %v3452 = vld [vmem:[#allocation4 + $0x90] sm:$0xff]
  %v3453 = vld [vmem:[#allocation4 + $0x98] sm:$0xff]
  %v3454 = vld [vmem:[#allocation4 + $0xa0] sm:$0xff]
  %v3455 = vld [vmem:[#allocation4 + $0xa8] sm:$0xff]
  %v3456 = vld [vmem:[#allocation4 + $0xb0] sm:$0xff]
  %v3457 = vld [vmem:[#allocation4 + $0xb8] sm:$0xff]
  %v3458 = vld [vmem:[#allocation4 + $0xc0] sm:$0xff]
  %v3459 = vld [vmem:[#allocation4 + $0xc8] sm:$0xff]
  %v3460 = vld [vmem:[#allocation4 + $0xd0] sm:$0xff]
  %v3461 = vld [vmem:[#allocation4 + $0xd8] sm:$0xff]
  %v3462 = vld [vmem:[#allocation4 + $0xe0] sm:$0xff]
  %v3463 = vld [vmem:[#allocation4 + $0xe8] sm:$0xff]
  %v3464 = vld [vmem:[#allocation4 + $0xf0] sm:$0xff]
  %v3465 = vld [vmem:[#allocation4 + $0xf8] sm:$0xff]
  %v3466 = vld [vmem:[#allocation4 + $0x100] sm:$0xff]
  %v3467 = vld [vmem:[#allocation4 + $0x108] sm:$0xff]
  %v3468 = vld [vmem:[#allocation4 + $0x110] sm:$0xff]
  %v3469 = vld [vmem:[#allocation4 + $0x118] sm:$0xff]
  %v3470 = vld [vmem:[#allocation4 + $0x120] sm:$0xff]
  %v3471 = vld [vmem:[#allocation4 + $0x128] sm:$0xff]
  %v3472 = vld [vmem:[#allocation4 + $0x130] sm:$0xff]
  %v3473 = vld [vmem:[#allocation4 + $0x138] sm:$0xff]
  %v3474 = vld [vmem:[#allocation4 + $0x140] sm:$0xff]
  %v3475 = vld [vmem:[#allocation4 + $0x148] sm:$0xff]
  %v3476 = vld [vmem:[#allocation4 + $0x150] sm:$0xff]
  %v3477 = vld [vmem:[#allocation4 + $0x158] sm:$0xff]
  %v3478 = vld [vmem:[#allocation4 + $0x160] sm:$0xff]
  %v3479 = vld [vmem:[#allocation4 + $0x168] sm:$0xff]
  %v3480 = vld [vmem:[#allocation4 + $0x170] sm:$0xff]
  %v3481 = vld [vmem:[#allocation4 + $0x178] sm:$0xff]
  %v3482 = vld [vmem:[#allocation4 + $0x180] sm:$0xff]
  %v3483 = vld [vmem:[#allocation4 + $0x188] sm:$0xff]
  %v3484 = vld [vmem:[#allocation4 + $0x190] sm:$0xff]
  %v3485 = vld [vmem:[#allocation4 + $0x198] sm:$0xff]
  %v3486 = vld [vmem:[#allocation4 + $0x1a0] sm:$0xff]
  %v3487 = vld [vmem:[#allocation4 + $0x1a8] sm:$0xff]
  %v3488 = vld [vmem:[#allocation4 + $0x1b0] sm:$0xff]
  %v3489 = vld [vmem:[#allocation4 + $0x1b8] sm:$0xff]
  %v3490 = vld [vmem:[#allocation4 + $0x1c0] sm:$0xff]
  %v3491 = vld [vmem:[#allocation4 + $0x1c8] sm:$0xff]
  %v3492 = vld [vmem:[#allocation4 + $0x1d0] sm:$0xff]
  %v3493 = vld [vmem:[#allocation4 + $0x1d8] sm:$0xff]
  %v3494 = vld [vmem:[#allocation4 + $0x1e0] sm:$0xff]
  %v3495 = vld [vmem:[#allocation4 + $0x1e8] sm:$0xff]
  %v3496 = vld [vmem:[#allocation4 + $0x1f0] sm:$0xff]
  %v3497 = vld [vmem:[#allocation4 + $0x1f8] sm:$0xff]
  %v3498 = vld [vmem:[#allocation4 + $0x200] sm:$0xff]
  %v3499 = vld [vmem:[#allocation4 + $0x208] sm:$0xff]
  %v3500 = vld [vmem:[#allocation4 + $0x210] sm:$0xff]
  %v3501 = vld [vmem:[#allocation4 + $0x218] sm:$0xff]
  %v3502 = vld [vmem:[#allocation4 + $0x220] sm:$0xff]
  %v3503 = vld [vmem:[#allocation4 + $0x228] sm:$0xff]
  %v3504 = vld [vmem:[#allocation4 + $0x230] sm:$0xff]
  %v3505 = vld [vmem:[#allocation4 + $0x238] sm:$0xff]
  %v3506 = vld [vmem:[#allocation4 + $0x240] sm:$0xff]
  %v3507 = vld [vmem:[#allocation4 + $0x248] sm:$0xff]
  %v3508 = vld [vmem:[#allocation4 + $0x250] sm:$0xff]
  %v3509 = vld [vmem:[#allocation4 + $0x258] sm:$0xff]
  %v3510 = vld [vmem:[#allocation4 + $0x260] sm:$0xff]
  %v3511 = vld [vmem:[#allocation4 + $0x268] sm:$0xff]
  %v3512 = vld [vmem:[#allocation4 + $0x270] sm:$0xff]
  %v3513 = vld [vmem:[#allocation4 + $0x278] sm:$0xff]
  %v3514 = vld [vmem:[%s3] sm:$0xf]
  %v3515 = vld [vmem:[%s3 + $0x4] sm:$0xf]
  %v3516 = vld [vmem:[%s3 + $0x8] sm:$0xf]
  %v3517 = vld [vmem:[%s3 + $0xc] sm:$0xf]
  %v3518 = vld [vmem:[%s3 + $0x10] sm:$0xf]
  %v3519 = vld [vmem:[%s3 + $0x14] sm:$0xf]
  %v3520 = vld [vmem:[%s3 + $0x18] sm:$0xf]
  %v3521 = vld [vmem:[%s3 + $0x1c] sm:$0xf]
  %v3522 = vld [vmem:[%s3 + $0x20] sm:$0xf]
  %v3523 = vld [vmem:[%s3 + $0x24] sm:$0xf]
  %v3524 = vld [vmem:[%s3 + $0x28] sm:$0xf]
  %v3525 = vld [vmem:[%s3 + $0x2c] sm:$0xf]
  %v3526 = vld [vmem:[%s3 + $0x30] sm:$0xf]
  %v3527 = vld [vmem:[%s3 + $0x34] sm:$0xf]
  %v3528 = vld [vmem:[%s3 + $0x38] sm:$0xf]
  %v3529 = vld [vmem:[%s3 + $0x3c] sm:$0xf]
  %v3530 = vld [vmem:[%s3 + $0x40] sm:$0xf]
  %v3531 = vld [vmem:[%s3 + $0x44] sm:$0xf]
  %v3532 = vld [vmem:[%s3 + $0x48] sm:$0xf]
  %v3533 = vld [vmem:[%s3 + $0x4c] sm:$0xf]
  %v3534 = vld [vmem:[%s3 + $0x50] sm:$0xf]
  %v3535 = vld [vmem:[%s3 + $0x54] sm:$0xf]
  %v3536 = vld [vmem:[%s3 + $0x58] sm:$0xf]
  %v3537 = vld [vmem:[%s3 + $0x5c] sm:$0xf]
  %v3538 = vld [vmem:[%s3 + $0x60] sm:$0xf]
  %v3539 = vld [vmem:[%s3 + $0x64] sm:$0xf]
  %v3540 = vld [vmem:[%s3 + $0x68] sm:$0xf]
  %v3541 = vld [vmem:[%s3 + $0x6c] sm:$0xf]
  %v3542 = vld [vmem:[%s3 + $0x70] sm:$0xf]
  %v3543 = vld [vmem:[%s3 + $0x74] sm:$0xf]
  %v3544 = vld [vmem:[%s3 + $0x78] sm:$0xf]
  %v3545 = vld [vmem:[%s3 + $0x7c] sm:$0xf]
  %v3546 = vld [vmem:[%s3 + $0x80] sm:$0xf]
  %v3547 = vld [vmem:[%s3 + $0x84] sm:$0xf]
  %v3548 = vld [vmem:[%s3 + $0x88] sm:$0xf]
  %v3549 = vld [vmem:[%s3 + $0x8c] sm:$0xf]
  %v3550 = vld [vmem:[%s3 + $0x90] sm:$0xf]
  %v3551 = vld [vmem:[%s3 + $0x94] sm:$0xf]
  %v3552 = vld [vmem:[%s3 + $0x98] sm:$0xf]
  %v3553 = vld [vmem:[%s3 + $0x9c] sm:$0xf]
  %v3554 = vld [vmem:[%s3 + $0xa0] sm:$0xf]
  %v3555 = vld [vmem:[%s3 + $0xa4] sm:$0xf]
  %v3556 = vld [vmem:[%s3 + $0xa8] sm:$0xf]
  %v3557 = vld [vmem:[%s3 + $0xac] sm:$0xf]
  %v3558 = vld [vmem:[%s3 + $0xb0] sm:$0xf]
  %v3559 = vld [vmem:[%s3 + $0xb4] sm:$0xf]
  %v3560 = vld [vmem:[%s3 + $0xb8] sm:$0xf]
  %v3561 = vld [vmem:[%s3 + $0xbc] sm:$0xf]
  %v3562 = vld [vmem:[%s3 + $0xc0] sm:$0xf]
  %v3563 = vld [vmem:[%s3 + $0xc4] sm:$0xf]
  %v3564 = vld [vmem:[%s3 + $0xc8] sm:$0xf]
  %v3565 = vld [vmem:[%s3 + $0xcc] sm:$0xf]
  %v3566 = vld [vmem:[%s3 + $0xd0] sm:$0xf]
  %v3567 = vld [vmem:[%s3 + $0xd4] sm:$0xf]
  %v3568 = vld [vmem:[%s3 + $0xd8] sm:$0xf]
  %v3569 = vld [vmem:[%s3 + $0xdc] sm:$0xf]
  %v3570 = vld [vmem:[%s3 + $0xe0] sm:$0xf]
  %v3571 = vld [vmem:[%s3 + $0xe4] sm:$0xf]
  %v3572 = vld [vmem:[%s3 + $0xe8] sm:$0xf]
  %v3573 = vld [vmem:[%s3 + $0xec] sm:$0xf]
  %v3574 = vld [vmem:[%s3 + $0xf0] sm:$0xf]
  %v3575 = vld [vmem:[%s3 + $0xf4] sm:$0xf]
  %v3576 = vld [vmem:[%s3 + $0xf8] sm:$0xf]
  %v3577 = vld [vmem:[%s3 + $0xfc] sm:$0xf]
  %v3578 = vld [vmem:[%s3 + $0x100] sm:$0xf]
  %v3579 = vld [vmem:[%s3 + $0x104] sm:$0xf]
  %v3580 = vld [vmem:[%s3 + $0x108] sm:$0xf]
  %v3581 = vld [vmem:[%s3 + $0x10c] sm:$0xf]
  %v3582 = vld [vmem:[%s3 + $0x110] sm:$0xf]
  %v3583 = vld [vmem:[%s3 + $0x114] sm:$0xf]
  %v3584 = vld [vmem:[%s3 + $0x118] sm:$0xf]
  %v3585 = vld [vmem:[%s3 + $0x11c] sm:$0xf]
  %v3586 = vld [vmem:[%s4] sm:$0x1]
  %v3588 = vlaneseq
  %v3589 = vshrl.u32 %v3588, 7
  %v3590 = vsub.s32 0, %v3589
  %v3591 = vrot.slane %v3586, %v3590
  %v3665 = vunpack.c.l.b16 %v3514
  %v3666 = vunpack.c.l.b16 %v3515
  %v3667 = vunpack.c.l.b16 %v3516
  %v3668 = vunpack.c.l.b16 %v3517
  %v3669 = vunpack.c.l.b16 %v3518
  %v3670 = vunpack.c.l.b16 %v3519
  %v3671 = vunpack.c.l.b16 %v3520
  %v3672 = vunpack.c.l.b16 %v3521
  %v3673 = vunpack.c.l.b16 %v3522
  %v3674 = vunpack.c.l.b16 %v3523
  %v3675 = vunpack.c.l.b16 %v3524
  %v3676 = vunpack.c.l.b16 %v3525
  %v3677 = vunpack.c.l.b16 %v3526
  %v3678 = vunpack.c.l.b16 %v3527
  %v3679 = vunpack.c.l.b16 %v3528
  %v3680 = vunpack.c.l.b16 %v3529
  %v3681 = vunpack.c.l.b16 %v3530
  %v3682 = vunpack.c.l.b16 %v3531
  %v3683 = vunpack.c.l.b16 %v3532
  %v3684 = vunpack.c.l.b16 %v3533
  %v3685 = vunpack.c.l.b16 %v3534
  %v3686 = vunpack.c.l.b16 %v3535
  %v3687 = vunpack.c.l.b16 %v3536
  %v3688 = vunpack.c.l.b16 %v3537
  %v3689 = vunpack.c.l.b16 %v3538
  %v3690 = vunpack.c.l.b16 %v3539
  %v3691 = vunpack.c.l.b16 %v3540
  %v3692 = vunpack.c.l.b16 %v3541
  %v3693 = vunpack.c.l.b16 %v3542
  %v3694 = vunpack.c.l.b16 %v3543
  %v3695 = vunpack.c.l.b16 %v3544
  %v3696 = vunpack.c.l.b16 %v3545
  %v3697 = vunpack.c.l.b16 %v3546
  %v3698 = vunpack.c.l.b16 %v3547
  %v3699 = vunpack.c.l.b16 %v3548
  %v3700 = vunpack.c.l.b16 %v3549
  %v3701 = vunpack.c.l.b16 %v3550
  %v3702 = vunpack.c.l.b16 %v3551
  %v3703 = vunpack.c.l.b16 %v3552
  %v3704 = vunpack.c.l.b16 %v3553
  %v3705 = vunpack.c.l.b16 %v3554
  %v3706 = vunpack.c.l.b16 %v3555
  %v3707 = vunpack.c.l.b16 %v3556
  %v3708 = vunpack.c.l.b16 %v3557
  %v3709 = vunpack.c.l.b16 %v3558
  %v3710 = vunpack.c.l.b16 %v3559
  %v3711 = vunpack.c.l.b16 %v3560
  %v3712 = vunpack.c.l.b16 %v3561
  %v3713 = vunpack.c.l.b16 %v3562
  %v3714 = vunpack.c.l.b16 %v3563
  %v3715 = vunpack.c.l.b16 %v3564
  %v3716 = vunpack.c.l.b16 %v3565
  %v3717 = vunpack.c.l.b16 %v3566
  %v3718 = vunpack.c.l.b16 %v3567
  %v3719 = vunpack.c.l.b16 %v3568
  %v3720 = vunpack.c.l.b16 %v3569
  %v3721 = vunpack.c.l.b16 %v3570
  %v3722 = vunpack.c.l.b16 %v3571
  %v3723 = vunpack.c.l.b16 %v3572
  %v3724 = vunpack.c.l.b16 %v3573
  %v3725 = vunpack.c.l.b16 %v3574
  %v3726 = vunpack.c.l.b16 %v3575
  %v3727 = vunpack.c.l.b16 %v3576
  %v3728 = vunpack.c.l.b16 %v3577
  %v3729 = vunpack.c.l.b16 %v3578
  %v3730 = vunpack.c.l.b16 %v3579
  %v3731 = vunpack.c.l.b16 %v3580
  %v3732 = vunpack.c.l.b16 %v3581
  %v3733 = vunpack.c.l.b16 %v3582
  %v3734 = vunpack.c.l.b16 %v3583
  %v3735 = vunpack.c.l.b16 %v3584
  %v3736 = vunpack.c.l.b16 %v3585
  %v3737 = vpack.c.b16 %v3666, %v3665
  %v3738 = vpack.c.b16 %v3668, %v3667
  %v3739 = vpack.c.b16 %v3670, %v3669
  %v3740 = vpack.c.b16 %v3672, %v3671
  %v3741 = vpack.c.b16 %v3674, %v3673
  %v3742 = vpack.c.b16 %v3676, %v3675
  %v3743 = vpack.c.b16 %v3678, %v3677
  %v3744 = vpack.c.b16 %v3680, %v3679
  %v3745 = vpack.c.b16 %v3682, %v3681
  %v3746 = vpack.c.b16 %v3684, %v3683
  %v3747 = vpack.c.b16 %v3686, %v3685
  %v3748 = vpack.c.b16 %v3688, %v3687
  %v3749 = vpack.c.b16 %v3690, %v3689
  %v3750 = vpack.c.b16 %v3692, %v3691
  %v3751 = vpack.c.b16 %v3694, %v3693
  %v3752 = vpack.c.b16 %v3696, %v3695
  %v3753 = vpack.c.b16 %v3698, %v3697
  %v3754 = vpack.c.b16 %v3700, %v3699
  %v3755 = vpack.c.b16 %v3702, %v3701
  %v3756 = vpack.c.b16 %v3704, %v3703
  %v3757 = vpack.c.b16 %v3706, %v3705
  %v3758 = vpack.c.b16 %v3708, %v3707
  %v3759 = vpack.c.b16 %v3710, %v3709
  %v3760 = vpack.c.b16 %v3712, %v3711
  %v3761 = vpack.c.b16 %v3714, %v3713
  %v3762 = vpack.c.b16 %v3716, %v3715
  %v3763 = vpack.c.b16 %v3718, %v3717
  %v3764 = vpack.c.b16 %v3720, %v3719
  %v3765 = vpack.c.b16 %v3722, %v3721
  %v3766 = vpack.c.b16 %v3724, %v3723
  %v3767 = vpack.c.b16 %v3726, %v3725
  %v3768 = vpack.c.b16 %v3728, %v3727
  %v3769 = vpack.c.b16 %v3730, %v3729
  %v3770 = vpack.c.b16 %v3732, %v3731
  %v3771 = vpack.c.b16 %v3734, %v3733
  %v3772 = vpack.c.b16 %v3736, %v3735
  %v3810 = vsel %vm2568, %v3438, 0
  %v3813 = vsel %vm2568, %v3443, 0
  %v3816 = vsel %vm2568, %v3448, 0
  %v3819 = vsel %vm2568, %v3453, 0
  %v3822 = vsel %vm2568, %v3458, 0
  %v3825 = vsel %vm2568, %v3463, 0
  %v3828 = vsel %vm2568, %v3468, 0
  %v3831 = vsel %vm2568, %v3473, 0
  %v3834 = vsel %vm2568, %v3478, 0
  %v3837 = vsel %vm2568, %v3483, 0
  %v3840 = vsel %vm2568, %v3488, 0
  %v3843 = vsel %vm2568, %v3493, 0
  %v3846 = vsel %vm2568, %v3498, 0
  %v3849 = vsel %vm2568, %v3503, 0
  %v3852 = vsel %vm2568, %v3508, 0
  %v3855 = vsel %vm2568, %v3513, 0
  %3857 = vmatprep.subr.bf16.mxu0 0
  %3858 = vmatpush1.bf16.msra.mxu0 %v3737
  %3859 = vmatprep.subr.bf16.mxu0 0
  %3860 = vmatpush1.bf16.msra.mxu0 %v3738
  %3861 = vmatprep.subr.bf16.mxu0 0
  %3862 = vmatpush1.bf16.msra.mxu0 %v3739
  %3863 = vmatprep.subr.bf16.mxu0 0
  %3864 = vmatpush1.bf16.msra.mxu0 %v3740
  %3865 = vmatprep.subr.bf16.mxu0 0
  %3866 = vmatpush1.bf16.msra.mxu0 %v3741
  %3867 = vmatprep.subr.bf16.mxu0 0
  %3868 = vmatpush1.bf16.msra.mxu0 %v3742
  %3869 = vmatprep.subr.bf16.mxu0 0
  %3870 = vmatpush1.bf16.msra.mxu0 %v3743
  %3871 = vmatprep.subr.bf16.mxu0 0
  %3872 = vmatpush1.bf16.msra.mxu0 %v3744
  %3873 = vmatprep.subr.bf16.mxu0 0
  %3874 = vmatpush1.bf16.msra.mxu0 %v3745
  %3875 = vmatprep.subr.bf16.mxu0 0
  %3876 = vmatpush1.bf16.msra.mxu0 %v3746
  %3877 = vmatprep.subr.bf16.mxu0 0
  %3878 = vmatpush1.bf16.msra.mxu0 %v3747
  %3879 = vmatprep.subr.bf16.mxu0 0
  %3880 = vmatpush1.bf16.msra.mxu0 %v3748
  %3881 = vmatprep.subr.bf16.mxu0 0
  %3882 = vmatpush1.bf16.msra.mxu0 %v3749
  %3883 = vmatprep.subr.bf16.mxu0 0
  %3884 = vmatpush1.bf16.msra.mxu0 %v3750
  %3885 = vmatprep.subr.bf16.mxu0 0
  %3886 = vmatpush1.bf16.msra.mxu0 %v3751
  %3887 = vmatprep.subr.bf16.mxu0 0
  %3888 = vmatpush1.bf16.msra.mxu0 %v3752
  %3889 = vmatprep.mubr.bf16.mxu0 %v3435
  %3890 = vmatmul.mubr.bf16.gmra.mrb[0].mxu0 %v3434
  %v3891 = vpop.f32.mrb[0].mxu0
  %v3892 = vadd.f32 %v3591, %v3891
  %v3893 = vpop.f32.mrb[0].mxu0
  %v3894 = vpop.f32.mrb[0].mxu0
  %v3895 = vadd.f32 %v3591, %v3894
  %v3896 = vpop.f32.mrb[0].mxu0
  %3897 = vmatprep.mubr.bf16.mxu0 %v3440
  %3898 = vmatmul.mubr.bf16.gmra.mrb[0].mxu0 %v3439
  %v3899 = vpop.f32.mrb[0].mxu0
  %v3900 = vadd.f32 %v3591, %v3899
  %v3901 = vpop.f32.mrb[0].mxu0
  %v3902 = vpop.f32.mrb[0].mxu0
  %v3903 = vadd.f32 %v3591, %v3902
  %v3904 = vpop.f32.mrb[0].mxu0
  %3905 = vmatprep.mubr.bf16.mxu0 %v3445
  %3906 = vmatmul.mubr.bf16.gmra.mrb[0].mxu0 %v3444
  %v3907 = vpop.f32.mrb[0].mxu0
  %v3908 = vadd.f32 %v3591, %v3907
  %v3909 = vpop.f32.mrb[0].mxu0
  %v3910 = vpop.f32.mrb[0].mxu0
  %v3911 = vadd.f32 %v3591, %v3910
  %v3912 = vpop.f32.mrb[0].mxu0
  %3913 = vmatprep.mubr.bf16.mxu0 %v3450
  %3914 = vmatmul.mubr.bf16.gmra.mrb[0].mxu0 %v3449
  %v3915 = vpop.f32.mrb[0].mxu0
  %v3916 = vadd.f32 %v3591, %v3915
  %v3917 = vpop.f32.mrb[0].mxu0
  %v3918 = vpop.f32.mrb[0].mxu0
  %v3919 = vadd.f32 %v3591, %v3918
  %v3920 = vpop.f32.mrb[0].mxu0
  %3921 = vmatprep.mubr.bf16.mxu0 %v3455
  %3922 = vmatmul.mubr.bf16.gmra.mrb[0].mxu0 %v3454
  %v3923 = vpop.f32.mrb[0].mxu0
  %v3924 = vadd.f32 %v3591, %v3923
  %v3925 = vpop.f32.mrb[0].mxu0
  %v3926 = vpop.f32.mrb[0].mxu0
  %v3927 = vadd.f32 %v3591, %v3926
  %v3928 = vpop.f32.mrb[0].mxu0
  %3929 = vmatprep.mubr.bf16.mxu0 %v3460
  %3930 = vmatmul.mubr.bf16.gmra.mrb[0].mxu0 %v3459
  %v3931 = vpop.f32.mrb[0].mxu0
  %v3932 = vadd.f32 %v3591, %v3931
  %v3933 = vpop.f32.mrb[0].mxu0
  %v3934 = vpop.f32.mrb[0].mxu0
  %v3935 = vadd.f32 %v3591, %v3934
  %v3936 = vpop.f32.mrb[0].mxu0
  %3937 = vmatprep.mubr.bf16.mxu0 %v3465
  %3938 = vmatmul.mubr.bf16.gmra.mrb[0].mxu0 %v3464
  %v3939 = vpop.f32.mrb[0].mxu0
  %v3940 = vadd.f32 %v3591, %v3939
  %v3941 = vpop.f32.mrb[0].mxu0
  %v3942 = vpop.f32.mrb[0].mxu0
  %v3943 = vadd.f32 %v3591, %v3942
  %v3944 = vpop.f32.mrb[0].mxu0
  %3945 = vmatprep.mubr.bf16.mxu0 %v3470
  %3946 = vmatmul.mubr.bf16.gmra.mrb[0].mxu0 %v3469
  %v3947 = vpop.f32.mrb[0].mxu0
  %v3948 = vadd.f32 %v3591, %v3947
  %v3949 = vpop.f32.mrb[0].mxu0
  %v3950 = vpop.f32.mrb[0].mxu0
  %v3951 = vadd.f32 %v3591, %v3950
  %v3952 = vpop.f32.mrb[0].mxu0
  %3953 = vmatprep.mubr.bf16.mxu0 %v3475
  %3954 = vmatmul.mubr.bf16.gmra.mrb[0].mxu0 %v3474
  %v3955 = vpop.f32.mrb[0].mxu0
  %v3956 = vadd.f32 %v3591, %v3955
  %v3957 = vpop.f32.mrb[0].mxu0
  %v3958 = vpop.f32.mrb[0].mxu0
  %v3959 = vadd.f32 %v3591, %v3958
  %v3960 = vpop.f32.mrb[0].mxu0
  %3961 = vmatprep.mubr.bf16.mxu0 %v3480
  %3962 = vmatmul.mubr.bf16.gmra.mrb[0].mxu0 %v3479
  %v3963 = vpop.f32.mrb[0].mxu0
  %v3964 = vadd.f32 %v3591, %v3963
  %v3965 = vpop.f32.mrb[0].mxu0
  %v3966 = vpop.f32.mrb[0].mxu0
  %v3967 = vadd.f32 %v3591, %v3966
  %v3968 = vpop.f32.mrb[0].mxu0
  %3969 = vmatprep.mubr.bf16.mxu0 %v3485
  %3970 = vmatmul.mubr.bf16.gmra.mrb[0].mxu0 %v3484
  %v3971 = vpop.f32.mrb[0].mxu0
  %v3972 = vadd.f32 %v3591, %v3971
  %v3973 = vpop.f32.mrb[0].mxu0
  %v3974 = vpop.f32.mrb[0].mxu0
  %v3975 = vadd.f32 %v3591, %v3974
  %v3976 = vpop.f32.mrb[0].mxu0
  %3977 = vmatprep.mubr.bf16.mxu0 %v3490
  %3978 = vmatmul.mubr.bf16.gmra.mrb[0].mxu0 %v3489
  %v3979 = vpop.f32.mrb[0].mxu0
  %v3980 = vadd.f32 %v3591, %v3979
  %v3981 = vpop.f32.mrb[0].mxu0
  %v3982 = vpop.f32.mrb[0].mxu0
  %v3983 = vadd.f32 %v3591, %v3982
  %v3984 = vpop.f32.mrb[0].mxu0
  %3985 = vmatprep.mubr.bf16.mxu0 %v3495
  %3986 = vmatmul.mubr.bf16.gmra.mrb[0].mxu0 %v3494
  %v3987 = vpop.f32.mrb[0].mxu0
  %v3988 = vadd.f32 %v3591, %v3987
  %v3989 = vpop.f32.mrb[0].mxu0
  %v3990 = vpop.f32.mrb[0].mxu0
  %v3991 = vadd.f32 %v3591, %v3990
  %v3992 = vpop.f32.mrb[0].mxu0
  %3993 = vmatprep.mubr.bf16.mxu0 %v3500
  %3994 = vmatmul.mubr.bf16.gmra.mrb[0].mxu0 %v3499
  %v3995 = vpop.f32.mrb[0].mxu0
  %v3996 = vadd.f32 %v3591, %v3995
  %v3997 = vpop.f32.mrb[0].mxu0
  %v3998 = vpop.f32.mrb[0].mxu0
  %v3999 = vadd.f32 %v3591, %v3998
  %v4000 = vpop.f32.mrb[0].mxu0
  %4001 = vmatprep.mubr.bf16.mxu0 %v3505
  %4002 = vmatmul.mubr.bf16.gmra.mrb[0].mxu0 %v3504
  %v4003 = vpop.f32.mrb[0].mxu0
  %v4004 = vadd.f32 %v3591, %v4003
  %v4005 = vpop.f32.mrb[0].mxu0
  %v4006 = vpop.f32.mrb[0].mxu0
  %v4007 = vadd.f32 %v3591, %v4006
  %v4008 = vpop.f32.mrb[0].mxu0
  %4009 = vmatprep.mubr.bf16.mxu0 %v3510
  %4010 = vmatmul.mubr.bf16.gmra.mrb[0].mxu0 %v3509
  %v4011 = vpop.f32.mrb[0].mxu0
  %v4012 = vadd.f32 %v3591, %v4011
  %v4013 = vpop.f32.mrb[0].mxu0
  %v4014 = vpop.f32.mrb[0].mxu0
  %v4015 = vadd.f32 %v3591, %v4014
  %v4016 = vpop.f32.mrb[0].mxu0
  %4017 = vdwg.mxu0
  %4018 = vmatprep.subr.bf16.mxu0 0
  %4019 = vmatpush1.bf16.msra.mxu0 %v3753
  %4020 = vmatprep.subr.bf16.mxu0 0
  %4021 = vmatpush1.bf16.msra.mxu0 %v3754
  %4022 = vmatprep.subr.bf16.mxu0 0
  %4023 = vmatpush1.bf16.msra.mxu0 %v3755
  %4024 = vmatprep.subr.bf16.mxu0 0
  %4025 = vmatpush1.bf16.msra.mxu0 %v3756
  %4026 = vmatprep.subr.bf16.mxu0 0
  %4027 = vmatpush1.bf16.msra.mxu0 %v3757
  %4028 = vmatprep.subr.bf16.mxu0 0
  %4029 = vmatpush1.bf16.msra.mxu0 %v3758
  %4030 = vmatprep.subr.bf16.mxu0 0
  %4031 = vmatpush1.bf16.msra.mxu0 %v3759
  %4032 = vmatprep.subr.bf16.mxu0 0
  %4033 = vmatpush1.bf16.msra.mxu0 %v3760
  %4034 = vmatprep.subr.bf16.mxu0 0
  %4035 = vmatpush1.bf16.msra.mxu0 %v3761
  %4036 = vmatprep.subr.bf16.mxu0 0
  %4037 = vmatpush1.bf16.msra.mxu0 %v3762
  %4038 = vmatprep.subr.bf16.mxu0 0
  %4039 = vmatpush1.bf16.msra.mxu0 %v3763
  %4040 = vmatprep.subr.bf16.mxu0 0
  %4041 = vmatpush1.bf16.msra.mxu0 %v3764
  %4042 = vmatprep.subr.bf16.mxu0 0
  %4043 = vmatpush1.bf16.msra.mxu0 %v3765
  %4044 = vmatprep.subr.bf16.mxu0 0
  %4045 = vmatpush1.bf16.msra.mxu0 %v3766
  %4046 = vmatprep.subr.bf16.mxu0 0
  %4047 = vmatpush1.bf16.msra.mxu0 %v3767
  %4048 = vmatprep.subr.bf16.mxu0 0
  %4049 = vmatpush1.bf16.msra.mxu0 %v3768
  %4050 = vmatprep.mubr.bf16.mxu0 %v3437
  %4051 = vmatmul.mubr.bf16.gmra.mrb[0].mxu0 %v3436
  %v4052 = vpop.f32.mrb[0].mxu0
  %v4053 = vadd.f32 %v3892, %v4052
  %v4054 = vpop.f32.mrb[0].mxu0
  %v4055 = vpop.f32.mrb[0].mxu0
  %v4056 = vadd.f32 %v3895, %v4055
  %v4057 = vpop.f32.mrb[0].mxu0
  %4058 = vmatprep.mubr.bf16.mxu0 %v3442
  %4059 = vmatmul.mubr.bf16.gmra.mrb[0].mxu0 %v3441
  %v4060 = vpop.f32.mrb[0].mxu0
  %v4061 = vadd.f32 %v3900, %v4060
  %v4062 = vpop.f32.mrb[0].mxu0
  %v4063 = vpop.f32.mrb[0].mxu0
  %v4064 = vadd.f32 %v3903, %v4063
  %v4065 = vpop.f32.mrb[0].mxu0
  %4066 = vmatprep.mubr.bf16.mxu0 %v3447
  %4067 = vmatmul.mubr.bf16.gmra.mrb[0].mxu0 %v3446
  %v4068 = vpop.f32.mrb[0].mxu0
  %v4069 = vadd.f32 %v3908, %v4068
  %v4070 = vpop.f32.mrb[0].mxu0
  %v4071 = vpop.f32.mrb[0].mxu0
  %v4072 = vadd.f32 %v3911, %v4071
  %v4073 = vpop.f32.mrb[0].mxu0
  %4074 = vmatprep.mubr.bf16.mxu0 %v3452
  %4075 = vmatmul.mubr.bf16.gmra.mrb[0].mxu0 %v3451
  %v4076 = vpop.f32.mrb[0].mxu0
  %v4077 = vadd.f32 %v3916, %v4076
  %v4078 = vpop.f32.mrb[0].mxu0
  %v4079 = vpop.f32.mrb[0].mxu0
  %v4080 = vadd.f32 %v3919, %v4079
  %v4081 = vpop.f32.mrb[0].mxu0
  %4082 = vmatprep.mubr.bf16.mxu0 %v3457
  %4083 = vmatmul.mubr.bf16.gmra.mrb[0].mxu0 %v3456
  %v4084 = vpop.f32.mrb[0].mxu0
  %v4085 = vadd.f32 %v3924, %v4084
  %v4086 = vpop.f32.mrb[0].mxu0
  %v4087 = vpop.f32.mrb[0].mxu0
  %v4088 = vadd.f32 %v3927, %v4087
  %v4089 = vpop.f32.mrb[0].mxu0
  %4090 = vmatprep.mubr.bf16.mxu0 %v3462
  %4091 = vmatmul.mubr.bf16.gmra.mrb[0].mxu0 %v3461
  %v4092 = vpop.f32.mrb[0].mxu0
  %v4093 = vadd.f32 %v3932, %v4092
  %v4094 = vpop.f32.mrb[0].mxu0
  %v4095 = vpop.f32.mrb[0].mxu0
  %v4096 = vadd.f32 %v3935, %v4095
  %v4097 = vpop.f32.mrb[0].mxu0
  %4098 = vmatprep.mubr.bf16.mxu0 %v3467
  %4099 = vmatmul.mubr.bf16.gmra.mrb[0].mxu0 %v3466
  %v4100 = vpop.f32.mrb[0].mxu0
  %v4101 = vadd.f32 %v3940, %v4100
  %v4102 = vpop.f32.mrb[0].mxu0
  %v4103 = vpop.f32.mrb[0].mxu0
  %v4104 = vadd.f32 %v3943, %v4103
  %v4105 = vpop.f32.mrb[0].mxu0
  %4106 = vmatprep.mubr.bf16.mxu0 %v3472
  %4107 = vmatmul.mubr.bf16.gmra.mrb[0].mxu0 %v3471
  %v4108 = vpop.f32.mrb[0].mxu0
  %v4109 = vadd.f32 %v3948, %v4108
  %v4110 = vpop.f32.mrb[0].mxu0
  %v4111 = vpop.f32.mrb[0].mxu0
  %v4112 = vadd.f32 %v3951, %v4111
  %v4113 = vpop.f32.mrb[0].mxu0
  %4114 = vmatprep.mubr.bf16.mxu0 %v3477
  %4115 = vmatmul.mubr.bf16.gmra.mrb[0].mxu0 %v3476
  %v4116 = vpop.f32.mrb[0].mxu0
  %v4117 = vadd.f32 %v3956, %v4116
  %v4118 = vpop.f32.mrb[0].mxu0
  %v4119 = vpop.f32.mrb[0].mxu0
  %v4120 = vadd.f32 %v3959, %v4119
  %v4121 = vpop.f32.mrb[0].mxu0
  %4122 = vmatprep.mubr.bf16.mxu0 %v3482
  %4123 = vmatmul.mubr.bf16.gmra.mrb[0].mxu0 %v3481
  %v4124 = vpop.f32.mrb[0].mxu0
  %v4125 = vadd.f32 %v3964, %v4124
  %v4126 = vpop.f32.mrb[0].mxu0
  %v4127 = vpop.f32.mrb[0].mxu0
  %v4128 = vadd.f32 %v3967, %v4127
  %v4129 = vpop.f32.mrb[0].mxu0
  %4130 = vmatprep.mubr.bf16.mxu0 %v3487
  %4131 = vmatmul.mubr.bf16.gmra.mrb[0].mxu0 %v3486
  %v4132 = vpop.f32.mrb[0].mxu0
  %v4133 = vadd.f32 %v3972, %v4132
  %v4134 = vpop.f32.mrb[0].mxu0
  %v4135 = vpop.f32.mrb[0].mxu0
  %v4136 = vadd.f32 %v3975, %v4135
  %v4137 = vpop.f32.mrb[0].mxu0
  %4138 = vmatprep.mubr.bf16.mxu0 %v3492
  %4139 = vmatmul.mubr.bf16.gmra.mrb[0].mxu0 %v3491
  %v4140 = vpop.f32.mrb[0].mxu0
  %v4141 = vadd.f32 %v3980, %v4140
  %v4142 = vpop.f32.mrb[0].mxu0
  %v4143 = vpop.f32.mrb[0].mxu0
  %v4144 = vadd.f32 %v3983, %v4143
  %v4145 = vpop.f32.mrb[0].mxu0
  %4146 = vmatprep.mubr.bf16.mxu0 %v3497
  %4147 = vmatmul.mubr.bf16.gmra.mrb[0].mxu0 %v3496
  %v4148 = vpop.f32.mrb[0].mxu0
  %v4149 = vadd.f32 %v3988, %v4148
  %v4150 = vpop.f32.mrb[0].mxu0
  %v4151 = vpop.f32.mrb[0].mxu0
  %v4152 = vadd.f32 %v3991, %v4151
  %v4153 = vpop.f32.mrb[0].mxu0
  %4154 = vmatprep.mubr.bf16.mxu0 %v3502
  %4155 = vmatmul.mubr.bf16.gmra.mrb[0].mxu0 %v3501
  %v4156 = vpop.f32.mrb[0].mxu0
  %v4157 = vadd.f32 %v3996, %v4156
  %v4158 = vpop.f32.mrb[0].mxu0
  %v4159 = vpop.f32.mrb[0].mxu0
  %v4160 = vadd.f32 %v3999, %v4159
  %v4161 = vpop.f32.mrb[0].mxu0
  %4162 = vmatprep.mubr.bf16.mxu0 %v3507
  %4163 = vmatmul.mubr.bf16.gmra.mrb[0].mxu0 %v3506
  %v4164 = vpop.f32.mrb[0].mxu0
  %v4165 = vadd.f32 %v4004, %v4164
  %v4166 = vpop.f32.mrb[0].mxu0
  %v4167 = vpop.f32.mrb[0].mxu0
  %v4168 = vadd.f32 %v4007, %v4167
  %v4169 = vpop.f32.mrb[0].mxu0
  %4170 = vmatprep.mubr.bf16.mxu0 %v3512
  %4171 = vmatmul.mubr.bf16.gmra.mrb[0].mxu0 %v3511
  %v4172 = vpop.f32.mrb[0].mxu0
  %v4173 = vadd.f32 %v4012, %v4172
  %v4174 = vpop.f32.mrb[0].mxu0
  %v4175 = vpop.f32.mrb[0].mxu0
  %v4176 = vadd.f32 %v4015, %v4175
  %v4177 = vpop.f32.mrb[0].mxu0
  %4178 = vdwg.mxu0
  %4179 = vmatprep.subr.bf16.mxu0 0
  %4180 = vmatpush1.bf16.msra.mxu0 %v3769
  %4181 = vmatprep.subr.bf16.mxu0 0
  %4182 = vmatpush1.bf16.msra.mxu0 %v3770
  %4183 = vmatprep.subr.bf16.mxu0 0
  %4184 = vmatpush1.bf16.msra.mxu0 %v3771
  %4185 = vmatprep.subr.bf16.mxu0 0
  %4186 = vmatpush1.bf16.msra.mxu0 %v3772
  %4187 = vmatprep.subr.bf16.mxu0 0
  %4188 = vmatpush1.bf16.msra.mxu0 0
  %4189 = vmatprep.subr.bf16.mxu0 0
  %4190 = vmatpush1.bf16.msra.mxu0 0
  %4191 = vmatprep.subr.bf16.mxu0 0
  %4192 = vmatpush1.bf16.msra.mxu0 0
  %4193 = vmatprep.subr.bf16.mxu0 0
  %4194 = vmatpush1.bf16.msra.mxu0 0
  %4195 = vmatprep.subr.bf16.mxu0 0
  %4196 = vmatpush1.bf16.msra.mxu0 0
  %4197 = vmatprep.subr.bf16.mxu0 0
  %4198 = vmatpush1.bf16.msra.mxu0 0
  %4199 = vmatprep.subr.bf16.mxu0 0
  %4200 = vmatpush1.bf16.msra.mxu0 0
  %4201 = vmatprep.subr.bf16.mxu0 0
  %4202 = vmatpush1.bf16.msra.mxu0 0
  %4203 = vmatprep.subr.bf16.mxu0 0
  %4204 = vmatpush1.bf16.msra.mxu0 0
  %4205 = vmatprep.subr.bf16.mxu0 0
  %4206 = vmatpush1.bf16.msra.mxu0 0
  %4207 = vmatprep.subr.bf16.mxu0 0
  %4208 = vmatpush1.bf16.msra.mxu0 0
  %4209 = vmatprep.subr.bf16.mxu0 0
  %4210 = vmatpush1.bf16.msra.mxu0 0
  %4211 = vmatprep.mubr.bf16.mxu0 0
  %4212 = vmatmul.mubr.bf16.gmra.mrb[0].mxu0 %v3810
  %v4213 = vpop.f32.mrb[0].mxu0
  %v4214 = vadd.f32 %v4053, %v4213
  %v4215 = vpop.f32.mrb[0].mxu0
  %v4216 = vpop.f32.mrb[0].mxu0
  %v4217 = vadd.f32 %v4056, %v4216
  %v4218 = vpop.f32.mrb[0].mxu0
  %4219 = vmatprep.mubr.bf16.mxu0 0
  %4220 = vmatmul.mubr.bf16.gmra.mrb[0].mxu0 %v3813
  %v4221 = vpop.f32.mrb[0].mxu0
  %v4222 = vadd.f32 %v4061, %v4221
  %v4223 = vpop.f32.mrb[0].mxu0
  %v4224 = vpop.f32.mrb[0].mxu0
  %v4225 = vadd.f32 %v4064, %v4224
  %v4226 = vpop.f32.mrb[0].mxu0
  %4227 = vmatprep.mubr.bf16.mxu0 0
  %4228 = vmatmul.mubr.bf16.gmra.mrb[0].mxu0 %v3816
  %v4229 = vpop.f32.mrb[0].mxu0
  %v4230 = vadd.f32 %v4069, %v4229
  %v4231 = vpop.f32.mrb[0].mxu0
  %v4232 = vpop.f32.mrb[0].mxu0
  %v4233 = vadd.f32 %v4072, %v4232
  %v4234 = vpop.f32.mrb[0].mxu0
  %4235 = vmatprep.mubr.bf16.mxu0 0
  %4236 = vmatmul.mubr.bf16.gmra.mrb[0].mxu0 %v3819
  %v4237 = vpop.f32.mrb[0].mxu0
  %v4238 = vadd.f32 %v4077, %v4237
  %v4239 = vpop.f32.mrb[0].mxu0
  %v4240 = vpop.f32.mrb[0].mxu0
  %v4241 = vadd.f32 %v4080, %v4240
  %v4242 = vpop.f32.mrb[0].mxu0
  %4243 = vmatprep.mubr.bf16.mxu0 0
  %4244 = vmatmul.mubr.bf16.gmra.mrb[0].mxu0 %v3822
  %v4245 = vpop.f32.mrb[0].mxu0
  %v4246 = vadd.f32 %v4085, %v4245
  %v4247 = vpop.f32.mrb[0].mxu0
  %v4248 = vpop.f32.mrb[0].mxu0
  %v4249 = vadd.f32 %v4088, %v4248
  %v4250 = vpop.f32.mrb[0].mxu0
  %4251 = vmatprep.mubr.bf16.mxu0 0
  %4252 = vmatmul.mubr.bf16.gmra.mrb[0].mxu0 %v3825
  %v4253 = vpop.f32.mrb[0].mxu0
  %v4254 = vadd.f32 %v4093, %v4253
  %v4255 = vpop.f32.mrb[0].mxu0
  %v4256 = vpop.f32.mrb[0].mxu0
  %v4257 = vadd.f32 %v4096, %v4256
  %v4258 = vpop.f32.mrb[0].mxu0
  %4259 = vmatprep.mubr.bf16.mxu0 0
  %4260 = vmatmul.mubr.bf16.gmra.mrb[0].mxu0 %v3828
  %v4261 = vpop.f32.mrb[0].mxu0
  %v4262 = vadd.f32 %v4101, %v4261
  %v4263 = vpop.f32.mrb[0].mxu0
  %v4264 = vpop.f32.mrb[0].mxu0
  %v4265 = vadd.f32 %v4104, %v4264
  %v4266 = vpop.f32.mrb[0].mxu0
  %4267 = vmatprep.mubr.bf16.mxu0 0
  %4268 = vmatmul.mubr.bf16.gmra.mrb[0].mxu0 %v3831
  %v4269 = vpop.f32.mrb[0].mxu0
  %v4270 = vadd.f32 %v4109, %v4269
  %v4271 = vpop.f32.mrb[0].mxu0
  %v4272 = vpop.f32.mrb[0].mxu0
  %v4273 = vadd.f32 %v4112, %v4272
  %v4274 = vpop.f32.mrb[0].mxu0
  %4275 = vmatprep.mubr.bf16.mxu0 0
  %4276 = vmatmul.mubr.bf16.gmra.mrb[0].mxu0 %v3834
  %v4277 = vpop.f32.mrb[0].mxu0
  %v4278 = vadd.f32 %v4117, %v4277
  %v4279 = vpop.f32.mrb[0].mxu0
  %v4280 = vpop.f32.mrb[0].mxu0
  %v4281 = vadd.f32 %v4120, %v4280
  %v4282 = vpop.f32.mrb[0].mxu0
  %4283 = vmatprep.mubr.bf16.mxu0 0
  %4284 = vmatmul.mubr.bf16.gmra.mrb[0].mxu0 %v3837
  %v4285 = vpop.f32.mrb[0].mxu0
  %v4286 = vadd.f32 %v4125, %v4285
  %v4287 = vpop.f32.mrb[0].mxu0
  %v4288 = vpop.f32.mrb[0].mxu0
  %v4289 = vadd.f32 %v4128, %v4288
  %v4290 = vpop.f32.mrb[0].mxu0
  %4291 = vmatprep.mubr.bf16.mxu0 0
  %4292 = vmatmul.mubr.bf16.gmra.mrb[0].mxu0 %v3840
  %v4293 = vpop.f32.mrb[0].mxu0
  %v4294 = vadd.f32 %v4133, %v4293
  %v4295 = vpop.f32.mrb[0].mxu0
  %v4296 = vpop.f32.mrb[0].mxu0
  %v4297 = vadd.f32 %v4136, %v4296
  %v4298 = vpop.f32.mrb[0].mxu0
  %4299 = vmatprep.mubr.bf16.mxu0 0
  %4300 = vmatmul.mubr.bf16.gmra.mrb[0].mxu0 %v3843
  %v4301 = vpop.f32.mrb[0].mxu0
  %v4302 = vadd.f32 %v4141, %v4301
  %v4303 = vpop.f32.mrb[0].mxu0
  %v4304 = vpop.f32.mrb[0].mxu0
  %v4305 = vadd.f32 %v4144, %v4304
  %v4306 = vpop.f32.mrb[0].mxu0
  %4307 = vmatprep.mubr.bf16.mxu0 0
  %4308 = vmatmul.mubr.bf16.gmra.mrb[0].mxu0 %v3846
  %v4309 = vpop.f32.mrb[0].mxu0
  %v4310 = vadd.f32 %v4149, %v4309
  %v4311 = vpop.f32.mrb[0].mxu0
  %v4312 = vpop.f32.mrb[0].mxu0
  %v4313 = vadd.f32 %v4152, %v4312
  %v4314 = vpop.f32.mrb[0].mxu0
  %4315 = vmatprep.mubr.bf16.mxu0 0
  %4316 = vmatmul.mubr.bf16.gmra.mrb[0].mxu0 %v3849
  %v4317 = vpop.f32.mrb[0].mxu0
  %v4318 = vadd.f32 %v4157, %v4317
  %v4319 = vpop.f32.mrb[0].mxu0
  %v4320 = vpop.f32.mrb[0].mxu0
  %v4321 = vadd.f32 %v4160, %v4320
  %v4322 = vpop.f32.mrb[0].mxu0
  %4323 = vmatprep.mubr.bf16.mxu0 0
  %4324 = vmatmul.mubr.bf16.gmra.mrb[0].mxu0 %v3852
  %v4325 = vpop.f32.mrb[0].mxu0
  %v4326 = vadd.f32 %v4165, %v4325
  %v4327 = vpop.f32.mrb[0].mxu0
  %v4328 = vpop.f32.mrb[0].mxu0
  %v4329 = vadd.f32 %v4168, %v4328
  %v4330 = vpop.f32.mrb[0].mxu0
  %4331 = vmatprep.mubr.bf16.mxu0 0
  %4332 = vmatmul.mubr.bf16.gmra.mrb[0].mxu0 %v3855
  %v4333 = vpop.f32.mrb[0].mxu0
  %v4334 = vadd.f32 %v4173, %v4333
  %v4335 = vpop.f32.mrb[0].mxu0
  %v4336 = vpop.f32.mrb[0].mxu0
  %v4337 = vadd.f32 %v4176, %v4336
  %v4338 = vpop.f32.mrb[0].mxu0
  %4339 = vdwg.mxu0
  %vm4340 = vcmp.gt.f32.partialorder %v4214, 0.0
  %vm4341 = vcmp.gt.f32.partialorder %v4217, 0.0
  %vm4342 = vcmp.gt.f32.partialorder %v4222, 0.0
  %vm4343 = vcmp.gt.f32.partialorder %v4225, 0.0
  %vm4344 = vcmp.gt.f32.partialorder %v4230, 0.0
  %vm4345 = vcmp.gt.f32.partialorder %v4233, 0.0
  %vm4346 = vcmp.gt.f32.partialorder %v4238, 0.0
  %vm4347 = vcmp.gt.f32.partialorder %v4241, 0.0
  %vm4348 = vcmp.gt.f32.partialorder %v4246, 0.0
  %vm4349 = vcmp.gt.f32.partialorder %v4249, 0.0
  %vm4350 = vcmp.gt.f32.partialorder %v4254, 0.0
  %vm4351 = vcmp.gt.f32.partialorder %v4257, 0.0
  %vm4352 = vcmp.gt.f32.partialorder %v4262, 0.0
  %vm4353 = vcmp.gt.f32.partialorder %v4265, 0.0
  %vm4354 = vcmp.gt.f32.partialorder %v4270, 0.0
  %vm4355 = vcmp.gt.f32.partialorder %v4273, 0.0
  %vm4356 = vcmp.gt.f32.partialorder %v4278, 0.0
  %vm4357 = vcmp.gt.f32.partialorder %v4281, 0.0
  %vm4358 = vcmp.gt.f32.partialorder %v4286, 0.0
  %vm4359 = vcmp.gt.f32.partialorder %v4289, 0.0
  %vm4360 = vcmp.gt.f32.partialorder %v4294, 0.0
  %vm4361 = vcmp.gt.f32.partialorder %v4297, 0.0
  %vm4362 = vcmp.gt.f32.partialorder %v4302, 0.0
  %vm4363 = vcmp.gt.f32.partialorder %v4305, 0.0
  %vm4364 = vcmp.gt.f32.partialorder %v4310, 0.0
  %vm4365 = vcmp.gt.f32.partialorder %v4313, 0.0
  %vm4366 = vcmp.gt.f32.partialorder %v4318, 0.0
  %vm4367 = vcmp.gt.f32.partialorder %v4321, 0.0
  %vm4368 = vcmp.gt.f32.partialorder %v4326, 0.0
  %vm4369 = vcmp.gt.f32.partialorder %v4329, 0.0
  %vm4370 = vcmp.gt.f32.partialorder %v4334, 0.0
  %vm4371 = vcmp.gt.f32.partialorder %v4337, 0.0
  %v4372 = vmul.f32 %v4214, 0.2
  %v4373 = vmul.f32 %v4217, 0.2
  %v4374 = vmul.f32 %v4222, 0.2
  %v4375 = vmul.f32 %v4225, 0.2
  %v4376 = vmul.f32 %v4230, 0.2
  %v4377 = vmul.f32 %v4233, 0.2
  %v4378 = vmul.f32 %v4238, 0.2
  %v4379 = vmul.f32 %v4241, 0.2
  %v4380 = vmul.f32 %v4246, 0.2
  %v4381 = vmul.f32 %v4249, 0.2
  %v4382 = vmul.f32 %v4254, 0.2
  %v4383 = vmul.f32 %v4257, 0.2
  %v4384 = vmul.f32 %v4262, 0.2
  %v4385 = vmul.f32 %v4265, 0.2
  %v4386 = vmul.f32 %v4270, 0.2
  %v4387 = vmul.f32 %v4273, 0.2
  %v4388 = vmul.f32 %v4278, 0.2
  %v4389 = vmul.f32 %v4281, 0.2
  %v4390 = vmul.f32 %v4286, 0.2
  %v4391 = vmul.f32 %v4289, 0.2
  %v4392 = vmul.f32 %v4294, 0.2
  %v4393 = vmul.f32 %v4297, 0.2
  %v4394 = vmul.f32 %v4302, 0.2
  %v4395 = vmul.f32 %v4305, 0.2
  %v4396 = vmul.f32 %v4310, 0.2
  %v4397 = vmul.f32 %v4313, 0.2
  %v4398 = vmul.f32 %v4318, 0.2
  %v4399 = vmul.f32 %v4321, 0.2
  %v4400 = vmul.f32 %v4326, 0.2
  %v4401 = vmul.f32 %v4329, 0.2
  %v4402 = vmul.f32 %v4334, 0.2
  %v4403 = vmul.f32 %v4337, 0.2
  %v4404 = vsel %vm4340, %v4214, %v4372
  %v4405 = vsel %vm4341, %v4217, %v4373
  %v4406 = vsel %vm4342, %v4222, %v4374
  %v4407 = vsel %vm4343, %v4225, %v4375
  %v4408 = vsel %vm4344, %v4230, %v4376
  %v4409 = vsel %vm4345, %v4233, %v4377
  %v4410 = vsel %vm4346, %v4238, %v4378
  %v4411 = vsel %vm4347, %v4241, %v4379
  %v4412 = vsel %vm4348, %v4246, %v4380
  %v4413 = vsel %vm4349, %v4249, %v4381
  %v4414 = vsel %vm4350, %v4254, %v4382
  %v4415 = vsel %vm4351, %v4257, %v4383
  %v4416 = vsel %vm4352, %v4262, %v4384
  %v4417 = vsel %vm4353, %v4265, %v4385
  %v4418 = vsel %vm4354, %v4270, %v4386
  %v4419 = vsel %vm4355, %v4273, %v4387
  %v4420 = vsel %vm4356, %v4278, %v4388
  %v4421 = vsel %vm4357, %v4281, %v4389
  %v4422 = vsel %vm4358, %v4286, %v4390
  %v4423 = vsel %vm4359, %v4289, %v4391
  %v4424 = vsel %vm4360, %v4294, %v4392
  %v4425 = vsel %vm4361, %v4297, %v4393
  %v4426 = vsel %vm4362, %v4302, %v4394
  %v4427 = vsel %vm4363, %v4305, %v4395
  %v4428 = vsel %vm4364, %v4310, %v4396
  %v4429 = vsel %vm4365, %v4313, %v4397
  %v4430 = vsel %vm4366, %v4318, %v4398
  %v4431 = vsel %vm4367, %v4321, %v4399
  %v4432 = vsel %vm4368, %v4326, %v4400
  %v4433 = vsel %vm4369, %v4329, %v4401
  %v4434 = vsel %vm4370, %v4334, %v4402
  %v4435 = vsel %vm4371, %v4337, %v4403
  %4436 = vst [vmem:[#allocation3] sm:$0xf] 0.0
  %4437 = vst [vmem:[#allocation3 + $0x28] sm:$0xf] 0.0
  %4438 = vst [vmem:[#allocation3 + $0x50] sm:$0xf] 0.0
  %4439 = vst [vmem:[#allocation3 + $0x78] sm:$0xf] 0.0
  %4440 = vst [vmem:[#allocation3 + $0xa0] sm:$0xf] 0.0
  %4441 = vst [vmem:[#allocation3 + $0xc8] sm:$0xf] 0.0
  %4442 = vst [vmem:[#allocation3 + $0xf0] sm:$0xf] 0.0
  %4443 = vst [vmem:[#allocation3 + $0x118] sm:$0xf] 0.0
  %4444 = vst [vmem:[#allocation3 + $0x24] sm:$0xf] 0.0
  %4445 = vst [vmem:[#allocation3 + $0x4c] sm:$0xf] 0.0
  %4446 = vst [vmem:[#allocation3 + $0x74] sm:$0xf] 0.0
  %4447 = vst [vmem:[#allocation3 + $0x9c] sm:$0xf] 0.0
  %4448 = vst [vmem:[#allocation3 + $0xc4] sm:$0xf] 0.0
  %4449 = vst [vmem:[#allocation3 + $0xec] sm:$0xf] 0.0
  %4450 = vst [vmem:[#allocation3 + $0x114] sm:$0xf] 0.0
  %4451 = vst [vmem:[#allocation3 + $0x13c] sm:$0xf] 0.0
  %4452 = vst [vmem:[#allocation3 + $0x4] sm:$0xff] %v4404
  %4453 = vst [vmem:[#allocation3 + $0xc] sm:$0xff] %v4405
  %4454 = vst [vmem:[#allocation3 + $0x14] sm:$0xff] %v4406
  %4455 = vst [vmem:[#allocation3 + $0x1c] sm:$0xff] %v4407
  %4456 = vst [vmem:[#allocation3 + $0x2c] sm:$0xff] %v4408
  %4457 = vst [vmem:[#allocation3 + $0x34] sm:$0xff] %v4409
  %4458 = vst [vmem:[#allocation3 + $0x3c] sm:$0xff] %v4410
  %4459 = vst [vmem:[#allocation3 + $0x44] sm:$0xff] %v4411
  %4460 = vst [vmem:[#allocation3 + $0x54] sm:$0xff] %v4412
  %4461 = vst [vmem:[#allocation3 + $0x5c] sm:$0xff] %v4413
  %4462 = vst [vmem:[#allocation3 + $0x64] sm:$0xff] %v4414
  %4463 = vst [vmem:[#allocation3 + $0x6c] sm:$0xff] %v4415
  %4464 = vst [vmem:[#allocation3 + $0x7c] sm:$0xff] %v4416
  %4465 = vst [vmem:[#allocation3 + $0x84] sm:$0xff] %v4417
  %4466 = vst [vmem:[#allocation3 + $0x8c] sm:$0xff] %v4418
  %4467 = vst [vmem:[#allocation3 + $0x94] sm:$0xff] %v4419
  %4468 = vst [vmem:[#allocation3 + $0xa4] sm:$0xff] %v4420
  %4469 = vst [vmem:[#allocation3 + $0xac] sm:$0xff] %v4421
  %4470 = vst [vmem:[#allocation3 + $0xb4] sm:$0xff] %v4422
  %4471 = vst [vmem:[#allocation3 + $0xbc] sm:$0xff] %v4423
  %4472 = vst [vmem:[#allocation3 + $0xcc] sm:$0xff] %v4424
  %4473 = vst [vmem:[#allocation3 + $0xd4] sm:$0xff] %v4425
  %4474 = vst [vmem:[#allocation3 + $0xdc] sm:$0xff] %v4426
  %4475 = vst [vmem:[#allocation3 + $0xe4] sm:$0xff] %v4427
  %4476 = vst [vmem:[#allocation3 + $0xf4] sm:$0xff] %v4428
  %4477 = vst [vmem:[#allocation3 + $0xfc] sm:$0xff] %v4429
  %4478 = vst [vmem:[#allocation3 + $0x104] sm:$0xff] %v4430
  %4479 = vst [vmem:[#allocation3 + $0x10c] sm:$0xff] %v4431
  %4480 = vst [vmem:[#allocation3 + $0x11c] sm:$0xff] %v4432
  %4481 = vst [vmem:[#allocation3 + $0x124] sm:$0xff] %v4433
  %4482 = vst [vmem:[#allocation3 + $0x12c] sm:$0xff] %v4434
  %4483 = vst [vmem:[#allocation3 + $0x134] sm:$0xff] %v4435
  %v4484 = vld [vmem:[#allocation3] sm:$0xff]
  %v4485 = vld [vmem:[#allocation3 + $0x8] sm:$0xff]
  %v4486 = vld [vmem:[#allocation3 + $0x10] sm:$0xff]
  %v4487 = vld [vmem:[#allocation3 + $0x18] sm:$0xff]
  %v4488 = vld [vmem:[#allocation3 + $0x28] sm:$0xff]
  %v4489 = vld [vmem:[#allocation3 + $0x30] sm:$0xff]
  %v4490 = vld [vmem:[#allocation3 + $0x38] sm:$0xff]
  %v4491 = vld [vmem:[#allocation3 + $0x40] sm:$0xff]
  %v4492 = vld [vmem:[#allocation3 + $0x50] sm:$0xff]
  %v4493 = vld [vmem:[#allocation3 + $0x58] sm:$0xff]
  %v4494 = vld [vmem:[#allocation3 + $0x60] sm:$0xff]
  %v4495 = vld [vmem:[#allocation3 + $0x68] sm:$0xff]
  %v4496 = vld [vmem:[#allocation3 + $0x78] sm:$0xff]
  %v4497 = vld [vmem:[#allocation3 + $0x80] sm:$0xff]
  %v4498 = vld [vmem:[#allocation3 + $0x88] sm:$0xff]
  %v4499 = vld [vmem:[#allocation3 + $0x90] sm:$0xff]
  %v4500 = vld [vmem:[#allocation3 + $0xa0] sm:$0xff]
  %v4501 = vld [vmem:[#allocation3 + $0xa8] sm:$0xff]
  %v4502 = vld [vmem:[#allocation3 + $0xb0] sm:$0xff]
  %v4503 = vld [vmem:[#allocation3 + $0xb8] sm:$0xff]
  %v4504 = vld [vmem:[#allocation3 + $0xc8] sm:$0xff]
  %v4505 = vld [vmem:[#allocation3 + $0xd0] sm:$0xff]
  %v4506 = vld [vmem:[#allocation3 + $0xd8] sm:$0xff]
  %v4507 = vld [vmem:[#allocation3 + $0xe0] sm:$0xff]
  %v4508 = vld [vmem:[#allocation3 + $0xf0] sm:$0xff]
  %v4509 = vld [vmem:[#allocation3 + $0xf8] sm:$0xff]
  %v4510 = vld [vmem:[#allocation3 + $0x100] sm:$0xff]
  %v4511 = vld [vmem:[#allocation3 + $0x108] sm:$0xff]
  %v4512 = vld [vmem:[#allocation3 + $0x118] sm:$0xff]
  %v4513 = vld [vmem:[#allocation3 + $0x120] sm:$0xff]
  %v4514 = vld [vmem:[#allocation3 + $0x128] sm:$0xff]
  %v4515 = vld [vmem:[#allocation3 + $0x130] sm:$0xff]
  %v4516 = vpack.c.bf16 %v4485, %v4484
  %v4517 = vpack.c.bf16 %v4487, %v4486
  %v4518 = vpack.c.bf16 %v4489, %v4488
  %v4519 = vpack.c.bf16 %v4491, %v4490
  %v4520 = vpack.c.bf16 %v4493, %v4492
  %v4521 = vpack.c.bf16 %v4495, %v4494
  %v4522 = vpack.c.bf16 %v4497, %v4496
  %v4523 = vpack.c.bf16 %v4499, %v4498
  %v4524 = vpack.c.bf16 %v4501, %v4500
  %v4525 = vpack.c.bf16 %v4503, %v4502
  %v4526 = vpack.c.bf16 %v4505, %v4504
  %v4527 = vpack.c.bf16 %v4507, %v4506
  %v4528 = vpack.c.bf16 %v4509, %v4508
  %v4529 = vpack.c.bf16 %v4511, %v4510
  %v4530 = vpack.c.bf16 %v4513, %v4512
  %v4531 = vpack.c.bf16 %v4515, %v4514
  %4532 = vst [vmem:[#allocation5] sm:$0xff] %v4516
  %4533 = vst [vmem:[#allocation5 + $0x48] sm:$0xff] %v4517
  %4534 = vst [vmem:[#allocation5 + $0x90] sm:$0xff] %v4518
  %4535 = vst [vmem:[#allocation5 + $0xd8] sm:$0xff] %v4519
  %4536 = vst [vmem:[#allocation5 + $0x120] sm:$0xff] %v4520
  %4537 = vst [vmem:[#allocation5 + $0x168] sm:$0xff] %v4521
  %4538 = vst [vmem:[#allocation5 + $0x1b0] sm:$0xff] %v4522
  %4539 = vst [vmem:[#allocation5 + $0x1f8] sm:$0xff] %v4523
  %4540 = vst [vmem:[#allocation5 + $0x240] sm:$0xff] %v4524
  %4541 = vst [vmem:[#allocation5 + $0x288] sm:$0xff] %v4525
  %4542 = vst [vmem:[#allocation5 + $0x2d0] sm:$0xff] %v4526
  %4543 = vst [vmem:[#allocation5 + $0x318] sm:$0xff] %v4527
  %4544 = vst [vmem:[#allocation5 + $0x360] sm:$0xff] %v4528
  %4545 = vst [vmem:[#allocation5 + $0x3a8] sm:$0xff] %v4529
  %4546 = vst [vmem:[#allocation5 + $0x3f0] sm:$0xff] %v4530
  %4547 = vst [vmem:[#allocation5 + $0x438] sm:$0xff] %v4531
  %v4548 = vld [vmem:[#allocation3 + $0x1] sm:$0xff]
  %v4549 = vld [vmem:[#allocation3 + $0x9] sm:$0xff]
  %v4550 = vld [vmem:[#allocation3 + $0x11] sm:$0xff]
  %v4551 = vld [vmem:[#allocation3 + $0x19] sm:$0xff]
  %v4552 = vld [vmem:[#allocation3 + $0x29] sm:$0xff]
  %v4553 = vld [vmem:[#allocation3 + $0x31] sm:$0xff]
  %v4554 = vld [vmem:[#allocation3 + $0x39] sm:$0xff]
  %v4555 = vld [vmem:[#allocation3 + $0x41] sm:$0xff]
  %v4556 = vld [vmem:[#allocation3 + $0x51] sm:$0xff]
  %v4557 = vld [vmem:[#allocation3 + $0x59] sm:$0xff]
  %v4558 = vld [vmem:[#allocation3 + $0x61] sm:$0xff]
  %v4559 = vld [vmem:[#allocation3 + $0x69] sm:$0xff]
  %v4560 = vld [vmem:[#allocation3 + $0x79] sm:$0xff]
  %v4561 = vld [vmem:[#allocation3 + $0x81] sm:$0xff]
  %v4562 = vld [vmem:[#allocation3 + $0x89] sm:$0xff]
  %v4563 = vld [vmem:[#allocation3 + $0x91] sm:$0xff]
  %v4564 = vld [vmem:[#allocation3 + $0xa1] sm:$0xff]
  %v4565 = vld [vmem:[#allocation3 + $0xa9] sm:$0xff]
  %v4566 = vld [vmem:[#allocation3 + $0xb1] sm:$0xff]
  %v4567 = vld [vmem:[#allocation3 + $0xb9] sm:$0xff]
  %v4568 = vld [vmem:[#allocation3 + $0xc9] sm:$0xff]
  %v4569 = vld [vmem:[#allocation3 + $0xd1] sm:$0xff]
  %v4570 = vld [vmem:[#allocation3 + $0xd9] sm:$0xff]
  %v4571 = vld [vmem:[#allocation3 + $0xe1] sm:$0xff]
  %v4572 = vld [vmem:[#allocation3 + $0xf1] sm:$0xff]
  %v4573 = vld [vmem:[#allocation3 + $0xf9] sm:$0xff]
  %v4574 = vld [vmem:[#allocation3 + $0x101] sm:$0xff]
  %v4575 = vld [vmem:[#allocation3 + $0x109] sm:$0xff]
  %v4576 = vld [vmem:[#allocation3 + $0x119] sm:$0xff]
  %v4577 = vld [vmem:[#allocation3 + $0x121] sm:$0xff]
  %v4578 = vld [vmem:[#allocation3 + $0x129] sm:$0xff]
  %v4579 = vld [vmem:[#allocation3 + $0x131] sm:$0xff]
  %v4580 = vpack.c.bf16 %v4549, %v4548
  %v4581 = vpack.c.bf16 %v4551, %v4550
  %v4582 = vpack.c.bf16 %v4553, %v4552
  %v4583 = vpack.c.bf16 %v4555, %v4554
  %v4584 = vpack.c.bf16 %v4557, %v4556
  %v4585 = vpack.c.bf16 %v4559, %v4558
  %v4586 = vpack.c.bf16 %v4561, %v4560
  %v4587 = vpack.c.bf16 %v4563, %v4562
  %v4588 = vpack.c.bf16 %v4565, %v4564
  %v4589 = vpack.c.bf16 %v4567, %v4566
  %v4590 = vpack.c.bf16 %v4569, %v4568
  %v4591 = vpack.c.bf16 %v4571, %v4570
  %v4592 = vpack.c.bf16 %v4573, %v4572
  %v4593 = vpack.c.bf16 %v4575, %v4574
  %v4594 = vpack.c.bf16 %v4577, %v4576
  %v4595 = vpack.c.bf16 %v4579, %v4578
  %4596 = vst [vmem:[#allocation5 + $0x8] sm:$0xff] %v4580
  %4597 = vst [vmem:[#allocation5 + $0x50] sm:$0xff] %v4581
  %4598 = vst [vmem:[#allocation5 + $0x98] sm:$0xff] %v4582
  %4599 = vst [vmem:[#allocation5 + $0xe0] sm:$0xff] %v4583
  %4600 = vst [vmem:[#allocation5 + $0x128] sm:$0xff] %v4584
  %4601 = vst [vmem:[#allocation5 + $0x170] sm:$0xff] %v4585
  %4602 = vst [vmem:[#allocation5 + $0x1b8] sm:$0xff] %v4586
  %4603 = vst [vmem:[#allocation5 + $0x200] sm:$0xff] %v4587
  %4604 = vst [vmem:[#allocation5 + $0x248] sm:$0xff] %v4588
  %4605 = vst [vmem:[#allocation5 + $0x290] sm:$0xff] %v4589
  %4606 = vst [vmem:[#allocation5 + $0x2d8] sm:$0xff] %v4590
  %4607 = vst [vmem:[#allocation5 + $0x320] sm:$0xff] %v4591
  %4608 = vst [vmem:[#allocation5 + $0x368] sm:$0xff] %v4592
  %4609 = vst [vmem:[#allocation5 + $0x3b0] sm:$0xff] %v4593
  %4610 = vst [vmem:[#allocation5 + $0x3f8] sm:$0xff] %v4594
  %4611 = vst [vmem:[#allocation5 + $0x440] sm:$0xff] %v4595
  %v4612 = vld [vmem:[#allocation3 + $0x2] sm:$0xff]
  %v4613 = vld [vmem:[#allocation3 + $0xa] sm:$0xff]
  %v4614 = vld [vmem:[#allocation3 + $0x12] sm:$0xff]
  %v4615 = vld [vmem:[#allocation3 + $0x1a] sm:$0xff]
  %v4616 = vld [vmem:[#allocation3 + $0x2a] sm:$0xff]
  %v4617 = vld [vmem:[#allocation3 + $0x32] sm:$0xff]
  %v4618 = vld [vmem:[#allocation3 + $0x3a] sm:$0xff]
  %v4619 = vld [vmem:[#allocation3 + $0x42] sm:$0xff]
  %v4620 = vld [vmem:[#allocation3 + $0x52] sm:$0xff]
  %v4621 = vld [vmem:[#allocation3 + $0x5a] sm:$0xff]
  %v4622 = vld [vmem:[#allocation3 + $0x62] sm:$0xff]
  %v4623 = vld [vmem:[#allocation3 + $0x6a] sm:$0xff]
  %v4624 = vld [vmem:[#allocation3 + $0x7a] sm:$0xff]
  %v4625 = vld [vmem:[#allocation3 + $0x82] sm:$0xff]
  %v4626 = vld [vmem:[#allocation3 + $0x8a] sm:$0xff]
  %v4627 = vld [vmem:[#allocation3 + $0x92] sm:$0xff]
  %v4628 = vld [vmem:[#allocation3 + $0xa2] sm:$0xff]
  %v4629 = vld [vmem:[#allocation3 + $0xaa] sm:$0xff]
  %v4630 = vld [vmem:[#allocation3 + $0xb2] sm:$0xff]
  %v4631 = vld [vmem:[#allocation3 + $0xba] sm:$0xff]
  %v4632 = vld [vmem:[#allocation3 + $0xca] sm:$0xff]
  %v4633 = vld [vmem:[#allocation3 + $0xd2] sm:$0xff]
  %v4634 = vld [vmem:[#allocation3 + $0xda] sm:$0xff]
  %v4635 = vld [vmem:[#allocation3 + $0xe2] sm:$0xff]
  %v4636 = vld [vmem:[#allocation3 + $0xf2] sm:$0xff]
  %v4637 = vld [vmem:[#allocation3 + $0xfa] sm:$0xff]
  %v4638 = vld [vmem:[#allocation3 + $0x102] sm:$0xff]
  %v4639 = vld [vmem:[#allocation3 + $0x10a] sm:$0xff]
  %v4640 = vld [vmem:[#allocation3 + $0x11a] sm:$0xff]
  %v4641 = vld [vmem:[#allocation3 + $0x122] sm:$0xff]
  %v4642 = vld [vmem:[#allocation3 + $0x12a] sm:$0xff]
  %v4643 = vld [vmem:[#allocation3 + $0x132] sm:$0xff]
  %v4644 = vpack.c.bf16 %v4613, %v4612
  %v4645 = vpack.c.bf16 %v4615, %v4614
  %v4646 = vpack.c.bf16 %v4617, %v4616
  %v4647 = vpack.c.bf16 %v4619, %v4618
  %v4648 = vpack.c.bf16 %v4621, %v4620
  %v4649 = vpack.c.bf16 %v4623, %v4622
  %v4650 = vpack.c.bf16 %v4625, %v4624
  %v4651 = vpack.c.bf16 %v4627, %v4626
  %v4652 = vpack.c.bf16 %v4629, %v4628
  %v4653 = vpack.c.bf16 %v4631, %v4630
  %v4654 = vpack.c.bf16 %v4633, %v4632
  %v4655 = vpack.c.bf16 %v4635, %v4634
  %v4656 = vpack.c.bf16 %v4637, %v4636
  %v4657 = vpack.c.bf16 %v4639, %v4638
  %v4658 = vpack.c.bf16 %v4641, %v4640
  %v4659 = vpack.c.bf16 %v4643, %v4642
  %4660 = vst [vmem:[#allocation5 + $0x10] sm:$0xff] %v4644
  %4661 = vst [vmem:[#allocation5 + $0x58] sm:$0xff] %v4645
  %4662 = vst [vmem:[#allocation5 + $0xa0] sm:$0xff] %v4646
  %4663 = vst [vmem:[#allocation5 + $0xe8] sm:$0xff] %v4647
  %4664 = vst [vmem:[#allocation5 + $0x130] sm:$0xff] %v4648
  %4665 = vst [vmem:[#allocation5 + $0x178] sm:$0xff] %v4649
  %4666 = vst [vmem:[#allocation5 + $0x1c0] sm:$0xff] %v4650
  %4667 = vst [vmem:[#allocation5 + $0x208] sm:$0xff] %v4651
  %4668 = vst [vmem:[#allocation5 + $0x250] sm:$0xff] %v4652
  %4669 = vst [vmem:[#allocation5 + $0x298] sm:$0xff] %v4653
  %4670 = vst [vmem:[#allocation5 + $0x2e0] sm:$0xff] %v4654
  %4671 = vst [vmem:[#allocation5 + $0x328] sm:$0xff] %v4655
  %4672 = vst [vmem:[#allocation5 + $0x370] sm:$0xff] %v4656
  %4673 = vst [vmem:[#allocation5 + $0x3b8] sm:$0xff] %v4657
  %4674 = vst [vmem:[#allocation5 + $0x400] sm:$0xff] %v4658
  %4675 = vst [vmem:[#allocation5 + $0x448] sm:$0xff] %v4659
  %v4676 = vld [vmem:[#allocation3 + $0x3] sm:$0xff]
  %v4677 = vld [vmem:[#allocation3 + $0xb] sm:$0xff]
  %v4678 = vld [vmem:[#allocation3 + $0x13] sm:$0xff]
  %v4679 = vld [vmem:[#allocation3 + $0x1b] sm:$0xff]
  %v4680 = vld [vmem:[#allocation3 + $0x2b] sm:$0xff]
  %v4681 = vld [vmem:[#allocation3 + $0x33] sm:$0xff]
  %v4682 = vld [vmem:[#allocation3 + $0x3b] sm:$0xff]
  %v4683 = vld [vmem:[#allocation3 + $0x43] sm:$0xff]
  %v4684 = vld [vmem:[#allocation3 + $0x53] sm:$0xff]
  %v4685 = vld [vmem:[#allocation3 + $0x5b] sm:$0xff]
  %v4686 = vld [vmem:[#allocation3 + $0x63] sm:$0xff]
  %v4687 = vld [vmem:[#allocation3 + $0x6b] sm:$0xff]
  %v4688 = vld [vmem:[#allocation3 + $0x7b] sm:$0xff]
  %v4689 = vld [vmem:[#allocation3 + $0x83] sm:$0xff]
  %v4690 = vld [vmem:[#allocation3 + $0x8b] sm:$0xff]
  %v4691 = vld [vmem:[#allocation3 + $0x93] sm:$0xff]
  %v4692 = vld [vmem:[#allocation3 + $0xa3] sm:$0xff]
  %v4693 = vld [vmem:[#allocation3 + $0xab] sm:$0xff]
  %v4694 = vld [vmem:[#allocation3 + $0xb3] sm:$0xff]
  %v4695 = vld [vmem:[#allocation3 + $0xbb] sm:$0xff]
  %v4696 = vld [vmem:[#allocation3 + $0xcb] sm:$0xff]
  %v4697 = vld [vmem:[#allocation3 + $0xd3] sm:$0xff]
  %v4698 = vld [vmem:[#allocation3 + $0xdb] sm:$0xff]
  %v4699 = vld [vmem:[#allocation3 + $0xe3] sm:$0xff]
  %v4700 = vld [vmem:[#allocation3 + $0xf3] sm:$0xff]
  %v4701 = vld [vmem:[#allocation3 + $0xfb] sm:$0xff]
  %v4702 = vld [vmem:[#allocation3 + $0x103] sm:$0xff]
  %v4703 = vld [vmem:[#allocation3 + $0x10b] sm:$0xff]
  %v4704 = vld [vmem:[#allocation3 + $0x11b] sm:$0xff]
  %v4705 = vld [vmem:[#allocation3 + $0x123] sm:$0xff]
  %v4706 = vld [vmem:[#allocation3 + $0x12b] sm:$0xff]
  %v4707 = vld [vmem:[#allocation3 + $0x133] sm:$0xff]
  %v4708 = vpack.c.bf16 %v4677, %v4676
  %v4709 = vpack.c.bf16 %v4679, %v4678
  %v4710 = vpack.c.bf16 %v4681, %v4680
  %v4711 = vpack.c.bf16 %v4683, %v4682
  %v4712 = vpack.c.bf16 %v4685, %v4684
  %v4713 = vpack.c.bf16 %v4687, %v4686
  %v4714 = vpack.c.bf16 %v4689, %v4688
  %v4715 = vpack.c.bf16 %v4691, %v4690
  %v4716 = vpack.c.bf16 %v4693, %v4692
  %v4717 = vpack.c.bf16 %v4695, %v4694
  %v4718 = vpack.c.bf16 %v4697, %v4696
  %v4719 = vpack.c.bf16 %v4699, %v4698
  %v4720 = vpack.c.bf16 %v4701, %v4700
  %v4721 = vpack.c.bf16 %v4703, %v4702
  %v4722 = vpack.c.bf16 %v4705, %v4704
  %v4723 = vpack.c.bf16 %v4707, %v4706
  %4724 = vst [vmem:[#allocation5 + $0x18] sm:$0xff] %v4708
  %4725 = vst [vmem:[#allocation5 + $0x60] sm:$0xff] %v4709
  %4726 = vst [vmem:[#allocation5 + $0xa8] sm:$0xff] %v4710
  %4727 = vst [vmem:[#allocation5 + $0xf0] sm:$0xff] %v4711
  %4728 = vst [vmem:[#allocation5 + $0x138] sm:$0xff] %v4712
  %4729 = vst [vmem:[#allocation5 + $0x180] sm:$0xff] %v4713
  %4730 = vst [vmem:[#allocation5 + $0x1c8] sm:$0xff] %v4714
  %4731 = vst [vmem:[#allocation5 + $0x210] sm:$0xff] %v4715
  %4732 = vst [vmem:[#allocation5 + $0x258] sm:$0xff] %v4716
  %4733 = vst [vmem:[#allocation5 + $0x2a0] sm:$0xff] %v4717
  %4734 = vst [vmem:[#allocation5 + $0x2e8] sm:$0xff] %v4718
  %4735 = vst [vmem:[#allocation5 + $0x330] sm:$0xff] %v4719
  %4736 = vst [vmem:[#allocation5 + $0x378] sm:$0xff] %v4720
  %4737 = vst [vmem:[#allocation5 + $0x3c0] sm:$0xff] %v4721
  %4738 = vst [vmem:[#allocation5 + $0x408] sm:$0xff] %v4722
  %4739 = vst [vmem:[#allocation5 + $0x450] sm:$0xff] %v4723
  %v4740 = vld [vmem:[#allocation3 + $0x4] sm:$0xff]
  %v4741 = vld [vmem:[#allocation3 + $0xc] sm:$0xff]
  %v4742 = vld [vmem:[#allocation3 + $0x14] sm:$0xff]
  %v4743 = vld [vmem:[#allocation3 + $0x1c] sm:$0xff]
  %v4744 = vld [vmem:[#allocation3 + $0x2c] sm:$0xff]
  %v4745 = vld [vmem:[#allocation3 + $0x34] sm:$0xff]
  %v4746 = vld [vmem:[#allocation3 + $0x3c] sm:$0xff]
  %v4747 = vld [vmem:[#allocation3 + $0x44] sm:$0xff]
  %v4748 = vld [vmem:[#allocation3 + $0x54] sm:$0xff]
  %v4749 = vld [vmem:[#allocation3 + $0x5c] sm:$0xff]
  %v4750 = vld [vmem:[#allocation3 + $0x64] sm:$0xff]
  %v4751 = vld [vmem:[#allocation3 + $0x6c] sm:$0xff]
  %v4752 = vld [vmem:[#allocation3 + $0x7c] sm:$0xff]
  %v4753 = vld [vmem:[#allocation3 + $0x84] sm:$0xff]
  %v4754 = vld [vmem:[#allocation3 + $0x8c] sm:$0xff]
  %v4755 = vld [vmem:[#allocation3 + $0x94] sm:$0xff]
  %v4756 = vld [vmem:[#allocation3 + $0xa4] sm:$0xff]
  %v4757 = vld [vmem:[#allocation3 + $0xac] sm:$0xff]
  %v4758 = vld [vmem:[#allocation3 + $0xb4] sm:$0xff]
  %v4759 = vld [vmem:[#allocation3 + $0xbc] sm:$0xff]
  %v4760 = vld [vmem:[#allocation3 + $0xcc] sm:$0xff]
  %v4761 = vld [vmem:[#allocation3 + $0xd4] sm:$0xff]
  %v4762 = vld [vmem:[#allocation3 + $0xdc] sm:$0xff]
  %v4763 = vld [vmem:[#allocation3 + $0xe4] sm:$0xff]
  %v4764 = vld [vmem:[#allocation3 + $0xf4] sm:$0xff]
  %v4765 = vld [vmem:[#allocation3 + $0xfc] sm:$0xff]
  %v4766 = vld [vmem:[#allocation3 + $0x104] sm:$0xff]
  %v4767 = vld [vmem:[#allocation3 + $0x10c] sm:$0xff]
  %v4768 = vld [vmem:[#allocation3 + $0x11c] sm:$0xff]
  %v4769 = vld [vmem:[#allocation3 + $0x124] sm:$0xff]
  %v4770 = vld [vmem:[#allocation3 + $0x12c] sm:$0xff]
  %v4771 = vld [vmem:[#allocation3 + $0x134] sm:$0xff]
  %v4772 = vpack.c.bf16 %v4741, %v4740
  %v4773 = vpack.c.bf16 %v4743, %v4742
  %v4774 = vpack.c.bf16 %v4745, %v4744
  %v4775 = vpack.c.bf16 %v4747, %v4746
  %v4776 = vpack.c.bf16 %v4749, %v4748
  %v4777 = vpack.c.bf16 %v4751, %v4750
  %v4778 = vpack.c.bf16 %v4753, %v4752
  %v4779 = vpack.c.bf16 %v4755, %v4754
  %v4780 = vpack.c.bf16 %v4757, %v4756
  %v4781 = vpack.c.bf16 %v4759, %v4758
  %v4782 = vpack.c.bf16 %v4761, %v4760
  %v4783 = vpack.c.bf16 %v4763, %v4762
  %v4784 = vpack.c.bf16 %v4765, %v4764
  %v4785 = vpack.c.bf16 %v4767, %v4766
  %v4786 = vpack.c.bf16 %v4769, %v4768
  %v4787 = vpack.c.bf16 %v4771, %v4770
  %4788 = vst [vmem:[#allocation5 + $0x20] sm:$0xff] %v4772
  %4789 = vst [vmem:[#allocation5 + $0x68] sm:$0xff] %v4773
  %4790 = vst [vmem:[#allocation5 + $0xb0] sm:$0xff] %v4774
  %4791 = vst [vmem:[#allocation5 + $0xf8] sm:$0xff] %v4775
  %4792 = vst [vmem:[#allocation5 + $0x140] sm:$0xff] %v4776
  %4793 = vst [vmem:[#allocation5 + $0x188] sm:$0xff] %v4777
  %4794 = vst [vmem:[#allocation5 + $0x1d0] sm:$0xff] %v4778
  %4795 = vst [vmem:[#allocation5 + $0x218] sm:$0xff] %v4779
  %4796 = vst [vmem:[#allocation5 + $0x260] sm:$0xff] %v4780
  %4797 = vst [vmem:[#allocation5 + $0x2a8] sm:$0xff] %v4781
  %4798 = vst [vmem:[#allocation5 + $0x2f0] sm:$0xff] %v4782
  %4799 = vst [vmem:[#allocation5 + $0x338] sm:$0xff] %v4783
  %4800 = vst [vmem:[#allocation5 + $0x380] sm:$0xff] %v4784
  %4801 = vst [vmem:[#allocation5 + $0x3c8] sm:$0xff] %v4785
  %4802 = vst [vmem:[#allocation5 + $0x410] sm:$0xff] %v4786
  %4803 = vst [vmem:[#allocation5 + $0x458] sm:$0xff] %v4787
  %v4804 = vld [vmem:[#allocation3 + $0x5] sm:$0xff]
  %v4805 = vld [vmem:[#allocation3 + $0xd] sm:$0xff]
  %v4806 = vld [vmem:[#allocation3 + $0x15] sm:$0xff]
  %v4807 = vld [vmem:[#allocation3 + $0x1d] sm:$0xff]
  %v4808 = vld [vmem:[#allocation3 + $0x2d] sm:$0xff]
  %v4809 = vld [vmem:[#allocation3 + $0x35] sm:$0xff]
  %v4810 = vld [vmem:[#allocation3 + $0x3d] sm:$0xff]
  %v4811 = vld [vmem:[#allocation3 + $0x45] sm:$0xff]
  %v4812 = vld [vmem:[#allocation3 + $0x55] sm:$0xff]
  %v4813 = vld [vmem:[#allocation3 + $0x5d] sm:$0xff]
  %v4814 = vld [vmem:[#allocation3 + $0x65] sm:$0xff]
  %v4815 = vld [vmem:[#allocation3 + $0x6d] sm:$0xff]
  %v4816 = vld [vmem:[#allocation3 + $0x7d] sm:$0xff]
  %v4817 = vld [vmem:[#allocation3 + $0x85] sm:$0xff]
  %v4818 = vld [vmem:[#allocation3 + $0x8d] sm:$0xff]
  %v4819 = vld [vmem:[#allocation3 + $0x95] sm:$0xff]
  %v4820 = vld [vmem:[#allocation3 + $0xa5] sm:$0xff]
  %v4821 = vld [vmem:[#allocation3 + $0xad] sm:$0xff]
  %v4822 = vld [vmem:[#allocation3 + $0xb5] sm:$0xff]
  %v4823 = vld [vmem:[#allocation3 + $0xbd] sm:$0xff]
  %v4824 = vld [vmem:[#allocation3 + $0xcd] sm:$0xff]
  %v4825 = vld [vmem:[#allocation3 + $0xd5] sm:$0xff]
  %v4826 = vld [vmem:[#allocation3 + $0xdd] sm:$0xff]
  %v4827 = vld [vmem:[#allocation3 + $0xe5] sm:$0xff]
  %v4828 = vld [vmem:[#allocation3 + $0xf5] sm:$0xff]
  %v4829 = vld [vmem:[#allocation3 + $0xfd] sm:$0xff]
  %v4830 = vld [vmem:[#allocation3 + $0x105] sm:$0xff]
  %v4831 = vld [vmem:[#allocation3 + $0x10d] sm:$0xff]
  %v4832 = vld [vmem:[#allocation3 + $0x11d] sm:$0xff]
  %v4833 = vld [vmem:[#allocation3 + $0x125] sm:$0xff]
  %v4834 = vld [vmem:[#allocation3 + $0x12d] sm:$0xff]
  %v4835 = vld [vmem:[#allocation3 + $0x135] sm:$0xff]
  %v4836 = vpack.c.bf16 %v4805, %v4804
  %v4837 = vpack.c.bf16 %v4807, %v4806
  %v4838 = vpack.c.bf16 %v4809, %v4808
  %v4839 = vpack.c.bf16 %v4811, %v4810
  %v4840 = vpack.c.bf16 %v4813, %v4812
  %v4841 = vpack.c.bf16 %v4815, %v4814
  %v4842 = vpack.c.bf16 %v4817, %v4816
  %v4843 = vpack.c.bf16 %v4819, %v4818
  %v4844 = vpack.c.bf16 %v4821, %v4820
  %v4845 = vpack.c.bf16 %v4823, %v4822
  %v4846 = vpack.c.bf16 %v4825, %v4824
  %v4847 = vpack.c.bf16 %v4827, %v4826
  %v4848 = vpack.c.bf16 %v4829, %v4828
  %v4849 = vpack.c.bf16 %v4831, %v4830
  %v4850 = vpack.c.bf16 %v4833, %v4832
  %v4851 = vpack.c.bf16 %v4835, %v4834
  %4852 = vst [vmem:[#allocation5 + $0x28] sm:$0xff] %v4836
  %4853 = vst [vmem:[#allocation5 + $0x70] sm:$0xff] %v4837
  %4854 = vst [vmem:[#allocation5 + $0xb8] sm:$0xff] %v4838
  %4855 = vst [vmem:[#allocation5 + $0x100] sm:$0xff] %v4839
  %4856 = vst [vmem:[#allocation5 + $0x148] sm:$0xff] %v4840
  %4857 = vst [vmem:[#allocation5 + $0x190] sm:$0xff] %v4841
  %4858 = vst [vmem:[#allocation5 + $0x1d8] sm:$0xff] %v4842
  %4859 = vst [vmem:[#allocation5 + $0x220] sm:$0xff] %v4843
  %4860 = vst [vmem:[#allocation5 + $0x268] sm:$0xff] %v4844
  %4861 = vst [vmem:[#allocation5 + $0x2b0] sm:$0xff] %v4845
  %4862 = vst [vmem:[#allocation5 + $0x2f8] sm:$0xff] %v4846
  %4863 = vst [vmem:[#allocation5 + $0x340] sm:$0xff] %v4847
  %4864 = vst [vmem:[#allocation5 + $0x388] sm:$0xff] %v4848
  %4865 = vst [vmem:[#allocation5 + $0x3d0] sm:$0xff] %v4849
  %4866 = vst [vmem:[#allocation5 + $0x418] sm:$0xff] %v4850
  %4867 = vst [vmem:[#allocation5 + $0x460] sm:$0xff] %v4851
  %v4868 = vld [vmem:[#allocation3 + $0x6] sm:$0xff]
  %v4869 = vld [vmem:[#allocation3 + $0xe] sm:$0xff]
  %v4870 = vld [vmem:[#allocation3 + $0x16] sm:$0xff]
  %v4871 = vld [vmem:[#allocation3 + $0x1e] sm:$0xff]
  %v4872 = vld [vmem:[#allocation3 + $0x2e] sm:$0xff]
  %v4873 = vld [vmem:[#allocation3 + $0x36] sm:$0xff]
  %v4874 = vld [vmem:[#allocation3 + $0x3e] sm:$0xff]
  %v4875 = vld [vmem:[#allocation3 + $0x46] sm:$0xff]
  %v4876 = vld [vmem:[#allocation3 + $0x56] sm:$0xff]
  %v4877 = vld [vmem:[#allocation3 + $0x5e] sm:$0xff]
  %v4878 = vld [vmem:[#allocation3 + $0x66] sm:$0xff]
  %v4879 = vld [vmem:[#allocation3 + $0x6e] sm:$0xff]
  %v4880 = vld [vmem:[#allocation3 + $0x7e] sm:$0xff]
  %v4881 = vld [vmem:[#allocation3 + $0x86] sm:$0xff]
  %v4882 = vld [vmem:[#allocation3 + $0x8e] sm:$0xff]
  %v4883 = vld [vmem:[#allocation3 + $0x96] sm:$0xff]
  %v4884 = vld [vmem:[#allocation3 + $0xa6] sm:$0xff]
  %v4885 = vld [vmem:[#allocation3 + $0xae] sm:$0xff]
  %v4886 = vld [vmem:[#allocation3 + $0xb6] sm:$0xff]
  %v4887 = vld [vmem:[#allocation3 + $0xbe] sm:$0xff]
  %v4888 = vld [vmem:[#allocation3 + $0xce] sm:$0xff]
  %v4889 = vld [vmem:[#allocation3 + $0xd6] sm:$0xff]
  %v4890 = vld [vmem:[#allocation3 + $0xde] sm:$0xff]
  %v4891 = vld [vmem:[#allocation3 + $0xe6] sm:$0xff]
  %v4892 = vld [vmem:[#allocation3 + $0xf6] sm:$0xff]
  %v4893 = vld [vmem:[#allocation3 + $0xfe] sm:$0xff]
  %v4894 = vld [vmem:[#allocation3 + $0x106] sm:$0xff]
  %v4895 = vld [vmem:[#allocation3 + $0x10e] sm:$0xff]
  %v4896 = vld [vmem:[#allocation3 + $0x11e] sm:$0xff]
  %v4897 = vld [vmem:[#allocation3 + $0x126] sm:$0xff]
  %v4898 = vld [vmem:[#allocation3 + $0x12e] sm:$0xff]
  %v4899 = vld [vmem:[#allocation3 + $0x136] sm:$0xff]
  %v4900 = vpack.c.bf16 %v4869, %v4868
  %v4901 = vpack.c.bf16 %v4871, %v4870
  %v4902 = vpack.c.bf16 %v4873, %v4872
  %v4903 = vpack.c.bf16 %v4875, %v4874
  %v4904 = vpack.c.bf16 %v4877, %v4876
  %v4905 = vpack.c.bf16 %v4879, %v4878
  %v4906 = vpack.c.bf16 %v4881, %v4880
  %v4907 = vpack.c.bf16 %v4883, %v4882
  %v4908 = vpack.c.bf16 %v4885, %v4884
  %v4909 = vpack.c.bf16 %v4887, %v4886
  %v4910 = vpack.c.bf16 %v4889, %v4888
  %v4911 = vpack.c.bf16 %v4891, %v4890
  %v4912 = vpack.c.bf16 %v4893, %v4892
  %v4913 = vpack.c.bf16 %v4895, %v4894
  %v4914 = vpack.c.bf16 %v4897, %v4896
  %v4915 = vpack.c.bf16 %v4899, %v4898
  %4916 = vst [vmem:[#allocation5 + $0x30] sm:$0xff] %v4900
  %4917 = vst [vmem:[#allocation5 + $0x78] sm:$0xff] %v4901
  %4918 = vst [vmem:[#allocation5 + $0xc0] sm:$0xff] %v4902
  %4919 = vst [vmem:[#allocation5 + $0x108] sm:$0xff] %v4903
  %4920 = vst [vmem:[#allocation5 + $0x150] sm:$0xff] %v4904
  %4921 = vst [vmem:[#allocation5 + $0x198] sm:$0xff] %v4905
  %4922 = vst [vmem:[#allocation5 + $0x1e0] sm:$0xff] %v4906
  %4923 = vst [vmem:[#allocation5 + $0x228] sm:$0xff] %v4907
  %4924 = vst [vmem:[#allocation5 + $0x270] sm:$0xff] %v4908
  %4925 = vst [vmem:[#allocation5 + $0x2b8] sm:$0xff] %v4909
  %4926 = vst [vmem:[#allocation5 + $0x300] sm:$0xff] %v4910
  %4927 = vst [vmem:[#allocation5 + $0x348] sm:$0xff] %v4911
  %4928 = vst [vmem:[#allocation5 + $0x390] sm:$0xff] %v4912
  %4929 = vst [vmem:[#allocation5 + $0x3d8] sm:$0xff] %v4913
  %4930 = vst [vmem:[#allocation5 + $0x420] sm:$0xff] %v4914
  %4931 = vst [vmem:[#allocation5 + $0x468] sm:$0xff] %v4915
  %v4932 = vld [vmem:[#allocation3 + $0x7] sm:$0xff]
  %v4933 = vld [vmem:[#allocation3 + $0xf] sm:$0xff]
  %v4934 = vld [vmem:[#allocation3 + $0x17] sm:$0xff]
  %v4935 = vld [vmem:[#allocation3 + $0x1f] sm:$0xff]
  %v4936 = vld [vmem:[#allocation3 + $0x2f] sm:$0xff]
  %v4937 = vld [vmem:[#allocation3 + $0x37] sm:$0xff]
  %v4938 = vld [vmem:[#allocation3 + $0x3f] sm:$0xff]
  %v4939 = vld [vmem:[#allocation3 + $0x47] sm:$0xff]
  %v4940 = vld [vmem:[#allocation3 + $0x57] sm:$0xff]
  %v4941 = vld [vmem:[#allocation3 + $0x5f] sm:$0xff]
  %v4942 = vld [vmem:[#allocation3 + $0x67] sm:$0xff]
  %v4943 = vld [vmem:[#allocation3 + $0x6f] sm:$0xff]
  %v4944 = vld [vmem:[#allocation3 + $0x7f] sm:$0xff]
  %v4945 = vld [vmem:[#allocation3 + $0x87] sm:$0xff]
  %v4946 = vld [vmem:[#allocation3 + $0x8f] sm:$0xff]
  %v4947 = vld [vmem:[#allocation3 + $0x97] sm:$0xff]
  %v4948 = vld [vmem:[#allocation3 + $0xa7] sm:$0xff]
  %v4949 = vld [vmem:[#allocation3 + $0xaf] sm:$0xff]
  %v4950 = vld [vmem:[#allocation3 + $0xb7] sm:$0xff]
  %v4951 = vld [vmem:[#allocation3 + $0xbf] sm:$0xff]
  %v4952 = vld [vmem:[#allocation3 + $0xcf] sm:$0xff]
  %v4953 = vld [vmem:[#allocation3 + $0xd7] sm:$0xff]
  %v4954 = vld [vmem:[#allocation3 + $0xdf] sm:$0xff]
  %v4955 = vld [vmem:[#allocation3 + $0xe7] sm:$0xff]
  %v4956 = vld [vmem:[#allocation3 + $0xf7] sm:$0xff]
  %v4957 = vld [vmem:[#allocation3 + $0xff] sm:$0xff]
  %v4958 = vld [vmem:[#allocation3 + $0x107] sm:$0xff]
  %v4959 = vld [vmem:[#allocation3 + $0x10f] sm:$0xff]
  %v4960 = vld [vmem:[#allocation3 + $0x11f] sm:$0xff]
  %v4961 = vld [vmem:[#allocation3 + $0x127] sm:$0xff]
  %v4962 = vld [vmem:[#allocation3 + $0x12f] sm:$0xff]
  %v4963 = vld [vmem:[#allocation3 + $0x137] sm:$0xff]
  %v4964 = vpack.c.bf16 %v4933, %v4932
  %v4965 = vpack.c.bf16 %v4935, %v4934
  %v4966 = vpack.c.bf16 %v4937, %v4936
  %v4967 = vpack.c.bf16 %v4939, %v4938
  %v4968 = vpack.c.bf16 %v4941, %v4940
  %v4969 = vpack.c.bf16 %v4943, %v4942
  %v4970 = vpack.c.bf16 %v4945, %v4944
  %v4971 = vpack.c.bf16 %v4947, %v4946
  %v4972 = vpack.c.bf16 %v4949, %v4948
  %v4973 = vpack.c.bf16 %v4951, %v4950
  %v4974 = vpack.c.bf16 %v4953, %v4952
  %v4975 = vpack.c.bf16 %v4955, %v4954
  %v4976 = vpack.c.bf16 %v4957, %v4956
  %v4977 = vpack.c.bf16 %v4959, %v4958
  %v4978 = vpack.c.bf16 %v4961, %v4960
  %v4979 = vpack.c.bf16 %v4963, %v4962
  %4980 = vst [vmem:[#allocation5 + $0x38] sm:$0xff] %v4964
  %4981 = vst [vmem:[#allocation5 + $0x80] sm:$0xff] %v4965
  %4982 = vst [vmem:[#allocation5 + $0xc8] sm:$0xff] %v4966
  %4983 = vst [vmem:[#allocation5 + $0x110] sm:$0xff] %v4967
  %4984 = vst [vmem:[#allocation5 + $0x158] sm:$0xff] %v4968
  %4985 = vst [vmem:[#allocation5 + $0x1a0] sm:$0xff] %v4969
  %4986 = vst [vmem:[#allocation5 + $0x1e8] sm:$0xff] %v4970
  %4987 = vst [vmem:[#allocation5 + $0x230] sm:$0xff] %v4971
  %4988 = vst [vmem:[#allocation5 + $0x278] sm:$0xff] %v4972
  %4989 = vst [vmem:[#allocation5 + $0x2c0] sm:$0xff] %v4973
  %4990 = vst [vmem:[#allocation5 + $0x308] sm:$0xff] %v4974
  %4991 = vst [vmem:[#allocation5 + $0x350] sm:$0xff] %v4975
  %4992 = vst [vmem:[#allocation5 + $0x398] sm:$0xff] %v4976
  %4993 = vst [vmem:[#allocation5 + $0x3e0] sm:$0xff] %v4977
  %4994 = vst [vmem:[#allocation5 + $0x428] sm:$0xff] %v4978
  %4995 = vst [vmem:[#allocation5 + $0x470] sm:$0xff] %v4979
  %v4996 = vld [vmem:[#allocation3 + $0x8] sm:$0xff]
  %v4997 = vld [vmem:[#allocation3 + $0x10] sm:$0xff]
  %v4998 = vld [vmem:[#allocation3 + $0x18] sm:$0xff]
  %v4999 = vld [vmem:[#allocation3 + $0x20] sm:$0xff]
  %v5000 = vld [vmem:[#allocation3 + $0x30] sm:$0xff]
  %v5001 = vld [vmem:[#allocation3 + $0x38] sm:$0xff]
  %v5002 = vld [vmem:[#allocation3 + $0x40] sm:$0xff]
  %v5003 = vld [vmem:[#allocation3 + $0x48] sm:$0xff]
  %v5004 = vld [vmem:[#allocation3 + $0x58] sm:$0xff]
  %v5005 = vld [vmem:[#allocation3 + $0x60] sm:$0xff]
  %v5006 = vld [vmem:[#allocation3 + $0x68] sm:$0xff]
  %v5007 = vld [vmem:[#allocation3 + $0x70] sm:$0xff]
  %v5008 = vld [vmem:[#allocation3 + $0x80] sm:$0xff]
  %v5009 = vld [vmem:[#allocation3 + $0x88] sm:$0xff]
  %v5010 = vld [vmem:[#allocation3 + $0x90] sm:$0xff]
  %v5011 = vld [vmem:[#allocation3 + $0x98] sm:$0xff]
  %v5012 = vld [vmem:[#allocation3 + $0xa8] sm:$0xff]
  %v5013 = vld [vmem:[#allocation3 + $0xb0] sm:$0xff]
  %v5014 = vld [vmem:[#allocation3 + $0xb8] sm:$0xff]
  %v5015 = vld [vmem:[#allocation3 + $0xc0] sm:$0xff]
  %v5016 = vld [vmem:[#allocation3 + $0xd0] sm:$0xff]
  %v5017 = vld [vmem:[#allocation3 + $0xd8] sm:$0xff]
  %v5018 = vld [vmem:[#allocation3 + $0xe0] sm:$0xff]
  %v5019 = vld [vmem:[#allocation3 + $0xe8] sm:$0xff]
  %v5020 = vld [vmem:[#allocation3 + $0xf8] sm:$0xff]
  %v5021 = vld [vmem:[#allocation3 + $0x100] sm:$0xff]
  %v5022 = vld [vmem:[#allocation3 + $0x108] sm:$0xff]
  %v5023 = vld [vmem:[#allocation3 + $0x110] sm:$0xff]
  %v5024 = vld [vmem:[#allocation3 + $0x120] sm:$0xff]
  %v5025 = vld [vmem:[#allocation3 + $0x128] sm:$0xff]
  %v5026 = vld [vmem:[#allocation3 + $0x130] sm:$0xff]
  %v5027 = vld [vmem:[#allocation3 + $0x138] sm:$0xff]
  %v5028 = vpack.c.bf16 %v4997, %v4996
  %v5029 = vpack.c.bf16 %v4999, %v4998
  %v5030 = vpack.c.bf16 %v5001, %v5000
  %v5031 = vpack.c.bf16 %v5003, %v5002
  %v5032 = vpack.c.bf16 %v5005, %v5004
  %v5033 = vpack.c.bf16 %v5007, %v5006
  %v5034 = vpack.c.bf16 %v5009, %v5008
  %v5035 = vpack.c.bf16 %v5011, %v5010
  %v5036 = vpack.c.bf16 %v5013, %v5012
  %v5037 = vpack.c.bf16 %v5015, %v5014
  %v5038 = vpack.c.bf16 %v5017, %v5016
  %v5039 = vpack.c.bf16 %v5019, %v5018
  %v5040 = vpack.c.bf16 %v5021, %v5020
  %v5041 = vpack.c.bf16 %v5023, %v5022
  %v5042 = vpack.c.bf16 %v5025, %v5024
  %v5043 = vpack.c.bf16 %v5027, %v5026
  %5044 = vst [vmem:[#allocation5 + $0x40] sm:$0xff] %v5028
  %5045 = vst [vmem:[#allocation5 + $0x88] sm:$0xff] %v5029
  %5046 = vst [vmem:[#allocation5 + $0xd0] sm:$0xff] %v5030
  %5047 = vst [vmem:[#allocation5 + $0x118] sm:$0xff] %v5031
  %5048 = vst [vmem:[#allocation5 + $0x160] sm:$0xff] %v5032
  %5049 = vst [vmem:[#allocation5 + $0x1a8] sm:$0xff] %v5033
  %5050 = vst [vmem:[#allocation5 + $0x1f0] sm:$0xff] %v5034
  %5051 = vst [vmem:[#allocation5 + $0x238] sm:$0xff] %v5035
  %5052 = vst [vmem:[#allocation5 + $0x280] sm:$0xff] %v5036
  %5053 = vst [vmem:[#allocation5 + $0x2c8] sm:$0xff] %v5037
  %5054 = vst [vmem:[#allocation5 + $0x310] sm:$0xff] %v5038
  %5055 = vst [vmem:[#allocation5 + $0x358] sm:$0xff] %v5039
  %5056 = vst [vmem:[#allocation5 + $0x3a0] sm:$0xff] %v5040
  %5057 = vst [vmem:[#allocation5 + $0x3e8] sm:$0xff] %v5041
  %5058 = vst [vmem:[#allocation5 + $0x430] sm:$0xff] %v5042
  %5059 = vst [vmem:[#allocation5 + $0x478] sm:$0xff] %v5043
  %v5060 = vld [vmem:[#allocation5] sm:$0xff]
  %v5061 = vld [vmem:[#allocation5 + $0x8] sm:$0xff]
  %v5062 = vld [vmem:[#allocation5 + $0x10] sm:$0xff]
  %v5063 = vld [vmem:[#allocation5 + $0x18] sm:$0xff]
  %v5064 = vld [vmem:[#allocation5 + $0x20] sm:$0xff]
  %v5065 = vld [vmem:[#allocation5 + $0x28] sm:$0xff]
  %v5066 = vld [vmem:[#allocation5 + $0x30] sm:$0xff]
  %v5067 = vld [vmem:[#allocation5 + $0x38] sm:$0xff]
  %v5068 = vld [vmem:[#allocation5 + $0x40] sm:$0xff]
  %v5069 = vld [vmem:[#allocation5 + $0x48] sm:$0xff]
  %v5070 = vld [vmem:[#allocation5 + $0x50] sm:$0xff]
  %v5071 = vld [vmem:[#allocation5 + $0x58] sm:$0xff]
  %v5072 = vld [vmem:[#allocation5 + $0x60] sm:$0xff]
  %v5073 = vld [vmem:[#allocation5 + $0x68] sm:$0xff]
  %v5074 = vld [vmem:[#allocation5 + $0x70] sm:$0xff]
  %v5075 = vld [vmem:[#allocation5 + $0x78] sm:$0xff]
  %v5076 = vld [vmem:[#allocation5 + $0x80] sm:$0xff]
  %v5077 = vld [vmem:[#allocation5 + $0x88] sm:$0xff]
  %v5078 = vld [vmem:[#allocation5 + $0x90] sm:$0xff]
  %v5079 = vld [vmem:[#allocation5 + $0x98] sm:$0xff]
  %v5080 = vld [vmem:[#allocation5 + $0xa0] sm:$0xff]
  %v5081 = vld [vmem:[#allocation5 + $0xa8] sm:$0xff]
  %v5082 = vld [vmem:[#allocation5 + $0xb0] sm:$0xff]
  %v5083 = vld [vmem:[#allocation5 + $0xb8] sm:$0xff]
  %v5084 = vld [vmem:[#allocation5 + $0xc0] sm:$0xff]
  %v5085 = vld [vmem:[#allocation5 + $0xc8] sm:$0xff]
  %v5086 = vld [vmem:[#allocation5 + $0xd0] sm:$0xff]
  %v5087 = vld [vmem:[#allocation5 + $0xd8] sm:$0xff]
  %v5088 = vld [vmem:[#allocation5 + $0xe0] sm:$0xff]
  %v5089 = vld [vmem:[#allocation5 + $0xe8] sm:$0xff]
  %v5090 = vld [vmem:[#allocation5 + $0xf0] sm:$0xff]
  %v5091 = vld [vmem:[#allocation5 + $0xf8] sm:$0xff]
  %v5092 = vld [vmem:[#allocation5 + $0x100] sm:$0xff]
  %v5093 = vld [vmem:[#allocation5 + $0x108] sm:$0xff]
  %v5094 = vld [vmem:[#allocation5 + $0x110] sm:$0xff]
  %v5095 = vld [vmem:[#allocation5 + $0x118] sm:$0xff]
  %v5096 = vld [vmem:[#allocation5 + $0x120] sm:$0xff]
  %v5097 = vld [vmem:[#allocation5 + $0x128] sm:$0xff]
  %v5098 = vld [vmem:[#allocation5 + $0x130] sm:$0xff]
  %v5099 = vld [vmem:[#allocation5 + $0x138] sm:$0xff]
  %v5100 = vld [vmem:[#allocation5 + $0x140] sm:$0xff]
  %v5101 = vld [vmem:[#allocation5 + $0x148] sm:$0xff]
  %v5102 = vld [vmem:[#allocation5 + $0x150] sm:$0xff]
  %v5103 = vld [vmem:[#allocation5 + $0x158] sm:$0xff]
  %v5104 = vld [vmem:[#allocation5 + $0x160] sm:$0xff]
  %v5105 = vld [vmem:[#allocation5 + $0x168] sm:$0xff]
  %v5106 = vld [vmem:[#allocation5 + $0x170] sm:$0xff]
  %v5107 = vld [vmem:[#allocation5 + $0x178] sm:$0xff]
  %v5108 = vld [vmem:[#allocation5 + $0x180] sm:$0xff]
  %v5109 = vld [vmem:[#allocation5 + $0x188] sm:$0xff]
  %v5110 = vld [vmem:[#allocation5 + $0x190] sm:$0xff]
  %v5111 = vld [vmem:[#allocation5 + $0x198] sm:$0xff]
  %v5112 = vld [vmem:[#allocation5 + $0x1a0] sm:$0xff]
  %v5113 = vld [vmem:[#allocation5 + $0x1a8] sm:$0xff]
  %v5114 = vld [vmem:[#allocation5 + $0x1b0] sm:$0xff]
  %v5115 = vld [vmem:[#allocation5 + $0x1b8] sm:$0xff]
  %v5116 = vld [vmem:[#allocation5 + $0x1c0] sm:$0xff]
  %v5117 = vld [vmem:[#allocation5 + $0x1c8] sm:$0xff]
  %v5118 = vld [vmem:[#allocation5 + $0x1d0] sm:$0xff]
  %v5119 = vld [vmem:[#allocation5 + $0x1d8] sm:$0xff]
  %v5120 = vld [vmem:[#allocation5 + $0x1e0] sm:$0xff]
  %v5121 = vld [vmem:[#allocation5 + $0x1e8] sm:$0xff]
  %v5122 = vld [vmem:[#allocation5 + $0x1f0] sm:$0xff]
  %v5123 = vld [vmem:[#allocation5 + $0x1f8] sm:$0xff]
  %v5124 = vld [vmem:[#allocation5 + $0x200] sm:$0xff]
  %v5125 = vld [vmem:[#allocation5 + $0x208] sm:$0xff]
  %v5126 = vld [vmem:[#allocation5 + $0x210] sm:$0xff]
  %v5127 = vld [vmem:[#allocation5 + $0x218] sm:$0xff]
  %v5128 = vld [vmem:[#allocation5 + $0x220] sm:$0xff]
  %v5129 = vld [vmem:[#allocation5 + $0x228] sm:$0xff]
  %v5130 = vld [vmem:[#allocation5 + $0x230] sm:$0xff]
  %v5131 = vld [vmem:[#allocation5 + $0x238] sm:$0xff]
  %v5132 = vld [vmem:[#allocation5 + $0x240] sm:$0xff]
  %v5133 = vld [vmem:[#allocation5 + $0x248] sm:$0xff]
  %v5134 = vld [vmem:[#allocation5 + $0x250] sm:$0xff]
  %v5135 = vld [vmem:[#allocation5 + $0x258] sm:$0xff]
  %v5136 = vld [vmem:[#allocation5 + $0x260] sm:$0xff]
  %v5137 = vld [vmem:[#allocation5 + $0x268] sm:$0xff]
  %v5138 = vld [vmem:[#allocation5 + $0x270] sm:$0xff]
  %v5139 = vld [vmem:[#allocation5 + $0x278] sm:$0xff]
  %v5140 = vld [vmem:[#allocation5 + $0x280] sm:$0xff]
  %v5141 = vld [vmem:[#allocation5 + $0x288] sm:$0xff]
  %v5142 = vld [vmem:[#allocation5 + $0x290] sm:$0xff]
  %v5143 = vld [vmem:[#allocation5 + $0x298] sm:$0xff]
  %v5144 = vld [vmem:[#allocation5 + $0x2a0] sm:$0xff]
  %v5145 = vld [vmem:[#allocation5 + $0x2a8] sm:$0xff]
  %v5146 = vld [vmem:[#allocation5 + $0x2b0] sm:$0xff]
  %v5147 = vld [vmem:[#allocation5 + $0x2b8] sm:$0xff]
  %v5148 = vld [vmem:[#allocation5 + $0x2c0] sm:$0xff]
  %v5149 = vld [vmem:[#allocation5 + $0x2c8] sm:$0xff]
  %v5150 = vld [vmem:[#allocation5 + $0x2d0] sm:$0xff]
  %v5151 = vld [vmem:[#allocation5 + $0x2d8] sm:$0xff]
  %v5152 = vld [vmem:[#allocation5 + $0x2e0] sm:$0xff]
  %v5153 = vld [vmem:[#allocation5 + $0x2e8] sm:$0xff]
  %v5154 = vld [vmem:[#allocation5 + $0x2f0] sm:$0xff]
  %v5155 = vld [vmem:[#allocation5 + $0x2f8] sm:$0xff]
  %v5156 = vld [vmem:[#allocation5 + $0x300] sm:$0xff]
  %v5157 = vld [vmem:[#allocation5 + $0x308] sm:$0xff]
  %v5158 = vld [vmem:[#allocation5 + $0x310] sm:$0xff]
  %v5159 = vld [vmem:[#allocation5 + $0x318] sm:$0xff]
  %v5160 = vld [vmem:[#allocation5 + $0x320] sm:$0xff]
  %v5161 = vld [vmem:[#allocation5 + $0x328] sm:$0xff]
  %v5162 = vld [vmem:[#allocation5 + $0x330] sm:$0xff]
  %v5163 = vld [vmem:[#allocation5 + $0x338] sm:$0xff]
  %v5164 = vld [vmem:[#allocation5 + $0x340] sm:$0xff]
  %v5165 = vld [vmem:[#allocation5 + $0x348] sm:$0xff]
  %v5166 = vld [vmem:[#allocation5 + $0x350] sm:$0xff]
  %v5167 = vld [vmem:[#allocation5 + $0x358] sm:$0xff]
  %v5168 = vld [vmem:[#allocation5 + $0x360] sm:$0xff]
  %v5169 = vld [vmem:[#allocation5 + $0x368] sm:$0xff]
  %v5170 = vld [vmem:[#allocation5 + $0x370] sm:$0xff]
  %v5171 = vld [vmem:[#allocation5 + $0x378] sm:$0xff]
  %v5172 = vld [vmem:[#allocation5 + $0x380] sm:$0xff]
  %v5173 = vld [vmem:[#allocation5 + $0x388] sm:$0xff]
  %v5174 = vld [vmem:[#allocation5 + $0x390] sm:$0xff]
  %v5175 = vld [vmem:[#allocation5 + $0x398] sm:$0xff]
  %v5176 = vld [vmem:[#allocation5 + $0x3a0] sm:$0xff]
  %v5177 = vld [vmem:[#allocation5 + $0x3a8] sm:$0xff]
  %v5178 = vld [vmem:[#allocation5 + $0x3b0] sm:$0xff]
  %v5179 = vld [vmem:[#allocation5 + $0x3b8] sm:$0xff]
  %v5180 = vld [vmem:[#allocation5 + $0x3c0] sm:$0xff]
  %v5181 = vld [vmem:[#allocation5 + $0x3c8] sm:$0xff]
  %v5182 = vld [vmem:[#allocation5 + $0x3d0] sm:$0xff]
  %v5183 = vld [vmem:[#allocation5 + $0x3d8] sm:$0xff]
  %v5184 = vld [vmem:[#allocation5 + $0x3e0] sm:$0xff]
  %v5185 = vld [vmem:[#allocation5 + $0x3e8] sm:$0xff]
  %v5186 = vld [vmem:[#allocation5 + $0x3f0] sm:$0xff]
  %v5187 = vld [vmem:[#allocation5 + $0x3f8] sm:$0xff]
  %v5188 = vld [vmem:[#allocation5 + $0x400] sm:$0xff]
  %v5189 = vld [vmem:[#allocation5 + $0x408] sm:$0xff]
  %v5190 = vld [vmem:[#allocation5 + $0x410] sm:$0xff]
  %v5191 = vld [vmem:[#allocation5 + $0x418] sm:$0xff]
  %v5192 = vld [vmem:[#allocation5 + $0x420] sm:$0xff]
  %v5193 = vld [vmem:[#allocation5 + $0x428] sm:$0xff]
  %v5194 = vld [vmem:[#allocation5 + $0x430] sm:$0xff]
  %v5195 = vld [vmem:[#allocation5 + $0x438] sm:$0xff]
  %v5196 = vld [vmem:[#allocation5 + $0x440] sm:$0xff]
  %v5197 = vld [vmem:[#allocation5 + $0x448] sm:$0xff]
  %v5198 = vld [vmem:[#allocation5 + $0x450] sm:$0xff]
  %v5199 = vld [vmem:[#allocation5 + $0x458] sm:$0xff]
  %v5200 = vld [vmem:[#allocation5 + $0x460] sm:$0xff]
  %v5201 = vld [vmem:[#allocation5 + $0x468] sm:$0xff]
  %v5202 = vld [vmem:[#allocation5 + $0x470] sm:$0xff]
  %v5203 = vld [vmem:[#allocation5 + $0x478] sm:$0xff]
  %v5204 = vld [vmem:[%s5] sm:$0xf]
  %v5205 = vld [vmem:[%s5 + $0x4] sm:$0xf]
  %v5206 = vld [vmem:[%s5 + $0x8] sm:$0xf]
  %v5207 = vld [vmem:[%s5 + $0xc] sm:$0xf]
  %v5208 = vld [vmem:[%s5 + $0x10] sm:$0xf]
  %v5209 = vld [vmem:[%s5 + $0x14] sm:$0xf]
  %v5210 = vld [vmem:[%s5 + $0x18] sm:$0xf]
  %v5211 = vld [vmem:[%s5 + $0x1c] sm:$0xf]
  %v5212 = vld [vmem:[%s5 + $0x20] sm:$0xf]
  %v5213 = vld [vmem:[%s5 + $0x24] sm:$0xf]
  %v5214 = vld [vmem:[%s5 + $0x28] sm:$0xf]
  %v5215 = vld [vmem:[%s5 + $0x2c] sm:$0xf]
  %v5216 = vld [vmem:[%s5 + $0x30] sm:$0xf]
  %v5217 = vld [vmem:[%s5 + $0x34] sm:$0xf]
  %v5218 = vld [vmem:[%s5 + $0x38] sm:$0xf]
  %v5219 = vld [vmem:[%s5 + $0x3c] sm:$0xf]
  %v5220 = vld [vmem:[%s5 + $0x40] sm:$0xf]
  %v5221 = vld [vmem:[%s5 + $0x44] sm:$0xf]
  %v5222 = vld [vmem:[%s5 + $0x48] sm:$0xf]
  %v5223 = vld [vmem:[%s5 + $0x4c] sm:$0xf]
  %v5224 = vld [vmem:[%s5 + $0x50] sm:$0xf]
  %v5225 = vld [vmem:[%s5 + $0x54] sm:$0xf]
  %v5226 = vld [vmem:[%s5 + $0x58] sm:$0xf]
  %v5227 = vld [vmem:[%s5 + $0x5c] sm:$0xf]
  %v5228 = vld [vmem:[%s5 + $0x60] sm:$0xf]
  %v5229 = vld [vmem:[%s5 + $0x64] sm:$0xf]
  %v5230 = vld [vmem:[%s5 + $0x68] sm:$0xf]
  %v5231 = vld [vmem:[%s5 + $0x6c] sm:$0xf]
  %v5232 = vld [vmem:[%s5 + $0x70] sm:$0xf]
  %v5233 = vld [vmem:[%s5 + $0x74] sm:$0xf]
  %v5234 = vld [vmem:[%s5 + $0x78] sm:$0xf]
  %v5235 = vld [vmem:[%s5 + $0x7c] sm:$0xf]
  %v5236 = vld [vmem:[%s5 + $0x80] sm:$0xf]
  %v5237 = vld [vmem:[%s5 + $0x84] sm:$0xf]
  %v5238 = vld [vmem:[%s5 + $0x88] sm:$0xf]
  %v5239 = vld [vmem:[%s5 + $0x8c] sm:$0xf]
  %v5240 = vld [vmem:[%s5 + $0x90] sm:$0xf]
  %v5241 = vld [vmem:[%s5 + $0x94] sm:$0xf]
  %v5242 = vld [vmem:[%s5 + $0x98] sm:$0xf]
  %v5243 = vld [vmem:[%s5 + $0x9c] sm:$0xf]
  %v5244 = vld [vmem:[%s5 + $0xa0] sm:$0xf]
  %v5245 = vld [vmem:[%s5 + $0xa4] sm:$0xf]
  %v5246 = vld [vmem:[%s5 + $0xa8] sm:$0xf]
  %v5247 = vld [vmem:[%s5 + $0xac] sm:$0xf]
  %v5248 = vld [vmem:[%s5 + $0xb0] sm:$0xf]
  %v5249 = vld [vmem:[%s5 + $0xb4] sm:$0xf]
  %v5250 = vld [vmem:[%s5 + $0xb8] sm:$0xf]
  %v5251 = vld [vmem:[%s5 + $0xbc] sm:$0xf]
  %v5252 = vld [vmem:[%s5 + $0xc0] sm:$0xf]
  %v5253 = vld [vmem:[%s5 + $0xc4] sm:$0xf]
  %v5254 = vld [vmem:[%s5 + $0xc8] sm:$0xf]
  %v5255 = vld [vmem:[%s5 + $0xcc] sm:$0xf]
  %v5256 = vld [vmem:[%s5 + $0xd0] sm:$0xf]
  %v5257 = vld [vmem:[%s5 + $0xd4] sm:$0xf]
  %v5258 = vld [vmem:[%s5 + $0xd8] sm:$0xf]
  %v5259 = vld [vmem:[%s5 + $0xdc] sm:$0xf]
  %v5260 = vld [vmem:[%s5 + $0xe0] sm:$0xf]
  %v5261 = vld [vmem:[%s5 + $0xe4] sm:$0xf]
  %v5262 = vld [vmem:[%s5 + $0xe8] sm:$0xf]
  %v5263 = vld [vmem:[%s5 + $0xec] sm:$0xf]
  %v5264 = vld [vmem:[%s5 + $0xf0] sm:$0xf]
  %v5265 = vld [vmem:[%s5 + $0xf4] sm:$0xf]
  %v5266 = vld [vmem:[%s5 + $0xf8] sm:$0xf]
  %v5267 = vld [vmem:[%s5 + $0xfc] sm:$0xf]
  %v5268 = vld [vmem:[%s5 + $0x100] sm:$0xf]
  %v5269 = vld [vmem:[%s5 + $0x104] sm:$0xf]
  %v5270 = vld [vmem:[%s5 + $0x108] sm:$0xf]
  %v5271 = vld [vmem:[%s5 + $0x10c] sm:$0xf]
  %v5272 = vld [vmem:[%s5 + $0x110] sm:$0xf]
  %v5273 = vld [vmem:[%s5 + $0x114] sm:$0xf]
  %v5274 = vld [vmem:[%s5 + $0x118] sm:$0xf]
  %v5275 = vld [vmem:[%s5 + $0x11c] sm:$0xf]
  %v5276 = vld [vmem:[%s5 + $0x120] sm:$0xf]
  %v5277 = vld [vmem:[%s5 + $0x124] sm:$0xf]
  %v5278 = vld [vmem:[%s5 + $0x128] sm:$0xf]
  %v5279 = vld [vmem:[%s5 + $0x12c] sm:$0xf]
  %v5280 = vld [vmem:[%s5 + $0x130] sm:$0xf]
  %v5281 = vld [vmem:[%s5 + $0x134] sm:$0xf]
  %v5282 = vld [vmem:[%s5 + $0x138] sm:$0xf]
  %v5283 = vld [vmem:[%s5 + $0x13c] sm:$0xf]
  %v5284 = vld [vmem:[%s5 + $0x140] sm:$0xf]
  %v5285 = vld [vmem:[%s5 + $0x144] sm:$0xf]
  %v5286 = vld [vmem:[%s5 + $0x148] sm:$0xf]
  %v5287 = vld [vmem:[%s5 + $0x14c] sm:$0xf]
  %v5288 = vld [vmem:[%s5 + $0x150] sm:$0xf]
  %v5289 = vld [vmem:[%s5 + $0x154] sm:$0xf]
  %v5290 = vld [vmem:[%s5 + $0x158] sm:$0xf]
  %v5291 = vld [vmem:[%s5 + $0x15c] sm:$0xf]
  %v5292 = vld [vmem:[%s5 + $0x160] sm:$0xf]
  %v5293 = vld [vmem:[%s5 + $0x164] sm:$0xf]
  %v5294 = vld [vmem:[%s5 + $0x168] sm:$0xf]
  %v5295 = vld [vmem:[%s5 + $0x16c] sm:$0xf]
  %v5296 = vld [vmem:[%s5 + $0x170] sm:$0xf]
  %v5297 = vld [vmem:[%s5 + $0x174] sm:$0xf]
  %v5298 = vld [vmem:[%s5 + $0x178] sm:$0xf]
  %v5299 = vld [vmem:[%s5 + $0x17c] sm:$0xf]
  %v5300 = vld [vmem:[%s5 + $0x180] sm:$0xf]
  %v5301 = vld [vmem:[%s5 + $0x184] sm:$0xf]
  %v5302 = vld [vmem:[%s5 + $0x188] sm:$0xf]
  %v5303 = vld [vmem:[%s5 + $0x18c] sm:$0xf]
  %v5304 = vld [vmem:[%s5 + $0x190] sm:$0xf]
  %v5305 = vld [vmem:[%s5 + $0x194] sm:$0xf]
  %v5306 = vld [vmem:[%s5 + $0x198] sm:$0xf]
  %v5307 = vld [vmem:[%s5 + $0x19c] sm:$0xf]
  %v5308 = vld [vmem:[%s5 + $0x1a0] sm:$0xf]
  %v5309 = vld [vmem:[%s5 + $0x1a4] sm:$0xf]
  %v5310 = vld [vmem:[%s5 + $0x1a8] sm:$0xf]
  %v5311 = vld [vmem:[%s5 + $0x1ac] sm:$0xf]
  %v5312 = vld [vmem:[%s5 + $0x1b0] sm:$0xf]
  %v5313 = vld [vmem:[%s5 + $0x1b4] sm:$0xf]
  %v5314 = vld [vmem:[%s5 + $0x1b8] sm:$0xf]
  %v5315 = vld [vmem:[%s5 + $0x1bc] sm:$0xf]
  %v5316 = vld [vmem:[%s5 + $0x1c0] sm:$0xf]
  %v5317 = vld [vmem:[%s5 + $0x1c4] sm:$0xf]
  %v5318 = vld [vmem:[%s5 + $0x1c8] sm:$0xf]
  %v5319 = vld [vmem:[%s5 + $0x1cc] sm:$0xf]
  %v5320 = vld [vmem:[%s5 + $0x1d0] sm:$0xf]
  %v5321 = vld [vmem:[%s5 + $0x1d4] sm:$0xf]
  %v5322 = vld [vmem:[%s5 + $0x1d8] sm:$0xf]
  %v5323 = vld [vmem:[%s5 + $0x1dc] sm:$0xf]
  %v5324 = vld [vmem:[%s5 + $0x1e0] sm:$0xf]
  %v5325 = vld [vmem:[%s5 + $0x1e4] sm:$0xf]
  %v5326 = vld [vmem:[%s5 + $0x1e8] sm:$0xf]
  %v5327 = vld [vmem:[%s5 + $0x1ec] sm:$0xf]
  %v5328 = vld [vmem:[%s5 + $0x1f0] sm:$0xf]
  %v5329 = vld [vmem:[%s5 + $0x1f4] sm:$0xf]
  %v5330 = vld [vmem:[%s5 + $0x1f8] sm:$0xf]
  %v5331 = vld [vmem:[%s5 + $0x1fc] sm:$0xf]
  %v5332 = vld [vmem:[%s5 + $0x200] sm:$0xf]
  %v5333 = vld [vmem:[%s5 + $0x204] sm:$0xf]
  %v5334 = vld [vmem:[%s5 + $0x208] sm:$0xf]
  %v5335 = vld [vmem:[%s5 + $0x20c] sm:$0xf]
  %v5336 = vld [vmem:[%s5 + $0x210] sm:$0xf]
  %v5337 = vld [vmem:[%s5 + $0x214] sm:$0xf]
  %v5338 = vld [vmem:[%s5 + $0x218] sm:$0xf]
  %v5339 = vld [vmem:[%s5 + $0x21c] sm:$0xf]
  %v5340 = vld [vmem:[%s5 + $0x220] sm:$0xf]
  %v5341 = vld [vmem:[%s5 + $0x224] sm:$0xf]
  %v5342 = vld [vmem:[%s5 + $0x228] sm:$0xf]
  %v5343 = vld [vmem:[%s5 + $0x22c] sm:$0xf]
  %v5344 = vld [vmem:[%s5 + $0x230] sm:$0xf]
  %v5345 = vld [vmem:[%s5 + $0x234] sm:$0xf]
  %v5346 = vld [vmem:[%s5 + $0x238] sm:$0xf]
  %v5347 = vld [vmem:[%s5 + $0x23c] sm:$0xf]
  %v5348 = vld [vmem:[%s6] sm:$0x1]
  %v5350 = vlaneseq
  %v5351 = vshrl.u32 %v5350, 7
  %v5352 = vsub.s32 0, %v5351
  %v5353 = vrot.slane %v5348, %v5352
  %v5499 = vunpack.c.l.b16 %v5204
  %v5500 = vunpack.c.l.b16 %v5205
  %v5501 = vunpack.c.l.b16 %v5206
  %v5502 = vunpack.c.l.b16 %v5207
  %v5503 = vunpack.c.l.b16 %v5208
  %v5504 = vunpack.c.l.b16 %v5209
  %v5505 = vunpack.c.l.b16 %v5210
  %v5506 = vunpack.c.l.b16 %v5211
  %v5507 = vunpack.c.l.b16 %v5212
  %v5508 = vunpack.c.l.b16 %v5213
  %v5509 = vunpack.c.l.b16 %v5214
  %v5510 = vunpack.c.l.b16 %v5215
  %v5511 = vunpack.c.l.b16 %v5216
  %v5512 = vunpack.c.l.b16 %v5217
  %v5513 = vunpack.c.l.b16 %v5218
  %v5514 = vunpack.c.l.b16 %v5219
  %v5515 = vunpack.c.l.b16 %v5220
  %v5516 = vunpack.c.l.b16 %v5221
  %v5517 = vunpack.c.l.b16 %v5222
  %v5518 = vunpack.c.l.b16 %v5223
  %v5519 = vunpack.c.l.b16 %v5224
  %v5520 = vunpack.c.l.b16 %v5225
  %v5521 = vunpack.c.l.b16 %v5226
  %v5522 = vunpack.c.l.b16 %v5227
  %v5523 = vunpack.c.l.b16 %v5228
  %v5524 = vunpack.c.l.b16 %v5229
  %v5525 = vunpack.c.l.b16 %v5230
  %v5526 = vunpack.c.l.b16 %v5231
  %v5527 = vunpack.c.l.b16 %v5232
  %v5528 = vunpack.c.l.b16 %v5233
  %v5529 = vunpack.c.l.b16 %v5234
  %v5530 = vunpack.c.l.b16 %v5235
  %v5531 = vunpack.c.l.b16 %v5236
  %v5532 = vunpack.c.l.b16 %v5237
  %v5533 = vunpack.c.l.b16 %v5238
  %v5534 = vunpack.c.l.b16 %v5239
  %v5535 = vunpack.c.l.b16 %v5240
  %v5536 = vunpack.c.l.b16 %v5241
  %v5537 = vunpack.c.l.b16 %v5242
  %v5538 = vunpack.c.l.b16 %v5243
  %v5539 = vunpack.c.l.b16 %v5244
  %v5540 = vunpack.c.l.b16 %v5245
  %v5541 = vunpack.c.l.b16 %v5246
  %v5542 = vunpack.c.l.b16 %v5247
  %v5543 = vunpack.c.l.b16 %v5248
  %v5544 = vunpack.c.l.b16 %v5249
  %v5545 = vunpack.c.l.b16 %v5250
  %v5546 = vunpack.c.l.b16 %v5251
  %v5547 = vunpack.c.l.b16 %v5252
  %v5548 = vunpack.c.l.b16 %v5253
  %v5549 = vunpack.c.l.b16 %v5254
  %v5550 = vunpack.c.l.b16 %v5255
  %v5551 = vunpack.c.l.b16 %v5256
  %v5552 = vunpack.c.l.b16 %v5257
  %v5553 = vunpack.c.l.b16 %v5258
  %v5554 = vunpack.c.l.b16 %v5259
  %v5555 = vunpack.c.l.b16 %v5260
  %v5556 = vunpack.c.l.b16 %v5261
  %v5557 = vunpack.c.l.b16 %v5262
  %v5558 = vunpack.c.l.b16 %v5263
  %v5559 = vunpack.c.l.b16 %v5264
  %v5560 = vunpack.c.l.b16 %v5265
  %v5561 = vunpack.c.l.b16 %v5266
  %v5562 = vunpack.c.l.b16 %v5267
  %v5563 = vunpack.c.l.b16 %v5268
  %v5564 = vunpack.c.l.b16 %v5269
  %v5565 = vunpack.c.l.b16 %v5270
  %v5566 = vunpack.c.l.b16 %v5271
  %v5567 = vunpack.c.l.b16 %v5272
  %v5568 = vunpack.c.l.b16 %v5273
  %v5569 = vunpack.c.l.b16 %v5274
  %v5570 = vunpack.c.l.b16 %v5275
  %v5571 = vunpack.c.l.b16 %v5276
  %v5572 = vunpack.c.l.b16 %v5277
  %v5573 = vunpack.c.l.b16 %v5278
  %v5574 = vunpack.c.l.b16 %v5279
  %v5575 = vunpack.c.l.b16 %v5280
  %v5576 = vunpack.c.l.b16 %v5281
  %v5577 = vunpack.c.l.b16 %v5282
  %v5578 = vunpack.c.l.b16 %v5283
  %v5579 = vunpack.c.l.b16 %v5284
  %v5580 = vunpack.c.l.b16 %v5285
  %v5581 = vunpack.c.l.b16 %v5286
  %v5582 = vunpack.c.l.b16 %v5287
  %v5583 = vunpack.c.l.b16 %v5288
  %v5584 = vunpack.c.l.b16 %v5289
  %v5585 = vunpack.c.l.b16 %v5290
  %v5586 = vunpack.c.l.b16 %v5291
  %v5587 = vunpack.c.l.b16 %v5292
  %v5588 = vunpack.c.l.b16 %v5293
  %v5589 = vunpack.c.l.b16 %v5294
  %v5590 = vunpack.c.l.b16 %v5295
  %v5591 = vunpack.c.l.b16 %v5296
  %v5592 = vunpack.c.l.b16 %v5297
  %v5593 = vunpack.c.l.b16 %v5298
  %v5594 = vunpack.c.l.b16 %v5299
  %v5595 = vunpack.c.l.b16 %v5300
  %v5596 = vunpack.c.l.b16 %v5301
  %v5597 = vunpack.c.l.b16 %v5302
  %v5598 = vunpack.c.l.b16 %v5303
  %v5599 = vunpack.c.l.b16 %v5304
  %v5600 = vunpack.c.l.b16 %v5305
  %v5601 = vunpack.c.l.b16 %v5306
  %v5602 = vunpack.c.l.b16 %v5307
  %v5603 = vunpack.c.l.b16 %v5308
  %v5604 = vunpack.c.l.b16 %v5309
  %v5605 = vunpack.c.l.b16 %v5310
  %v5606 = vunpack.c.l.b16 %v5311
  %v5607 = vunpack.c.l.b16 %v5312
  %v5608 = vunpack.c.l.b16 %v5313
  %v5609 = vunpack.c.l.b16 %v5314
  %v5610 = vunpack.c.l.b16 %v5315
  %v5611 = vunpack.c.l.b16 %v5316
  %v5612 = vunpack.c.l.b16 %v5317
  %v5613 = vunpack.c.l.b16 %v5318
  %v5614 = vunpack.c.l.b16 %v5319
  %v5615 = vunpack.c.l.b16 %v5320
  %v5616 = vunpack.c.l.b16 %v5321
  %v5617 = vunpack.c.l.b16 %v5322
  %v5618 = vunpack.c.l.b16 %v5323
  %v5619 = vunpack.c.l.b16 %v5324
  %v5620 = vunpack.c.l.b16 %v5325
  %v5621 = vunpack.c.l.b16 %v5326
  %v5622 = vunpack.c.l.b16 %v5327
  %v5623 = vunpack.c.l.b16 %v5328
  %v5624 = vunpack.c.l.b16 %v5329
  %v5625 = vunpack.c.l.b16 %v5330
  %v5626 = vunpack.c.l.b16 %v5331
  %v5627 = vunpack.c.l.b16 %v5332
  %v5628 = vunpack.c.l.b16 %v5333
  %v5629 = vunpack.c.l.b16 %v5334
  %v5630 = vunpack.c.l.b16 %v5335
  %v5631 = vunpack.c.l.b16 %v5336
  %v5632 = vunpack.c.l.b16 %v5337
  %v5633 = vunpack.c.l.b16 %v5338
  %v5634 = vunpack.c.l.b16 %v5339
  %v5635 = vunpack.c.l.b16 %v5340
  %v5636 = vunpack.c.l.b16 %v5341
  %v5637 = vunpack.c.l.b16 %v5342
  %v5638 = vunpack.c.l.b16 %v5343
  %v5639 = vunpack.c.l.b16 %v5344
  %v5640 = vunpack.c.l.b16 %v5345
  %v5641 = vunpack.c.l.b16 %v5346
  %v5642 = vunpack.c.l.b16 %v5347
  %v5643 = vpack.c.b16 %v5500, %v5499
  %v5644 = vpack.c.b16 %v5502, %v5501
  %v5645 = vpack.c.b16 %v5504, %v5503
  %v5646 = vpack.c.b16 %v5506, %v5505
  %v5647 = vpack.c.b16 %v5508, %v5507
  %v5648 = vpack.c.b16 %v5510, %v5509
  %v5649 = vpack.c.b16 %v5512, %v5511
  %v5650 = vpack.c.b16 %v5514, %v5513
  %v5651 = vpack.c.b16 %v5516, %v5515
  %v5652 = vpack.c.b16 %v5518, %v5517
  %v5653 = vpack.c.b16 %v5520, %v5519
  %v5654 = vpack.c.b16 %v5522, %v5521
  %v5655 = vpack.c.b16 %v5524, %v5523
  %v5656 = vpack.c.b16 %v5526, %v5525
  %v5657 = vpack.c.b16 %v5528, %v5527
  %v5658 = vpack.c.b16 %v5530, %v5529
  %v5659 = vpack.c.b16 %v5532, %v5531
  %v5660 = vpack.c.b16 %v5534, %v5533
  %v5661 = vpack.c.b16 %v5536, %v5535
  %v5662 = vpack.c.b16 %v5538, %v5537
  %v5663 = vpack.c.b16 %v5540, %v5539
  %v5664 = vpack.c.b16 %v5542, %v5541
  %v5665 = vpack.c.b16 %v5544, %v5543
  %v5666 = vpack.c.b16 %v5546, %v5545
  %v5667 = vpack.c.b16 %v5548, %v5547
  %v5668 = vpack.c.b16 %v5550, %v5549
  %v5669 = vpack.c.b16 %v5552, %v5551
  %v5670 = vpack.c.b16 %v5554, %v5553
  %v5671 = vpack.c.b16 %v5556, %v5555
  %v5672 = vpack.c.b16 %v5558, %v5557
  %v5673 = vpack.c.b16 %v5560, %v5559
  %v5674 = vpack.c.b16 %v5562, %v5561
  %v5675 = vpack.c.b16 %v5564, %v5563
  %v5676 = vpack.c.b16 %v5566, %v5565
  %v5677 = vpack.c.b16 %v5568, %v5567
  %v5678 = vpack.c.b16 %v5570, %v5569
  %v5679 = vpack.c.b16 %v5572, %v5571
  %v5680 = vpack.c.b16 %v5574, %v5573
  %v5681 = vpack.c.b16 %v5576, %v5575
  %v5682 = vpack.c.b16 %v5578, %v5577
  %v5683 = vpack.c.b16 %v5580, %v5579
  %v5684 = vpack.c.b16 %v5582, %v5581
  %v5685 = vpack.c.b16 %v5584, %v5583
  %v5686 = vpack.c.b16 %v5586, %v5585
  %v5687 = vpack.c.b16 %v5588, %v5587
  %v5688 = vpack.c.b16 %v5590, %v5589
  %v5689 = vpack.c.b16 %v5592, %v5591
  %v5690 = vpack.c.b16 %v5594, %v5593
  %v5691 = vpack.c.b16 %v5596, %v5595
  %v5692 = vpack.c.b16 %v5598, %v5597
  %v5693 = vpack.c.b16 %v5600, %v5599
  %v5694 = vpack.c.b16 %v5602, %v5601
  %v5695 = vpack.c.b16 %v5604, %v5603
  %v5696 = vpack.c.b16 %v5606, %v5605
  %v5697 = vpack.c.b16 %v5608, %v5607
  %v5698 = vpack.c.b16 %v5610, %v5609
  %v5699 = vpack.c.b16 %v5612, %v5611
  %v5700 = vpack.c.b16 %v5614, %v5613
  %v5701 = vpack.c.b16 %v5616, %v5615
  %v5702 = vpack.c.b16 %v5618, %v5617
  %v5703 = vpack.c.b16 %v5620, %v5619
  %v5704 = vpack.c.b16 %v5622, %v5621
  %v5705 = vpack.c.b16 %v5624, %v5623
  %v5706 = vpack.c.b16 %v5626, %v5625
  %v5707 = vpack.c.b16 %v5628, %v5627
  %v5708 = vpack.c.b16 %v5630, %v5629
  %v5709 = vpack.c.b16 %v5632, %v5631
  %v5710 = vpack.c.b16 %v5634, %v5633
  %v5711 = vpack.c.b16 %v5636, %v5635
  %v5712 = vpack.c.b16 %v5638, %v5637
  %v5713 = vpack.c.b16 %v5640, %v5639
  %v5714 = vpack.c.b16 %v5642, %v5641
  %5787 = vmatprep.subr.bf16.mxu0 0
  %5788 = vmatpush1.bf16.msra.mxu0 %v5643
  %5789 = vmatprep.subr.bf16.mxu0 0
  %5790 = vmatpush1.bf16.msra.mxu0 %v5644
  %5791 = vmatprep.subr.bf16.mxu0 0
  %5792 = vmatpush1.bf16.msra.mxu0 %v5645
  %5793 = vmatprep.subr.bf16.mxu0 0
  %5794 = vmatpush1.bf16.msra.mxu0 %v5646
  %5795 = vmatprep.subr.bf16.mxu0 0
  %5796 = vmatpush1.bf16.msra.mxu0 %v5647
  %5797 = vmatprep.subr.bf16.mxu0 0
  %5798 = vmatpush1.bf16.msra.mxu0 %v5648
  %5799 = vmatprep.subr.bf16.mxu0 0
  %5800 = vmatpush1.bf16.msra.mxu0 %v5649
  %5801 = vmatprep.subr.bf16.mxu0 0
  %5802 = vmatpush1.bf16.msra.mxu0 %v5650
  %5803 = vmatprep.subr.bf16.mxu0 0
  %5804 = vmatpush1.bf16.msra.mxu0 %v5651
  %5805 = vmatprep.subr.bf16.mxu0 0
  %5806 = vmatpush1.bf16.msra.mxu0 %v5652
  %5807 = vmatprep.subr.bf16.mxu0 0
  %5808 = vmatpush1.bf16.msra.mxu0 %v5653
  %5809 = vmatprep.subr.bf16.mxu0 0
  %5810 = vmatpush1.bf16.msra.mxu0 %v5654
  %5811 = vmatprep.subr.bf16.mxu0 0
  %5812 = vmatpush1.bf16.msra.mxu0 %v5655
  %5813 = vmatprep.subr.bf16.mxu0 0
  %5814 = vmatpush1.bf16.msra.mxu0 %v5656
  %5815 = vmatprep.subr.bf16.mxu0 0
  %5816 = vmatpush1.bf16.msra.mxu0 %v5657
  %5817 = vmatprep.subr.bf16.mxu0 0
  %5818 = vmatpush1.bf16.msra.mxu0 %v5658
  %5819 = vmatprep.mubr.bf16.mxu0 %v5061
  %5820 = vmatmul.mubr.bf16.gmra.mrb[0].mxu0 %v5060
  %v5821 = vpop.f32.mrb[0].mxu0
  %v5822 = vadd.f32 %v5353, %v5821
  %v5823 = vpop.f32.mrb[0].mxu0
  %v5824 = vpop.f32.mrb[0].mxu0
  %v5825 = vadd.f32 %v5353, %v5824
  %v5826 = vpop.f32.mrb[0].mxu0
  %5827 = vmatprep.mubr.bf16.mxu0 %v5070
  %5828 = vmatmul.mubr.bf16.gmra.mrb[0].mxu0 %v5069
  %v5829 = vpop.f32.mrb[0].mxu0
  %v5830 = vadd.f32 %v5353, %v5829
  %v5831 = vpop.f32.mrb[0].mxu0
  %v5832 = vpop.f32.mrb[0].mxu0
  %v5833 = vadd.f32 %v5353, %v5832
  %v5834 = vpop.f32.mrb[0].mxu0
  %5835 = vmatprep.mubr.bf16.mxu0 %v5079
  %5836 = vmatmul.mubr.bf16.gmra.mrb[0].mxu0 %v5078
  %v5837 = vpop.f32.mrb[0].mxu0
  %v5838 = vadd.f32 %v5353, %v5837
  %v5839 = vpop.f32.mrb[0].mxu0
  %v5840 = vpop.f32.mrb[0].mxu0
  %v5841 = vadd.f32 %v5353, %v5840
  %v5842 = vpop.f32.mrb[0].mxu0
  %5843 = vmatprep.mubr.bf16.mxu0 %v5088
  %5844 = vmatmul.mubr.bf16.gmra.mrb[0].mxu0 %v5087
  %v5845 = vpop.f32.mrb[0].mxu0
  %v5846 = vadd.f32 %v5353, %v5845
  %v5847 = vpop.f32.mrb[0].mxu0
  %v5848 = vpop.f32.mrb[0].mxu0
  %v5849 = vadd.f32 %v5353, %v5848
  %v5850 = vpop.f32.mrb[0].mxu0
  %5851 = vmatprep.mubr.bf16.mxu0 %v5097
  %5852 = vmatmul.mubr.bf16.gmra.mrb[0].mxu0 %v5096
  %v5853 = vpop.f32.mrb[0].mxu0
  %v5854 = vadd.f32 %v5353, %v5853
  %v5855 = vpop.f32.mrb[0].mxu0
  %v5856 = vpop.f32.mrb[0].mxu0
  %v5857 = vadd.f32 %v5353, %v5856
  %v5858 = vpop.f32.mrb[0].mxu0
  %5859 = vmatprep.mubr.bf16.mxu0 %v5106
  %5860 = vmatmul.mubr.bf16.gmra.mrb[0].mxu0 %v5105
  %v5861 = vpop.f32.mrb[0].mxu0
  %v5862 = vadd.f32 %v5353, %v5861
  %v5863 = vpop.f32.mrb[0].mxu0
  %v5864 = vpop.f32.mrb[0].mxu0
  %v5865 = vadd.f32 %v5353, %v5864
  %v5866 = vpop.f32.mrb[0].mxu0
  %5867 = vmatprep.mubr.bf16.mxu0 %v5115
  %5868 = vmatmul.mubr.bf16.gmra.mrb[0].mxu0 %v5114
  %v5869 = vpop.f32.mrb[0].mxu0
  %v5870 = vadd.f32 %v5353, %v5869
  %v5871 = vpop.f32.mrb[0].mxu0
  %v5872 = vpop.f32.mrb[0].mxu0
  %v5873 = vadd.f32 %v5353, %v5872
  %v5874 = vpop.f32.mrb[0].mxu0
  %5875 = vmatprep.mubr.bf16.mxu0 %v5124
  %5876 = vmatmul.mubr.bf16.gmra.mrb[0].mxu0 %v5123
  %v5877 = vpop.f32.mrb[0].mxu0
  %v5878 = vadd.f32 %v5353, %v5877
  %v5879 = vpop.f32.mrb[0].mxu0
  %v5880 = vpop.f32.mrb[0].mxu0
  %v5881 = vadd.f32 %v5353, %v5880
  %v5882 = vpop.f32.mrb[0].mxu0
  %5883 = vmatprep.mubr.bf16.mxu0 %v5133
  %5884 = vmatmul.mubr.bf16.gmra.mrb[0].mxu0 %v5132
  %v5885 = vpop.f32.mrb[0].mxu0
  %v5886 = vadd.f32 %v5353, %v5885
  %v5887 = vpop.f32.mrb[0].mxu0
  %v5888 = vpop.f32.mrb[0].mxu0
  %v5889 = vadd.f32 %v5353, %v5888
  %v5890 = vpop.f32.mrb[0].mxu0
  %5891 = vmatprep.mubr.bf16.mxu0 %v5142
  %5892 = vmatmul.mubr.bf16.gmra.mrb[0].mxu0 %v5141
  %v5893 = vpop.f32.mrb[0].mxu0
  %v5894 = vadd.f32 %v5353, %v5893
  %v5895 = vpop.f32.mrb[0].mxu0
  %v5896 = vpop.f32.mrb[0].mxu0
  %v5897 = vadd.f32 %v5353, %v5896
  %v5898 = vpop.f32.mrb[0].mxu0
  %5899 = vmatprep.mubr.bf16.mxu0 %v5151
  %5900 = vmatmul.mubr.bf16.gmra.mrb[0].mxu0 %v5150
  %v5901 = vpop.f32.mrb[0].mxu0
  %v5902 = vadd.f32 %v5353, %v5901
  %v5903 = vpop.f32.mrb[0].mxu0
  %v5904 = vpop.f32.mrb[0].mxu0
  %v5905 = vadd.f32 %v5353, %v5904
  %v5906 = vpop.f32.mrb[0].mxu0
  %5907 = vmatprep.mubr.bf16.mxu0 %v5160
  %5908 = vmatmul.mubr.bf16.gmra.mrb[0].mxu0 %v5159
  %v5909 = vpop.f32.mrb[0].mxu0
  %v5910 = vadd.f32 %v5353, %v5909
  %v5911 = vpop.f32.mrb[0].mxu0
  %v5912 = vpop.f32.mrb[0].mxu0
  %v5913 = vadd.f32 %v5353, %v5912
  %v5914 = vpop.f32.mrb[0].mxu0
  %5915 = vmatprep.mubr.bf16.mxu0 %v5169
  %5916 = vmatmul.mubr.bf16.gmra.mrb[0].mxu0 %v5168
  %v5917 = vpop.f32.mrb[0].mxu0
  %v5918 = vadd.f32 %v5353, %v5917
  %v5919 = vpop.f32.mrb[0].mxu0
  %v5920 = vpop.f32.mrb[0].mxu0
  %v5921 = vadd.f32 %v5353, %v5920
  %v5922 = vpop.f32.mrb[0].mxu0
  %5923 = vmatprep.mubr.bf16.mxu0 %v5178
  %5924 = vmatmul.mubr.bf16.gmra.mrb[0].mxu0 %v5177
  %v5925 = vpop.f32.mrb[0].mxu0
  %v5926 = vadd.f32 %v5353, %v5925
  %v5927 = vpop.f32.mrb[0].mxu0
  %v5928 = vpop.f32.mrb[0].mxu0
  %v5929 = vadd.f32 %v5353, %v5928
  %v5930 = vpop.f32.mrb[0].mxu0
  %5931 = vmatprep.mubr.bf16.mxu0 %v5187
  %5932 = vmatmul.mubr.bf16.gmra.mrb[0].mxu0 %v5186
  %v5933 = vpop.f32.mrb[0].mxu0
  %v5934 = vadd.f32 %v5353, %v5933
  %v5935 = vpop.f32.mrb[0].mxu0
  %v5936 = vpop.f32.mrb[0].mxu0
  %v5937 = vadd.f32 %v5353, %v5936
  %v5938 = vpop.f32.mrb[0].mxu0
  %5939 = vmatprep.mubr.bf16.mxu0 %v5196
  %5940 = vmatmul.mubr.bf16.gmra.mrb[0].mxu0 %v5195
  %v5941 = vpop.f32.mrb[0].mxu0
  %v5942 = vadd.f32 %v5353, %v5941
  %v5943 = vpop.f32.mrb[0].mxu0
  %v5944 = vpop.f32.mrb[0].mxu0
  %v5945 = vadd.f32 %v5353, %v5944
  %v5946 = vpop.f32.mrb[0].mxu0
  %5947 = vdwg.mxu0
  %5948 = vmatprep.subr.bf16.mxu0 0
  %5949 = vmatpush1.bf16.msra.mxu0 %v5659
  %5950 = vmatprep.subr.bf16.mxu0 0
  %5951 = vmatpush1.bf16.msra.mxu0 %v5660
  %5952 = vmatprep.subr.bf16.mxu0 0
  %5953 = vmatpush1.bf16.msra.mxu0 %v5661
  %5954 = vmatprep.subr.bf16.mxu0 0
  %5955 = vmatpush1.bf16.msra.mxu0 %v5662
  %5956 = vmatprep.subr.bf16.mxu0 0
  %5957 = vmatpush1.bf16.msra.mxu0 %v5663
  %5958 = vmatprep.subr.bf16.mxu0 0
  %5959 = vmatpush1.bf16.msra.mxu0 %v5664
  %5960 = vmatprep.subr.bf16.mxu0 0
  %5961 = vmatpush1.bf16.msra.mxu0 %v5665
  %5962 = vmatprep.subr.bf16.mxu0 0
  %5963 = vmatpush1.bf16.msra.mxu0 %v5666
  %5964 = vmatprep.subr.bf16.mxu0 0
  %5965 = vmatpush1.bf16.msra.mxu0 %v5667
  %5966 = vmatprep.subr.bf16.mxu0 0
  %5967 = vmatpush1.bf16.msra.mxu0 %v5668
  %5968 = vmatprep.subr.bf16.mxu0 0
  %5969 = vmatpush1.bf16.msra.mxu0 %v5669
  %5970 = vmatprep.subr.bf16.mxu0 0
  %5971 = vmatpush1.bf16.msra.mxu0 %v5670
  %5972 = vmatprep.subr.bf16.mxu0 0
  %5973 = vmatpush1.bf16.msra.mxu0 %v5671
  %5974 = vmatprep.subr.bf16.mxu0 0
  %5975 = vmatpush1.bf16.msra.mxu0 %v5672
  %5976 = vmatprep.subr.bf16.mxu0 0
  %5977 = vmatpush1.bf16.msra.mxu0 %v5673
  %5978 = vmatprep.subr.bf16.mxu0 0
  %5979 = vmatpush1.bf16.msra.mxu0 %v5674
  %5980 = vmatprep.mubr.bf16.mxu0 %v5063
  %5981 = vmatmul.mubr.bf16.gmra.mrb[0].mxu0 %v5062
  %v5982 = vpop.f32.mrb[0].mxu0
  %v5983 = vadd.f32 %v5822, %v5982
  %v5984 = vpop.f32.mrb[0].mxu0
  %v5985 = vpop.f32.mrb[0].mxu0
  %v5986 = vadd.f32 %v5825, %v5985
  %v5987 = vpop.f32.mrb[0].mxu0
  %5988 = vmatprep.mubr.bf16.mxu0 %v5072
  %5989 = vmatmul.mubr.bf16.gmra.mrb[0].mxu0 %v5071
  %v5990 = vpop.f32.mrb[0].mxu0
  %v5991 = vadd.f32 %v5830, %v5990
  %v5992 = vpop.f32.mrb[0].mxu0
  %v5993 = vpop.f32.mrb[0].mxu0
  %v5994 = vadd.f32 %v5833, %v5993
  %v5995 = vpop.f32.mrb[0].mxu0
  %5996 = vmatprep.mubr.bf16.mxu0 %v5081
  %5997 = vmatmul.mubr.bf16.gmra.mrb[0].mxu0 %v5080
  %v5998 = vpop.f32.mrb[0].mxu0
  %v5999 = vadd.f32 %v5838, %v5998
  %v6000 = vpop.f32.mrb[0].mxu0
  %v6001 = vpop.f32.mrb[0].mxu0
  %v6002 = vadd.f32 %v5841, %v6001
  %v6003 = vpop.f32.mrb[0].mxu0
  %6004 = vmatprep.mubr.bf16.mxu0 %v5090
  %6005 = vmatmul.mubr.bf16.gmra.mrb[0].mxu0 %v5089
  %v6006 = vpop.f32.mrb[0].mxu0
  %v6007 = vadd.f32 %v5846, %v6006
  %v6008 = vpop.f32.mrb[0].mxu0
  %v6009 = vpop.f32.mrb[0].mxu0
  %v6010 = vadd.f32 %v5849, %v6009
  %v6011 = vpop.f32.mrb[0].mxu0
  %6012 = vmatprep.mubr.bf16.mxu0 %v5099
  %6013 = vmatmul.mubr.bf16.gmra.mrb[0].mxu0 %v5098
  %v6014 = vpop.f32.mrb[0].mxu0
  %v6015 = vadd.f32 %v5854, %v6014
  %v6016 = vpop.f32.mrb[0].mxu0
  %v6017 = vpop.f32.mrb[0].mxu0
  %v6018 = vadd.f32 %v5857, %v6017
  %v6019 = vpop.f32.mrb[0].mxu0
  %6020 = vmatprep.mubr.bf16.mxu0 %v5108
  %6021 = vmatmul.mubr.bf16.gmra.mrb[0].mxu0 %v5107
  %v6022 = vpop.f32.mrb[0].mxu0
  %v6023 = vadd.f32 %v5862, %v6022
  %v6024 = vpop.f32.mrb[0].mxu0
  %v6025 = vpop.f32.mrb[0].mxu0
  %v6026 = vadd.f32 %v5865, %v6025
  %v6027 = vpop.f32.mrb[0].mxu0
  %6028 = vmatprep.mubr.bf16.mxu0 %v5117
  %6029 = vmatmul.mubr.bf16.gmra.mrb[0].mxu0 %v5116
  %v6030 = vpop.f32.mrb[0].mxu0
  %v6031 = vadd.f32 %v5870, %v6030
  %v6032 = vpop.f32.mrb[0].mxu0
  %v6033 = vpop.f32.mrb[0].mxu0
  %v6034 = vadd.f32 %v5873, %v6033
  %v6035 = vpop.f32.mrb[0].mxu0
  %6036 = vmatprep.mubr.bf16.mxu0 %v5126
  %6037 = vmatmul.mubr.bf16.gmra.mrb[0].mxu0 %v5125
  %v6038 = vpop.f32.mrb[0].mxu0
  %v6039 = vadd.f32 %v5878, %v6038
  %v6040 = vpop.f32.mrb[0].mxu0
  %v6041 = vpop.f32.mrb[0].mxu0
  %v6042 = vadd.f32 %v5881, %v6041
  %v6043 = vpop.f32.mrb[0].mxu0
  %6044 = vmatprep.mubr.bf16.mxu0 %v5135
  %6045 = vmatmul.mubr.bf16.gmra.mrb[0].mxu0 %v5134
  %v6046 = vpop.f32.mrb[0].mxu0
  %v6047 = vadd.f32 %v5886, %v6046
  %v6048 = vpop.f32.mrb[0].mxu0
  %v6049 = vpop.f32.mrb[0].mxu0
  %v6050 = vadd.f32 %v5889, %v6049
  %v6051 = vpop.f32.mrb[0].mxu0
  %6052 = vmatprep.mubr.bf16.mxu0 %v5144
  %6053 = vmatmul.mubr.bf16.gmra.mrb[0].mxu0 %v5143
  %v6054 = vpop.f32.mrb[0].mxu0
  %v6055 = vadd.f32 %v5894, %v6054
  %v6056 = vpop.f32.mrb[0].mxu0
  %v6057 = vpop.f32.mrb[0].mxu0
  %v6058 = vadd.f32 %v5897, %v6057
  %v6059 = vpop.f32.mrb[0].mxu0
  %6060 = vmatprep.mubr.bf16.mxu0 %v5153
  %6061 = vmatmul.mubr.bf16.gmra.mrb[0].mxu0 %v5152
  %v6062 = vpop.f32.mrb[0].mxu0
  %v6063 = vadd.f32 %v5902, %v6062
  %v6064 = vpop.f32.mrb[0].mxu0
  %v6065 = vpop.f32.mrb[0].mxu0
  %v6066 = vadd.f32 %v5905, %v6065
  %v6067 = vpop.f32.mrb[0].mxu0
  %6068 = vmatprep.mubr.bf16.mxu0 %v5162
  %6069 = vmatmul.mubr.bf16.gmra.mrb[0].mxu0 %v5161
  %v6070 = vpop.f32.mrb[0].mxu0
  %v6071 = vadd.f32 %v5910, %v6070
  %v6072 = vpop.f32.mrb[0].mxu0
  %v6073 = vpop.f32.mrb[0].mxu0
  %v6074 = vadd.f32 %v5913, %v6073
  %v6075 = vpop.f32.mrb[0].mxu0
  %6076 = vmatprep.mubr.bf16.mxu0 %v5171
  %6077 = vmatmul.mubr.bf16.gmra.mrb[0].mxu0 %v5170
  %v6078 = vpop.f32.mrb[0].mxu0
  %v6079 = vadd.f32 %v5918, %v6078
  %v6080 = vpop.f32.mrb[0].mxu0
  %v6081 = vpop.f32.mrb[0].mxu0
  %v6082 = vadd.f32 %v5921, %v6081
  %v6083 = vpop.f32.mrb[0].mxu0
  %6084 = vmatprep.mubr.bf16.mxu0 %v5180
  %6085 = vmatmul.mubr.bf16.gmra.mrb[0].mxu0 %v5179
  %v6086 = vpop.f32.mrb[0].mxu0
  %v6087 = vadd.f32 %v5926, %v6086
  %v6088 = vpop.f32.mrb[0].mxu0
  %v6089 = vpop.f32.mrb[0].mxu0
  %v6090 = vadd.f32 %v5929, %v6089
  %v6091 = vpop.f32.mrb[0].mxu0
  %6092 = vmatprep.mubr.bf16.mxu0 %v5189
  %6093 = vmatmul.mubr.bf16.gmra.mrb[0].mxu0 %v5188
  %v6094 = vpop.f32.mrb[0].mxu0
  %v6095 = vadd.f32 %v5934, %v6094
  %v6096 = vpop.f32.mrb[0].mxu0
  %v6097 = vpop.f32.mrb[0].mxu0
  %v6098 = vadd.f32 %v5937, %v6097
  %v6099 = vpop.f32.mrb[0].mxu0
  %6100 = vmatprep.mubr.bf16.mxu0 %v5198
  %6101 = vmatmul.mubr.bf16.gmra.mrb[0].mxu0 %v5197
  %v6102 = vpop.f32.mrb[0].mxu0
  %v6103 = vadd.f32 %v5942, %v6102
  %v6104 = vpop.f32.mrb[0].mxu0
  %v6105 = vpop.f32.mrb[0].mxu0
  %v6106 = vadd.f32 %v5945, %v6105
  %v6107 = vpop.f32.mrb[0].mxu0
  %6108 = vdwg.mxu0
  %6109 = vmatprep.subr.bf16.mxu0 0
  %6110 = vmatpush1.bf16.msra.mxu0 %v5675
  %6111 = vmatprep.subr.bf16.mxu0 0
  %6112 = vmatpush1.bf16.msra.mxu0 %v5676
  %6113 = vmatprep.subr.bf16.mxu0 0
  %6114 = vmatpush1.bf16.msra.mxu0 %v5677
  %6115 = vmatprep.subr.bf16.mxu0 0
  %6116 = vmatpush1.bf16.msra.mxu0 %v5678
  %6117 = vmatprep.subr.bf16.mxu0 0
  %6118 = vmatpush1.bf16.msra.mxu0 %v5679
  %6119 = vmatprep.subr.bf16.mxu0 0
  %6120 = vmatpush1.bf16.msra.mxu0 %v5680
  %6121 = vmatprep.subr.bf16.mxu0 0
  %6122 = vmatpush1.bf16.msra.mxu0 %v5681
  %6123 = vmatprep.subr.bf16.mxu0 0
  %6124 = vmatpush1.bf16.msra.mxu0 %v5682
  %6125 = vmatprep.subr.bf16.mxu0 0
  %6126 = vmatpush1.bf16.msra.mxu0 %v5683
  %6127 = vmatprep.subr.bf16.mxu0 0
  %6128 = vmatpush1.bf16.msra.mxu0 %v5684
  %6129 = vmatprep.subr.bf16.mxu0 0
  %6130 = vmatpush1.bf16.msra.mxu0 %v5685
  %6131 = vmatprep.subr.bf16.mxu0 0
  %6132 = vmatpush1.bf16.msra.mxu0 %v5686
  %6133 = vmatprep.subr.bf16.mxu0 0
  %6134 = vmatpush1.bf16.msra.mxu0 %v5687
  %6135 = vmatprep.subr.bf16.mxu0 0
  %6136 = vmatpush1.bf16.msra.mxu0 %v5688
  %6137 = vmatprep.subr.bf16.mxu0 0
  %6138 = vmatpush1.bf16.msra.mxu0 %v5689
  %6139 = vmatprep.subr.bf16.mxu0 0
  %6140 = vmatpush1.bf16.msra.mxu0 %v5690
  %6141 = vmatprep.mubr.bf16.mxu0 %v5065
  %6142 = vmatmul.mubr.bf16.gmra.mrb[0].mxu0 %v5064
  %v6143 = vpop.f32.mrb[0].mxu0
  %v6144 = vadd.f32 %v5983, %v6143
  %v6145 = vpop.f32.mrb[0].mxu0
  %v6146 = vpop.f32.mrb[0].mxu0
  %v6147 = vadd.f32 %v5986, %v6146
  %v6148 = vpop.f32.mrb[0].mxu0
  %6149 = vmatprep.mubr.bf16.mxu0 %v5074
  %6150 = vmatmul.mubr.bf16.gmra.mrb[0].mxu0 %v5073
  %v6151 = vpop.f32.mrb[0].mxu0
  %v6152 = vadd.f32 %v5991, %v6151
  %v6153 = vpop.f32.mrb[0].mxu0
  %v6154 = vpop.f32.mrb[0].mxu0
  %v6155 = vadd.f32 %v5994, %v6154
  %v6156 = vpop.f32.mrb[0].mxu0
  %6157 = vmatprep.mubr.bf16.mxu0 %v5083
  %6158 = vmatmul.mubr.bf16.gmra.mrb[0].mxu0 %v5082
  %v6159 = vpop.f32.mrb[0].mxu0
  %v6160 = vadd.f32 %v5999, %v6159
  %v6161 = vpop.f32.mrb[0].mxu0
  %v6162 = vpop.f32.mrb[0].mxu0
  %v6163 = vadd.f32 %v6002, %v6162
  %v6164 = vpop.f32.mrb[0].mxu0
  %6165 = vmatprep.mubr.bf16.mxu0 %v5092
  %6166 = vmatmul.mubr.bf16.gmra.mrb[0].mxu0 %v5091
  %v6167 = vpop.f32.mrb[0].mxu0
  %v6168 = vadd.f32 %v6007, %v6167
  %v6169 = vpop.f32.mrb[0].mxu0
  %v6170 = vpop.f32.mrb[0].mxu0
  %v6171 = vadd.f32 %v6010, %v6170
  %v6172 = vpop.f32.mrb[0].mxu0
  %6173 = vmatprep.mubr.bf16.mxu0 %v5101
  %6174 = vmatmul.mubr.bf16.gmra.mrb[0].mxu0 %v5100
  %v6175 = vpop.f32.mrb[0].mxu0
  %v6176 = vadd.f32 %v6015, %v6175
  %v6177 = vpop.f32.mrb[0].mxu0
  %v6178 = vpop.f32.mrb[0].mxu0
  %v6179 = vadd.f32 %v6018, %v6178
  %v6180 = vpop.f32.mrb[0].mxu0
  %6181 = vmatprep.mubr.bf16.mxu0 %v5110
  %6182 = vmatmul.mubr.bf16.gmra.mrb[0].mxu0 %v5109
  %v6183 = vpop.f32.mrb[0].mxu0
  %v6184 = vadd.f32 %v6023, %v6183
  %v6185 = vpop.f32.mrb[0].mxu0
  %v6186 = vpop.f32.mrb[0].mxu0
  %v6187 = vadd.f32 %v6026, %v6186
  %v6188 = vpop.f32.mrb[0].mxu0
  %6189 = vmatprep.mubr.bf16.mxu0 %v5119
  %6190 = vmatmul.mubr.bf16.gmra.mrb[0].mxu0 %v5118
  %v6191 = vpop.f32.mrb[0].mxu0
  %v6192 = vadd.f32 %v6031, %v6191
  %v6193 = vpop.f32.mrb[0].mxu0
  %v6194 = vpop.f32.mrb[0].mxu0
  %v6195 = vadd.f32 %v6034, %v6194
  %v6196 = vpop.f32.mrb[0].mxu0
  %6197 = vmatprep.mubr.bf16.mxu0 %v5128
  %6198 = vmatmul.mubr.bf16.gmra.mrb[0].mxu0 %v5127
  %v6199 = vpop.f32.mrb[0].mxu0
  %v6200 = vadd.f32 %v6039, %v6199
  %v6201 = vpop.f32.mrb[0].mxu0
  %v6202 = vpop.f32.mrb[0].mxu0
  %v6203 = vadd.f32 %v6042, %v6202
  %v6204 = vpop.f32.mrb[0].mxu0
  %6205 = vmatprep.mubr.bf16.mxu0 %v5137
  %6206 = vmatmul.mubr.bf16.gmra.mrb[0].mxu0 %v5136
  %v6207 = vpop.f32.mrb[0].mxu0
  %v6208 = vadd.f32 %v6047, %v6207
  %v6209 = vpop.f32.mrb[0].mxu0
  %v6210 = vpop.f32.mrb[0].mxu0
  %v6211 = vadd.f32 %v6050, %v6210
  %v6212 = vpop.f32.mrb[0].mxu0
  %6213 = vmatprep.mubr.bf16.mxu0 %v5146
  %6214 = vmatmul.mubr.bf16.gmra.mrb[0].mxu0 %v5145
  %v6215 = vpop.f32.mrb[0].mxu0
  %v6216 = vadd.f32 %v6055, %v6215
  %v6217 = vpop.f32.mrb[0].mxu0
  %v6218 = vpop.f32.mrb[0].mxu0
  %v6219 = vadd.f32 %v6058, %v6218
  %v6220 = vpop.f32.mrb[0].mxu0
  %6221 = vmatprep.mubr.bf16.mxu0 %v5155
  %6222 = vmatmul.mubr.bf16.gmra.mrb[0].mxu0 %v5154
  %v6223 = vpop.f32.mrb[0].mxu0
  %v6224 = vadd.f32 %v6063, %v6223
  %v6225 = vpop.f32.mrb[0].mxu0
  %v6226 = vpop.f32.mrb[0].mxu0
  %v6227 = vadd.f32 %v6066, %v6226
  %v6228 = vpop.f32.mrb[0].mxu0
  %6229 = vmatprep.mubr.bf16.mxu0 %v5164
  %6230 = vmatmul.mubr.bf16.gmra.mrb[0].mxu0 %v5163
  %v6231 = vpop.f32.mrb[0].mxu0
  %v6232 = vadd.f32 %v6071, %v6231
  %v6233 = vpop.f32.mrb[0].mxu0
  %v6234 = vpop.f32.mrb[0].mxu0
  %v6235 = vadd.f32 %v6074, %v6234
  %v6236 = vpop.f32.mrb[0].mxu0
  %6237 = vmatprep.mubr.bf16.mxu0 %v5173
  %6238 = vmatmul.mubr.bf16.gmra.mrb[0].mxu0 %v5172
  %v6239 = vpop.f32.mrb[0].mxu0
  %v6240 = vadd.f32 %v6079, %v6239
  %v6241 = vpop.f32.mrb[0].mxu0
  %v6242 = vpop.f32.mrb[0].mxu0
  %v6243 = vadd.f32 %v6082, %v6242
  %v6244 = vpop.f32.mrb[0].mxu0
  %6245 = vmatprep.mubr.bf16.mxu0 %v5182
  %6246 = vmatmul.mubr.bf16.gmra.mrb[0].mxu0 %v5181
  %v6247 = vpop.f32.mrb[0].mxu0
  %v6248 = vadd.f32 %v6087, %v6247
  %v6249 = vpop.f32.mrb[0].mxu0
  %v6250 = vpop.f32.mrb[0].mxu0
  %v6251 = vadd.f32 %v6090, %v6250
  %v6252 = vpop.f32.mrb[0].mxu0
  %6253 = vmatprep.mubr.bf16.mxu0 %v5191
  %6254 = vmatmul.mubr.bf16.gmra.mrb[0].mxu0 %v5190
  %v6255 = vpop.f32.mrb[0].mxu0
  %v6256 = vadd.f32 %v6095, %v6255
  %v6257 = vpop.f32.mrb[0].mxu0
  %v6258 = vpop.f32.mrb[0].mxu0
  %v6259 = vadd.f32 %v6098, %v6258
  %v6260 = vpop.f32.mrb[0].mxu0
  %6261 = vmatprep.mubr.bf16.mxu0 %v5200
  %6262 = vmatmul.mubr.bf16.gmra.mrb[0].mxu0 %v5199
  %v6263 = vpop.f32.mrb[0].mxu0
  %v6264 = vadd.f32 %v6103, %v6263
  %v6265 = vpop.f32.mrb[0].mxu0
  %v6266 = vpop.f32.mrb[0].mxu0
  %v6267 = vadd.f32 %v6106, %v6266
  %v6268 = vpop.f32.mrb[0].mxu0
  %6269 = vdwg.mxu0
  %6270 = vmatprep.subr.bf16.mxu0 0
  %6271 = vmatpush1.bf16.msra.mxu0 %v5691
  %6272 = vmatprep.subr.bf16.mxu0 0
  %6273 = vmatpush1.bf16.msra.mxu0 %v5692
  %6274 = vmatprep.subr.bf16.mxu0 0
  %6275 = vmatpush1.bf16.msra.mxu0 %v5693
  %6276 = vmatprep.subr.bf16.mxu0 0
  %6277 = vmatpush1.bf16.msra.mxu0 %v5694
  %6278 = vmatprep.subr.bf16.mxu0 0
  %6279 = vmatpush1.bf16.msra.mxu0 %v5695
  %6280 = vmatprep.subr.bf16.mxu0 0
  %6281 = vmatpush1.bf16.msra.mxu0 %v5696
  %6282 = vmatprep.subr.bf16.mxu0 0
  %6283 = vmatpush1.bf16.msra.mxu0 %v5697
  %6284 = vmatprep.subr.bf16.mxu0 0
  %6285 = vmatpush1.bf16.msra.mxu0 %v5698
  %6286 = vmatprep.subr.bf16.mxu0 0
  %6287 = vmatpush1.bf16.msra.mxu0 %v5699
  %6288 = vmatprep.subr.bf16.mxu0 0
  %6289 = vmatpush1.bf16.msra.mxu0 %v5700
  %6290 = vmatprep.subr.bf16.mxu0 0
  %6291 = vmatpush1.bf16.msra.mxu0 %v5701
  %6292 = vmatprep.subr.bf16.mxu0 0
  %6293 = vmatpush1.bf16.msra.mxu0 %v5702
  %6294 = vmatprep.subr.bf16.mxu0 0
  %6295 = vmatpush1.bf16.msra.mxu0 %v5703
  %6296 = vmatprep.subr.bf16.mxu0 0
  %6297 = vmatpush1.bf16.msra.mxu0 %v5704
  %6298 = vmatprep.subr.bf16.mxu0 0
  %6299 = vmatpush1.bf16.msra.mxu0 %v5705
  %6300 = vmatprep.subr.bf16.mxu0 0
  %6301 = vmatpush1.bf16.msra.mxu0 %v5706
  %6302 = vmatprep.mubr.bf16.mxu0 %v5067
  %6303 = vmatmul.mubr.bf16.gmra.mrb[0].mxu0 %v5066
  %v6304 = vpop.f32.mrb[0].mxu0
  %v6305 = vadd.f32 %v6144, %v6304
  %v6306 = vpop.f32.mrb[0].mxu0
  %v6307 = vpop.f32.mrb[0].mxu0
  %v6308 = vadd.f32 %v6147, %v6307
  %v6309 = vpop.f32.mrb[0].mxu0
  %6310 = vmatprep.mubr.bf16.mxu0 %v5076
  %6311 = vmatmul.mubr.bf16.gmra.mrb[0].mxu0 %v5075
  %v6312 = vpop.f32.mrb[0].mxu0
  %v6313 = vadd.f32 %v6152, %v6312
  %v6314 = vpop.f32.mrb[0].mxu0
  %v6315 = vpop.f32.mrb[0].mxu0
  %v6316 = vadd.f32 %v6155, %v6315
  %v6317 = vpop.f32.mrb[0].mxu0
  %6318 = vmatprep.mubr.bf16.mxu0 %v5085
  %6319 = vmatmul.mubr.bf16.gmra.mrb[0].mxu0 %v5084
  %v6320 = vpop.f32.mrb[0].mxu0
  %v6321 = vadd.f32 %v6160, %v6320
  %v6322 = vpop.f32.mrb[0].mxu0
  %v6323 = vpop.f32.mrb[0].mxu0
  %v6324 = vadd.f32 %v6163, %v6323
  %v6325 = vpop.f32.mrb[0].mxu0
  %6326 = vmatprep.mubr.bf16.mxu0 %v5094
  %6327 = vmatmul.mubr.bf16.gmra.mrb[0].mxu0 %v5093
  %v6328 = vpop.f32.mrb[0].mxu0
  %v6329 = vadd.f32 %v6168, %v6328
  %v6330 = vpop.f32.mrb[0].mxu0
  %v6331 = vpop.f32.mrb[0].mxu0
  %v6332 = vadd.f32 %v6171, %v6331
  %v6333 = vpop.f32.mrb[0].mxu0
  %6334 = vmatprep.mubr.bf16.mxu0 %v5103
  %6335 = vmatmul.mubr.bf16.gmra.mrb[0].mxu0 %v5102
  %v6336 = vpop.f32.mrb[0].mxu0
  %v6337 = vadd.f32 %v6176, %v6336
  %v6338 = vpop.f32.mrb[0].mxu0
  %v6339 = vpop.f32.mrb[0].mxu0
  %v6340 = vadd.f32 %v6179, %v6339
  %v6341 = vpop.f32.mrb[0].mxu0
  %6342 = vmatprep.mubr.bf16.mxu0 %v5112
  %6343 = vmatmul.mubr.bf16.gmra.mrb[0].mxu0 %v5111
  %v6344 = vpop.f32.mrb[0].mxu0
  %v6345 = vadd.f32 %v6184, %v6344
  %v6346 = vpop.f32.mrb[0].mxu0
  %v6347 = vpop.f32.mrb[0].mxu0
  %v6348 = vadd.f32 %v6187, %v6347
  %v6349 = vpop.f32.mrb[0].mxu0
  %6350 = vmatprep.mubr.bf16.mxu0 %v5121
  %6351 = vmatmul.mubr.bf16.gmra.mrb[0].mxu0 %v5120
  %v6352 = vpop.f32.mrb[0].mxu0
  %v6353 = vadd.f32 %v6192, %v6352
  %v6354 = vpop.f32.mrb[0].mxu0
  %v6355 = vpop.f32.mrb[0].mxu0
  %v6356 = vadd.f32 %v6195, %v6355
  %v6357 = vpop.f32.mrb[0].mxu0
  %6358 = vmatprep.mubr.bf16.mxu0 %v5130
  %6359 = vmatmul.mubr.bf16.gmra.mrb[0].mxu0 %v5129
  %v6360 = vpop.f32.mrb[0].mxu0
  %v6361 = vadd.f32 %v6200, %v6360
  %v6362 = vpop.f32.mrb[0].mxu0
  %v6363 = vpop.f32.mrb[0].mxu0
  %v6364 = vadd.f32 %v6203, %v6363
  %v6365 = vpop.f32.mrb[0].mxu0
  %6366 = vmatprep.mubr.bf16.mxu0 %v5139
  %6367 = vmatmul.mubr.bf16.gmra.mrb[0].mxu0 %v5138
  %v6368 = vpop.f32.mrb[0].mxu0
  %v6369 = vadd.f32 %v6208, %v6368
  %v6370 = vpop.f32.mrb[0].mxu0
  %v6371 = vpop.f32.mrb[0].mxu0
  %v6372 = vadd.f32 %v6211, %v6371
  %v6373 = vpop.f32.mrb[0].mxu0
  %6374 = vmatprep.mubr.bf16.mxu0 %v5148
  %6375 = vmatmul.mubr.bf16.gmra.mrb[0].mxu0 %v5147
  %v6376 = vpop.f32.mrb[0].mxu0
  %v6377 = vadd.f32 %v6216, %v6376
  %v6378 = vpop.f32.mrb[0].mxu0
  %v6379 = vpop.f32.mrb[0].mxu0
  %v6380 = vadd.f32 %v6219, %v6379
  %v6381 = vpop.f32.mrb[0].mxu0
  %6382 = vmatprep.mubr.bf16.mxu0 %v5157
  %6383 = vmatmul.mubr.bf16.gmra.mrb[0].mxu0 %v5156
  %v6384 = vpop.f32.mrb[0].mxu0
  %v6385 = vadd.f32 %v6224, %v6384
  %v6386 = vpop.f32.mrb[0].mxu0
  %v6387 = vpop.f32.mrb[0].mxu0
  %v6388 = vadd.f32 %v6227, %v6387
  %v6389 = vpop.f32.mrb[0].mxu0
  %6390 = vmatprep.mubr.bf16.mxu0 %v5166
  %6391 = vmatmul.mubr.bf16.gmra.mrb[0].mxu0 %v5165
  %v6392 = vpop.f32.mrb[0].mxu0
  %v6393 = vadd.f32 %v6232, %v6392
  %v6394 = vpop.f32.mrb[0].mxu0
  %v6395 = vpop.f32.mrb[0].mxu0
  %v6396 = vadd.f32 %v6235, %v6395
  %v6397 = vpop.f32.mrb[0].mxu0
  %6398 = vmatprep.mubr.bf16.mxu0 %v5175
  %6399 = vmatmul.mubr.bf16.gmra.mrb[0].mxu0 %v5174
  %v6400 = vpop.f32.mrb[0].mxu0
  %v6401 = vadd.f32 %v6240, %v6400
  %v6402 = vpop.f32.mrb[0].mxu0
  %v6403 = vpop.f32.mrb[0].mxu0
  %v6404 = vadd.f32 %v6243, %v6403
  %v6405 = vpop.f32.mrb[0].mxu0
  %6406 = vmatprep.mubr.bf16.mxu0 %v5184
  %6407 = vmatmul.mubr.bf16.gmra.mrb[0].mxu0 %v5183
  %v6408 = vpop.f32.mrb[0].mxu0
  %v6409 = vadd.f32 %v6248, %v6408
  %v6410 = vpop.f32.mrb[0].mxu0
  %v6411 = vpop.f32.mrb[0].mxu0
  %v6412 = vadd.f32 %v6251, %v6411
  %v6413 = vpop.f32.mrb[0].mxu0
  %6414 = vmatprep.mubr.bf16.mxu0 %v5193
  %6415 = vmatmul.mubr.bf16.gmra.mrb[0].mxu0 %v5192
  %v6416 = vpop.f32.mrb[0].mxu0
  %v6417 = vadd.f32 %v6256, %v6416
  %v6418 = vpop.f32.mrb[0].mxu0
  %v6419 = vpop.f32.mrb[0].mxu0
  %v6420 = vadd.f32 %v6259, %v6419
  %v6421 = vpop.f32.mrb[0].mxu0
  %6422 = vmatprep.mubr.bf16.mxu0 %v5202
  %6423 = vmatmul.mubr.bf16.gmra.mrb[0].mxu0 %v5201
  %v6424 = vpop.f32.mrb[0].mxu0
  %v6425 = vadd.f32 %v6264, %v6424
  %v6426 = vpop.f32.mrb[0].mxu0
  %v6427 = vpop.f32.mrb[0].mxu0
  %v6428 = vadd.f32 %v6267, %v6427
  %v6429 = vpop.f32.mrb[0].mxu0
  %6430 = vdwg.mxu0
  %6431 = vmatprep.subr.bf16.mxu0 0
  %6432 = vmatpush1.bf16.msra.mxu0 %v5707
  %6433 = vmatprep.subr.bf16.mxu0 0
  %6434 = vmatpush1.bf16.msra.mxu0 %v5708
  %6435 = vmatprep.subr.bf16.mxu0 0
  %6436 = vmatpush1.bf16.msra.mxu0 %v5709
  %6437 = vmatprep.subr.bf16.mxu0 0
  %6438 = vmatpush1.bf16.msra.mxu0 %v5710
  %6439 = vmatprep.subr.bf16.mxu0 0
  %6440 = vmatpush1.bf16.msra.mxu0 %v5711
  %6441 = vmatprep.subr.bf16.mxu0 0
  %6442 = vmatpush1.bf16.msra.mxu0 %v5712
  %6443 = vmatprep.subr.bf16.mxu0 0
  %6444 = vmatpush1.bf16.msra.mxu0 %v5713
  %6445 = vmatprep.subr.bf16.mxu0 0
  %6446 = vmatpush1.bf16.msra.mxu0 %v5714
  %6447 = vmatprep.subr.bf16.mxu0 0
  %6448 = vmatpush1.bf16.msra.mxu0 0
  %6449 = vmatprep.subr.bf16.mxu0 0
  %6450 = vmatpush1.bf16.msra.mxu0 0
  %6451 = vmatprep.subr.bf16.mxu0 0
  %6452 = vmatpush1.bf16.msra.mxu0 0
  %6453 = vmatprep.subr.bf16.mxu0 0
  %6454 = vmatpush1.bf16.msra.mxu0 0
  %6455 = vmatprep.subr.bf16.mxu0 0
  %6456 = vmatpush1.bf16.msra.mxu0 0
  %6457 = vmatprep.subr.bf16.mxu0 0
  %6458 = vmatpush1.bf16.msra.mxu0 0
  %6459 = vmatprep.subr.bf16.mxu0 0
  %6460 = vmatpush1.bf16.msra.mxu0 0
  %6461 = vmatprep.subr.bf16.mxu0 0
  %6462 = vmatpush1.bf16.msra.mxu0 0
  %6463 = vmatprep.mubr.bf16.mxu0 0
  %6464 = vmatmul.mubr.bf16.gmra.mrb[0].mxu0 %v5068
  %v6465 = vpop.f32.mrb[0].mxu0
  %v6466 = vadd.f32 %v6305, %v6465
  %v6467 = vpop.f32.mrb[0].mxu0
  %v6468 = vpop.f32.mrb[0].mxu0
  %v6469 = vadd.f32 %v6308, %v6468
  %v6470 = vpop.f32.mrb[0].mxu0
  %6471 = vmatprep.mubr.bf16.mxu0 0
  %6472 = vmatmul.mubr.bf16.gmra.mrb[0].mxu0 %v5077
  %v6473 = vpop.f32.mrb[0].mxu0
  %v6474 = vadd.f32 %v6313, %v6473
  %v6475 = vpop.f32.mrb[0].mxu0
  %v6476 = vpop.f32.mrb[0].mxu0
  %v6477 = vadd.f32 %v6316, %v6476
  %v6478 = vpop.f32.mrb[0].mxu0
  %6479 = vmatprep.mubr.bf16.mxu0 0
  %6480 = vmatmul.mubr.bf16.gmra.mrb[0].mxu0 %v5086
  %v6481 = vpop.f32.mrb[0].mxu0
  %v6482 = vadd.f32 %v6321, %v6481
  %v6483 = vpop.f32.mrb[0].mxu0
  %v6484 = vpop.f32.mrb[0].mxu0
  %v6485 = vadd.f32 %v6324, %v6484
  %v6486 = vpop.f32.mrb[0].mxu0
  %6487 = vmatprep.mubr.bf16.mxu0 0
  %6488 = vmatmul.mubr.bf16.gmra.mrb[0].mxu0 %v5095
  %v6489 = vpop.f32.mrb[0].mxu0
  %v6490 = vadd.f32 %v6329, %v6489
  %v6491 = vpop.f32.mrb[0].mxu0
  %v6492 = vpop.f32.mrb[0].mxu0
  %v6493 = vadd.f32 %v6332, %v6492
  %v6494 = vpop.f32.mrb[0].mxu0
  %6495 = vmatprep.mubr.bf16.mxu0 0
  %6496 = vmatmul.mubr.bf16.gmra.mrb[0].mxu0 %v5104
  %v6497 = vpop.f32.mrb[0].mxu0
  %v6498 = vadd.f32 %v6337, %v6497
  %v6499 = vpop.f32.mrb[0].mxu0
  %v6500 = vpop.f32.mrb[0].mxu0
  %v6501 = vadd.f32 %v6340, %v6500
  %v6502 = vpop.f32.mrb[0].mxu0
  %6503 = vmatprep.mubr.bf16.mxu0 0
  %6504 = vmatmul.mubr.bf16.gmra.mrb[0].mxu0 %v5113
  %v6505 = vpop.f32.mrb[0].mxu0
  %v6506 = vadd.f32 %v6345, %v6505
  %v6507 = vpop.f32.mrb[0].mxu0
  %v6508 = vpop.f32.mrb[0].mxu0
  %v6509 = vadd.f32 %v6348, %v6508
  %v6510 = vpop.f32.mrb[0].mxu0
  %6511 = vmatprep.mubr.bf16.mxu0 0
  %6512 = vmatmul.mubr.bf16.gmra.mrb[0].mxu0 %v5122
  %v6513 = vpop.f32.mrb[0].mxu0
  %v6514 = vadd.f32 %v6353, %v6513
  %v6515 = vpop.f32.mrb[0].mxu0
  %v6516 = vpop.f32.mrb[0].mxu0
  %v6517 = vadd.f32 %v6356, %v6516
  %v6518 = vpop.f32.mrb[0].mxu0
  %6519 = vmatprep.mubr.bf16.mxu0 0
  %6520 = vmatmul.mubr.bf16.gmra.mrb[0].mxu0 %v5131
  %v6521 = vpop.f32.mrb[0].mxu0
  %v6522 = vadd.f32 %v6361, %v6521
  %v6523 = vpop.f32.mrb[0].mxu0
  %v6524 = vpop.f32.mrb[0].mxu0
  %v6525 = vadd.f32 %v6364, %v6524
  %v6526 = vpop.f32.mrb[0].mxu0
  %6527 = vmatprep.mubr.bf16.mxu0 0
  %6528 = vmatmul.mubr.bf16.gmra.mrb[0].mxu0 %v5140
  %v6529 = vpop.f32.mrb[0].mxu0
  %v6530 = vadd.f32 %v6369, %v6529
  %v6531 = vpop.f32.mrb[0].mxu0
  %v6532 = vpop.f32.mrb[0].mxu0
  %v6533 = vadd.f32 %v6372, %v6532
  %v6534 = vpop.f32.mrb[0].mxu0
  %6535 = vmatprep.mubr.bf16.mxu0 0
  %6536 = vmatmul.mubr.bf16.gmra.mrb[0].mxu0 %v5149
  %v6537 = vpop.f32.mrb[0].mxu0
  %v6538 = vadd.f32 %v6377, %v6537
  %v6539 = vpop.f32.mrb[0].mxu0
  %v6540 = vpop.f32.mrb[0].mxu0
  %v6541 = vadd.f32 %v6380, %v6540
  %v6542 = vpop.f32.mrb[0].mxu0
  %6543 = vmatprep.mubr.bf16.mxu0 0
  %6544 = vmatmul.mubr.bf16.gmra.mrb[0].mxu0 %v5158
  %v6545 = vpop.f32.mrb[0].mxu0
  %v6546 = vadd.f32 %v6385, %v6545
  %v6547 = vpop.f32.mrb[0].mxu0
  %v6548 = vpop.f32.mrb[0].mxu0
  %v6549 = vadd.f32 %v6388, %v6548
  %v6550 = vpop.f32.mrb[0].mxu0
  %6551 = vmatprep.mubr.bf16.mxu0 0
  %6552 = vmatmul.mubr.bf16.gmra.mrb[0].mxu0 %v5167
  %v6553 = vpop.f32.mrb[0].mxu0
  %v6554 = vadd.f32 %v6393, %v6553
  %v6555 = vpop.f32.mrb[0].mxu0
  %v6556 = vpop.f32.mrb[0].mxu0
  %v6557 = vadd.f32 %v6396, %v6556
  %v6558 = vpop.f32.mrb[0].mxu0
  %6559 = vmatprep.mubr.bf16.mxu0 0
  %6560 = vmatmul.mubr.bf16.gmra.mrb[0].mxu0 %v5176
  %v6561 = vpop.f32.mrb[0].mxu0
  %v6562 = vadd.f32 %v6401, %v6561
  %v6563 = vpop.f32.mrb[0].mxu0
  %v6564 = vpop.f32.mrb[0].mxu0
  %v6565 = vadd.f32 %v6404, %v6564
  %v6566 = vpop.f32.mrb[0].mxu0
  %6567 = vmatprep.mubr.bf16.mxu0 0
  %6568 = vmatmul.mubr.bf16.gmra.mrb[0].mxu0 %v5185
  %v6569 = vpop.f32.mrb[0].mxu0
  %v6570 = vadd.f32 %v6409, %v6569
  %v6571 = vpop.f32.mrb[0].mxu0
  %v6572 = vpop.f32.mrb[0].mxu0
  %v6573 = vadd.f32 %v6412, %v6572
  %v6574 = vpop.f32.mrb[0].mxu0
  %6575 = vmatprep.mubr.bf16.mxu0 0
  %6576 = vmatmul.mubr.bf16.gmra.mrb[0].mxu0 %v5194
  %v6577 = vpop.f32.mrb[0].mxu0
  %v6578 = vadd.f32 %v6417, %v6577
  %v6579 = vpop.f32.mrb[0].mxu0
  %v6580 = vpop.f32.mrb[0].mxu0
  %v6581 = vadd.f32 %v6420, %v6580
  %v6582 = vpop.f32.mrb[0].mxu0
  %6583 = vmatprep.mubr.bf16.mxu0 0
  %6584 = vmatmul.mubr.bf16.gmra.mrb[0].mxu0 %v5203
  %v6585 = vpop.f32.mrb[0].mxu0
  %v6586 = vadd.f32 %v6425, %v6585
  %v6587 = vpop.f32.mrb[0].mxu0
  %v6588 = vpop.f32.mrb[0].mxu0
  %v6589 = vadd.f32 %v6428, %v6588
  %v6590 = vpop.f32.mrb[0].mxu0
  %6591 = vdwg.mxu0
  %vm6592 = vcmp.gt.f32.partialorder %v6466, 0.0
  %vm6593 = vcmp.gt.f32.partialorder %v6469, 0.0
  %vm6594 = vcmp.gt.f32.partialorder %v6474, 0.0
  %vm6595 = vcmp.gt.f32.partialorder %v6477, 0.0
  %vm6596 = vcmp.gt.f32.partialorder %v6482, 0.0
  %vm6597 = vcmp.gt.f32.partialorder %v6485, 0.0
  %vm6598 = vcmp.gt.f32.partialorder %v6490, 0.0
  %vm6599 = vcmp.gt.f32.partialorder %v6493, 0.0
  %vm6600 = vcmp.gt.f32.partialorder %v6498, 0.0
  %vm6601 = vcmp.gt.f32.partialorder %v6501, 0.0
  %vm6602 = vcmp.gt.f32.partialorder %v6506, 0.0
  %vm6603 = vcmp.gt.f32.partialorder %v6509, 0.0
  %vm6604 = vcmp.gt.f32.partialorder %v6514, 0.0
  %vm6605 = vcmp.gt.f32.partialorder %v6517, 0.0
  %vm6606 = vcmp.gt.f32.partialorder %v6522, 0.0
  %vm6607 = vcmp.gt.f32.partialorder %v6525, 0.0
  %vm6608 = vcmp.gt.f32.partialorder %v6530, 0.0
  %vm6609 = vcmp.gt.f32.partialorder %v6533, 0.0
  %vm6610 = vcmp.gt.f32.partialorder %v6538, 0.0
  %vm6611 = vcmp.gt.f32.partialorder %v6541, 0.0
  %vm6612 = vcmp.gt.f32.partialorder %v6546, 0.0
  %vm6613 = vcmp.gt.f32.partialorder %v6549, 0.0
  %vm6614 = vcmp.gt.f32.partialorder %v6554, 0.0
  %vm6615 = vcmp.gt.f32.partialorder %v6557, 0.0
  %vm6616 = vcmp.gt.f32.partialorder %v6562, 0.0
  %vm6617 = vcmp.gt.f32.partialorder %v6565, 0.0
  %vm6618 = vcmp.gt.f32.partialorder %v6570, 0.0
  %vm6619 = vcmp.gt.f32.partialorder %v6573, 0.0
  %vm6620 = vcmp.gt.f32.partialorder %v6578, 0.0
  %vm6621 = vcmp.gt.f32.partialorder %v6581, 0.0
  %vm6622 = vcmp.gt.f32.partialorder %v6586, 0.0
  %vm6623 = vcmp.gt.f32.partialorder %v6589, 0.0
  %v6624 = vmul.f32 %v6466, 0.2
  %v6625 = vmul.f32 %v6469, 0.2
  %v6626 = vmul.f32 %v6474, 0.2
  %v6627 = vmul.f32 %v6477, 0.2
  %v6628 = vmul.f32 %v6482, 0.2
  %v6629 = vmul.f32 %v6485, 0.2
  %v6630 = vmul.f32 %v6490, 0.2
  %v6631 = vmul.f32 %v6493, 0.2
  %v6632 = vmul.f32 %v6498, 0.2
  %v6633 = vmul.f32 %v6501, 0.2
  %v6634 = vmul.f32 %v6506, 0.2
  %v6635 = vmul.f32 %v6509, 0.2
  %v6636 = vmul.f32 %v6514, 0.2
  %v6637 = vmul.f32 %v6517, 0.2
  %v6638 = vmul.f32 %v6522, 0.2
  %v6639 = vmul.f32 %v6525, 0.2
  %v6640 = vmul.f32 %v6530, 0.2
  %v6641 = vmul.f32 %v6533, 0.2
  %v6642 = vmul.f32 %v6538, 0.2
  %v6643 = vmul.f32 %v6541, 0.2
  %v6644 = vmul.f32 %v6546, 0.2
  %v6645 = vmul.f32 %v6549, 0.2
  %v6646 = vmul.f32 %v6554, 0.2
  %v6647 = vmul.f32 %v6557, 0.2
  %v6648 = vmul.f32 %v6562, 0.2
  %v6649 = vmul.f32 %v6565, 0.2
  %v6650 = vmul.f32 %v6570, 0.2
  %v6651 = vmul.f32 %v6573, 0.2
  %v6652 = vmul.f32 %v6578, 0.2
  %v6653 = vmul.f32 %v6581, 0.2
  %v6654 = vmul.f32 %v6586, 0.2
  %v6655 = vmul.f32 %v6589, 0.2
  %v6656 = vsel %vm6592, %v6466, %v6624
  %v6657 = vsel %vm6593, %v6469, %v6625
  %v6658 = vsel %vm6594, %v6474, %v6626
  %v6659 = vsel %vm6595, %v6477, %v6627
  %v6660 = vsel %vm6596, %v6482, %v6628
  %v6661 = vsel %vm6597, %v6485, %v6629
  %v6662 = vsel %vm6598, %v6490, %v6630
  %v6663 = vsel %vm6599, %v6493, %v6631
  %v6664 = vsel %vm6600, %v6498, %v6632
  %v6665 = vsel %vm6601, %v6501, %v6633
  %v6666 = vsel %vm6602, %v6506, %v6634
  %v6667 = vsel %vm6603, %v6509, %v6635
  %v6668 = vsel %vm6604, %v6514, %v6636
  %v6669 = vsel %vm6605, %v6517, %v6637
  %v6670 = vsel %vm6606, %v6522, %v6638
  %v6671 = vsel %vm6607, %v6525, %v6639
  %v6672 = vsel %vm6608, %v6530, %v6640
  %v6673 = vsel %vm6609, %v6533, %v6641
  %v6674 = vsel %vm6610, %v6538, %v6642
  %v6675 = vsel %vm6611, %v6541, %v6643
  %v6676 = vsel %vm6612, %v6546, %v6644
  %v6677 = vsel %vm6613, %v6549, %v6645
  %v6678 = vsel %vm6614, %v6554, %v6646
  %v6679 = vsel %vm6615, %v6557, %v6647
  %v6680 = vsel %vm6616, %v6562, %v6648
  %v6681 = vsel %vm6617, %v6565, %v6649
  %v6682 = vsel %vm6618, %v6570, %v6650
  %v6683 = vsel %vm6619, %v6573, %v6651
  %v6684 = vsel %vm6620, %v6578, %v6652
  %v6685 = vsel %vm6621, %v6581, %v6653
  %v6686 = vsel %vm6622, %v6586, %v6654
  %v6687 = vsel %vm6623, %v6589, %v6655
  %6688 = vst [vmem:[#allocation6] sm:$0xff] %v6656
  %6689 = vst [vmem:[#allocation6 + $0x8] sm:$0xff] %v6657
  %6690 = vst [vmem:[#allocation6 + $0x10] sm:$0xff] %v6658
  %6691 = vst [vmem:[#allocation6 + $0x18] sm:$0xff] %v6659
  %6692 = vst [vmem:[#allocation6 + $0x20] sm:$0xff] %v6660
  %6693 = vst [vmem:[#allocation6 + $0x28] sm:$0xff] %v6661
  %6694 = vst [vmem:[#allocation6 + $0x30] sm:$0xff] %v6662
  %6695 = vst [vmem:[#allocation6 + $0x38] sm:$0xff] %v6663
  %6696 = vst [vmem:[#allocation6 + $0x40] sm:$0xff] %v6664
  %6697 = vst [vmem:[#allocation6 + $0x48] sm:$0xff] %v6665
  %6698 = vst [vmem:[#allocation6 + $0x50] sm:$0xff] %v6666
  %6699 = vst [vmem:[#allocation6 + $0x58] sm:$0xff] %v6667
  %6700 = vst [vmem:[#allocation6 + $0x60] sm:$0xff] %v6668
  %6701 = vst [vmem:[#allocation6 + $0x68] sm:$0xff] %v6669
  %6702 = vst [vmem:[#allocation6 + $0x70] sm:$0xff] %v6670
  %6703 = vst [vmem:[#allocation6 + $0x78] sm:$0xff] %v6671
  %6704 = vst [vmem:[#allocation6 + $0x80] sm:$0xff] %v6672
  %6705 = vst [vmem:[#allocation6 + $0x88] sm:$0xff] %v6673
  %6706 = vst [vmem:[#allocation6 + $0x90] sm:$0xff] %v6674
  %6707 = vst [vmem:[#allocation6 + $0x98] sm:$0xff] %v6675
  %6708 = vst [vmem:[#allocation6 + $0xa0] sm:$0xff] %v6676
  %6709 = vst [vmem:[#allocation6 + $0xa8] sm:$0xff] %v6677
  %6710 = vst [vmem:[#allocation6 + $0xb0] sm:$0xff] %v6678
  %6711 = vst [vmem:[#allocation6 + $0xb8] sm:$0xff] %v6679
  %6712 = vst [vmem:[#allocation6 + $0xc0] sm:$0xff] %v6680
  %6713 = vst [vmem:[#allocation6 + $0xc8] sm:$0xff] %v6681
  %6714 = vst [vmem:[#allocation6 + $0xd0] sm:$0xff] %v6682
  %6715 = vst [vmem:[#allocation6 + $0xd8] sm:$0xff] %v6683
  %6716 = vst [vmem:[#allocation6 + $0xe0] sm:$0xff] %v6684
  %6717 = vst [vmem:[#allocation6 + $0xe8] sm:$0xff] %v6685
  %6718 = vst [vmem:[#allocation6 + $0xf0] sm:$0xff] %v6686
  %6719 = vst [vmem:[#allocation6 + $0xf8] sm:$0xff] %v6687
  %v6720 = vld [vmem:[#allocation6] sm:$0x1]
  %v6721 = vld [vmem:[#allocation6 + $0x20] sm:$0x1]
  %v6722 = vld [vmem:[#allocation6 + $0x40] sm:$0x1]
  %v6723 = vld [vmem:[#allocation6 + $0x60] sm:$0x1]
  %v6724 = vld [vmem:[#allocation6 + $0x80] sm:$0x1]
  %v6725 = vld [vmem:[#allocation6 + $0xa0] sm:$0x1]
  %v6726 = vld [vmem:[#allocation6 + $0xc0] sm:$0x1]
  %v6727 = vld [vmem:[#allocation6 + $0xe0] sm:$0x1]
  %v6728 = vpack.c.bf16 %v6720, %v6720
  %v6729 = vpack.c.bf16 %v6721, %v6721
  %v6730 = vpack.c.bf16 %v6722, %v6722
  %v6731 = vpack.c.bf16 %v6723, %v6723
  %v6732 = vpack.c.bf16 %v6724, %v6724
  %v6733 = vpack.c.bf16 %v6725, %v6725
  %v6734 = vpack.c.bf16 %v6726, %v6726
  %v6735 = vpack.c.bf16 %v6727, %v6727
  %v6736 = vld [vmem:[%s7] sm:$0xf]
  %v6737 = vld [vmem:[%s7 + $0x4] sm:$0xf]
  %v6738 = vld [vmem:[%s7 + $0x8] sm:$0xf]
  %v6739 = vld [vmem:[%s7 + $0xc] sm:$0xf]
  %v6740 = vld [vmem:[%s7 + $0x10] sm:$0xf]
  %v6741 = vld [vmem:[%s7 + $0x14] sm:$0xf]
  %v6742 = vld [vmem:[%s7 + $0x18] sm:$0xf]
  %v6743 = vld [vmem:[%s7 + $0x1c] sm:$0xf]
  %v6744 = vld [vmem:[%s7 + $0x20] sm:$0xf]
  %v6745 = vld [vmem:[%s7 + $0x24] sm:$0xf]
  %v6746 = vld [vmem:[%s7 + $0x28] sm:$0xf]
  %v6747 = vld [vmem:[%s7 + $0x2c] sm:$0xf]
  %v6748 = vld [vmem:[%s7 + $0x30] sm:$0xf]
  %v6749 = vld [vmem:[%s7 + $0x34] sm:$0xf]
  %v6750 = vld [vmem:[%s7 + $0x38] sm:$0xf]
  %v6751 = vld [vmem:[%s7 + $0x3c] sm:$0xf]
  %v6752 = vld [vmem:[#allocation6 + $0x1] sm:$0x1]
  %v6753 = vld [vmem:[#allocation6 + $0x21] sm:$0x1]
  %v6754 = vld [vmem:[#allocation6 + $0x41] sm:$0x1]
  %v6755 = vld [vmem:[#allocation6 + $0x61] sm:$0x1]
  %v6756 = vld [vmem:[#allocation6 + $0x81] sm:$0x1]
  %v6757 = vld [vmem:[#allocation6 + $0xa1] sm:$0x1]
  %v6758 = vld [vmem:[#allocation6 + $0xc1] sm:$0x1]
  %v6759 = vld [vmem:[#allocation6 + $0xe1] sm:$0x1]
  %v6760 = vpack.c.bf16 %v6752, %v6752
  %v6761 = vpack.c.bf16 %v6753, %v6753
  %v6762 = vpack.c.bf16 %v6754, %v6754
  %v6763 = vpack.c.bf16 %v6755, %v6755
  %v6764 = vpack.c.bf16 %v6756, %v6756
  %v6765 = vpack.c.bf16 %v6757, %v6757
  %v6766 = vpack.c.bf16 %v6758, %v6758
  %v6767 = vpack.c.bf16 %v6759, %v6759
  %s6768 = scalar_lea.vmem %s7, 64
  %v6769 = vld [vmem:[%s6768] sm:$0xf]
  %v6770 = vld [vmem:[%s6768 + $0x4] sm:$0xf]
  %v6771 = vld [vmem:[%s6768 + $0x8] sm:$0xf]
  %v6772 = vld [vmem:[%s6768 + $0xc] sm:$0xf]
  %v6773 = vld [vmem:[%s6768 + $0x10] sm:$0xf]
  %v6774 = vld [vmem:[%s6768 + $0x14] sm:$0xf]
  %v6775 = vld [vmem:[%s6768 + $0x18] sm:$0xf]
  %v6776 = vld [vmem:[%s6768 + $0x1c] sm:$0xf]
  %v6777 = vld [vmem:[%s6768 + $0x20] sm:$0xf]
  %v6778 = vld [vmem:[%s6768 + $0x24] sm:$0xf]
  %v6779 = vld [vmem:[%s6768 + $0x28] sm:$0xf]
  %v6780 = vld [vmem:[%s6768 + $0x2c] sm:$0xf]
  %v6781 = vld [vmem:[%s6768 + $0x30] sm:$0xf]
  %v6782 = vld [vmem:[%s6768 + $0x34] sm:$0xf]
  %v6783 = vld [vmem:[%s6768 + $0x38] sm:$0xf]
  %v6784 = vld [vmem:[%s6768 + $0x3c] sm:$0xf]
  %v6793 = vunpack.c.l.b16 %v6760
  %v6794 = vunpack.c.l.b16 %v6761
  %v6795 = vunpack.c.l.b16 %v6762
  %v6796 = vunpack.c.l.b16 %v6763
  %v6797 = vunpack.c.l.b16 %v6764
  %v6798 = vunpack.c.l.b16 %v6765
  %v6799 = vunpack.c.l.b16 %v6766
  %v6800 = vunpack.c.l.b16 %v6767
  %v6801 = vrot.slane %v6794, 7
  %vm6802 = vcmask 1041409
  %v6803 = vsel %vm6802, %v6801, %v6793
  %v6804 = vrot.slane %v6795, 6
  %vm6805 = vcmask 1042434
  %v6806 = vsel %vm6805, %v6804, %v6803
  %v6807 = vrot.slane %v6796, 5
  %vm6808 = vcmask 1043459
  %v6809 = vsel %vm6808, %v6807, %v6806
  %v6810 = vrot.slane %v6797, 4
  %vm6811 = vcmask 1044484
  %v6812 = vsel %vm6811, %v6810, %v6809
  %v6813 = vrot.slane %v6798, 3
  %vm6814 = vcmask 1045509
  %v6815 = vsel %vm6814, %v6813, %v6812
  %v6816 = vrot.slane %v6799, 2
  %vm6817 = vcmask 1046534
  %v6818 = vsel %vm6817, %v6816, %v6815
  %v6819 = vrot.slane %v6800, 1
  %vm6820 = vcmask 1047559
  %v6821 = vsel %vm6820, %v6819, %v6818
  %v6822 = vpack.c.b16 %v6821, %v6821
  %v6840 = vunpack.c.l.b16 %v6769
  %v6841 = vunpack.c.l.b16 %v6770
  %v6842 = vunpack.c.l.b16 %v6771
  %v6843 = vunpack.c.l.b16 %v6772
  %v6844 = vunpack.c.l.b16 %v6773
  %v6845 = vunpack.c.l.b16 %v6774
  %v6846 = vunpack.c.l.b16 %v6775
  %v6847 = vunpack.c.l.b16 %v6776
  %v6848 = vunpack.c.l.b16 %v6777
  %v6849 = vunpack.c.l.b16 %v6778
  %v6850 = vunpack.c.l.b16 %v6779
  %v6851 = vunpack.c.l.b16 %v6780
  %v6852 = vunpack.c.l.b16 %v6781
  %v6853 = vunpack.c.l.b16 %v6782
  %v6854 = vunpack.c.l.b16 %v6783
  %v6855 = vunpack.c.l.b16 %v6784
  %v6856 = vpack.c.b16 %v6841, %v6840
  %v6857 = vpack.c.b16 %v6843, %v6842
  %v6858 = vpack.c.b16 %v6845, %v6844
  %v6859 = vpack.c.b16 %v6847, %v6846
  %v6860 = vpack.c.b16 %v6849, %v6848
  %v6861 = vpack.c.b16 %v6851, %v6850
  %v6862 = vpack.c.b16 %v6853, %v6852
  %v6863 = vpack.c.b16 %v6855, %v6854
  %6872 = vmatprep.subr.bf16.mxu0 0
  %6873 = vmatpush1.bf16.msra.mxu0 %v6856
  %6874 = vmatprep.subr.bf16.mxu0 0
  %6875 = vmatpush1.bf16.msra.mxu0 %v6857
  %6876 = vmatprep.subr.bf16.mxu0 0
  %6877 = vmatpush1.bf16.msra.mxu0 %v6858
  %6878 = vmatprep.subr.bf16.mxu0 0
  %6879 = vmatpush1.bf16.msra.mxu0 %v6859
  %6880 = vmatprep.subr.bf16.mxu0 0
  %6881 = vmatpush1.bf16.msra.mxu0 %v6860
  %6882 = vmatprep.subr.bf16.mxu0 0
  %6883 = vmatpush1.bf16.msra.mxu0 %v6861
  %6884 = vmatprep.subr.bf16.mxu0 0
  %6885 = vmatpush1.bf16.msra.mxu0 %v6862
  %6886 = vmatprep.subr.bf16.mxu0 0
  %6887 = vmatpush1.bf16.msra.mxu0 %v6863
  %6888 = vmatprep.subr.bf16.mxu0 0
  %6889 = vmatpush1.bf16.msra.mxu0 0
  %6890 = vmatprep.subr.bf16.mxu0 0
  %6891 = vmatpush1.bf16.msra.mxu0 0
  %6892 = vmatprep.subr.bf16.mxu0 0
  %6893 = vmatpush1.bf16.msra.mxu0 0
  %6894 = vmatprep.subr.bf16.mxu0 0
  %6895 = vmatpush1.bf16.msra.mxu0 0
  %6896 = vmatprep.subr.bf16.mxu0 0
  %6897 = vmatpush1.bf16.msra.mxu0 0
  %6898 = vmatprep.subr.bf16.mxu0 0
  %6899 = vmatpush1.bf16.msra.mxu0 0
  %6900 = vmatprep.subr.bf16.mxu0 0
  %6901 = vmatpush1.bf16.msra.mxu0 0
  %6902 = vmatprep.subr.bf16.mxu0 0
  %6903 = vmatpush1.bf16.msra.mxu0 0
  %6904 = vmatprep.mubr.bf16.mxu0 0
  %6905 = vmatmul.mubr.bf16.gmra.mrb[0].mxu0 %v6822
  %v6906 = vpop.f32.mrb[0].mxu0
  %v6907 = vadd.f32 0.0, %v6906
  %v6908 = vpop.f32.mrb[0].mxu0
  %v6909 = vpop.f32.mrb[0].mxu0
  %v6910 = vpop.f32.mrb[0].mxu0
  %6911 = vdwg.mxu0
  %v6920 = vunpack.c.l.b16 %v6728
  %v6921 = vunpack.c.l.b16 %v6729
  %v6922 = vunpack.c.l.b16 %v6730
  %v6923 = vunpack.c.l.b16 %v6731
  %v6924 = vunpack.c.l.b16 %v6732
  %v6925 = vunpack.c.l.b16 %v6733
  %v6926 = vunpack.c.l.b16 %v6734
  %v6927 = vunpack.c.l.b16 %v6735
  %v6928 = vrot.slane %v6921, 7
  %v6929 = vsel %vm6802, %v6928, %v6920
  %v6930 = vrot.slane %v6922, 6
  %v6931 = vsel %vm6805, %v6930, %v6929
  %v6932 = vrot.slane %v6923, 5
  %v6933 = vsel %vm6808, %v6932, %v6931
  %v6934 = vrot.slane %v6924, 4
  %v6935 = vsel %vm6811, %v6934, %v6933
  %v6936 = vrot.slane %v6925, 3
  %v6937 = vsel %vm6814, %v6936, %v6935
  %v6938 = vrot.slane %v6926, 2
  %v6939 = vsel %vm6817, %v6938, %v6937
  %v6940 = vrot.slane %v6927, 1
  %v6941 = vsel %vm6820, %v6940, %v6939
  %v6942 = vpack.c.b16 %v6941, %v6941
  %v6960 = vunpack.c.l.b16 %v6736
  %v6961 = vunpack.c.l.b16 %v6737
  %v6962 = vunpack.c.l.b16 %v6738
  %v6963 = vunpack.c.l.b16 %v6739
  %v6964 = vunpack.c.l.b16 %v6740
  %v6965 = vunpack.c.l.b16 %v6741
  %v6966 = vunpack.c.l.b16 %v6742
  %v6967 = vunpack.c.l.b16 %v6743
  %v6968 = vunpack.c.l.b16 %v6744
  %v6969 = vunpack.c.l.b16 %v6745
  %v6970 = vunpack.c.l.b16 %v6746
  %v6971 = vunpack.c.l.b16 %v6747
  %v6972 = vunpack.c.l.b16 %v6748
  %v6973 = vunpack.c.l.b16 %v6749
  %v6974 = vunpack.c.l.b16 %v6750
  %v6975 = vunpack.c.l.b16 %v6751
  %v6976 = vpack.c.b16 %v6961, %v6960
  %v6977 = vpack.c.b16 %v6963, %v6962
  %v6978 = vpack.c.b16 %v6965, %v6964
  %v6979 = vpack.c.b16 %v6967, %v6966
  %v6980 = vpack.c.b16 %v6969, %v6968
  %v6981 = vpack.c.b16 %v6971, %v6970
  %v6982 = vpack.c.b16 %v6973, %v6972
  %v6983 = vpack.c.b16 %v6975, %v6974
  %6992 = vmatprep.subr.bf16.mxu0 0
  %6993 = vmatpush1.bf16.msra.mxu0 %v6976
  %6994 = vmatprep.subr.bf16.mxu0 0
  %6995 = vmatpush1.bf16.msra.mxu0 %v6977
  %6996 = vmatprep.subr.bf16.mxu0 0
  %6997 = vmatpush1.bf16.msra.mxu0 %v6978
  %6998 = vmatprep.subr.bf16.mxu0 0
  %6999 = vmatpush1.bf16.msra.mxu0 %v6979
  %7000 = vmatprep.subr.bf16.mxu0 0
  %7001 = vmatpush1.bf16.msra.mxu0 %v6980
  %7002 = vmatprep.subr.bf16.mxu0 0
  %7003 = vmatpush1.bf16.msra.mxu0 %v6981
  %7004 = vmatprep.subr.bf16.mxu0 0
  %7005 = vmatpush1.bf16.msra.mxu0 %v6982
  %7006 = vmatprep.subr.bf16.mxu0 0
  %7007 = vmatpush1.bf16.msra.mxu0 %v6983
  %7008 = vmatprep.subr.bf16.mxu0 0
  %7009 = vmatpush1.bf16.msra.mxu0 0
  %7010 = vmatprep.subr.bf16.mxu0 0
  %7011 = vmatpush1.bf16.msra.mxu0 0
  %7012 = vmatprep.subr.bf16.mxu0 0
  %7013 = vmatpush1.bf16.msra.mxu0 0
  %7014 = vmatprep.subr.bf16.mxu0 0
  %7015 = vmatpush1.bf16.msra.mxu0 0
  %7016 = vmatprep.subr.bf16.mxu0 0
  %7017 = vmatpush1.bf16.msra.mxu0 0
  %7018 = vmatprep.subr.bf16.mxu0 0
  %7019 = vmatpush1.bf16.msra.mxu0 0
  %7020 = vmatprep.subr.bf16.mxu0 0
  %7021 = vmatpush1.bf16.msra.mxu0 0
  %7022 = vmatprep.subr.bf16.mxu0 0
  %7023 = vmatpush1.bf16.msra.mxu0 0
  %7024 = vmatprep.mubr.bf16.mxu0 0
  %7025 = vmatmul.mubr.bf16.gmra.mrb[0].mxu0 %v6942
  %v7026 = vpop.f32.mrb[0].mxu0
  %v7027 = vadd.f32 %v6907, %v7026
  %v7028 = vpop.f32.mrb[0].mxu0
  %v7029 = vpop.f32.mrb[0].mxu0
  %v7030 = vpop.f32.mrb[0].mxu0
  %7031 = vdwg.mxu0
  %v7032 = vld [vmem:[#allocation6 + $0x2] sm:$0x1]
  %v7033 = vld [vmem:[#allocation6 + $0x22] sm:$0x1]
  %v7034 = vld [vmem:[#allocation6 + $0x42] sm:$0x1]
  %v7035 = vld [vmem:[#allocation6 + $0x62] sm:$0x1]
  %v7036 = vld [vmem:[#allocation6 + $0x82] sm:$0x1]
  %v7037 = vld [vmem:[#allocation6 + $0xa2] sm:$0x1]
  %v7038 = vld [vmem:[#allocation6 + $0xc2] sm:$0x1]
  %v7039 = vld [vmem:[#allocation6 + $0xe2] sm:$0x1]
  %v7040 = vpack.c.bf16 %v7032, %v7032
  %v7041 = vpack.c.bf16 %v7033, %v7033
  %v7042 = vpack.c.bf16 %v7034, %v7034
  %v7043 = vpack.c.bf16 %v7035, %v7035
  %v7044 = vpack.c.bf16 %v7036, %v7036
  %v7045 = vpack.c.bf16 %v7037, %v7037
  %v7046 = vpack.c.bf16 %v7038, %v7038
  %v7047 = vpack.c.bf16 %v7039, %v7039
  %s7048 = scalar_lea.vmem %s7, 128
  %v7049 = vld [vmem:[%s7048] sm:$0xf]
  %v7050 = vld [vmem:[%s7048 + $0x4] sm:$0xf]
  %v7051 = vld [vmem:[%s7048 + $0x8] sm:$0xf]
  %v7052 = vld [vmem:[%s7048 + $0xc] sm:$0xf]
  %v7053 = vld [vmem:[%s7048 + $0x10] sm:$0xf]
  %v7054 = vld [vmem:[%s7048 + $0x14] sm:$0xf]
  %v7055 = vld [vmem:[%s7048 + $0x18] sm:$0xf]
  %v7056 = vld [vmem:[%s7048 + $0x1c] sm:$0xf]
  %v7057 = vld [vmem:[%s7048 + $0x20] sm:$0xf]
  %v7058 = vld [vmem:[%s7048 + $0x24] sm:$0xf]
  %v7059 = vld [vmem:[%s7048 + $0x28] sm:$0xf]
  %v7060 = vld [vmem:[%s7048 + $0x2c] sm:$0xf]
  %v7061 = vld [vmem:[%s7048 + $0x30] sm:$0xf]
  %v7062 = vld [vmem:[%s7048 + $0x34] sm:$0xf]
  %v7063 = vld [vmem:[%s7048 + $0x38] sm:$0xf]
  %v7064 = vld [vmem:[%s7048 + $0x3c] sm:$0xf]
  %v7073 = vunpack.c.l.b16 %v7040
  %v7074 = vunpack.c.l.b16 %v7041
  %v7075 = vunpack.c.l.b16 %v7042
  %v7076 = vunpack.c.l.b16 %v7043
  %v7077 = vunpack.c.l.b16 %v7044
  %v7078 = vunpack.c.l.b16 %v7045
  %v7079 = vunpack.c.l.b16 %v7046
  %v7080 = vunpack.c.l.b16 %v7047
  %v7081 = vrot.slane %v7074, 7
  %v7082 = vsel %vm6802, %v7081, %v7073
  %v7083 = vrot.slane %v7075, 6
  %v7084 = vsel %vm6805, %v7083, %v7082
  %v7085 = vrot.slane %v7076, 5
  %v7086 = vsel %vm6808, %v7085, %v7084
  %v7087 = vrot.slane %v7077, 4
  %v7088 = vsel %vm6811, %v7087, %v7086
  %v7089 = vrot.slane %v7078, 3
  %v7090 = vsel %vm6814, %v7089, %v7088
  %v7091 = vrot.slane %v7079, 2
  %v7092 = vsel %vm6817, %v7091, %v7090
  %v7093 = vrot.slane %v7080, 1
  %v7094 = vsel %vm6820, %v7093, %v7092
  %v7095 = vpack.c.b16 %v7094, %v7094
  %v7113 = vunpack.c.l.b16 %v7049
  %v7114 = vunpack.c.l.b16 %v7050
  %v7115 = vunpack.c.l.b16 %v7051
  %v7116 = vunpack.c.l.b16 %v7052
  %v7117 = vunpack.c.l.b16 %v7053
  %v7118 = vunpack.c.l.b16 %v7054
  %v7119 = vunpack.c.l.b16 %v7055
  %v7120 = vunpack.c.l.b16 %v7056
  %v7121 = vunpack.c.l.b16 %v7057
  %v7122 = vunpack.c.l.b16 %v7058
  %v7123 = vunpack.c.l.b16 %v7059
  %v7124 = vunpack.c.l.b16 %v7060
  %v7125 = vunpack.c.l.b16 %v7061
  %v7126 = vunpack.c.l.b16 %v7062
  %v7127 = vunpack.c.l.b16 %v7063
  %v7128 = vunpack.c.l.b16 %v7064
  %v7129 = vpack.c.b16 %v7114, %v7113
  %v7130 = vpack.c.b16 %v7116, %v7115
  %v7131 = vpack.c.b16 %v7118, %v7117
  %v7132 = vpack.c.b16 %v7120, %v7119
  %v7133 = vpack.c.b16 %v7122, %v7121
  %v7134 = vpack.c.b16 %v7124, %v7123
  %v7135 = vpack.c.b16 %v7126, %v7125
  %v7136 = vpack.c.b16 %v7128, %v7127
  %7145 = vmatprep.subr.bf16.mxu0 0
  %7146 = vmatpush1.bf16.msra.mxu0 %v7129
  %7147 = vmatprep.subr.bf16.mxu0 0
  %7148 = vmatpush1.bf16.msra.mxu0 %v7130
  %7149 = vmatprep.subr.bf16.mxu0 0
  %7150 = vmatpush1.bf16.msra.mxu0 %v7131
  %7151 = vmatprep.subr.bf16.mxu0 0
  %7152 = vmatpush1.bf16.msra.mxu0 %v7132
  %7153 = vmatprep.subr.bf16.mxu0 0
  %7154 = vmatpush1.bf16.msra.mxu0 %v7133
  %7155 = vmatprep.subr.bf16.mxu0 0
  %7156 = vmatpush1.bf16.msra.mxu0 %v7134
  %7157 = vmatprep.subr.bf16.mxu0 0
  %7158 = vmatpush1.bf16.msra.mxu0 %v7135
  %7159 = vmatprep.subr.bf16.mxu0 0
  %7160 = vmatpush1.bf16.msra.mxu0 %v7136
  %7161 = vmatprep.subr.bf16.mxu0 0
  %7162 = vmatpush1.bf16.msra.mxu0 0
  %7163 = vmatprep.subr.bf16.mxu0 0
  %7164 = vmatpush1.bf16.msra.mxu0 0
  %7165 = vmatprep.subr.bf16.mxu0 0
  %7166 = vmatpush1.bf16.msra.mxu0 0
  %7167 = vmatprep.subr.bf16.mxu0 0
  %7168 = vmatpush1.bf16.msra.mxu0 0
  %7169 = vmatprep.subr.bf16.mxu0 0
  %7170 = vmatpush1.bf16.msra.mxu0 0
  %7171 = vmatprep.subr.bf16.mxu0 0
  %7172 = vmatpush1.bf16.msra.mxu0 0
  %7173 = vmatprep.subr.bf16.mxu0 0
  %7174 = vmatpush1.bf16.msra.mxu0 0
  %7175 = vmatprep.subr.bf16.mxu0 0
  %7176 = vmatpush1.bf16.msra.mxu0 0
  %7177 = vmatprep.mubr.bf16.mxu0 0
  %7178 = vmatmul.mubr.bf16.gmra.mrb[0].mxu0 %v7095
  %v7179 = vpop.f32.mrb[0].mxu0
  %v7180 = vadd.f32 0.0, %v7179
  %v7181 = vpop.f32.mrb[0].mxu0
  %v7182 = vpop.f32.mrb[0].mxu0
  %v7183 = vpop.f32.mrb[0].mxu0
  %7184 = vdwg.mxu0
  %v7185 = vadd.f32 %v7027, %v7180
  %v7186 = vld [vmem:[#allocation6 + $0x3] sm:$0x1]
  %v7187 = vld [vmem:[#allocation6 + $0x23] sm:$0x1]
  %v7188 = vld [vmem:[#allocation6 + $0x43] sm:$0x1]
  %v7189 = vld [vmem:[#allocation6 + $0x63] sm:$0x1]
  %v7190 = vld [vmem:[#allocation6 + $0x83] sm:$0x1]
  %v7191 = vld [vmem:[#allocation6 + $0xa3] sm:$0x1]
  %v7192 = vld [vmem:[#allocation6 + $0xc3] sm:$0x1]
  %v7193 = vld [vmem:[#allocation6 + $0xe3] sm:$0x1]
  %v7194 = vpack.c.bf16 %v7186, %v7186
  %v7195 = vpack.c.bf16 %v7187, %v7187
  %v7196 = vpack.c.bf16 %v7188, %v7188
  %v7197 = vpack.c.bf16 %v7189, %v7189
  %v7198 = vpack.c.bf16 %v7190, %v7190
  %v7199 = vpack.c.bf16 %v7191, %v7191
  %v7200 = vpack.c.bf16 %v7192, %v7192
  %v7201 = vpack.c.bf16 %v7193, %v7193
  %s7202 = scalar_lea.vmem %s7, 192
  %v7203 = vld [vmem:[%s7202] sm:$0xf]
  %v7204 = vld [vmem:[%s7202 + $0x4] sm:$0xf]
  %v7205 = vld [vmem:[%s7202 + $0x8] sm:$0xf]
  %v7206 = vld [vmem:[%s7202 + $0xc] sm:$0xf]
  %v7207 = vld [vmem:[%s7202 + $0x10] sm:$0xf]
  %v7208 = vld [vmem:[%s7202 + $0x14] sm:$0xf]
  %v7209 = vld [vmem:[%s7202 + $0x18] sm:$0xf]
  %v7210 = vld [vmem:[%s7202 + $0x1c] sm:$0xf]
  %v7211 = vld [vmem:[%s7202 + $0x20] sm:$0xf]
  %v7212 = vld [vmem:[%s7202 + $0x24] sm:$0xf]
  %v7213 = vld [vmem:[%s7202 + $0x28] sm:$0xf]
  %v7214 = vld [vmem:[%s7202 + $0x2c] sm:$0xf]
  %v7215 = vld [vmem:[%s7202 + $0x30] sm:$0xf]
  %v7216 = vld [vmem:[%s7202 + $0x34] sm:$0xf]
  %v7217 = vld [vmem:[%s7202 + $0x38] sm:$0xf]
  %v7218 = vld [vmem:[%s7202 + $0x3c] sm:$0xf]
  %v7227 = vunpack.c.l.b16 %v7194
  %v7228 = vunpack.c.l.b16 %v7195
  %v7229 = vunpack.c.l.b16 %v7196
  %v7230 = vunpack.c.l.b16 %v7197
  %v7231 = vunpack.c.l.b16 %v7198
  %v7232 = vunpack.c.l.b16 %v7199
  %v7233 = vunpack.c.l.b16 %v7200
  %v7234 = vunpack.c.l.b16 %v7201
  %v7235 = vrot.slane %v7228, 7
  %v7236 = vsel %vm6802, %v7235, %v7227
  %v7237 = vrot.slane %v7229, 6
  %v7238 = vsel %vm6805, %v7237, %v7236
  %v7239 = vrot.slane %v7230, 5
  %v7240 = vsel %vm6808, %v7239, %v7238
  %v7241 = vrot.slane %v7231, 4
  %v7242 = vsel %vm6811, %v7241, %v7240
  %v7243 = vrot.slane %v7232, 3
  %v7244 = vsel %vm6814, %v7243, %v7242
  %v7245 = vrot.slane %v7233, 2
  %v7246 = vsel %vm6817, %v7245, %v7244
  %v7247 = vrot.slane %v7234, 1
  %v7248 = vsel %vm6820, %v7247, %v7246
  %v7249 = vpack.c.b16 %v7248, %v7248
  %v7267 = vunpack.c.l.b16 %v7203
  %v7268 = vunpack.c.l.b16 %v7204
  %v7269 = vunpack.c.l.b16 %v7205
  %v7270 = vunpack.c.l.b16 %v7206
  %v7271 = vunpack.c.l.b16 %v7207
  %v7272 = vunpack.c.l.b16 %v7208
  %v7273 = vunpack.c.l.b16 %v7209
  %v7274 = vunpack.c.l.b16 %v7210
  %v7275 = vunpack.c.l.b16 %v7211
  %v7276 = vunpack.c.l.b16 %v7212
  %v7277 = vunpack.c.l.b16 %v7213
  %v7278 = vunpack.c.l.b16 %v7214
  %v7279 = vunpack.c.l.b16 %v7215
  %v7280 = vunpack.c.l.b16 %v7216
  %v7281 = vunpack.c.l.b16 %v7217
  %v7282 = vunpack.c.l.b16 %v7218
  %v7283 = vpack.c.b16 %v7268, %v7267
  %v7284 = vpack.c.b16 %v7270, %v7269
  %v7285 = vpack.c.b16 %v7272, %v7271
  %v7286 = vpack.c.b16 %v7274, %v7273
  %v7287 = vpack.c.b16 %v7276, %v7275
  %v7288 = vpack.c.b16 %v7278, %v7277
  %v7289 = vpack.c.b16 %v7280, %v7279
  %v7290 = vpack.c.b16 %v7282, %v7281
  %7299 = vmatprep.subr.bf16.mxu0 0
  %7300 = vmatpush1.bf16.msra.mxu0 %v7283
  %7301 = vmatprep.subr.bf16.mxu0 0
  %7302 = vmatpush1.bf16.msra.mxu0 %v7284
  %7303 = vmatprep.subr.bf16.mxu0 0
  %7304 = vmatpush1.bf16.msra.mxu0 %v7285
  %7305 = vmatprep.subr.bf16.mxu0 0
  %7306 = vmatpush1.bf16.msra.mxu0 %v7286
  %7307 = vmatprep.subr.bf16.mxu0 0
  %7308 = vmatpush1.bf16.msra.mxu0 %v7287
  %7309 = vmatprep.subr.bf16.mxu0 0
  %7310 = vmatpush1.bf16.msra.mxu0 %v7288
  %7311 = vmatprep.subr.bf16.mxu0 0
  %7312 = vmatpush1.bf16.msra.mxu0 %v7289
  %7313 = vmatprep.subr.bf16.mxu0 0
  %7314 = vmatpush1.bf16.msra.mxu0 %v7290
  %7315 = vmatprep.subr.bf16.mxu0 0
  %7316 = vmatpush1.bf16.msra.mxu0 0
  %7317 = vmatprep.subr.bf16.mxu0 0
  %7318 = vmatpush1.bf16.msra.mxu0 0
  %7319 = vmatprep.subr.bf16.mxu0 0
  %7320 = vmatpush1.bf16.msra.mxu0 0
  %7321 = vmatprep.subr.bf16.mxu0 0
  %7322 = vmatpush1.bf16.msra.mxu0 0
  %7323 = vmatprep.subr.bf16.mxu0 0
  %7324 = vmatpush1.bf16.msra.mxu0 0
  %7325 = vmatprep.subr.bf16.mxu0 0
  %7326 = vmatpush1.bf16.msra.mxu0 0
  %7327 = vmatprep.subr.bf16.mxu0 0
  %7328 = vmatpush1.bf16.msra.mxu0 0
  %7329 = vmatprep.subr.bf16.mxu0 0
  %7330 = vmatpush1.bf16.msra.mxu0 0
  %7331 = vmatprep.mubr.bf16.mxu0 0
  %7332 = vmatmul.mubr.bf16.gmra.mrb[0].mxu0 %v7249
  %v7333 = vpop.f32.mrb[0].mxu0
  %v7334 = vadd.f32 0.0, %v7333
  %v7335 = vpop.f32.mrb[0].mxu0
  %v7336 = vpop.f32.mrb[0].mxu0
  %v7337 = vpop.f32.mrb[0].mxu0
  %7338 = vdwg.mxu0
  %v7339 = vadd.f32 %v7185, %v7334
  %v7340 = vld [vmem:[#allocation6 + $0x4] sm:$0x1]
  %v7341 = vld [vmem:[#allocation6 + $0x24] sm:$0x1]
  %v7342 = vld [vmem:[#allocation6 + $0x44] sm:$0x1]
  %v7343 = vld [vmem:[#allocation6 + $0x64] sm:$0x1]
  %v7344 = vld [vmem:[#allocation6 + $0x84] sm:$0x1]
  %v7345 = vld [vmem:[#allocation6 + $0xa4] sm:$0x1]
  %v7346 = vld [vmem:[#allocation6 + $0xc4] sm:$0x1]
  %v7347 = vld [vmem:[#allocation6 + $0xe4] sm:$0x1]
  %v7348 = vpack.c.bf16 %v7340, %v7340
  %v7349 = vpack.c.bf16 %v7341, %v7341
  %v7350 = vpack.c.bf16 %v7342, %v7342
  %v7351 = vpack.c.bf16 %v7343, %v7343
  %v7352 = vpack.c.bf16 %v7344, %v7344
  %v7353 = vpack.c.bf16 %v7345, %v7345
  %v7354 = vpack.c.bf16 %v7346, %v7346
  %v7355 = vpack.c.bf16 %v7347, %v7347
  %s7356 = scalar_lea.vmem %s7, 256
  %v7357 = vld [vmem:[%s7356] sm:$0xf]
  %v7358 = vld [vmem:[%s7356 + $0x4] sm:$0xf]
  %v7359 = vld [vmem:[%s7356 + $0x8] sm:$0xf]
  %v7360 = vld [vmem:[%s7356 + $0xc] sm:$0xf]
  %v7361 = vld [vmem:[%s7356 + $0x10] sm:$0xf]
  %v7362 = vld [vmem:[%s7356 + $0x14] sm:$0xf]
  %v7363 = vld [vmem:[%s7356 + $0x18] sm:$0xf]
  %v7364 = vld [vmem:[%s7356 + $0x1c] sm:$0xf]
  %v7365 = vld [vmem:[%s7356 + $0x20] sm:$0xf]
  %v7366 = vld [vmem:[%s7356 + $0x24] sm:$0xf]
  %v7367 = vld [vmem:[%s7356 + $0x28] sm:$0xf]
  %v7368 = vld [vmem:[%s7356 + $0x2c] sm:$0xf]
  %v7369 = vld [vmem:[%s7356 + $0x30] sm:$0xf]
  %v7370 = vld [vmem:[%s7356 + $0x34] sm:$0xf]
  %v7371 = vld [vmem:[%s7356 + $0x38] sm:$0xf]
  %v7372 = vld [vmem:[%s7356 + $0x3c] sm:$0xf]
  %v7381 = vunpack.c.l.b16 %v7348
  %v7382 = vunpack.c.l.b16 %v7349
  %v7383 = vunpack.c.l.b16 %v7350
  %v7384 = vunpack.c.l.b16 %v7351
  %v7385 = vunpack.c.l.b16 %v7352
  %v7386 = vunpack.c.l.b16 %v7353
  %v7387 = vunpack.c.l.b16 %v7354
  %v7388 = vunpack.c.l.b16 %v7355
  %v7389 = vrot.slane %v7382, 7
  %v7390 = vsel %vm6802, %v7389, %v7381
  %v7391 = vrot.slane %v7383, 6
  %v7392 = vsel %vm6805, %v7391, %v7390
  %v7393 = vrot.slane %v7384, 5
  %v7394 = vsel %vm6808, %v7393, %v7392
  %v7395 = vrot.slane %v7385, 4
  %v7396 = vsel %vm6811, %v7395, %v7394
  %v7397 = vrot.slane %v7386, 3
  %v7398 = vsel %vm6814, %v7397, %v7396
  %v7399 = vrot.slane %v7387, 2
  %v7400 = vsel %vm6817, %v7399, %v7398
  %v7401 = vrot.slane %v7388, 1
  %v7402 = vsel %vm6820, %v7401, %v7400
  %v7403 = vpack.c.b16 %v7402, %v7402
  %v7421 = vunpack.c.l.b16 %v7357
  %v7422 = vunpack.c.l.b16 %v7358
  %v7423 = vunpack.c.l.b16 %v7359
  %v7424 = vunpack.c.l.b16 %v7360
  %v7425 = vunpack.c.l.b16 %v7361
  %v7426 = vunpack.c.l.b16 %v7362
  %v7427 = vunpack.c.l.b16 %v7363
  %v7428 = vunpack.c.l.b16 %v7364
  %v7429 = vunpack.c.l.b16 %v7365
  %v7430 = vunpack.c.l.b16 %v7366
  %v7431 = vunpack.c.l.b16 %v7367
  %v7432 = vunpack.c.l.b16 %v7368
  %v7433 = vunpack.c.l.b16 %v7369
  %v7434 = vunpack.c.l.b16 %v7370
  %v7435 = vunpack.c.l.b16 %v7371
  %v7436 = vunpack.c.l.b16 %v7372
  %v7437 = vpack.c.b16 %v7422, %v7421
  %v7438 = vpack.c.b16 %v7424, %v7423
  %v7439 = vpack.c.b16 %v7426, %v7425
  %v7440 = vpack.c.b16 %v7428, %v7427
  %v7441 = vpack.c.b16 %v7430, %v7429
  %v7442 = vpack.c.b16 %v7432, %v7431
  %v7443 = vpack.c.b16 %v7434, %v7433
  %v7444 = vpack.c.b16 %v7436, %v7435
  %7453 = vmatprep.subr.bf16.mxu0 0
  %7454 = vmatpush1.bf16.msra.mxu0 %v7437
  %7455 = vmatprep.subr.bf16.mxu0 0
  %7456 = vmatpush1.bf16.msra.mxu0 %v7438
  %7457 = vmatprep.subr.bf16.mxu0 0
  %7458 = vmatpush1.bf16.msra.mxu0 %v7439
  %7459 = vmatprep.subr.bf16.mxu0 0
  %7460 = vmatpush1.bf16.msra.mxu0 %v7440
  %7461 = vmatprep.subr.bf16.mxu0 0
  %7462 = vmatpush1.bf16.msra.mxu0 %v7441
  %7463 = vmatprep.subr.bf16.mxu0 0
  %7464 = vmatpush1.bf16.msra.mxu0 %v7442
  %7465 = vmatprep.subr.bf16.mxu0 0
  %7466 = vmatpush1.bf16.msra.mxu0 %v7443
  %7467 = vmatprep.subr.bf16.mxu0 0
  %7468 = vmatpush1.bf16.msra.mxu0 %v7444
  %7469 = vmatprep.subr.bf16.mxu0 0
  %7470 = vmatpush1.bf16.msra.mxu0 0
  %7471 = vmatprep.subr.bf16.mxu0 0
  %7472 = vmatpush1.bf16.msra.mxu0 0
  %7473 = vmatprep.subr.bf16.mxu0 0
  %7474 = vmatpush1.bf16.msra.mxu0 0
  %7475 = vmatprep.subr.bf16.mxu0 0
  %7476 = vmatpush1.bf16.msra.mxu0 0
  %7477 = vmatprep.subr.bf16.mxu0 0
  %7478 = vmatpush1.bf16.msra.mxu0 0
  %7479 = vmatprep.subr.bf16.mxu0 0
  %7480 = vmatpush1.bf16.msra.mxu0 0
  %7481 = vmatprep.subr.bf16.mxu0 0
  %7482 = vmatpush1.bf16.msra.mxu0 0
  %7483 = vmatprep.subr.bf16.mxu0 0
  %7484 = vmatpush1.bf16.msra.mxu0 0
  %7485 = vmatprep.mubr.bf16.mxu0 0
  %7486 = vmatmul.mubr.bf16.gmra.mrb[0].mxu0 %v7403
  %v7487 = vpop.f32.mrb[0].mxu0
  %v7488 = vadd.f32 0.0, %v7487
  %v7489 = vpop.f32.mrb[0].mxu0
  %v7490 = vpop.f32.mrb[0].mxu0
  %v7491 = vpop.f32.mrb[0].mxu0
  %7492 = vdwg.mxu0
  %v7493 = vadd.f32 %v7339, %v7488
  %v7494 = vld [vmem:[#allocation6 + $0x5] sm:$0x1]
  %v7495 = vld [vmem:[#allocation6 + $0x25] sm:$0x1]
  %v7496 = vld [vmem:[#allocation6 + $0x45] sm:$0x1]
  %v7497 = vld [vmem:[#allocation6 + $0x65] sm:$0x1]
  %v7498 = vld [vmem:[#allocation6 + $0x85] sm:$0x1]
  %v7499 = vld [vmem:[#allocation6 + $0xa5] sm:$0x1]
  %v7500 = vld [vmem:[#allocation6 + $0xc5] sm:$0x1]
  %v7501 = vld [vmem:[#allocation6 + $0xe5] sm:$0x1]
  %v7502 = vpack.c.bf16 %v7494, %v7494
  %v7503 = vpack.c.bf16 %v7495, %v7495
  %v7504 = vpack.c.bf16 %v7496, %v7496
  %v7505 = vpack.c.bf16 %v7497, %v7497
  %v7506 = vpack.c.bf16 %v7498, %v7498
  %v7507 = vpack.c.bf16 %v7499, %v7499
  %v7508 = vpack.c.bf16 %v7500, %v7500
  %v7509 = vpack.c.bf16 %v7501, %v7501
  %s7510 = scalar_lea.vmem %s7, 320
  %v7511 = vld [vmem:[%s7510] sm:$0xf]
  %v7512 = vld [vmem:[%s7510 + $0x4] sm:$0xf]
  %v7513 = vld [vmem:[%s7510 + $0x8] sm:$0xf]
  %v7514 = vld [vmem:[%s7510 + $0xc] sm:$0xf]
  %v7515 = vld [vmem:[%s7510 + $0x10] sm:$0xf]
  %v7516 = vld [vmem:[%s7510 + $0x14] sm:$0xf]
  %v7517 = vld [vmem:[%s7510 + $0x18] sm:$0xf]
  %v7518 = vld [vmem:[%s7510 + $0x1c] sm:$0xf]
  %v7519 = vld [vmem:[%s7510 + $0x20] sm:$0xf]
  %v7520 = vld [vmem:[%s7510 + $0x24] sm:$0xf]
  %v7521 = vld [vmem:[%s7510 + $0x28] sm:$0xf]
  %v7522 = vld [vmem:[%s7510 + $0x2c] sm:$0xf]
  %v7523 = vld [vmem:[%s7510 + $0x30] sm:$0xf]
  %v7524 = vld [vmem:[%s7510 + $0x34] sm:$0xf]
  %v7525 = vld [vmem:[%s7510 + $0x38] sm:$0xf]
  %v7526 = vld [vmem:[%s7510 + $0x3c] sm:$0xf]
  %v7535 = vunpack.c.l.b16 %v7502
  %v7536 = vunpack.c.l.b16 %v7503
  %v7537 = vunpack.c.l.b16 %v7504
  %v7538 = vunpack.c.l.b16 %v7505
  %v7539 = vunpack.c.l.b16 %v7506
  %v7540 = vunpack.c.l.b16 %v7507
  %v7541 = vunpack.c.l.b16 %v7508
  %v7542 = vunpack.c.l.b16 %v7509
  %v7543 = vrot.slane %v7536, 7
  %v7544 = vsel %vm6802, %v7543, %v7535
  %v7545 = vrot.slane %v7537, 6
  %v7546 = vsel %vm6805, %v7545, %v7544
  %v7547 = vrot.slane %v7538, 5
  %v7548 = vsel %vm6808, %v7547, %v7546
  %v7549 = vrot.slane %v7539, 4
  %v7550 = vsel %vm6811, %v7549, %v7548
  %v7551 = vrot.slane %v7540, 3
  %v7552 = vsel %vm6814, %v7551, %v7550
  %v7553 = vrot.slane %v7541, 2
  %v7554 = vsel %vm6817, %v7553, %v7552
  %v7555 = vrot.slane %v7542, 1
  %v7556 = vsel %vm6820, %v7555, %v7554
  %v7557 = vpack.c.b16 %v7556, %v7556
  %v7575 = vunpack.c.l.b16 %v7511
  %v7576 = vunpack.c.l.b16 %v7512
  %v7577 = vunpack.c.l.b16 %v7513
  %v7578 = vunpack.c.l.b16 %v7514
  %v7579 = vunpack.c.l.b16 %v7515
  %v7580 = vunpack.c.l.b16 %v7516
  %v7581 = vunpack.c.l.b16 %v7517
  %v7582 = vunpack.c.l.b16 %v7518
  %v7583 = vunpack.c.l.b16 %v7519
  %v7584 = vunpack.c.l.b16 %v7520
  %v7585 = vunpack.c.l.b16 %v7521
  %v7586 = vunpack.c.l.b16 %v7522
  %v7587 = vunpack.c.l.b16 %v7523
  %v7588 = vunpack.c.l.b16 %v7524
  %v7589 = vunpack.c.l.b16 %v7525
  %v7590 = vunpack.c.l.b16 %v7526
  %v7591 = vpack.c.b16 %v7576, %v7575
  %v7592 = vpack.c.b16 %v7578, %v7577
  %v7593 = vpack.c.b16 %v7580, %v7579
  %v7594 = vpack.c.b16 %v7582, %v7581
  %v7595 = vpack.c.b16 %v7584, %v7583
  %v7596 = vpack.c.b16 %v7586, %v7585
  %v7597 = vpack.c.b16 %v7588, %v7587
  %v7598 = vpack.c.b16 %v7590, %v7589
  %7607 = vmatprep.subr.bf16.mxu0 0
  %7608 = vmatpush1.bf16.msra.mxu0 %v7591
  %7609 = vmatprep.subr.bf16.mxu0 0
  %7610 = vmatpush1.bf16.msra.mxu0 %v7592
  %7611 = vmatprep.subr.bf16.mxu0 0
  %7612 = vmatpush1.bf16.msra.mxu0 %v7593
  %7613 = vmatprep.subr.bf16.mxu0 0
  %7614 = vmatpush1.bf16.msra.mxu0 %v7594
  %7615 = vmatprep.subr.bf16.mxu0 0
  %7616 = vmatpush1.bf16.msra.mxu0 %v7595
  %7617 = vmatprep.subr.bf16.mxu0 0
  %7618 = vmatpush1.bf16.msra.mxu0 %v7596
  %7619 = vmatprep.subr.bf16.mxu0 0
  %7620 = vmatpush1.bf16.msra.mxu0 %v7597
  %7621 = vmatprep.subr.bf16.mxu0 0
  %7622 = vmatpush1.bf16.msra.mxu0 %v7598
  %7623 = vmatprep.subr.bf16.mxu0 0
  %7624 = vmatpush1.bf16.msra.mxu0 0
  %7625 = vmatprep.subr.bf16.mxu0 0
  %7626 = vmatpush1.bf16.msra.mxu0 0
  %7627 = vmatprep.subr.bf16.mxu0 0
  %7628 = vmatpush1.bf16.msra.mxu0 0
  %7629 = vmatprep.subr.bf16.mxu0 0
  %7630 = vmatpush1.bf16.msra.mxu0 0
  %7631 = vmatprep.subr.bf16.mxu0 0
  %7632 = vmatpush1.bf16.msra.mxu0 0
  %7633 = vmatprep.subr.bf16.mxu0 0
  %7634 = vmatpush1.bf16.msra.mxu0 0
  %7635 = vmatprep.subr.bf16.mxu0 0
  %7636 = vmatpush1.bf16.msra.mxu0 0
  %7637 = vmatprep.subr.bf16.mxu0 0
  %7638 = vmatpush1.bf16.msra.mxu0 0
  %7639 = vmatprep.mubr.bf16.mxu0 0
  %7640 = vmatmul.mubr.bf16.gmra.mrb[0].mxu0 %v7557
  %v7641 = vpop.f32.mrb[0].mxu0
  %v7642 = vadd.f32 0.0, %v7641
  %v7643 = vpop.f32.mrb[0].mxu0
  %v7644 = vpop.f32.mrb[0].mxu0
  %v7645 = vpop.f32.mrb[0].mxu0
  %7646 = vdwg.mxu0
  %v7647 = vadd.f32 %v7493, %v7642
  %v7648 = vld [vmem:[#allocation6 + $0x6] sm:$0x1]
  %v7649 = vld [vmem:[#allocation6 + $0x26] sm:$0x1]
  %v7650 = vld [vmem:[#allocation6 + $0x46] sm:$0x1]
  %v7651 = vld [vmem:[#allocation6 + $0x66] sm:$0x1]
  %v7652 = vld [vmem:[#allocation6 + $0x86] sm:$0x1]
  %v7653 = vld [vmem:[#allocation6 + $0xa6] sm:$0x1]
  %v7654 = vld [vmem:[#allocation6 + $0xc6] sm:$0x1]
  %v7655 = vld [vmem:[#allocation6 + $0xe6] sm:$0x1]
  %v7656 = vpack.c.bf16 %v7648, %v7648
  %v7657 = vpack.c.bf16 %v7649, %v7649
  %v7658 = vpack.c.bf16 %v7650, %v7650
  %v7659 = vpack.c.bf16 %v7651, %v7651
  %v7660 = vpack.c.bf16 %v7652, %v7652
  %v7661 = vpack.c.bf16 %v7653, %v7653
  %v7662 = vpack.c.bf16 %v7654, %v7654
  %v7663 = vpack.c.bf16 %v7655, %v7655
  %s7664 = scalar_lea.vmem %s7, 384
  %v7665 = vld [vmem:[%s7664] sm:$0xf]
  %v7666 = vld [vmem:[%s7664 + $0x4] sm:$0xf]
  %v7667 = vld [vmem:[%s7664 + $0x8] sm:$0xf]
  %v7668 = vld [vmem:[%s7664 + $0xc] sm:$0xf]
  %v7669 = vld [vmem:[%s7664 + $0x10] sm:$0xf]
  %v7670 = vld [vmem:[%s7664 + $0x14] sm:$0xf]
  %v7671 = vld [vmem:[%s7664 + $0x18] sm:$0xf]
  %v7672 = vld [vmem:[%s7664 + $0x1c] sm:$0xf]
  %v7673 = vld [vmem:[%s7664 + $0x20] sm:$0xf]
  %v7674 = vld [vmem:[%s7664 + $0x24] sm:$0xf]
  %v7675 = vld [vmem:[%s7664 + $0x28] sm:$0xf]
  %v7676 = vld [vmem:[%s7664 + $0x2c] sm:$0xf]
  %v7677 = vld [vmem:[%s7664 + $0x30] sm:$0xf]
  %v7678 = vld [vmem:[%s7664 + $0x34] sm:$0xf]
  %v7679 = vld [vmem:[%s7664 + $0x38] sm:$0xf]
  %v7680 = vld [vmem:[%s7664 + $0x3c] sm:$0xf]
  %v7689 = vunpack.c.l.b16 %v7656
  %v7690 = vunpack.c.l.b16 %v7657
  %v7691 = vunpack.c.l.b16 %v7658
  %v7692 = vunpack.c.l.b16 %v7659
  %v7693 = vunpack.c.l.b16 %v7660
  %v7694 = vunpack.c.l.b16 %v7661
  %v7695 = vunpack.c.l.b16 %v7662
  %v7696 = vunpack.c.l.b16 %v7663
  %v7697 = vrot.slane %v7690, 7
  %v7698 = vsel %vm6802, %v7697, %v7689
  %v7699 = vrot.slane %v7691, 6
  %v7700 = vsel %vm6805, %v7699, %v7698
  %v7701 = vrot.slane %v7692, 5
  %v7702 = vsel %vm6808, %v7701, %v7700
  %v7703 = vrot.slane %v7693, 4
  %v7704 = vsel %vm6811, %v7703, %v7702
  %v7705 = vrot.slane %v7694, 3
  %v7706 = vsel %vm6814, %v7705, %v7704
  %v7707 = vrot.slane %v7695, 2
  %v7708 = vsel %vm6817, %v7707, %v7706
  %v7709 = vrot.slane %v7696, 1
  %v7710 = vsel %vm6820, %v7709, %v7708
  %v7711 = vpack.c.b16 %v7710, %v7710
  %v7729 = vunpack.c.l.b16 %v7665
  %v7730 = vunpack.c.l.b16 %v7666
  %v7731 = vunpack.c.l.b16 %v7667
  %v7732 = vunpack.c.l.b16 %v7668
  %v7733 = vunpack.c.l.b16 %v7669
  %v7734 = vunpack.c.l.b16 %v7670
  %v7735 = vunpack.c.l.b16 %v7671
  %v7736 = vunpack.c.l.b16 %v7672
  %v7737 = vunpack.c.l.b16 %v7673
  %v7738 = vunpack.c.l.b16 %v7674
  %v7739 = vunpack.c.l.b16 %v7675
  %v7740 = vunpack.c.l.b16 %v7676
  %v7741 = vunpack.c.l.b16 %v7677
  %v7742 = vunpack.c.l.b16 %v7678
  %v7743 = vunpack.c.l.b16 %v7679
  %v7744 = vunpack.c.l.b16 %v7680
  %v7745 = vpack.c.b16 %v7730, %v7729
  %v7746 = vpack.c.b16 %v7732, %v7731
  %v7747 = vpack.c.b16 %v7734, %v7733
  %v7748 = vpack.c.b16 %v7736, %v7735
  %v7749 = vpack.c.b16 %v7738, %v7737
  %v7750 = vpack.c.b16 %v7740, %v7739
  %v7751 = vpack.c.b16 %v7742, %v7741
  %v7752 = vpack.c.b16 %v7744, %v7743
  %7761 = vmatprep.subr.bf16.mxu0 0
  %7762 = vmatpush1.bf16.msra.mxu0 %v7745
  %7763 = vmatprep.subr.bf16.mxu0 0
  %7764 = vmatpush1.bf16.msra.mxu0 %v7746
  %7765 = vmatprep.subr.bf16.mxu0 0
  %7766 = vmatpush1.bf16.msra.mxu0 %v7747
  %7767 = vmatprep.subr.bf16.mxu0 0
  %7768 = vmatpush1.bf16.msra.mxu0 %v7748
  %7769 = vmatprep.subr.bf16.mxu0 0
  %7770 = vmatpush1.bf16.msra.mxu0 %v7749
  %7771 = vmatprep.subr.bf16.mxu0 0
  %7772 = vmatpush1.bf16.msra.mxu0 %v7750
  %7773 = vmatprep.subr.bf16.mxu0 0
  %7774 = vmatpush1.bf16.msra.mxu0 %v7751
  %7775 = vmatprep.subr.bf16.mxu0 0
  %7776 = vmatpush1.bf16.msra.mxu0 %v7752
  %7777 = vmatprep.subr.bf16.mxu0 0
  %7778 = vmatpush1.bf16.msra.mxu0 0
  %7779 = vmatprep.subr.bf16.mxu0 0
  %7780 = vmatpush1.bf16.msra.mxu0 0
  %7781 = vmatprep.subr.bf16.mxu0 0
  %7782 = vmatpush1.bf16.msra.mxu0 0
  %7783 = vmatprep.subr.bf16.mxu0 0
  %7784 = vmatpush1.bf16.msra.mxu0 0
  %7785 = vmatprep.subr.bf16.mxu0 0
  %7786 = vmatpush1.bf16.msra.mxu0 0
  %7787 = vmatprep.subr.bf16.mxu0 0
  %7788 = vmatpush1.bf16.msra.mxu0 0
  %7789 = vmatprep.subr.bf16.mxu0 0
  %7790 = vmatpush1.bf16.msra.mxu0 0
  %7791 = vmatprep.subr.bf16.mxu0 0
  %7792 = vmatpush1.bf16.msra.mxu0 0
  %7793 = vmatprep.mubr.bf16.mxu0 0
  %7794 = vmatmul.mubr.bf16.gmra.mrb[0].mxu0 %v7711
  %v7795 = vpop.f32.mrb[0].mxu0
  %v7796 = vadd.f32 0.0, %v7795
  %v7797 = vpop.f32.mrb[0].mxu0
  %v7798 = vpop.f32.mrb[0].mxu0
  %v7799 = vpop.f32.mrb[0].mxu0
  %7800 = vdwg.mxu0
  %v7801 = vadd.f32 %v7647, %v7796
  %v7802 = vld [vmem:[#allocation6 + $0x7] sm:$0x1]
  %v7803 = vld [vmem:[#allocation6 + $0x27] sm:$0x1]
  %v7804 = vld [vmem:[#allocation6 + $0x47] sm:$0x1]
  %v7805 = vld [vmem:[#allocation6 + $0x67] sm:$0x1]
  %v7806 = vld [vmem:[#allocation6 + $0x87] sm:$0x1]
  %v7807 = vld [vmem:[#allocation6 + $0xa7] sm:$0x1]
  %v7808 = vld [vmem:[#allocation6 + $0xc7] sm:$0x1]
  %v7809 = vld [vmem:[#allocation6 + $0xe7] sm:$0x1]
  %v7810 = vpack.c.bf16 %v7802, %v7802
  %v7811 = vpack.c.bf16 %v7803, %v7803
  %v7812 = vpack.c.bf16 %v7804, %v7804
  %v7813 = vpack.c.bf16 %v7805, %v7805
  %v7814 = vpack.c.bf16 %v7806, %v7806
  %v7815 = vpack.c.bf16 %v7807, %v7807
  %v7816 = vpack.c.bf16 %v7808, %v7808
  %v7817 = vpack.c.bf16 %v7809, %v7809
  %s7818 = scalar_lea.vmem %s7, 448
  %v7819 = vld [vmem:[%s7818] sm:$0xf]
  %v7820 = vld [vmem:[%s7818 + $0x4] sm:$0xf]
  %v7821 = vld [vmem:[%s7818 + $0x8] sm:$0xf]
  %v7822 = vld [vmem:[%s7818 + $0xc] sm:$0xf]
  %v7823 = vld [vmem:[%s7818 + $0x10] sm:$0xf]
  %v7824 = vld [vmem:[%s7818 + $0x14] sm:$0xf]
  %v7825 = vld [vmem:[%s7818 + $0x18] sm:$0xf]
  %v7826 = vld [vmem:[%s7818 + $0x1c] sm:$0xf]
  %v7827 = vld [vmem:[%s7818 + $0x20] sm:$0xf]
  %v7828 = vld [vmem:[%s7818 + $0x24] sm:$0xf]
  %v7829 = vld [vmem:[%s7818 + $0x28] sm:$0xf]
  %v7830 = vld [vmem:[%s7818 + $0x2c] sm:$0xf]
  %v7831 = vld [vmem:[%s7818 + $0x30] sm:$0xf]
  %v7832 = vld [vmem:[%s7818 + $0x34] sm:$0xf]
  %v7833 = vld [vmem:[%s7818 + $0x38] sm:$0xf]
  %v7834 = vld [vmem:[%s7818 + $0x3c] sm:$0xf]
  %v7843 = vunpack.c.l.b16 %v7810
  %v7844 = vunpack.c.l.b16 %v7811
  %v7845 = vunpack.c.l.b16 %v7812
  %v7846 = vunpack.c.l.b16 %v7813
  %v7847 = vunpack.c.l.b16 %v7814
  %v7848 = vunpack.c.l.b16 %v7815
  %v7849 = vunpack.c.l.b16 %v7816
  %v7850 = vunpack.c.l.b16 %v7817
  %v7851 = vrot.slane %v7844, 7
  %v7852 = vsel %vm6802, %v7851, %v7843
  %v7853 = vrot.slane %v7845, 6
  %v7854 = vsel %vm6805, %v7853, %v7852
  %v7855 = vrot.slane %v7846, 5
  %v7856 = vsel %vm6808, %v7855, %v7854
  %v7857 = vrot.slane %v7847, 4
  %v7858 = vsel %vm6811, %v7857, %v7856
  %v7859 = vrot.slane %v7848, 3
  %v7860 = vsel %vm6814, %v7859, %v7858
  %v7861 = vrot.slane %v7849, 2
  %v7862 = vsel %vm6817, %v7861, %v7860
  %v7863 = vrot.slane %v7850, 1
  %v7864 = vsel %vm6820, %v7863, %v7862
  %v7865 = vpack.c.b16 %v7864, %v7864
  %v7883 = vunpack.c.l.b16 %v7819
  %v7884 = vunpack.c.l.b16 %v7820
  %v7885 = vunpack.c.l.b16 %v7821
  %v7886 = vunpack.c.l.b16 %v7822
  %v7887 = vunpack.c.l.b16 %v7823
  %v7888 = vunpack.c.l.b16 %v7824
  %v7889 = vunpack.c.l.b16 %v7825
  %v7890 = vunpack.c.l.b16 %v7826
  %v7891 = vunpack.c.l.b16 %v7827
  %v7892 = vunpack.c.l.b16 %v7828
  %v7893 = vunpack.c.l.b16 %v7829
  %v7894 = vunpack.c.l.b16 %v7830
  %v7895 = vunpack.c.l.b16 %v7831
  %v7896 = vunpack.c.l.b16 %v7832
  %v7897 = vunpack.c.l.b16 %v7833
  %v7898 = vunpack.c.l.b16 %v7834
  %v7899 = vpack.c.b16 %v7884, %v7883
  %v7900 = vpack.c.b16 %v7886, %v7885
  %v7901 = vpack.c.b16 %v7888, %v7887
  %v7902 = vpack.c.b16 %v7890, %v7889
  %v7903 = vpack.c.b16 %v7892, %v7891
  %v7904 = vpack.c.b16 %v7894, %v7893
  %v7905 = vpack.c.b16 %v7896, %v7895
  %v7906 = vpack.c.b16 %v7898, %v7897
  %7915 = vmatprep.subr.bf16.mxu0 0
  %7916 = vmatpush1.bf16.msra.mxu0 %v7899
  %7917 = vmatprep.subr.bf16.mxu0 0
  %7918 = vmatpush1.bf16.msra.mxu0 %v7900
  %7919 = vmatprep.subr.bf16.mxu0 0
  %7920 = vmatpush1.bf16.msra.mxu0 %v7901
  %7921 = vmatprep.subr.bf16.mxu0 0
  %7922 = vmatpush1.bf16.msra.mxu0 %v7902
  %7923 = vmatprep.subr.bf16.mxu0 0
  %7924 = vmatpush1.bf16.msra.mxu0 %v7903
  %7925 = vmatprep.subr.bf16.mxu0 0
  %7926 = vmatpush1.bf16.msra.mxu0 %v7904
  %7927 = vmatprep.subr.bf16.mxu0 0
  %7928 = vmatpush1.bf16.msra.mxu0 %v7905
  %7929 = vmatprep.subr.bf16.mxu0 0
  %7930 = vmatpush1.bf16.msra.mxu0 %v7906
  %7931 = vmatprep.subr.bf16.mxu0 0
  %7932 = vmatpush1.bf16.msra.mxu0 0
  %7933 = vmatprep.subr.bf16.mxu0 0
  %7934 = vmatpush1.bf16.msra.mxu0 0
  %7935 = vmatprep.subr.bf16.mxu0 0
  %7936 = vmatpush1.bf16.msra.mxu0 0
  %7937 = vmatprep.subr.bf16.mxu0 0
  %7938 = vmatpush1.bf16.msra.mxu0 0
  %7939 = vmatprep.subr.bf16.mxu0 0
  %7940 = vmatpush1.bf16.msra.mxu0 0
  %7941 = vmatprep.subr.bf16.mxu0 0
  %7942 = vmatpush1.bf16.msra.mxu0 0
  %7943 = vmatprep.subr.bf16.mxu0 0
  %7944 = vmatpush1.bf16.msra.mxu0 0
  %7945 = vmatprep.subr.bf16.mxu0 0
  %7946 = vmatpush1.bf16.msra.mxu0 0
  %7947 = vmatprep.mubr.bf16.mxu0 0
  %7948 = vmatmul.mubr.bf16.gmra.mrb[0].mxu0 %v7865
  %v7949 = vpop.f32.mrb[0].mxu0
  %v7950 = vadd.f32 0.0, %v7949
  %v7951 = vpop.f32.mrb[0].mxu0
  %v7952 = vpop.f32.mrb[0].mxu0
  %v7953 = vpop.f32.mrb[0].mxu0
  %7954 = vdwg.mxu0
  %v7955 = vadd.f32 %v7801, %v7950
  %v7956 = vld [vmem:[#allocation6 + $0x8] sm:$0x1]
  %v7957 = vld [vmem:[#allocation6 + $0x28] sm:$0x1]
  %v7958 = vld [vmem:[#allocation6 + $0x48] sm:$0x1]
  %v7959 = vld [vmem:[#allocation6 + $0x68] sm:$0x1]
  %v7960 = vld [vmem:[#allocation6 + $0x88] sm:$0x1]
  %v7961 = vld [vmem:[#allocation6 + $0xa8] sm:$0x1]
  %v7962 = vld [vmem:[#allocation6 + $0xc8] sm:$0x1]
  %v7963 = vld [vmem:[#allocation6 + $0xe8] sm:$0x1]
  %v7964 = vpack.c.bf16 %v7956, %v7956
  %v7965 = vpack.c.bf16 %v7957, %v7957
  %v7966 = vpack.c.bf16 %v7958, %v7958
  %v7967 = vpack.c.bf16 %v7959, %v7959
  %v7968 = vpack.c.bf16 %v7960, %v7960
  %v7969 = vpack.c.bf16 %v7961, %v7961
  %v7970 = vpack.c.bf16 %v7962, %v7962
  %v7971 = vpack.c.bf16 %v7963, %v7963
  %s7972 = scalar_lea.vmem %s7, 512
  %v7973 = vld [vmem:[%s7972] sm:$0xf]
  %v7974 = vld [vmem:[%s7972 + $0x4] sm:$0xf]
  %v7975 = vld [vmem:[%s7972 + $0x8] sm:$0xf]
  %v7976 = vld [vmem:[%s7972 + $0xc] sm:$0xf]
  %v7977 = vld [vmem:[%s7972 + $0x10] sm:$0xf]
  %v7978 = vld [vmem:[%s7972 + $0x14] sm:$0xf]
  %v7979 = vld [vmem:[%s7972 + $0x18] sm:$0xf]
  %v7980 = vld [vmem:[%s7972 + $0x1c] sm:$0xf]
  %v7981 = vld [vmem:[%s7972 + $0x20] sm:$0xf]
  %v7982 = vld [vmem:[%s7972 + $0x24] sm:$0xf]
  %v7983 = vld [vmem:[%s7972 + $0x28] sm:$0xf]
  %v7984 = vld [vmem:[%s7972 + $0x2c] sm:$0xf]
  %v7985 = vld [vmem:[%s7972 + $0x30] sm:$0xf]
  %v7986 = vld [vmem:[%s7972 + $0x34] sm:$0xf]
  %v7987 = vld [vmem:[%s7972 + $0x38] sm:$0xf]
  %v7988 = vld [vmem:[%s7972 + $0x3c] sm:$0xf]
  %v7997 = vunpack.c.l.b16 %v7964
  %v7998 = vunpack.c.l.b16 %v7965
  %v7999 = vunpack.c.l.b16 %v7966
  %v8000 = vunpack.c.l.b16 %v7967
  %v8001 = vunpack.c.l.b16 %v7968
  %v8002 = vunpack.c.l.b16 %v7969
  %v8003 = vunpack.c.l.b16 %v7970
  %v8004 = vunpack.c.l.b16 %v7971
  %v8005 = vrot.slane %v7998, 7
  %v8006 = vsel %vm6802, %v8005, %v7997
  %v8007 = vrot.slane %v7999, 6
  %v8008 = vsel %vm6805, %v8007, %v8006
  %v8009 = vrot.slane %v8000, 5
  %v8010 = vsel %vm6808, %v8009, %v8008
  %v8011 = vrot.slane %v8001, 4
  %v8012 = vsel %vm6811, %v8011, %v8010
  %v8013 = vrot.slane %v8002, 3
  %v8014 = vsel %vm6814, %v8013, %v8012
  %v8015 = vrot.slane %v8003, 2
  %v8016 = vsel %vm6817, %v8015, %v8014
  %v8017 = vrot.slane %v8004, 1
  %v8018 = vsel %vm6820, %v8017, %v8016
  %v8019 = vpack.c.b16 %v8018, %v8018
  %v8037 = vunpack.c.l.b16 %v7973
  %v8038 = vunpack.c.l.b16 %v7974
  %v8039 = vunpack.c.l.b16 %v7975
  %v8040 = vunpack.c.l.b16 %v7976
  %v8041 = vunpack.c.l.b16 %v7977
  %v8042 = vunpack.c.l.b16 %v7978
  %v8043 = vunpack.c.l.b16 %v7979
  %v8044 = vunpack.c.l.b16 %v7980
  %v8045 = vunpack.c.l.b16 %v7981
  %v8046 = vunpack.c.l.b16 %v7982
  %v8047 = vunpack.c.l.b16 %v7983
  %v8048 = vunpack.c.l.b16 %v7984
  %v8049 = vunpack.c.l.b16 %v7985
  %v8050 = vunpack.c.l.b16 %v7986
  %v8051 = vunpack.c.l.b16 %v7987
  %v8052 = vunpack.c.l.b16 %v7988
  %v8053 = vpack.c.b16 %v8038, %v8037
  %v8054 = vpack.c.b16 %v8040, %v8039
  %v8055 = vpack.c.b16 %v8042, %v8041
  %v8056 = vpack.c.b16 %v8044, %v8043
  %v8057 = vpack.c.b16 %v8046, %v8045
  %v8058 = vpack.c.b16 %v8048, %v8047
  %v8059 = vpack.c.b16 %v8050, %v8049
  %v8060 = vpack.c.b16 %v8052, %v8051
  %8069 = vmatprep.subr.bf16.mxu0 0
  %8070 = vmatpush1.bf16.msra.mxu0 %v8053
  %8071 = vmatprep.subr.bf16.mxu0 0
  %8072 = vmatpush1.bf16.msra.mxu0 %v8054
  %8073 = vmatprep.subr.bf16.mxu0 0
  %8074 = vmatpush1.bf16.msra.mxu0 %v8055
  %8075 = vmatprep.subr.bf16.mxu0 0
  %8076 = vmatpush1.bf16.msra.mxu0 %v8056
  %8077 = vmatprep.subr.bf16.mxu0 0
  %8078 = vmatpush1.bf16.msra.mxu0 %v8057
  %8079 = vmatprep.subr.bf16.mxu0 0
  %8080 = vmatpush1.bf16.msra.mxu0 %v8058
  %8081 = vmatprep.subr.bf16.mxu0 0
  %8082 = vmatpush1.bf16.msra.mxu0 %v8059
  %8083 = vmatprep.subr.bf16.mxu0 0
  %8084 = vmatpush1.bf16.msra.mxu0 %v8060
  %8085 = vmatprep.subr.bf16.mxu0 0
  %8086 = vmatpush1.bf16.msra.mxu0 0
  %8087 = vmatprep.subr.bf16.mxu0 0
  %8088 = vmatpush1.bf16.msra.mxu0 0
  %8089 = vmatprep.subr.bf16.mxu0 0
  %8090 = vmatpush1.bf16.msra.mxu0 0
  %8091 = vmatprep.subr.bf16.mxu0 0
  %8092 = vmatpush1.bf16.msra.mxu0 0
  %8093 = vmatprep.subr.bf16.mxu0 0
  %8094 = vmatpush1.bf16.msra.mxu0 0
  %8095 = vmatprep.subr.bf16.mxu0 0
  %8096 = vmatpush1.bf16.msra.mxu0 0
  %8097 = vmatprep.subr.bf16.mxu0 0
  %8098 = vmatpush1.bf16.msra.mxu0 0
  %8099 = vmatprep.subr.bf16.mxu0 0
  %8100 = vmatpush1.bf16.msra.mxu0 0
  %8101 = vmatprep.mubr.bf16.mxu0 0
  %8102 = vmatmul.mubr.bf16.gmra.mrb[0].mxu0 %v8019
  %v8103 = vpop.f32.mrb[0].mxu0
  %v8104 = vadd.f32 0.0, %v8103
  %v8105 = vpop.f32.mrb[0].mxu0
  %v8106 = vpop.f32.mrb[0].mxu0
  %v8107 = vpop.f32.mrb[0].mxu0
  %8108 = vdwg.mxu0
  %v8109 = vadd.f32 %v7955, %v8104
  %v8110 = vld [vmem:[#allocation6 + $0x9] sm:$0x1]
  %v8111 = vld [vmem:[#allocation6 + $0x29] sm:$0x1]
  %v8112 = vld [vmem:[#allocation6 + $0x49] sm:$0x1]
  %v8113 = vld [vmem:[#allocation6 + $0x69] sm:$0x1]
  %v8114 = vld [vmem:[#allocation6 + $0x89] sm:$0x1]
  %v8115 = vld [vmem:[#allocation6 + $0xa9] sm:$0x1]
  %v8116 = vld [vmem:[#allocation6 + $0xc9] sm:$0x1]
  %v8117 = vld [vmem:[#allocation6 + $0xe9] sm:$0x1]
  %v8118 = vpack.c.bf16 %v8110, %v8110
  %v8119 = vpack.c.bf16 %v8111, %v8111
  %v8120 = vpack.c.bf16 %v8112, %v8112
  %v8121 = vpack.c.bf16 %v8113, %v8113
  %v8122 = vpack.c.bf16 %v8114, %v8114
  %v8123 = vpack.c.bf16 %v8115, %v8115
  %v8124 = vpack.c.bf16 %v8116, %v8116
  %v8125 = vpack.c.bf16 %v8117, %v8117
  %s8126 = scalar_lea.vmem %s7, 576
  %v8127 = vld [vmem:[%s8126] sm:$0xf]
  %v8128 = vld [vmem:[%s8126 + $0x4] sm:$0xf]
  %v8129 = vld [vmem:[%s8126 + $0x8] sm:$0xf]
  %v8130 = vld [vmem:[%s8126 + $0xc] sm:$0xf]
  %v8131 = vld [vmem:[%s8126 + $0x10] sm:$0xf]
  %v8132 = vld [vmem:[%s8126 + $0x14] sm:$0xf]
  %v8133 = vld [vmem:[%s8126 + $0x18] sm:$0xf]
  %v8134 = vld [vmem:[%s8126 + $0x1c] sm:$0xf]
  %v8135 = vld [vmem:[%s8126 + $0x20] sm:$0xf]
  %v8136 = vld [vmem:[%s8126 + $0x24] sm:$0xf]
  %v8137 = vld [vmem:[%s8126 + $0x28] sm:$0xf]
  %v8138 = vld [vmem:[%s8126 + $0x2c] sm:$0xf]
  %v8139 = vld [vmem:[%s8126 + $0x30] sm:$0xf]
  %v8140 = vld [vmem:[%s8126 + $0x34] sm:$0xf]
  %v8141 = vld [vmem:[%s8126 + $0x38] sm:$0xf]
  %v8142 = vld [vmem:[%s8126 + $0x3c] sm:$0xf]
  %v8151 = vunpack.c.l.b16 %v8118
  %v8152 = vunpack.c.l.b16 %v8119
  %v8153 = vunpack.c.l.b16 %v8120
  %v8154 = vunpack.c.l.b16 %v8121
  %v8155 = vunpack.c.l.b16 %v8122
  %v8156 = vunpack.c.l.b16 %v8123
  %v8157 = vunpack.c.l.b16 %v8124
  %v8158 = vunpack.c.l.b16 %v8125
  %v8159 = vrot.slane %v8152, 7
  %v8160 = vsel %vm6802, %v8159, %v8151
  %v8161 = vrot.slane %v8153, 6
  %v8162 = vsel %vm6805, %v8161, %v8160
  %v8163 = vrot.slane %v8154, 5
  %v8164 = vsel %vm6808, %v8163, %v8162
  %v8165 = vrot.slane %v8155, 4
  %v8166 = vsel %vm6811, %v8165, %v8164
  %v8167 = vrot.slane %v8156, 3
  %v8168 = vsel %vm6814, %v8167, %v8166
  %v8169 = vrot.slane %v8157, 2
  %v8170 = vsel %vm6817, %v8169, %v8168
  %v8171 = vrot.slane %v8158, 1
  %v8172 = vsel %vm6820, %v8171, %v8170
  %v8173 = vpack.c.b16 %v8172, %v8172
  %v8191 = vunpack.c.l.b16 %v8127
  %v8192 = vunpack.c.l.b16 %v8128
  %v8193 = vunpack.c.l.b16 %v8129
  %v8194 = vunpack.c.l.b16 %v8130
  %v8195 = vunpack.c.l.b16 %v8131
  %v8196 = vunpack.c.l.b16 %v8132
  %v8197 = vunpack.c.l.b16 %v8133
  %v8198 = vunpack.c.l.b16 %v8134
  %v8199 = vunpack.c.l.b16 %v8135
  %v8200 = vunpack.c.l.b16 %v8136
  %v8201 = vunpack.c.l.b16 %v8137
  %v8202 = vunpack.c.l.b16 %v8138
  %v8203 = vunpack.c.l.b16 %v8139
  %v8204 = vunpack.c.l.b16 %v8140
  %v8205 = vunpack.c.l.b16 %v8141
  %v8206 = vunpack.c.l.b16 %v8142
  %v8207 = vpack.c.b16 %v8192, %v8191
  %v8208 = vpack.c.b16 %v8194, %v8193
  %v8209 = vpack.c.b16 %v8196, %v8195
  %v8210 = vpack.c.b16 %v8198, %v8197
  %v8211 = vpack.c.b16 %v8200, %v8199
  %v8212 = vpack.c.b16 %v8202, %v8201
  %v8213 = vpack.c.b16 %v8204, %v8203
  %v8214 = vpack.c.b16 %v8206, %v8205
  %8223 = vmatprep.subr.bf16.mxu0 0
  %8224 = vmatpush1.bf16.msra.mxu0 %v8207
  %8225 = vmatprep.subr.bf16.mxu0 0
  %8226 = vmatpush1.bf16.msra.mxu0 %v8208
  %8227 = vmatprep.subr.bf16.mxu0 0
  %8228 = vmatpush1.bf16.msra.mxu0 %v8209
  %8229 = vmatprep.subr.bf16.mxu0 0
  %8230 = vmatpush1.bf16.msra.mxu0 %v8210
  %8231 = vmatprep.subr.bf16.mxu0 0
  %8232 = vmatpush1.bf16.msra.mxu0 %v8211
  %8233 = vmatprep.subr.bf16.mxu0 0
  %8234 = vmatpush1.bf16.msra.mxu0 %v8212
  %8235 = vmatprep.subr.bf16.mxu0 0
  %8236 = vmatpush1.bf16.msra.mxu0 %v8213
  %8237 = vmatprep.subr.bf16.mxu0 0
  %8238 = vmatpush1.bf16.msra.mxu0 %v8214
  %8239 = vmatprep.subr.bf16.mxu0 0
  %8240 = vmatpush1.bf16.msra.mxu0 0
  %8241 = vmatprep.subr.bf16.mxu0 0
  %8242 = vmatpush1.bf16.msra.mxu0 0
  %8243 = vmatprep.subr.bf16.mxu0 0
  %8244 = vmatpush1.bf16.msra.mxu0 0
  %8245 = vmatprep.subr.bf16.mxu0 0
  %8246 = vmatpush1.bf16.msra.mxu0 0
  %8247 = vmatprep.subr.bf16.mxu0 0
  %8248 = vmatpush1.bf16.msra.mxu0 0
  %8249 = vmatprep.subr.bf16.mxu0 0
  %8250 = vmatpush1.bf16.msra.mxu0 0
  %8251 = vmatprep.subr.bf16.mxu0 0
  %8252 = vmatpush1.bf16.msra.mxu0 0
  %8253 = vmatprep.subr.bf16.mxu0 0
  %8254 = vmatpush1.bf16.msra.mxu0 0
  %8255 = vmatprep.mubr.bf16.mxu0 0
  %8256 = vmatmul.mubr.bf16.gmra.mrb[0].mxu0 %v8173
  %v8257 = vpop.f32.mrb[0].mxu0
  %v8258 = vadd.f32 0.0, %v8257
  %v8259 = vpop.f32.mrb[0].mxu0
  %v8260 = vpop.f32.mrb[0].mxu0
  %v8261 = vpop.f32.mrb[0].mxu0
  %8262 = vdwg.mxu0
  %v8263 = vadd.f32 %v8109, %v8258
  %v8264 = vld [vmem:[#allocation6 + $0xa] sm:$0x1]
  %v8265 = vld [vmem:[#allocation6 + $0x2a] sm:$0x1]
  %v8266 = vld [vmem:[#allocation6 + $0x4a] sm:$0x1]
  %v8267 = vld [vmem:[#allocation6 + $0x6a] sm:$0x1]
  %v8268 = vld [vmem:[#allocation6 + $0x8a] sm:$0x1]
  %v8269 = vld [vmem:[#allocation6 + $0xaa] sm:$0x1]
  %v8270 = vld [vmem:[#allocation6 + $0xca] sm:$0x1]
  %v8271 = vld [vmem:[#allocation6 + $0xea] sm:$0x1]
  %v8272 = vpack.c.bf16 %v8264, %v8264
  %v8273 = vpack.c.bf16 %v8265, %v8265
  %v8274 = vpack.c.bf16 %v8266, %v8266
  %v8275 = vpack.c.bf16 %v8267, %v8267
  %v8276 = vpack.c.bf16 %v8268, %v8268
  %v8277 = vpack.c.bf16 %v8269, %v8269
  %v8278 = vpack.c.bf16 %v8270, %v8270
  %v8279 = vpack.c.bf16 %v8271, %v8271
  %s8280 = scalar_lea.vmem %s7, 640
  %v8281 = vld [vmem:[%s8280] sm:$0xf]
  %v8282 = vld [vmem:[%s8280 + $0x4] sm:$0xf]
  %v8283 = vld [vmem:[%s8280 + $0x8] sm:$0xf]
  %v8284 = vld [vmem:[%s8280 + $0xc] sm:$0xf]
  %v8285 = vld [vmem:[%s8280 + $0x10] sm:$0xf]
  %v8286 = vld [vmem:[%s8280 + $0x14] sm:$0xf]
  %v8287 = vld [vmem:[%s8280 + $0x18] sm:$0xf]
  %v8288 = vld [vmem:[%s8280 + $0x1c] sm:$0xf]
  %v8289 = vld [vmem:[%s8280 + $0x20] sm:$0xf]
  %v8290 = vld [vmem:[%s8280 + $0x24] sm:$0xf]
  %v8291 = vld [vmem:[%s8280 + $0x28] sm:$0xf]
  %v8292 = vld [vmem:[%s8280 + $0x2c] sm:$0xf]
  %v8293 = vld [vmem:[%s8280 + $0x30] sm:$0xf]
  %v8294 = vld [vmem:[%s8280 + $0x34] sm:$0xf]
  %v8295 = vld [vmem:[%s8280 + $0x38] sm:$0xf]
  %v8296 = vld [vmem:[%s8280 + $0x3c] sm:$0xf]
  %v8305 = vunpack.c.l.b16 %v8272
  %v8306 = vunpack.c.l.b16 %v8273
  %v8307 = vunpack.c.l.b16 %v8274
  %v8308 = vunpack.c.l.b16 %v8275
  %v8309 = vunpack.c.l.b16 %v8276
  %v8310 = vunpack.c.l.b16 %v8277
  %v8311 = vunpack.c.l.b16 %v8278
  %v8312 = vunpack.c.l.b16 %v8279
  %v8313 = vrot.slane %v8306, 7
  %v8314 = vsel %vm6802, %v8313, %v8305
  %v8315 = vrot.slane %v8307, 6
  %v8316 = vsel %vm6805, %v8315, %v8314
  %v8317 = vrot.slane %v8308, 5
  %v8318 = vsel %vm6808, %v8317, %v8316
  %v8319 = vrot.slane %v8309, 4
  %v8320 = vsel %vm6811, %v8319, %v8318
  %v8321 = vrot.slane %v8310, 3
  %v8322 = vsel %vm6814, %v8321, %v8320
  %v8323 = vrot.slane %v8311, 2
  %v8324 = vsel %vm6817, %v8323, %v8322
  %v8325 = vrot.slane %v8312, 1
  %v8326 = vsel %vm6820, %v8325, %v8324
  %v8327 = vpack.c.b16 %v8326, %v8326
  %v8345 = vunpack.c.l.b16 %v8281
  %v8346 = vunpack.c.l.b16 %v8282
  %v8347 = vunpack.c.l.b16 %v8283
  %v8348 = vunpack.c.l.b16 %v8284
  %v8349 = vunpack.c.l.b16 %v8285
  %v8350 = vunpack.c.l.b16 %v8286
  %v8351 = vunpack.c.l.b16 %v8287
  %v8352 = vunpack.c.l.b16 %v8288
  %v8353 = vunpack.c.l.b16 %v8289
  %v8354 = vunpack.c.l.b16 %v8290
  %v8355 = vunpack.c.l.b16 %v8291
  %v8356 = vunpack.c.l.b16 %v8292
  %v8357 = vunpack.c.l.b16 %v8293
  %v8358 = vunpack.c.l.b16 %v8294
  %v8359 = vunpack.c.l.b16 %v8295
  %v8360 = vunpack.c.l.b16 %v8296
  %v8361 = vpack.c.b16 %v8346, %v8345
  %v8362 = vpack.c.b16 %v8348, %v8347
  %v8363 = vpack.c.b16 %v8350, %v8349
  %v8364 = vpack.c.b16 %v8352, %v8351
  %v8365 = vpack.c.b16 %v8354, %v8353
  %v8366 = vpack.c.b16 %v8356, %v8355
  %v8367 = vpack.c.b16 %v8358, %v8357
  %v8368 = vpack.c.b16 %v8360, %v8359
  %8377 = vmatprep.subr.bf16.mxu0 0
  %8378 = vmatpush1.bf16.msra.mxu0 %v8361
  %8379 = vmatprep.subr.bf16.mxu0 0
  %8380 = vmatpush1.bf16.msra.mxu0 %v8362
  %8381 = vmatprep.subr.bf16.mxu0 0
  %8382 = vmatpush1.bf16.msra.mxu0 %v8363
  %8383 = vmatprep.subr.bf16.mxu0 0
  %8384 = vmatpush1.bf16.msra.mxu0 %v8364
  %8385 = vmatprep.subr.bf16.mxu0 0
  %8386 = vmatpush1.bf16.msra.mxu0 %v8365
  %8387 = vmatprep.subr.bf16.mxu0 0
  %8388 = vmatpush1.bf16.msra.mxu0 %v8366
  %8389 = vmatprep.subr.bf16.mxu0 0
  %8390 = vmatpush1.bf16.msra.mxu0 %v8367
  %8391 = vmatprep.subr.bf16.mxu0 0
  %8392 = vmatpush1.bf16.msra.mxu0 %v8368
  %8393 = vmatprep.subr.bf16.mxu0 0
  %8394 = vmatpush1.bf16.msra.mxu0 0
  %8395 = vmatprep.subr.bf16.mxu0 0
  %8396 = vmatpush1.bf16.msra.mxu0 0
  %8397 = vmatprep.subr.bf16.mxu0 0
  %8398 = vmatpush1.bf16.msra.mxu0 0
  %8399 = vmatprep.subr.bf16.mxu0 0
  %8400 = vmatpush1.bf16.msra.mxu0 0
  %8401 = vmatprep.subr.bf16.mxu0 0
  %8402 = vmatpush1.bf16.msra.mxu0 0
  %8403 = vmatprep.subr.bf16.mxu0 0
  %8404 = vmatpush1.bf16.msra.mxu0 0
  %8405 = vmatprep.subr.bf16.mxu0 0
  %8406 = vmatpush1.bf16.msra.mxu0 0
  %8407 = vmatprep.subr.bf16.mxu0 0
  %8408 = vmatpush1.bf16.msra.mxu0 0
  %8409 = vmatprep.mubr.bf16.mxu0 0
  %8410 = vmatmul.mubr.bf16.gmra.mrb[0].mxu0 %v8327
  %v8411 = vpop.f32.mrb[0].mxu0
  %v8412 = vadd.f32 0.0, %v8411
  %v8413 = vpop.f32.mrb[0].mxu0
  %v8414 = vpop.f32.mrb[0].mxu0
  %v8415 = vpop.f32.mrb[0].mxu0
  %8416 = vdwg.mxu0
  %v8417 = vadd.f32 %v8263, %v8412
  %v8418 = vld [vmem:[#allocation6 + $0xb] sm:$0x1]
  %v8419 = vld [vmem:[#allocation6 + $0x2b] sm:$0x1]
  %v8420 = vld [vmem:[#allocation6 + $0x4b] sm:$0x1]
  %v8421 = vld [vmem:[#allocation6 + $0x6b] sm:$0x1]
  %v8422 = vld [vmem:[#allocation6 + $0x8b] sm:$0x1]
  %v8423 = vld [vmem:[#allocation6 + $0xab] sm:$0x1]
  %v8424 = vld [vmem:[#allocation6 + $0xcb] sm:$0x1]
  %v8425 = vld [vmem:[#allocation6 + $0xeb] sm:$0x1]
  %v8426 = vpack.c.bf16 %v8418, %v8418
  %v8427 = vpack.c.bf16 %v8419, %v8419
  %v8428 = vpack.c.bf16 %v8420, %v8420
  %v8429 = vpack.c.bf16 %v8421, %v8421
  %v8430 = vpack.c.bf16 %v8422, %v8422
  %v8431 = vpack.c.bf16 %v8423, %v8423
  %v8432 = vpack.c.bf16 %v8424, %v8424
  %v8433 = vpack.c.bf16 %v8425, %v8425
  %s8434 = scalar_lea.vmem %s7, 704
  %v8435 = vld [vmem:[%s8434] sm:$0xf]
  %v8436 = vld [vmem:[%s8434 + $0x4] sm:$0xf]
  %v8437 = vld [vmem:[%s8434 + $0x8] sm:$0xf]
  %v8438 = vld [vmem:[%s8434 + $0xc] sm:$0xf]
  %v8439 = vld [vmem:[%s8434 + $0x10] sm:$0xf]
  %v8440 = vld [vmem:[%s8434 + $0x14] sm:$0xf]
  %v8441 = vld [vmem:[%s8434 + $0x18] sm:$0xf]
  %v8442 = vld [vmem:[%s8434 + $0x1c] sm:$0xf]
  %v8443 = vld [vmem:[%s8434 + $0x20] sm:$0xf]
  %v8444 = vld [vmem:[%s8434 + $0x24] sm:$0xf]
  %v8445 = vld [vmem:[%s8434 + $0x28] sm:$0xf]
  %v8446 = vld [vmem:[%s8434 + $0x2c] sm:$0xf]
  %v8447 = vld [vmem:[%s8434 + $0x30] sm:$0xf]
  %v8448 = vld [vmem:[%s8434 + $0x34] sm:$0xf]
  %v8449 = vld [vmem:[%s8434 + $0x38] sm:$0xf]
  %v8450 = vld [vmem:[%s8434 + $0x3c] sm:$0xf]
  %v8459 = vunpack.c.l.b16 %v8426
  %v8460 = vunpack.c.l.b16 %v8427
  %v8461 = vunpack.c.l.b16 %v8428
  %v8462 = vunpack.c.l.b16 %v8429
  %v8463 = vunpack.c.l.b16 %v8430
  %v8464 = vunpack.c.l.b16 %v8431
  %v8465 = vunpack.c.l.b16 %v8432
  %v8466 = vunpack.c.l.b16 %v8433
  %v8467 = vrot.slane %v8460, 7
  %v8468 = vsel %vm6802, %v8467, %v8459
  %v8469 = vrot.slane %v8461, 6
  %v8470 = vsel %vm6805, %v8469, %v8468
  %v8471 = vrot.slane %v8462, 5
  %v8472 = vsel %vm6808, %v8471, %v8470
  %v8473 = vrot.slane %v8463, 4
  %v8474 = vsel %vm6811, %v8473, %v8472
  %v8475 = vrot.slane %v8464, 3
  %v8476 = vsel %vm6814, %v8475, %v8474
  %v8477 = vrot.slane %v8465, 2
  %v8478 = vsel %vm6817, %v8477, %v8476
  %v8479 = vrot.slane %v8466, 1
  %v8480 = vsel %vm6820, %v8479, %v8478
  %v8481 = vpack.c.b16 %v8480, %v8480
  %v8499 = vunpack.c.l.b16 %v8435
  %v8500 = vunpack.c.l.b16 %v8436
  %v8501 = vunpack.c.l.b16 %v8437
  %v8502 = vunpack.c.l.b16 %v8438
  %v8503 = vunpack.c.l.b16 %v8439
  %v8504 = vunpack.c.l.b16 %v8440
  %v8505 = vunpack.c.l.b16 %v8441
  %v8506 = vunpack.c.l.b16 %v8442
  %v8507 = vunpack.c.l.b16 %v8443
  %v8508 = vunpack.c.l.b16 %v8444
  %v8509 = vunpack.c.l.b16 %v8445
  %v8510 = vunpack.c.l.b16 %v8446
  %v8511 = vunpack.c.l.b16 %v8447
  %v8512 = vunpack.c.l.b16 %v8448
  %v8513 = vunpack.c.l.b16 %v8449
  %v8514 = vunpack.c.l.b16 %v8450
  %v8515 = vpack.c.b16 %v8500, %v8499
  %v8516 = vpack.c.b16 %v8502, %v8501
  %v8517 = vpack.c.b16 %v8504, %v8503
  %v8518 = vpack.c.b16 %v8506, %v8505
  %v8519 = vpack.c.b16 %v8508, %v8507
  %v8520 = vpack.c.b16 %v8510, %v8509
  %v8521 = vpack.c.b16 %v8512, %v8511
  %v8522 = vpack.c.b16 %v8514, %v8513
  %8531 = vmatprep.subr.bf16.mxu0 0
  %8532 = vmatpush1.bf16.msra.mxu0 %v8515
  %8533 = vmatprep.subr.bf16.mxu0 0
  %8534 = vmatpush1.bf16.msra.mxu0 %v8516
  %8535 = vmatprep.subr.bf16.mxu0 0
  %8536 = vmatpush1.bf16.msra.mxu0 %v8517
  %8537 = vmatprep.subr.bf16.mxu0 0
  %8538 = vmatpush1.bf16.msra.mxu0 %v8518
  %8539 = vmatprep.subr.bf16.mxu0 0
  %8540 = vmatpush1.bf16.msra.mxu0 %v8519
  %8541 = vmatprep.subr.bf16.mxu0 0
  %8542 = vmatpush1.bf16.msra.mxu0 %v8520
  %8543 = vmatprep.subr.bf16.mxu0 0
  %8544 = vmatpush1.bf16.msra.mxu0 %v8521
  %8545 = vmatprep.subr.bf16.mxu0 0
  %8546 = vmatpush1.bf16.msra.mxu0 %v8522
  %8547 = vmatprep.subr.bf16.mxu0 0
  %8548 = vmatpush1.bf16.msra.mxu0 0
  %8549 = vmatprep.subr.bf16.mxu0 0
  %8550 = vmatpush1.bf16.msra.mxu0 0
  %8551 = vmatprep.subr.bf16.mxu0 0
  %8552 = vmatpush1.bf16.msra.mxu0 0
  %8553 = vmatprep.subr.bf16.mxu0 0
  %8554 = vmatpush1.bf16.msra.mxu0 0
  %8555 = vmatprep.subr.bf16.mxu0 0
  %8556 = vmatpush1.bf16.msra.mxu0 0
  %8557 = vmatprep.subr.bf16.mxu0 0
  %8558 = vmatpush1.bf16.msra.mxu0 0
  %8559 = vmatprep.subr.bf16.mxu0 0
  %8560 = vmatpush1.bf16.msra.mxu0 0
  %8561 = vmatprep.subr.bf16.mxu0 0
  %8562 = vmatpush1.bf16.msra.mxu0 0
  %8563 = vmatprep.mubr.bf16.mxu0 0
  %8564 = vmatmul.mubr.bf16.gmra.mrb[0].mxu0 %v8481
  %v8565 = vpop.f32.mrb[0].mxu0
  %v8566 = vadd.f32 0.0, %v8565
  %v8567 = vpop.f32.mrb[0].mxu0
  %v8568 = vpop.f32.mrb[0].mxu0
  %v8569 = vpop.f32.mrb[0].mxu0
  %8570 = vdwg.mxu0
  %v8571 = vadd.f32 %v8417, %v8566
  %v8572 = vld [vmem:[#allocation6 + $0xc] sm:$0x1]
  %v8573 = vld [vmem:[#allocation6 + $0x2c] sm:$0x1]
  %v8574 = vld [vmem:[#allocation6 + $0x4c] sm:$0x1]
  %v8575 = vld [vmem:[#allocation6 + $0x6c] sm:$0x1]
  %v8576 = vld [vmem:[#allocation6 + $0x8c] sm:$0x1]
  %v8577 = vld [vmem:[#allocation6 + $0xac] sm:$0x1]
  %v8578 = vld [vmem:[#allocation6 + $0xcc] sm:$0x1]
  %v8579 = vld [vmem:[#allocation6 + $0xec] sm:$0x1]
  %v8580 = vpack.c.bf16 %v8572, %v8572
  %v8581 = vpack.c.bf16 %v8573, %v8573
  %v8582 = vpack.c.bf16 %v8574, %v8574
  %v8583 = vpack.c.bf16 %v8575, %v8575
  %v8584 = vpack.c.bf16 %v8576, %v8576
  %v8585 = vpack.c.bf16 %v8577, %v8577
  %v8586 = vpack.c.bf16 %v8578, %v8578
  %v8587 = vpack.c.bf16 %v8579, %v8579
  %s8588 = scalar_lea.vmem %s7, 768
  %v8589 = vld [vmem:[%s8588] sm:$0xf]
  %v8590 = vld [vmem:[%s8588 + $0x4] sm:$0xf]
  %v8591 = vld [vmem:[%s8588 + $0x8] sm:$0xf]
  %v8592 = vld [vmem:[%s8588 + $0xc] sm:$0xf]
  %v8593 = vld [vmem:[%s8588 + $0x10] sm:$0xf]
  %v8594 = vld [vmem:[%s8588 + $0x14] sm:$0xf]
  %v8595 = vld [vmem:[%s8588 + $0x18] sm:$0xf]
  %v8596 = vld [vmem:[%s8588 + $0x1c] sm:$0xf]
  %v8597 = vld [vmem:[%s8588 + $0x20] sm:$0xf]
  %v8598 = vld [vmem:[%s8588 + $0x24] sm:$0xf]
  %v8599 = vld [vmem:[%s8588 + $0x28] sm:$0xf]
  %v8600 = vld [vmem:[%s8588 + $0x2c] sm:$0xf]
  %v8601 = vld [vmem:[%s8588 + $0x30] sm:$0xf]
  %v8602 = vld [vmem:[%s8588 + $0x34] sm:$0xf]
  %v8603 = vld [vmem:[%s8588 + $0x38] sm:$0xf]
  %v8604 = vld [vmem:[%s8588 + $0x3c] sm:$0xf]
  %v8613 = vunpack.c.l.b16 %v8580
  %v8614 = vunpack.c.l.b16 %v8581
  %v8615 = vunpack.c.l.b16 %v8582
  %v8616 = vunpack.c.l.b16 %v8583
  %v8617 = vunpack.c.l.b16 %v8584
  %v8618 = vunpack.c.l.b16 %v8585
  %v8619 = vunpack.c.l.b16 %v8586
  %v8620 = vunpack.c.l.b16 %v8587
  %v8621 = vrot.slane %v8614, 7
  %v8622 = vsel %vm6802, %v8621, %v8613
  %v8623 = vrot.slane %v8615, 6
  %v8624 = vsel %vm6805, %v8623, %v8622
  %v8625 = vrot.slane %v8616, 5
  %v8626 = vsel %vm6808, %v8625, %v8624
  %v8627 = vrot.slane %v8617, 4
  %v8628 = vsel %vm6811, %v8627, %v8626
  %v8629 = vrot.slane %v8618, 3
  %v8630 = vsel %vm6814, %v8629, %v8628
  %v8631 = vrot.slane %v8619, 2
  %v8632 = vsel %vm6817, %v8631, %v8630
  %v8633 = vrot.slane %v8620, 1
  %v8634 = vsel %vm6820, %v8633, %v8632
  %v8635 = vpack.c.b16 %v8634, %v8634
  %v8653 = vunpack.c.l.b16 %v8589
  %v8654 = vunpack.c.l.b16 %v8590
  %v8655 = vunpack.c.l.b16 %v8591
  %v8656 = vunpack.c.l.b16 %v8592
  %v8657 = vunpack.c.l.b16 %v8593
  %v8658 = vunpack.c.l.b16 %v8594
  %v8659 = vunpack.c.l.b16 %v8595
  %v8660 = vunpack.c.l.b16 %v8596
  %v8661 = vunpack.c.l.b16 %v8597
  %v8662 = vunpack.c.l.b16 %v8598
  %v8663 = vunpack.c.l.b16 %v8599
  %v8664 = vunpack.c.l.b16 %v8600
  %v8665 = vunpack.c.l.b16 %v8601
  %v8666 = vunpack.c.l.b16 %v8602
  %v8667 = vunpack.c.l.b16 %v8603
  %v8668 = vunpack.c.l.b16 %v8604
  %v8669 = vpack.c.b16 %v8654, %v8653
  %v8670 = vpack.c.b16 %v8656, %v8655
  %v8671 = vpack.c.b16 %v8658, %v8657
  %v8672 = vpack.c.b16 %v8660, %v8659
  %v8673 = vpack.c.b16 %v8662, %v8661
  %v8674 = vpack.c.b16 %v8664, %v8663
  %v8675 = vpack.c.b16 %v8666, %v8665
  %v8676 = vpack.c.b16 %v8668, %v8667
  %8685 = vmatprep.subr.bf16.mxu0 0
  %8686 = vmatpush1.bf16.msra.mxu0 %v8669
  %8687 = vmatprep.subr.bf16.mxu0 0
  %8688 = vmatpush1.bf16.msra.mxu0 %v8670
  %8689 = vmatprep.subr.bf16.mxu0 0
  %8690 = vmatpush1.bf16.msra.mxu0 %v8671
  %8691 = vmatprep.subr.bf16.mxu0 0
  %8692 = vmatpush1.bf16.msra.mxu0 %v8672
  %8693 = vmatprep.subr.bf16.mxu0 0
  %8694 = vmatpush1.bf16.msra.mxu0 %v8673
  %8695 = vmatprep.subr.bf16.mxu0 0
  %8696 = vmatpush1.bf16.msra.mxu0 %v8674
  %8697 = vmatprep.subr.bf16.mxu0 0
  %8698 = vmatpush1.bf16.msra.mxu0 %v8675
  %8699 = vmatprep.subr.bf16.mxu0 0
  %8700 = vmatpush1.bf16.msra.mxu0 %v8676
  %8701 = vmatprep.subr.bf16.mxu0 0
  %8702 = vmatpush1.bf16.msra.mxu0 0
  %8703 = vmatprep.subr.bf16.mxu0 0
  %8704 = vmatpush1.bf16.msra.mxu0 0
  %8705 = vmatprep.subr.bf16.mxu0 0
  %8706 = vmatpush1.bf16.msra.mxu0 0
  %8707 = vmatprep.subr.bf16.mxu0 0
  %8708 = vmatpush1.bf16.msra.mxu0 0
  %8709 = vmatprep.subr.bf16.mxu0 0
  %8710 = vmatpush1.bf16.msra.mxu0 0
  %8711 = vmatprep.subr.bf16.mxu0 0
  %8712 = vmatpush1.bf16.msra.mxu0 0
  %8713 = vmatprep.subr.bf16.mxu0 0
  %8714 = vmatpush1.bf16.msra.mxu0 0
  %8715 = vmatprep.subr.bf16.mxu0 0
  %8716 = vmatpush1.bf16.msra.mxu0 0
  %8717 = vmatprep.mubr.bf16.mxu0 0
  %8718 = vmatmul.mubr.bf16.gmra.mrb[0].mxu0 %v8635
  %v8719 = vpop.f32.mrb[0].mxu0
  %v8720 = vadd.f32 0.0, %v8719
  %v8721 = vpop.f32.mrb[0].mxu0
  %v8722 = vpop.f32.mrb[0].mxu0
  %v8723 = vpop.f32.mrb[0].mxu0
  %8724 = vdwg.mxu0
  %v8725 = vadd.f32 %v8571, %v8720
  %v8726 = vld [vmem:[#allocation6 + $0xd] sm:$0x1]
  %v8727 = vld [vmem:[#allocation6 + $0x2d] sm:$0x1]
  %v8728 = vld [vmem:[#allocation6 + $0x4d] sm:$0x1]
  %v8729 = vld [vmem:[#allocation6 + $0x6d] sm:$0x1]
  %v8730 = vld [vmem:[#allocation6 + $0x8d] sm:$0x1]
  %v8731 = vld [vmem:[#allocation6 + $0xad] sm:$0x1]
  %v8732 = vld [vmem:[#allocation6 + $0xcd] sm:$0x1]
  %v8733 = vld [vmem:[#allocation6 + $0xed] sm:$0x1]
  %v8734 = vpack.c.bf16 %v8726, %v8726
  %v8735 = vpack.c.bf16 %v8727, %v8727
  %v8736 = vpack.c.bf16 %v8728, %v8728
  %v8737 = vpack.c.bf16 %v8729, %v8729
  %v8738 = vpack.c.bf16 %v8730, %v8730
  %v8739 = vpack.c.bf16 %v8731, %v8731
  %v8740 = vpack.c.bf16 %v8732, %v8732
  %v8741 = vpack.c.bf16 %v8733, %v8733
  %s8742 = scalar_lea.vmem %s7, 832
  %v8743 = vld [vmem:[%s8742] sm:$0xf]
  %v8744 = vld [vmem:[%s8742 + $0x4] sm:$0xf]
  %v8745 = vld [vmem:[%s8742 + $0x8] sm:$0xf]
  %v8746 = vld [vmem:[%s8742 + $0xc] sm:$0xf]
  %v8747 = vld [vmem:[%s8742 + $0x10] sm:$0xf]
  %v8748 = vld [vmem:[%s8742 + $0x14] sm:$0xf]
  %v8749 = vld [vmem:[%s8742 + $0x18] sm:$0xf]
  %v8750 = vld [vmem:[%s8742 + $0x1c] sm:$0xf]
  %v8751 = vld [vmem:[%s8742 + $0x20] sm:$0xf]
  %v8752 = vld [vmem:[%s8742 + $0x24] sm:$0xf]
  %v8753 = vld [vmem:[%s8742 + $0x28] sm:$0xf]
  %v8754 = vld [vmem:[%s8742 + $0x2c] sm:$0xf]
  %v8755 = vld [vmem:[%s8742 + $0x30] sm:$0xf]
  %v8756 = vld [vmem:[%s8742 + $0x34] sm:$0xf]
  %v8757 = vld [vmem:[%s8742 + $0x38] sm:$0xf]
  %v8758 = vld [vmem:[%s8742 + $0x3c] sm:$0xf]
  %v8767 = vunpack.c.l.b16 %v8734
  %v8768 = vunpack.c.l.b16 %v8735
  %v8769 = vunpack.c.l.b16 %v8736
  %v8770 = vunpack.c.l.b16 %v8737
  %v8771 = vunpack.c.l.b16 %v8738
  %v8772 = vunpack.c.l.b16 %v8739
  %v8773 = vunpack.c.l.b16 %v8740
  %v8774 = vunpack.c.l.b16 %v8741
  %v8775 = vrot.slane %v8768, 7
  %v8776 = vsel %vm6802, %v8775, %v8767
  %v8777 = vrot.slane %v8769, 6
  %v8778 = vsel %vm6805, %v8777, %v8776
  %v8779 = vrot.slane %v8770, 5
  %v8780 = vsel %vm6808, %v8779, %v8778
  %v8781 = vrot.slane %v8771, 4
  %v8782 = vsel %vm6811, %v8781, %v8780
  %v8783 = vrot.slane %v8772, 3
  %v8784 = vsel %vm6814, %v8783, %v8782
  %v8785 = vrot.slane %v8773, 2
  %v8786 = vsel %vm6817, %v8785, %v8784
  %v8787 = vrot.slane %v8774, 1
  %v8788 = vsel %vm6820, %v8787, %v8786
  %v8789 = vpack.c.b16 %v8788, %v8788
  %v8807 = vunpack.c.l.b16 %v8743
  %v8808 = vunpack.c.l.b16 %v8744
  %v8809 = vunpack.c.l.b16 %v8745
  %v8810 = vunpack.c.l.b16 %v8746
  %v8811 = vunpack.c.l.b16 %v8747
  %v8812 = vunpack.c.l.b16 %v8748
  %v8813 = vunpack.c.l.b16 %v8749
  %v8814 = vunpack.c.l.b16 %v8750
  %v8815 = vunpack.c.l.b16 %v8751
  %v8816 = vunpack.c.l.b16 %v8752
  %v8817 = vunpack.c.l.b16 %v8753
  %v8818 = vunpack.c.l.b16 %v8754
  %v8819 = vunpack.c.l.b16 %v8755
  %v8820 = vunpack.c.l.b16 %v8756
  %v8821 = vunpack.c.l.b16 %v8757
  %v8822 = vunpack.c.l.b16 %v8758
  %v8823 = vpack.c.b16 %v8808, %v8807
  %v8824 = vpack.c.b16 %v8810, %v8809
  %v8825 = vpack.c.b16 %v8812, %v8811
  %v8826 = vpack.c.b16 %v8814, %v8813
  %v8827 = vpack.c.b16 %v8816, %v8815
  %v8828 = vpack.c.b16 %v8818, %v8817
  %v8829 = vpack.c.b16 %v8820, %v8819
  %v8830 = vpack.c.b16 %v8822, %v8821
  %8839 = vmatprep.subr.bf16.mxu0 0
  %8840 = vmatpush1.bf16.msra.mxu0 %v8823
  %8841 = vmatprep.subr.bf16.mxu0 0
  %8842 = vmatpush1.bf16.msra.mxu0 %v8824
  %8843 = vmatprep.subr.bf16.mxu0 0
  %8844 = vmatpush1.bf16.msra.mxu0 %v8825
  %8845 = vmatprep.subr.bf16.mxu0 0
  %8846 = vmatpush1.bf16.msra.mxu0 %v8826
  %8847 = vmatprep.subr.bf16.mxu0 0
  %8848 = vmatpush1.bf16.msra.mxu0 %v8827
  %8849 = vmatprep.subr.bf16.mxu0 0
  %8850 = vmatpush1.bf16.msra.mxu0 %v8828
  %8851 = vmatprep.subr.bf16.mxu0 0
  %8852 = vmatpush1.bf16.msra.mxu0 %v8829
  %8853 = vmatprep.subr.bf16.mxu0 0
  %8854 = vmatpush1.bf16.msra.mxu0 %v8830
  %8855 = vmatprep.subr.bf16.mxu0 0
  %8856 = vmatpush1.bf16.msra.mxu0 0
  %8857 = vmatprep.subr.bf16.mxu0 0
  %8858 = vmatpush1.bf16.msra.mxu0 0
  %8859 = vmatprep.subr.bf16.mxu0 0
  %8860 = vmatpush1.bf16.msra.mxu0 0
  %8861 = vmatprep.subr.bf16.mxu0 0
  %8862 = vmatpush1.bf16.msra.mxu0 0
  %8863 = vmatprep.subr.bf16.mxu0 0
  %8864 = vmatpush1.bf16.msra.mxu0 0
  %8865 = vmatprep.subr.bf16.mxu0 0
  %8866 = vmatpush1.bf16.msra.mxu0 0
  %8867 = vmatprep.subr.bf16.mxu0 0
  %8868 = vmatpush1.bf16.msra.mxu0 0
  %8869 = vmatprep.subr.bf16.mxu0 0
  %8870 = vmatpush1.bf16.msra.mxu0 0
  %8871 = vmatprep.mubr.bf16.mxu0 0
  %8872 = vmatmul.mubr.bf16.gmra.mrb[0].mxu0 %v8789
  %v8873 = vpop.f32.mrb[0].mxu0
  %v8874 = vadd.f32 0.0, %v8873
  %v8875 = vpop.f32.mrb[0].mxu0
  %v8876 = vpop.f32.mrb[0].mxu0
  %v8877 = vpop.f32.mrb[0].mxu0
  %8878 = vdwg.mxu0
  %v8879 = vadd.f32 %v8725, %v8874
  %v8880 = vld [vmem:[#allocation6 + $0xe] sm:$0x1]
  %v8881 = vld [vmem:[#allocation6 + $0x2e] sm:$0x1]
  %v8882 = vld [vmem:[#allocation6 + $0x4e] sm:$0x1]
  %v8883 = vld [vmem:[#allocation6 + $0x6e] sm:$0x1]
  %v8884 = vld [vmem:[#allocation6 + $0x8e] sm:$0x1]
  %v8885 = vld [vmem:[#allocation6 + $0xae] sm:$0x1]
  %v8886 = vld [vmem:[#allocation6 + $0xce] sm:$0x1]
  %v8887 = vld [vmem:[#allocation6 + $0xee] sm:$0x1]
  %v8888 = vpack.c.bf16 %v8880, %v8880
  %v8889 = vpack.c.bf16 %v8881, %v8881
  %v8890 = vpack.c.bf16 %v8882, %v8882
  %v8891 = vpack.c.bf16 %v8883, %v8883
  %v8892 = vpack.c.bf16 %v8884, %v8884
  %v8893 = vpack.c.bf16 %v8885, %v8885
  %v8894 = vpack.c.bf16 %v8886, %v8886
  %v8895 = vpack.c.bf16 %v8887, %v8887
  %s8896 = scalar_lea.vmem %s7, 896
  %v8897 = vld [vmem:[%s8896] sm:$0xf]
  %v8898 = vld [vmem:[%s8896 + $0x4] sm:$0xf]
  %v8899 = vld [vmem:[%s8896 + $0x8] sm:$0xf]
  %v8900 = vld [vmem:[%s8896 + $0xc] sm:$0xf]
  %v8901 = vld [vmem:[%s8896 + $0x10] sm:$0xf]
  %v8902 = vld [vmem:[%s8896 + $0x14] sm:$0xf]
  %v8903 = vld [vmem:[%s8896 + $0x18] sm:$0xf]
  %v8904 = vld [vmem:[%s8896 + $0x1c] sm:$0xf]
  %v8905 = vld [vmem:[%s8896 + $0x20] sm:$0xf]
  %v8906 = vld [vmem:[%s8896 + $0x24] sm:$0xf]
  %v8907 = vld [vmem:[%s8896 + $0x28] sm:$0xf]
  %v8908 = vld [vmem:[%s8896 + $0x2c] sm:$0xf]
  %v8909 = vld [vmem:[%s8896 + $0x30] sm:$0xf]
  %v8910 = vld [vmem:[%s8896 + $0x34] sm:$0xf]
  %v8911 = vld [vmem:[%s8896 + $0x38] sm:$0xf]
  %v8912 = vld [vmem:[%s8896 + $0x3c] sm:$0xf]
  %v8921 = vunpack.c.l.b16 %v8888
  %v8922 = vunpack.c.l.b16 %v8889
  %v8923 = vunpack.c.l.b16 %v8890
  %v8924 = vunpack.c.l.b16 %v8891
  %v8925 = vunpack.c.l.b16 %v8892
  %v8926 = vunpack.c.l.b16 %v8893
  %v8927 = vunpack.c.l.b16 %v8894
  %v8928 = vunpack.c.l.b16 %v8895
  %v8929 = vrot.slane %v8922, 7
  %v8930 = vsel %vm6802, %v8929, %v8921
  %v8931 = vrot.slane %v8923, 6
  %v8932 = vsel %vm6805, %v8931, %v8930
  %v8933 = vrot.slane %v8924, 5
  %v8934 = vsel %vm6808, %v8933, %v8932
  %v8935 = vrot.slane %v8925, 4
  %v8936 = vsel %vm6811, %v8935, %v8934
  %v8937 = vrot.slane %v8926, 3
  %v8938 = vsel %vm6814, %v8937, %v8936
  %v8939 = vrot.slane %v8927, 2
  %v8940 = vsel %vm6817, %v8939, %v8938
  %v8941 = vrot.slane %v8928, 1
  %v8942 = vsel %vm6820, %v8941, %v8940
  %v8943 = vpack.c.b16 %v8942, %v8942
  %v8961 = vunpack.c.l.b16 %v8897
  %v8962 = vunpack.c.l.b16 %v8898
  %v8963 = vunpack.c.l.b16 %v8899
  %v8964 = vunpack.c.l.b16 %v8900
  %v8965 = vunpack.c.l.b16 %v8901
  %v8966 = vunpack.c.l.b16 %v8902
  %v8967 = vunpack.c.l.b16 %v8903
  %v8968 = vunpack.c.l.b16 %v8904
  %v8969 = vunpack.c.l.b16 %v8905
  %v8970 = vunpack.c.l.b16 %v8906
  %v8971 = vunpack.c.l.b16 %v8907
  %v8972 = vunpack.c.l.b16 %v8908
  %v8973 = vunpack.c.l.b16 %v8909
  %v8974 = vunpack.c.l.b16 %v8910
  %v8975 = vunpack.c.l.b16 %v8911
  %v8976 = vunpack.c.l.b16 %v8912
  %v8977 = vpack.c.b16 %v8962, %v8961
  %v8978 = vpack.c.b16 %v8964, %v8963
  %v8979 = vpack.c.b16 %v8966, %v8965
  %v8980 = vpack.c.b16 %v8968, %v8967
  %v8981 = vpack.c.b16 %v8970, %v8969
  %v8982 = vpack.c.b16 %v8972, %v8971
  %v8983 = vpack.c.b16 %v8974, %v8973
  %v8984 = vpack.c.b16 %v8976, %v8975
  %8993 = vmatprep.subr.bf16.mxu0 0
  %8994 = vmatpush1.bf16.msra.mxu0 %v8977
  %8995 = vmatprep.subr.bf16.mxu0 0
  %8996 = vmatpush1.bf16.msra.mxu0 %v8978
  %8997 = vmatprep.subr.bf16.mxu0 0
  %8998 = vmatpush1.bf16.msra.mxu0 %v8979
  %8999 = vmatprep.subr.bf16.mxu0 0
  %9000 = vmatpush1.bf16.msra.mxu0 %v8980
  %9001 = vmatprep.subr.bf16.mxu0 0
  %9002 = vmatpush1.bf16.msra.mxu0 %v8981
  %9003 = vmatprep.subr.bf16.mxu0 0
  %9004 = vmatpush1.bf16.msra.mxu0 %v8982
  %9005 = vmatprep.subr.bf16.mxu0 0
  %9006 = vmatpush1.bf16.msra.mxu0 %v8983
  %9007 = vmatprep.subr.bf16.mxu0 0
  %9008 = vmatpush1.bf16.msra.mxu0 %v8984
  %9009 = vmatprep.subr.bf16.mxu0 0
  %9010 = vmatpush1.bf16.msra.mxu0 0
  %9011 = vmatprep.subr.bf16.mxu0 0
  %9012 = vmatpush1.bf16.msra.mxu0 0
  %9013 = vmatprep.subr.bf16.mxu0 0
  %9014 = vmatpush1.bf16.msra.mxu0 0
  %9015 = vmatprep.subr.bf16.mxu0 0
  %9016 = vmatpush1.bf16.msra.mxu0 0
  %9017 = vmatprep.subr.bf16.mxu0 0
  %9018 = vmatpush1.bf16.msra.mxu0 0
  %9019 = vmatprep.subr.bf16.mxu0 0
  %9020 = vmatpush1.bf16.msra.mxu0 0
  %9021 = vmatprep.subr.bf16.mxu0 0
  %9022 = vmatpush1.bf16.msra.mxu0 0
  %9023 = vmatprep.subr.bf16.mxu0 0
  %9024 = vmatpush1.bf16.msra.mxu0 0
  %9025 = vmatprep.mubr.bf16.mxu0 0
  %9026 = vmatmul.mubr.bf16.gmra.mrb[0].mxu0 %v8943
  %v9027 = vpop.f32.mrb[0].mxu0
  %v9028 = vadd.f32 0.0, %v9027
  %v9029 = vpop.f32.mrb[0].mxu0
  %v9030 = vpop.f32.mrb[0].mxu0
  %v9031 = vpop.f32.mrb[0].mxu0
  %9032 = vdwg.mxu0
  %v9033 = vadd.f32 %v8879, %v9028
  %v9034 = vld [vmem:[#allocation6 + $0xf] sm:$0x1]
  %v9035 = vld [vmem:[#allocation6 + $0x2f] sm:$0x1]
  %v9036 = vld [vmem:[#allocation6 + $0x4f] sm:$0x1]
  %v9037 = vld [vmem:[#allocation6 + $0x6f] sm:$0x1]
  %v9038 = vld [vmem:[#allocation6 + $0x8f] sm:$0x1]
  %v9039 = vld [vmem:[#allocation6 + $0xaf] sm:$0x1]
  %v9040 = vld [vmem:[#allocation6 + $0xcf] sm:$0x1]
  %v9041 = vld [vmem:[#allocation6 + $0xef] sm:$0x1]
  %v9042 = vpack.c.bf16 %v9034, %v9034
  %v9043 = vpack.c.bf16 %v9035, %v9035
  %v9044 = vpack.c.bf16 %v9036, %v9036
  %v9045 = vpack.c.bf16 %v9037, %v9037
  %v9046 = vpack.c.bf16 %v9038, %v9038
  %v9047 = vpack.c.bf16 %v9039, %v9039
  %v9048 = vpack.c.bf16 %v9040, %v9040
  %v9049 = vpack.c.bf16 %v9041, %v9041
  %s9050 = scalar_lea.vmem %s7, 960
  %v9051 = vld [vmem:[%s9050] sm:$0xf]
  %v9052 = vld [vmem:[%s9050 + $0x4] sm:$0xf]
  %v9053 = vld [vmem:[%s9050 + $0x8] sm:$0xf]
  %v9054 = vld [vmem:[%s9050 + $0xc] sm:$0xf]
  %v9055 = vld [vmem:[%s9050 + $0x10] sm:$0xf]
  %v9056 = vld [vmem:[%s9050 + $0x14] sm:$0xf]
  %v9057 = vld [vmem:[%s9050 + $0x18] sm:$0xf]
  %v9058 = vld [vmem:[%s9050 + $0x1c] sm:$0xf]
  %v9059 = vld [vmem:[%s9050 + $0x20] sm:$0xf]
  %v9060 = vld [vmem:[%s9050 + $0x24] sm:$0xf]
  %v9061 = vld [vmem:[%s9050 + $0x28] sm:$0xf]
  %v9062 = vld [vmem:[%s9050 + $0x2c] sm:$0xf]
  %v9063 = vld [vmem:[%s9050 + $0x30] sm:$0xf]
  %v9064 = vld [vmem:[%s9050 + $0x34] sm:$0xf]
  %v9065 = vld [vmem:[%s9050 + $0x38] sm:$0xf]
  %v9066 = vld [vmem:[%s9050 + $0x3c] sm:$0xf]
  %v9075 = vunpack.c.l.b16 %v9042
  %v9076 = vunpack.c.l.b16 %v9043
  %v9077 = vunpack.c.l.b16 %v9044
  %v9078 = vunpack.c.l.b16 %v9045
  %v9079 = vunpack.c.l.b16 %v9046
  %v9080 = vunpack.c.l.b16 %v9047
  %v9081 = vunpack.c.l.b16 %v9048
  %v9082 = vunpack.c.l.b16 %v9049
  %v9083 = vrot.slane %v9076, 7
  %v9084 = vsel %vm6802, %v9083, %v9075
  %v9085 = vrot.slane %v9077, 6
  %v9086 = vsel %vm6805, %v9085, %v9084
  %v9087 = vrot.slane %v9078, 5
  %v9088 = vsel %vm6808, %v9087, %v9086
  %v9089 = vrot.slane %v9079, 4
  %v9090 = vsel %vm6811, %v9089, %v9088
  %v9091 = vrot.slane %v9080, 3
  %v9092 = vsel %vm6814, %v9091, %v9090
  %v9093 = vrot.slane %v9081, 2
  %v9094 = vsel %vm6817, %v9093, %v9092
  %v9095 = vrot.slane %v9082, 1
  %v9096 = vsel %vm6820, %v9095, %v9094
  %v9097 = vpack.c.b16 %v9096, %v9096
  %v9115 = vunpack.c.l.b16 %v9051
  %v9116 = vunpack.c.l.b16 %v9052
  %v9117 = vunpack.c.l.b16 %v9053
  %v9118 = vunpack.c.l.b16 %v9054
  %v9119 = vunpack.c.l.b16 %v9055
  %v9120 = vunpack.c.l.b16 %v9056
  %v9121 = vunpack.c.l.b16 %v9057
  %v9122 = vunpack.c.l.b16 %v9058
  %v9123 = vunpack.c.l.b16 %v9059
  %v9124 = vunpack.c.l.b16 %v9060
  %v9125 = vunpack.c.l.b16 %v9061
  %v9126 = vunpack.c.l.b16 %v9062
  %v9127 = vunpack.c.l.b16 %v9063
  %v9128 = vunpack.c.l.b16 %v9064
  %v9129 = vunpack.c.l.b16 %v9065
  %v9130 = vunpack.c.l.b16 %v9066
  %v9131 = vpack.c.b16 %v9116, %v9115
  %v9132 = vpack.c.b16 %v9118, %v9117
  %v9133 = vpack.c.b16 %v9120, %v9119
  %v9134 = vpack.c.b16 %v9122, %v9121
  %v9135 = vpack.c.b16 %v9124, %v9123
  %v9136 = vpack.c.b16 %v9126, %v9125
  %v9137 = vpack.c.b16 %v9128, %v9127
  %v9138 = vpack.c.b16 %v9130, %v9129
  %9147 = vmatprep.subr.bf16.mxu0 0
  %9148 = vmatpush1.bf16.msra.mxu0 %v9131
  %9149 = vmatprep.subr.bf16.mxu0 0
  %9150 = vmatpush1.bf16.msra.mxu0 %v9132
  %9151 = vmatprep.subr.bf16.mxu0 0
  %9152 = vmatpush1.bf16.msra.mxu0 %v9133
  %9153 = vmatprep.subr.bf16.mxu0 0
  %9154 = vmatpush1.bf16.msra.mxu0 %v9134
  %9155 = vmatprep.subr.bf16.mxu0 0
  %9156 = vmatpush1.bf16.msra.mxu0 %v9135
  %9157 = vmatprep.subr.bf16.mxu0 0
  %9158 = vmatpush1.bf16.msra.mxu0 %v9136
  %9159 = vmatprep.subr.bf16.mxu0 0
  %9160 = vmatpush1.bf16.msra.mxu0 %v9137
  %9161 = vmatprep.subr.bf16.mxu0 0
  %9162 = vmatpush1.bf16.msra.mxu0 %v9138
  %9163 = vmatprep.subr.bf16.mxu0 0
  %9164 = vmatpush1.bf16.msra.mxu0 0
  %9165 = vmatprep.subr.bf16.mxu0 0
  %9166 = vmatpush1.bf16.msra.mxu0 0
  %9167 = vmatprep.subr.bf16.mxu0 0
  %9168 = vmatpush1.bf16.msra.mxu0 0
  %9169 = vmatprep.subr.bf16.mxu0 0
  %9170 = vmatpush1.bf16.msra.mxu0 0
  %9171 = vmatprep.subr.bf16.mxu0 0
  %9172 = vmatpush1.bf16.msra.mxu0 0
  %9173 = vmatprep.subr.bf16.mxu0 0
  %9174 = vmatpush1.bf16.msra.mxu0 0
  %9175 = vmatprep.subr.bf16.mxu0 0
  %9176 = vmatpush1.bf16.msra.mxu0 0
  %9177 = vmatprep.subr.bf16.mxu0 0
  %9178 = vmatpush1.bf16.msra.mxu0 0
  %9179 = vmatprep.mubr.bf16.mxu0 0
  %9180 = vmatmul.mubr.bf16.gmra.mrb[0].mxu0 %v9097
  %v9181 = vpop.f32.mrb[0].mxu0
  %v9182 = vadd.f32 0.0, %v9181
  %v9183 = vpop.f32.mrb[0].mxu0
  %v9184 = vpop.f32.mrb[0].mxu0
  %v9185 = vpop.f32.mrb[0].mxu0
  %9186 = vdwg.mxu0
  %v9187 = vadd.f32 %v9033, %v9182
  %v9188 = vld [vmem:[#allocation6 + $0x10] sm:$0x1]
  %v9189 = vld [vmem:[#allocation6 + $0x30] sm:$0x1]
  %v9190 = vld [vmem:[#allocation6 + $0x50] sm:$0x1]
  %v9191 = vld [vmem:[#allocation6 + $0x70] sm:$0x1]
  %v9192 = vld [vmem:[#allocation6 + $0x90] sm:$0x1]
  %v9193 = vld [vmem:[#allocation6 + $0xb0] sm:$0x1]
  %v9194 = vld [vmem:[#allocation6 + $0xd0] sm:$0x1]
  %v9195 = vld [vmem:[#allocation6 + $0xf0] sm:$0x1]
  %v9196 = vpack.c.bf16 %v9188, %v9188
  %v9197 = vpack.c.bf16 %v9189, %v9189
  %v9198 = vpack.c.bf16 %v9190, %v9190
  %v9199 = vpack.c.bf16 %v9191, %v9191
  %v9200 = vpack.c.bf16 %v9192, %v9192
  %v9201 = vpack.c.bf16 %v9193, %v9193
  %v9202 = vpack.c.bf16 %v9194, %v9194
  %v9203 = vpack.c.bf16 %v9195, %v9195
  %s9204 = scalar_lea.vmem %s7, 1024
  %v9205 = vld [vmem:[%s9204] sm:$0xf]
  %v9206 = vld [vmem:[%s9204 + $0x4] sm:$0xf]
  %v9207 = vld [vmem:[%s9204 + $0x8] sm:$0xf]
  %v9208 = vld [vmem:[%s9204 + $0xc] sm:$0xf]
  %v9209 = vld [vmem:[%s9204 + $0x10] sm:$0xf]
  %v9210 = vld [vmem:[%s9204 + $0x14] sm:$0xf]
  %v9211 = vld [vmem:[%s9204 + $0x18] sm:$0xf]
  %v9212 = vld [vmem:[%s9204 + $0x1c] sm:$0xf]
  %v9213 = vld [vmem:[%s9204 + $0x20] sm:$0xf]
  %v9214 = vld [vmem:[%s9204 + $0x24] sm:$0xf]
  %v9215 = vld [vmem:[%s9204 + $0x28] sm:$0xf]
  %v9216 = vld [vmem:[%s9204 + $0x2c] sm:$0xf]
  %v9217 = vld [vmem:[%s9204 + $0x30] sm:$0xf]
  %v9218 = vld [vmem:[%s9204 + $0x34] sm:$0xf]
  %v9219 = vld [vmem:[%s9204 + $0x38] sm:$0xf]
  %v9220 = vld [vmem:[%s9204 + $0x3c] sm:$0xf]
  %v9229 = vunpack.c.l.b16 %v9196
  %v9230 = vunpack.c.l.b16 %v9197
  %v9231 = vunpack.c.l.b16 %v9198
  %v9232 = vunpack.c.l.b16 %v9199
  %v9233 = vunpack.c.l.b16 %v9200
  %v9234 = vunpack.c.l.b16 %v9201
  %v9235 = vunpack.c.l.b16 %v9202
  %v9236 = vunpack.c.l.b16 %v9203
  %v9237 = vrot.slane %v9230, 7
  %v9238 = vsel %vm6802, %v9237, %v9229
  %v9239 = vrot.slane %v9231, 6
  %v9240 = vsel %vm6805, %v9239, %v9238
  %v9241 = vrot.slane %v9232, 5
  %v9242 = vsel %vm6808, %v9241, %v9240
  %v9243 = vrot.slane %v9233, 4
  %v9244 = vsel %vm6811, %v9243, %v9242
  %v9245 = vrot.slane %v9234, 3
  %v9246 = vsel %vm6814, %v9245, %v9244
  %v9247 = vrot.slane %v9235, 2
  %v9248 = vsel %vm6817, %v9247, %v9246
  %v9249 = vrot.slane %v9236, 1
  %v9250 = vsel %vm6820, %v9249, %v9248
  %v9251 = vpack.c.b16 %v9250, %v9250
  %v9269 = vunpack.c.l.b16 %v9205
  %v9270 = vunpack.c.l.b16 %v9206
  %v9271 = vunpack.c.l.b16 %v9207
  %v9272 = vunpack.c.l.b16 %v9208
  %v9273 = vunpack.c.l.b16 %v9209
  %v9274 = vunpack.c.l.b16 %v9210
  %v9275 = vunpack.c.l.b16 %v9211
  %v9276 = vunpack.c.l.b16 %v9212
  %v9277 = vunpack.c.l.b16 %v9213
  %v9278 = vunpack.c.l.b16 %v9214
  %v9279 = vunpack.c.l.b16 %v9215
  %v9280 = vunpack.c.l.b16 %v9216
  %v9281 = vunpack.c.l.b16 %v9217
  %v9282 = vunpack.c.l.b16 %v9218
  %v9283 = vunpack.c.l.b16 %v9219
  %v9284 = vunpack.c.l.b16 %v9220
  %v9285 = vpack.c.b16 %v9270, %v9269
  %v9286 = vpack.c.b16 %v9272, %v9271
  %v9287 = vpack.c.b16 %v9274, %v9273
  %v9288 = vpack.c.b16 %v9276, %v9275
  %v9289 = vpack.c.b16 %v9278, %v9277
  %v9290 = vpack.c.b16 %v9280, %v9279
  %v9291 = vpack.c.b16 %v9282, %v9281
  %v9292 = vpack.c.b16 %v9284, %v9283
  %9301 = vmatprep.subr.bf16.mxu0 0
  %9302 = vmatpush1.bf16.msra.mxu0 %v9285
  %9303 = vmatprep.subr.bf16.mxu0 0
  %9304 = vmatpush1.bf16.msra.mxu0 %v9286
  %9305 = vmatprep.subr.bf16.mxu0 0
  %9306 = vmatpush1.bf16.msra.mxu0 %v9287
  %9307 = vmatprep.subr.bf16.mxu0 0
  %9308 = vmatpush1.bf16.msra.mxu0 %v9288
  %9309 = vmatprep.subr.bf16.mxu0 0
  %9310 = vmatpush1.bf16.msra.mxu0 %v9289
  %9311 = vmatprep.subr.bf16.mxu0 0
  %9312 = vmatpush1.bf16.msra.mxu0 %v9290
  %9313 = vmatprep.subr.bf16.mxu0 0
  %9314 = vmatpush1.bf16.msra.mxu0 %v9291
  %9315 = vmatprep.subr.bf16.mxu0 0
  %9316 = vmatpush1.bf16.msra.mxu0 %v9292
  %9317 = vmatprep.subr.bf16.mxu0 0
  %9318 = vmatpush1.bf16.msra.mxu0 0
  %9319 = vmatprep.subr.bf16.mxu0 0
  %9320 = vmatpush1.bf16.msra.mxu0 0
  %9321 = vmatprep.subr.bf16.mxu0 0
  %9322 = vmatpush1.bf16.msra.mxu0 0
  %9323 = vmatprep.subr.bf16.mxu0 0
  %9324 = vmatpush1.bf16.msra.mxu0 0
  %9325 = vmatprep.subr.bf16.mxu0 0
  %9326 = vmatpush1.bf16.msra.mxu0 0
  %9327 = vmatprep.subr.bf16.mxu0 0
  %9328 = vmatpush1.bf16.msra.mxu0 0
  %9329 = vmatprep.subr.bf16.mxu0 0
  %9330 = vmatpush1.bf16.msra.mxu0 0
  %9331 = vmatprep.subr.bf16.mxu0 0
  %9332 = vmatpush1.bf16.msra.mxu0 0
  %9333 = vmatprep.mubr.bf16.mxu0 0
  %9334 = vmatmul.mubr.bf16.gmra.mrb[0].mxu0 %v9251
  %v9335 = vpop.f32.mrb[0].mxu0
  %v9336 = vadd.f32 0.0, %v9335
  %v9337 = vpop.f32.mrb[0].mxu0
  %v9338 = vpop.f32.mrb[0].mxu0
  %v9339 = vpop.f32.mrb[0].mxu0
  %9340 = vdwg.mxu0
  %v9341 = vadd.f32 %v9187, %v9336
  %v9342 = vld [vmem:[#allocation6 + $0x11] sm:$0x1]
  %v9343 = vld [vmem:[#allocation6 + $0x31] sm:$0x1]
  %v9344 = vld [vmem:[#allocation6 + $0x51] sm:$0x1]
  %v9345 = vld [vmem:[#allocation6 + $0x71] sm:$0x1]
  %v9346 = vld [vmem:[#allocation6 + $0x91] sm:$0x1]
  %v9347 = vld [vmem:[#allocation6 + $0xb1] sm:$0x1]
  %v9348 = vld [vmem:[#allocation6 + $0xd1] sm:$0x1]
  %v9349 = vld [vmem:[#allocation6 + $0xf1] sm:$0x1]
  %v9350 = vpack.c.bf16 %v9342, %v9342
  %v9351 = vpack.c.bf16 %v9343, %v9343
  %v9352 = vpack.c.bf16 %v9344, %v9344
  %v9353 = vpack.c.bf16 %v9345, %v9345
  %v9354 = vpack.c.bf16 %v9346, %v9346
  %v9355 = vpack.c.bf16 %v9347, %v9347
  %v9356 = vpack.c.bf16 %v9348, %v9348
  %v9357 = vpack.c.bf16 %v9349, %v9349
  %s9358 = scalar_lea.vmem %s7, 1088
  %v9359 = vld [vmem:[%s9358] sm:$0xf]
  %v9360 = vld [vmem:[%s9358 + $0x4] sm:$0xf]
  %v9361 = vld [vmem:[%s9358 + $0x8] sm:$0xf]
  %v9362 = vld [vmem:[%s9358 + $0xc] sm:$0xf]
  %v9363 = vld [vmem:[%s9358 + $0x10] sm:$0xf]
  %v9364 = vld [vmem:[%s9358 + $0x14] sm:$0xf]
  %v9365 = vld [vmem:[%s9358 + $0x18] sm:$0xf]
  %v9366 = vld [vmem:[%s9358 + $0x1c] sm:$0xf]
  %v9367 = vld [vmem:[%s9358 + $0x20] sm:$0xf]
  %v9368 = vld [vmem:[%s9358 + $0x24] sm:$0xf]
  %v9369 = vld [vmem:[%s9358 + $0x28] sm:$0xf]
  %v9370 = vld [vmem:[%s9358 + $0x2c] sm:$0xf]
  %v9371 = vld [vmem:[%s9358 + $0x30] sm:$0xf]
  %v9372 = vld [vmem:[%s9358 + $0x34] sm:$0xf]
  %v9373 = vld [vmem:[%s9358 + $0x38] sm:$0xf]
  %v9374 = vld [vmem:[%s9358 + $0x3c] sm:$0xf]
  %v9383 = vunpack.c.l.b16 %v9350
  %v9384 = vunpack.c.l.b16 %v9351
  %v9385 = vunpack.c.l.b16 %v9352
  %v9386 = vunpack.c.l.b16 %v9353
  %v9387 = vunpack.c.l.b16 %v9354
  %v9388 = vunpack.c.l.b16 %v9355
  %v9389 = vunpack.c.l.b16 %v9356
  %v9390 = vunpack.c.l.b16 %v9357
  %v9391 = vrot.slane %v9384, 7
  %v9392 = vsel %vm6802, %v9391, %v9383
  %v9393 = vrot.slane %v9385, 6
  %v9394 = vsel %vm6805, %v9393, %v9392
  %v9395 = vrot.slane %v9386, 5
  %v9396 = vsel %vm6808, %v9395, %v9394
  %v9397 = vrot.slane %v9387, 4
  %v9398 = vsel %vm6811, %v9397, %v9396
  %v9399 = vrot.slane %v9388, 3
  %v9400 = vsel %vm6814, %v9399, %v9398
  %v9401 = vrot.slane %v9389, 2
  %v9402 = vsel %vm6817, %v9401, %v9400
  %v9403 = vrot.slane %v9390, 1
  %v9404 = vsel %vm6820, %v9403, %v9402
  %v9405 = vpack.c.b16 %v9404, %v9404
  %v9423 = vunpack.c.l.b16 %v9359
  %v9424 = vunpack.c.l.b16 %v9360
  %v9425 = vunpack.c.l.b16 %v9361
  %v9426 = vunpack.c.l.b16 %v9362
  %v9427 = vunpack.c.l.b16 %v9363
  %v9428 = vunpack.c.l.b16 %v9364
  %v9429 = vunpack.c.l.b16 %v9365
  %v9430 = vunpack.c.l.b16 %v9366
  %v9431 = vunpack.c.l.b16 %v9367
  %v9432 = vunpack.c.l.b16 %v9368
  %v9433 = vunpack.c.l.b16 %v9369
  %v9434 = vunpack.c.l.b16 %v9370
  %v9435 = vunpack.c.l.b16 %v9371
  %v9436 = vunpack.c.l.b16 %v9372
  %v9437 = vunpack.c.l.b16 %v9373
  %v9438 = vunpack.c.l.b16 %v9374
  %v9439 = vpack.c.b16 %v9424, %v9423
  %v9440 = vpack.c.b16 %v9426, %v9425
  %v9441 = vpack.c.b16 %v9428, %v9427
  %v9442 = vpack.c.b16 %v9430, %v9429
  %v9443 = vpack.c.b16 %v9432, %v9431
  %v9444 = vpack.c.b16 %v9434, %v9433
  %v9445 = vpack.c.b16 %v9436, %v9435
  %v9446 = vpack.c.b16 %v9438, %v9437
  %9455 = vmatprep.subr.bf16.mxu0 0
  %9456 = vmatpush1.bf16.msra.mxu0 %v9439
  %9457 = vmatprep.subr.bf16.mxu0 0
  %9458 = vmatpush1.bf16.msra.mxu0 %v9440
  %9459 = vmatprep.subr.bf16.mxu0 0
  %9460 = vmatpush1.bf16.msra.mxu0 %v9441
  %9461 = vmatprep.subr.bf16.mxu0 0
  %9462 = vmatpush1.bf16.msra.mxu0 %v9442
  %9463 = vmatprep.subr.bf16.mxu0 0
  %9464 = vmatpush1.bf16.msra.mxu0 %v9443
  %9465 = vmatprep.subr.bf16.mxu0 0
  %9466 = vmatpush1.bf16.msra.mxu0 %v9444
  %9467 = vmatprep.subr.bf16.mxu0 0
  %9468 = vmatpush1.bf16.msra.mxu0 %v9445
  %9469 = vmatprep.subr.bf16.mxu0 0
  %9470 = vmatpush1.bf16.msra.mxu0 %v9446
  %9471 = vmatprep.subr.bf16.mxu0 0
  %9472 = vmatpush1.bf16.msra.mxu0 0
  %9473 = vmatprep.subr.bf16.mxu0 0
  %9474 = vmatpush1.bf16.msra.mxu0 0
  %9475 = vmatprep.subr.bf16.mxu0 0
  %9476 = vmatpush1.bf16.msra.mxu0 0
  %9477 = vmatprep.subr.bf16.mxu0 0
  %9478 = vmatpush1.bf16.msra.mxu0 0
  %9479 = vmatprep.subr.bf16.mxu0 0
  %9480 = vmatpush1.bf16.msra.mxu0 0
  %9481 = vmatprep.subr.bf16.mxu0 0
  %9482 = vmatpush1.bf16.msra.mxu0 0
  %9483 = vmatprep.subr.bf16.mxu0 0
  %9484 = vmatpush1.bf16.msra.mxu0 0
  %9485 = vmatprep.subr.bf16.mxu0 0
  %9486 = vmatpush1.bf16.msra.mxu0 0
  %9487 = vmatprep.mubr.bf16.mxu0 0
  %9488 = vmatmul.mubr.bf16.gmra.mrb[0].mxu0 %v9405
  %v9489 = vpop.f32.mrb[0].mxu0
  %v9490 = vadd.f32 0.0, %v9489
  %v9491 = vpop.f32.mrb[0].mxu0
  %v9492 = vpop.f32.mrb[0].mxu0
  %v9493 = vpop.f32.mrb[0].mxu0
  %9494 = vdwg.mxu0
  %v9495 = vadd.f32 %v9341, %v9490
  %v9496 = vld [vmem:[#allocation6 + $0x12] sm:$0x1]
  %v9497 = vld [vmem:[#allocation6 + $0x32] sm:$0x1]
  %v9498 = vld [vmem:[#allocation6 + $0x52] sm:$0x1]
  %v9499 = vld [vmem:[#allocation6 + $0x72] sm:$0x1]
  %v9500 = vld [vmem:[#allocation6 + $0x92] sm:$0x1]
  %v9501 = vld [vmem:[#allocation6 + $0xb2] sm:$0x1]
  %v9502 = vld [vmem:[#allocation6 + $0xd2] sm:$0x1]
  %v9503 = vld [vmem:[#allocation6 + $0xf2] sm:$0x1]
  %v9504 = vpack.c.bf16 %v9496, %v9496
  %v9505 = vpack.c.bf16 %v9497, %v9497
  %v9506 = vpack.c.bf16 %v9498, %v9498
  %v9507 = vpack.c.bf16 %v9499, %v9499
  %v9508 = vpack.c.bf16 %v9500, %v9500
  %v9509 = vpack.c.bf16 %v9501, %v9501
  %v9510 = vpack.c.bf16 %v9502, %v9502
  %v9511 = vpack.c.bf16 %v9503, %v9503
  %s9512 = scalar_lea.vmem %s7, 1152
  %v9513 = vld [vmem:[%s9512] sm:$0xf]
  %v9514 = vld [vmem:[%s9512 + $0x4] sm:$0xf]
  %v9515 = vld [vmem:[%s9512 + $0x8] sm:$0xf]
  %v9516 = vld [vmem:[%s9512 + $0xc] sm:$0xf]
  %v9517 = vld [vmem:[%s9512 + $0x10] sm:$0xf]
  %v9518 = vld [vmem:[%s9512 + $0x14] sm:$0xf]
  %v9519 = vld [vmem:[%s9512 + $0x18] sm:$0xf]
  %v9520 = vld [vmem:[%s9512 + $0x1c] sm:$0xf]
  %v9521 = vld [vmem:[%s9512 + $0x20] sm:$0xf]
  %v9522 = vld [vmem:[%s9512 + $0x24] sm:$0xf]
  %v9523 = vld [vmem:[%s9512 + $0x28] sm:$0xf]
  %v9524 = vld [vmem:[%s9512 + $0x2c] sm:$0xf]
  %v9525 = vld [vmem:[%s9512 + $0x30] sm:$0xf]
  %v9526 = vld [vmem:[%s9512 + $0x34] sm:$0xf]
  %v9527 = vld [vmem:[%s9512 + $0x38] sm:$0xf]
  %v9528 = vld [vmem:[%s9512 + $0x3c] sm:$0xf]
  %v9537 = vunpack.c.l.b16 %v9504
  %v9538 = vunpack.c.l.b16 %v9505
  %v9539 = vunpack.c.l.b16 %v9506
  %v9540 = vunpack.c.l.b16 %v9507
  %v9541 = vunpack.c.l.b16 %v9508
  %v9542 = vunpack.c.l.b16 %v9509
  %v9543 = vunpack.c.l.b16 %v9510
  %v9544 = vunpack.c.l.b16 %v9511
  %v9545 = vrot.slane %v9538, 7
  %v9546 = vsel %vm6802, %v9545, %v9537
  %v9547 = vrot.slane %v9539, 6
  %v9548 = vsel %vm6805, %v9547, %v9546
  %v9549 = vrot.slane %v9540, 5
  %v9550 = vsel %vm6808, %v9549, %v9548
  %v9551 = vrot.slane %v9541, 4
  %v9552 = vsel %vm6811, %v9551, %v9550
  %v9553 = vrot.slane %v9542, 3
  %v9554 = vsel %vm6814, %v9553, %v9552
  %v9555 = vrot.slane %v9543, 2
  %v9556 = vsel %vm6817, %v9555, %v9554
  %v9557 = vrot.slane %v9544, 1
  %v9558 = vsel %vm6820, %v9557, %v9556
  %v9559 = vpack.c.b16 %v9558, %v9558
  %v9577 = vunpack.c.l.b16 %v9513
  %v9578 = vunpack.c.l.b16 %v9514
  %v9579 = vunpack.c.l.b16 %v9515
  %v9580 = vunpack.c.l.b16 %v9516
  %v9581 = vunpack.c.l.b16 %v9517
  %v9582 = vunpack.c.l.b16 %v9518
  %v9583 = vunpack.c.l.b16 %v9519
  %v9584 = vunpack.c.l.b16 %v9520
  %v9585 = vunpack.c.l.b16 %v9521
  %v9586 = vunpack.c.l.b16 %v9522
  %v9587 = vunpack.c.l.b16 %v9523
  %v9588 = vunpack.c.l.b16 %v9524
  %v9589 = vunpack.c.l.b16 %v9525
  %v9590 = vunpack.c.l.b16 %v9526
  %v9591 = vunpack.c.l.b16 %v9527
  %v9592 = vunpack.c.l.b16 %v9528
  %v9593 = vpack.c.b16 %v9578, %v9577
  %v9594 = vpack.c.b16 %v9580, %v9579
  %v9595 = vpack.c.b16 %v9582, %v9581
  %v9596 = vpack.c.b16 %v9584, %v9583
  %v9597 = vpack.c.b16 %v9586, %v9585
  %v9598 = vpack.c.b16 %v9588, %v9587
  %v9599 = vpack.c.b16 %v9590, %v9589
  %v9600 = vpack.c.b16 %v9592, %v9591
  %9609 = vmatprep.subr.bf16.mxu0 0
  %9610 = vmatpush1.bf16.msra.mxu0 %v9593
  %9611 = vmatprep.subr.bf16.mxu0 0
  %9612 = vmatpush1.bf16.msra.mxu0 %v9594
  %9613 = vmatprep.subr.bf16.mxu0 0
  %9614 = vmatpush1.bf16.msra.mxu0 %v9595
  %9615 = vmatprep.subr.bf16.mxu0 0
  %9616 = vmatpush1.bf16.msra.mxu0 %v9596
  %9617 = vmatprep.subr.bf16.mxu0 0
  %9618 = vmatpush1.bf16.msra.mxu0 %v9597
  %9619 = vmatprep.subr.bf16.mxu0 0
  %9620 = vmatpush1.bf16.msra.mxu0 %v9598
  %9621 = vmatprep.subr.bf16.mxu0 0
  %9622 = vmatpush1.bf16.msra.mxu0 %v9599
  %9623 = vmatprep.subr.bf16.mxu0 0
  %9624 = vmatpush1.bf16.msra.mxu0 %v9600
  %9625 = vmatprep.subr.bf16.mxu0 0
  %9626 = vmatpush1.bf16.msra.mxu0 0
  %9627 = vmatprep.subr.bf16.mxu0 0
  %9628 = vmatpush1.bf16.msra.mxu0 0
  %9629 = vmatprep.subr.bf16.mxu0 0
  %9630 = vmatpush1.bf16.msra.mxu0 0
  %9631 = vmatprep.subr.bf16.mxu0 0
  %9632 = vmatpush1.bf16.msra.mxu0 0
  %9633 = vmatprep.subr.bf16.mxu0 0
  %9634 = vmatpush1.bf16.msra.mxu0 0
  %9635 = vmatprep.subr.bf16.mxu0 0
  %9636 = vmatpush1.bf16.msra.mxu0 0
  %9637 = vmatprep.subr.bf16.mxu0 0
  %9638 = vmatpush1.bf16.msra.mxu0 0
  %9639 = vmatprep.subr.bf16.mxu0 0
  %9640 = vmatpush1.bf16.msra.mxu0 0
  %9641 = vmatprep.mubr.bf16.mxu0 0
  %9642 = vmatmul.mubr.bf16.gmra.mrb[0].mxu0 %v9559
  %v9643 = vpop.f32.mrb[0].mxu0
  %v9644 = vadd.f32 0.0, %v9643
  %v9645 = vpop.f32.mrb[0].mxu0
  %v9646 = vpop.f32.mrb[0].mxu0
  %v9647 = vpop.f32.mrb[0].mxu0
  %9648 = vdwg.mxu0
  %v9649 = vadd.f32 %v9495, %v9644
  %v9650 = vld [vmem:[#allocation6 + $0x13] sm:$0x1]
  %v9651 = vld [vmem:[#allocation6 + $0x33] sm:$0x1]
  %v9652 = vld [vmem:[#allocation6 + $0x53] sm:$0x1]
  %v9653 = vld [vmem:[#allocation6 + $0x73] sm:$0x1]
  %v9654 = vld [vmem:[#allocation6 + $0x93] sm:$0x1]
  %v9655 = vld [vmem:[#allocation6 + $0xb3] sm:$0x1]
  %v9656 = vld [vmem:[#allocation6 + $0xd3] sm:$0x1]
  %v9657 = vld [vmem:[#allocation6 + $0xf3] sm:$0x1]
  %v9658 = vpack.c.bf16 %v9650, %v9650
  %v9659 = vpack.c.bf16 %v9651, %v9651
  %v9660 = vpack.c.bf16 %v9652, %v9652
  %v9661 = vpack.c.bf16 %v9653, %v9653
  %v9662 = vpack.c.bf16 %v9654, %v9654
  %v9663 = vpack.c.bf16 %v9655, %v9655
  %v9664 = vpack.c.bf16 %v9656, %v9656
  %v9665 = vpack.c.bf16 %v9657, %v9657
  %s9666 = scalar_lea.vmem %s7, 1216
  %v9667 = vld [vmem:[%s9666] sm:$0xf]
  %v9668 = vld [vmem:[%s9666 + $0x4] sm:$0xf]
  %v9669 = vld [vmem:[%s9666 + $0x8] sm:$0xf]
  %v9670 = vld [vmem:[%s9666 + $0xc] sm:$0xf]
  %v9671 = vld [vmem:[%s9666 + $0x10] sm:$0xf]
  %v9672 = vld [vmem:[%s9666 + $0x14] sm:$0xf]
  %v9673 = vld [vmem:[%s9666 + $0x18] sm:$0xf]
  %v9674 = vld [vmem:[%s9666 + $0x1c] sm:$0xf]
  %v9675 = vld [vmem:[%s9666 + $0x20] sm:$0xf]
  %v9676 = vld [vmem:[%s9666 + $0x24] sm:$0xf]
  %v9677 = vld [vmem:[%s9666 + $0x28] sm:$0xf]
  %v9678 = vld [vmem:[%s9666 + $0x2c] sm:$0xf]
  %v9679 = vld [vmem:[%s9666 + $0x30] sm:$0xf]
  %v9680 = vld [vmem:[%s9666 + $0x34] sm:$0xf]
  %v9681 = vld [vmem:[%s9666 + $0x38] sm:$0xf]
  %v9682 = vld [vmem:[%s9666 + $0x3c] sm:$0xf]
  %v9691 = vunpack.c.l.b16 %v9658
  %v9692 = vunpack.c.l.b16 %v9659
  %v9693 = vunpack.c.l.b16 %v9660
  %v9694 = vunpack.c.l.b16 %v9661
  %v9695 = vunpack.c.l.b16 %v9662
  %v9696 = vunpack.c.l.b16 %v9663
  %v9697 = vunpack.c.l.b16 %v9664
  %v9698 = vunpack.c.l.b16 %v9665
  %v9699 = vrot.slane %v9692, 7
  %v9700 = vsel %vm6802, %v9699, %v9691
  %v9701 = vrot.slane %v9693, 6
  %v9702 = vsel %vm6805, %v9701, %v9700
  %v9703 = vrot.slane %v9694, 5
  %v9704 = vsel %vm6808, %v9703, %v9702
  %v9705 = vrot.slane %v9695, 4
  %v9706 = vsel %vm6811, %v9705, %v9704
  %v9707 = vrot.slane %v9696, 3
  %v9708 = vsel %vm6814, %v9707, %v9706
  %v9709 = vrot.slane %v9697, 2
  %v9710 = vsel %vm6817, %v9709, %v9708
  %v9711 = vrot.slane %v9698, 1
  %v9712 = vsel %vm6820, %v9711, %v9710
  %v9713 = vpack.c.b16 %v9712, %v9712
  %v9731 = vunpack.c.l.b16 %v9667
  %v9732 = vunpack.c.l.b16 %v9668
  %v9733 = vunpack.c.l.b16 %v9669
  %v9734 = vunpack.c.l.b16 %v9670
  %v9735 = vunpack.c.l.b16 %v9671
  %v9736 = vunpack.c.l.b16 %v9672
  %v9737 = vunpack.c.l.b16 %v9673
  %v9738 = vunpack.c.l.b16 %v9674
  %v9739 = vunpack.c.l.b16 %v9675
  %v9740 = vunpack.c.l.b16 %v9676
  %v9741 = vunpack.c.l.b16 %v9677
  %v9742 = vunpack.c.l.b16 %v9678
  %v9743 = vunpack.c.l.b16 %v9679
  %v9744 = vunpack.c.l.b16 %v9680
  %v9745 = vunpack.c.l.b16 %v9681
  %v9746 = vunpack.c.l.b16 %v9682
  %v9747 = vpack.c.b16 %v9732, %v9731
  %v9748 = vpack.c.b16 %v9734, %v9733
  %v9749 = vpack.c.b16 %v9736, %v9735
  %v9750 = vpack.c.b16 %v9738, %v9737
  %v9751 = vpack.c.b16 %v9740, %v9739
  %v9752 = vpack.c.b16 %v9742, %v9741
  %v9753 = vpack.c.b16 %v9744, %v9743
  %v9754 = vpack.c.b16 %v9746, %v9745
  %9763 = vmatprep.subr.bf16.mxu0 0
  %9764 = vmatpush1.bf16.msra.mxu0 %v9747
  %9765 = vmatprep.subr.bf16.mxu0 0
  %9766 = vmatpush1.bf16.msra.mxu0 %v9748
  %9767 = vmatprep.subr.bf16.mxu0 0
  %9768 = vmatpush1.bf16.msra.mxu0 %v9749
  %9769 = vmatprep.subr.bf16.mxu0 0
  %9770 = vmatpush1.bf16.msra.mxu0 %v9750
  %9771 = vmatprep.subr.bf16.mxu0 0
  %9772 = vmatpush1.bf16.msra.mxu0 %v9751
  %9773 = vmatprep.subr.bf16.mxu0 0
  %9774 = vmatpush1.bf16.msra.mxu0 %v9752
  %9775 = vmatprep.subr.bf16.mxu0 0
  %9776 = vmatpush1.bf16.msra.mxu0 %v9753
  %9777 = vmatprep.subr.bf16.mxu0 0
  %9778 = vmatpush1.bf16.msra.mxu0 %v9754
  %9779 = vmatprep.subr.bf16.mxu0 0
  %9780 = vmatpush1.bf16.msra.mxu0 0
  %9781 = vmatprep.subr.bf16.mxu0 0
  %9782 = vmatpush1.bf16.msra.mxu0 0
  %9783 = vmatprep.subr.bf16.mxu0 0
  %9784 = vmatpush1.bf16.msra.mxu0 0
  %9785 = vmatprep.subr.bf16.mxu0 0
  %9786 = vmatpush1.bf16.msra.mxu0 0
  %9787 = vmatprep.subr.bf16.mxu0 0
  %9788 = vmatpush1.bf16.msra.mxu0 0
  %9789 = vmatprep.subr.bf16.mxu0 0
  %9790 = vmatpush1.bf16.msra.mxu0 0
  %9791 = vmatprep.subr.bf16.mxu0 0
  %9792 = vmatpush1.bf16.msra.mxu0 0
  %9793 = vmatprep.subr.bf16.mxu0 0
  %9794 = vmatpush1.bf16.msra.mxu0 0
  %9795 = vmatprep.mubr.bf16.mxu0 0
  %9796 = vmatmul.mubr.bf16.gmra.mrb[0].mxu0 %v9713
  %v9797 = vpop.f32.mrb[0].mxu0
  %v9798 = vadd.f32 0.0, %v9797
  %v9799 = vpop.f32.mrb[0].mxu0
  %v9800 = vpop.f32.mrb[0].mxu0
  %v9801 = vpop.f32.mrb[0].mxu0
  %9802 = vdwg.mxu0
  %v9803 = vadd.f32 %v9649, %v9798
  %v9804 = vld [vmem:[#allocation6 + $0x14] sm:$0x1]
  %v9805 = vld [vmem:[#allocation6 + $0x34] sm:$0x1]
  %v9806 = vld [vmem:[#allocation6 + $0x54] sm:$0x1]
  %v9807 = vld [vmem:[#allocation6 + $0x74] sm:$0x1]
  %v9808 = vld [vmem:[#allocation6 + $0x94] sm:$0x1]
  %v9809 = vld [vmem:[#allocation6 + $0xb4] sm:$0x1]
  %v9810 = vld [vmem:[#allocation6 + $0xd4] sm:$0x1]
  %v9811 = vld [vmem:[#allocation6 + $0xf4] sm:$0x1]
  %v9812 = vpack.c.bf16 %v9804, %v9804
  %v9813 = vpack.c.bf16 %v9805, %v9805
  %v9814 = vpack.c.bf16 %v9806, %v9806
  %v9815 = vpack.c.bf16 %v9807, %v9807
  %v9816 = vpack.c.bf16 %v9808, %v9808
  %v9817 = vpack.c.bf16 %v9809, %v9809
  %v9818 = vpack.c.bf16 %v9810, %v9810
  %v9819 = vpack.c.bf16 %v9811, %v9811
  %s9820 = scalar_lea.vmem %s7, 1280
  %v9821 = vld [vmem:[%s9820] sm:$0xf]
  %v9822 = vld [vmem:[%s9820 + $0x4] sm:$0xf]
  %v9823 = vld [vmem:[%s9820 + $0x8] sm:$0xf]
  %v9824 = vld [vmem:[%s9820 + $0xc] sm:$0xf]
  %v9825 = vld [vmem:[%s9820 + $0x10] sm:$0xf]
  %v9826 = vld [vmem:[%s9820 + $0x14] sm:$0xf]
  %v9827 = vld [vmem:[%s9820 + $0x18] sm:$0xf]
  %v9828 = vld [vmem:[%s9820 + $0x1c] sm:$0xf]
  %v9829 = vld [vmem:[%s9820 + $0x20] sm:$0xf]
  %v9830 = vld [vmem:[%s9820 + $0x24] sm:$0xf]
  %v9831 = vld [vmem:[%s9820 + $0x28] sm:$0xf]
  %v9832 = vld [vmem:[%s9820 + $0x2c] sm:$0xf]
  %v9833 = vld [vmem:[%s9820 + $0x30] sm:$0xf]
  %v9834 = vld [vmem:[%s9820 + $0x34] sm:$0xf]
  %v9835 = vld [vmem:[%s9820 + $0x38] sm:$0xf]
  %v9836 = vld [vmem:[%s9820 + $0x3c] sm:$0xf]
  %v9845 = vunpack.c.l.b16 %v9812
  %v9846 = vunpack.c.l.b16 %v9813
  %v9847 = vunpack.c.l.b16 %v9814
  %v9848 = vunpack.c.l.b16 %v9815
  %v9849 = vunpack.c.l.b16 %v9816
  %v9850 = vunpack.c.l.b16 %v9817
  %v9851 = vunpack.c.l.b16 %v9818
  %v9852 = vunpack.c.l.b16 %v9819
  %v9853 = vrot.slane %v9846, 7
  %v9854 = vsel %vm6802, %v9853, %v9845
  %v9855 = vrot.slane %v9847, 6
  %v9856 = vsel %vm6805, %v9855, %v9854
  %v9857 = vrot.slane %v9848, 5
  %v9858 = vsel %vm6808, %v9857, %v9856
  %v9859 = vrot.slane %v9849, 4
  %v9860 = vsel %vm6811, %v9859, %v9858
  %v9861 = vrot.slane %v9850, 3
  %v9862 = vsel %vm6814, %v9861, %v9860
  %v9863 = vrot.slane %v9851, 2
  %v9864 = vsel %vm6817, %v9863, %v9862
  %v9865 = vrot.slane %v9852, 1
  %v9866 = vsel %vm6820, %v9865, %v9864
  %v9867 = vpack.c.b16 %v9866, %v9866
  %v9885 = vunpack.c.l.b16 %v9821
  %v9886 = vunpack.c.l.b16 %v9822
  %v9887 = vunpack.c.l.b16 %v9823
  %v9888 = vunpack.c.l.b16 %v9824
  %v9889 = vunpack.c.l.b16 %v9825
  %v9890 = vunpack.c.l.b16 %v9826
  %v9891 = vunpack.c.l.b16 %v9827
  %v9892 = vunpack.c.l.b16 %v9828
  %v9893 = vunpack.c.l.b16 %v9829
  %v9894 = vunpack.c.l.b16 %v9830
  %v9895 = vunpack.c.l.b16 %v9831
  %v9896 = vunpack.c.l.b16 %v9832
  %v9897 = vunpack.c.l.b16 %v9833
  %v9898 = vunpack.c.l.b16 %v9834
  %v9899 = vunpack.c.l.b16 %v9835
  %v9900 = vunpack.c.l.b16 %v9836
  %v9901 = vpack.c.b16 %v9886, %v9885
  %v9902 = vpack.c.b16 %v9888, %v9887
  %v9903 = vpack.c.b16 %v9890, %v9889
  %v9904 = vpack.c.b16 %v9892, %v9891
  %v9905 = vpack.c.b16 %v9894, %v9893
  %v9906 = vpack.c.b16 %v9896, %v9895
  %v9907 = vpack.c.b16 %v9898, %v9897
  %v9908 = vpack.c.b16 %v9900, %v9899
  %9917 = vmatprep.subr.bf16.mxu0 0
  %9918 = vmatpush1.bf16.msra.mxu0 %v9901
  %9919 = vmatprep.subr.bf16.mxu0 0
  %9920 = vmatpush1.bf16.msra.mxu0 %v9902
  %9921 = vmatprep.subr.bf16.mxu0 0
  %9922 = vmatpush1.bf16.msra.mxu0 %v9903
  %9923 = vmatprep.subr.bf16.mxu0 0
  %9924 = vmatpush1.bf16.msra.mxu0 %v9904
  %9925 = vmatprep.subr.bf16.mxu0 0
  %9926 = vmatpush1.bf16.msra.mxu0 %v9905
  %9927 = vmatprep.subr.bf16.mxu0 0
  %9928 = vmatpush1.bf16.msra.mxu0 %v9906
  %9929 = vmatprep.subr.bf16.mxu0 0
  %9930 = vmatpush1.bf16.msra.mxu0 %v9907
  %9931 = vmatprep.subr.bf16.mxu0 0
  %9932 = vmatpush1.bf16.msra.mxu0 %v9908
  %9933 = vmatprep.subr.bf16.mxu0 0
  %9934 = vmatpush1.bf16.msra.mxu0 0
  %9935 = vmatprep.subr.bf16.mxu0 0
  %9936 = vmatpush1.bf16.msra.mxu0 0
  %9937 = vmatprep.subr.bf16.mxu0 0
  %9938 = vmatpush1.bf16.msra.mxu0 0
  %9939 = vmatprep.subr.bf16.mxu0 0
  %9940 = vmatpush1.bf16.msra.mxu0 0
  %9941 = vmatprep.subr.bf16.mxu0 0
  %9942 = vmatpush1.bf16.msra.mxu0 0
  %9943 = vmatprep.subr.bf16.mxu0 0
  %9944 = vmatpush1.bf16.msra.mxu0 0
  %9945 = vmatprep.subr.bf16.mxu0 0
  %9946 = vmatpush1.bf16.msra.mxu0 0
  %9947 = vmatprep.subr.bf16.mxu0 0
  %9948 = vmatpush1.bf16.msra.mxu0 0
  %9949 = vmatprep.mubr.bf16.mxu0 0
  %9950 = vmatmul.mubr.bf16.gmra.mrb[0].mxu0 %v9867
  %v9951 = vpop.f32.mrb[0].mxu0
  %v9952 = vadd.f32 0.0, %v9951
  %v9953 = vpop.f32.mrb[0].mxu0
  %v9954 = vpop.f32.mrb[0].mxu0
  %v9955 = vpop.f32.mrb[0].mxu0
  %9956 = vdwg.mxu0
  %v9957 = vadd.f32 %v9803, %v9952
  %v9958 = vld [vmem:[#allocation6 + $0x15] sm:$0x1]
  %v9959 = vld [vmem:[#allocation6 + $0x35] sm:$0x1]
  %v9960 = vld [vmem:[#allocation6 + $0x55] sm:$0x1]
  %v9961 = vld [vmem:[#allocation6 + $0x75] sm:$0x1]
  %v9962 = vld [vmem:[#allocation6 + $0x95] sm:$0x1]
  %v9963 = vld [vmem:[#allocation6 + $0xb5] sm:$0x1]
  %v9964 = vld [vmem:[#allocation6 + $0xd5] sm:$0x1]
  %v9965 = vld [vmem:[#allocation6 + $0xf5] sm:$0x1]
  %v9966 = vpack.c.bf16 %v9958, %v9958
  %v9967 = vpack.c.bf16 %v9959, %v9959
  %v9968 = vpack.c.bf16 %v9960, %v9960
  %v9969 = vpack.c.bf16 %v9961, %v9961
  %v9970 = vpack.c.bf16 %v9962, %v9962
  %v9971 = vpack.c.bf16 %v9963, %v9963
  %v9972 = vpack.c.bf16 %v9964, %v9964
  %v9973 = vpack.c.bf16 %v9965, %v9965
  %s9974 = scalar_lea.vmem %s7, 1344
  %v9975 = vld [vmem:[%s9974] sm:$0xf]
  %v9976 = vld [vmem:[%s9974 + $0x4] sm:$0xf]
  %v9977 = vld [vmem:[%s9974 + $0x8] sm:$0xf]
  %v9978 = vld [vmem:[%s9974 + $0xc] sm:$0xf]
  %v9979 = vld [vmem:[%s9974 + $0x10] sm:$0xf]
  %v9980 = vld [vmem:[%s9974 + $0x14] sm:$0xf]
  %v9981 = vld [vmem:[%s9974 + $0x18] sm:$0xf]
  %v9982 = vld [vmem:[%s9974 + $0x1c] sm:$0xf]
  %v9983 = vld [vmem:[%s9974 + $0x20] sm:$0xf]
  %v9984 = vld [vmem:[%s9974 + $0x24] sm:$0xf]
  %v9985 = vld [vmem:[%s9974 + $0x28] sm:$0xf]
  %v9986 = vld [vmem:[%s9974 + $0x2c] sm:$0xf]
  %v9987 = vld [vmem:[%s9974 + $0x30] sm:$0xf]
  %v9988 = vld [vmem:[%s9974 + $0x34] sm:$0xf]
  %v9989 = vld [vmem:[%s9974 + $0x38] sm:$0xf]
  %v9990 = vld [vmem:[%s9974 + $0x3c] sm:$0xf]
  %v9999 = vunpack.c.l.b16 %v9966
  %v10000 = vunpack.c.l.b16 %v9967
  %v10001 = vunpack.c.l.b16 %v9968
  %v10002 = vunpack.c.l.b16 %v9969
  %v10003 = vunpack.c.l.b16 %v9970
  %v10004 = vunpack.c.l.b16 %v9971
  %v10005 = vunpack.c.l.b16 %v9972
  %v10006 = vunpack.c.l.b16 %v9973
  %v10007 = vrot.slane %v10000, 7
  %v10008 = vsel %vm6802, %v10007, %v9999
  %v10009 = vrot.slane %v10001, 6
  %v10010 = vsel %vm6805, %v10009, %v10008
  %v10011 = vrot.slane %v10002, 5
  %v10012 = vsel %vm6808, %v10011, %v10010
  %v10013 = vrot.slane %v10003, 4
  %v10014 = vsel %vm6811, %v10013, %v10012
  %v10015 = vrot.slane %v10004, 3
  %v10016 = vsel %vm6814, %v10015, %v10014
  %v10017 = vrot.slane %v10005, 2
  %v10018 = vsel %vm6817, %v10017, %v10016
  %v10019 = vrot.slane %v10006, 1
  %v10020 = vsel %vm6820, %v10019, %v10018
  %v10021 = vpack.c.b16 %v10020, %v10020
  %v10039 = vunpack.c.l.b16 %v9975
  %v10040 = vunpack.c.l.b16 %v9976
  %v10041 = vunpack.c.l.b16 %v9977
  %v10042 = vunpack.c.l.b16 %v9978
  %v10043 = vunpack.c.l.b16 %v9979
  %v10044 = vunpack.c.l.b16 %v9980
  %v10045 = vunpack.c.l.b16 %v9981
  %v10046 = vunpack.c.l.b16 %v9982
  %v10047 = vunpack.c.l.b16 %v9983
  %v10048 = vunpack.c.l.b16 %v9984
  %v10049 = vunpack.c.l.b16 %v9985
  %v10050 = vunpack.c.l.b16 %v9986
  %v10051 = vunpack.c.l.b16 %v9987
  %v10052 = vunpack.c.l.b16 %v9988
  %v10053 = vunpack.c.l.b16 %v9989
  %v10054 = vunpack.c.l.b16 %v9990
  %v10055 = vpack.c.b16 %v10040, %v10039
  %v10056 = vpack.c.b16 %v10042, %v10041
  %v10057 = vpack.c.b16 %v10044, %v10043
  %v10058 = vpack.c.b16 %v10046, %v10045
  %v10059 = vpack.c.b16 %v10048, %v10047
  %v10060 = vpack.c.b16 %v10050, %v10049
  %v10061 = vpack.c.b16 %v10052, %v10051
  %v10062 = vpack.c.b16 %v10054, %v10053
  %10071 = vmatprep.subr.bf16.mxu0 0
  %10072 = vmatpush1.bf16.msra.mxu0 %v10055
  %10073 = vmatprep.subr.bf16.mxu0 0
  %10074 = vmatpush1.bf16.msra.mxu0 %v10056
  %10075 = vmatprep.subr.bf16.mxu0 0
  %10076 = vmatpush1.bf16.msra.mxu0 %v10057
  %10077 = vmatprep.subr.bf16.mxu0 0
  %10078 = vmatpush1.bf16.msra.mxu0 %v10058
  %10079 = vmatprep.subr.bf16.mxu0 0
  %10080 = vmatpush1.bf16.msra.mxu0 %v10059
  %10081 = vmatprep.subr.bf16.mxu0 0
  %10082 = vmatpush1.bf16.msra.mxu0 %v10060
  %10083 = vmatprep.subr.bf16.mxu0 0
  %10084 = vmatpush1.bf16.msra.mxu0 %v10061
  %10085 = vmatprep.subr.bf16.mxu0 0
  %10086 = vmatpush1.bf16.msra.mxu0 %v10062
  %10087 = vmatprep.subr.bf16.mxu0 0
  %10088 = vmatpush1.bf16.msra.mxu0 0
  %10089 = vmatprep.subr.bf16.mxu0 0
  %10090 = vmatpush1.bf16.msra.mxu0 0
  %10091 = vmatprep.subr.bf16.mxu0 0
  %10092 = vmatpush1.bf16.msra.mxu0 0
  %10093 = vmatprep.subr.bf16.mxu0 0
  %10094 = vmatpush1.bf16.msra.mxu0 0
  %10095 = vmatprep.subr.bf16.mxu0 0
  %10096 = vmatpush1.bf16.msra.mxu0 0
  %10097 = vmatprep.subr.bf16.mxu0 0
  %10098 = vmatpush1.bf16.msra.mxu0 0
  %10099 = vmatprep.subr.bf16.mxu0 0
  %10100 = vmatpush1.bf16.msra.mxu0 0
  %10101 = vmatprep.subr.bf16.mxu0 0
  %10102 = vmatpush1.bf16.msra.mxu0 0
  %10103 = vmatprep.mubr.bf16.mxu0 0
  %10104 = vmatmul.mubr.bf16.gmra.mrb[0].mxu0 %v10021
  %v10105 = vpop.f32.mrb[0].mxu0
  %v10106 = vadd.f32 0.0, %v10105
  %v10107 = vpop.f32.mrb[0].mxu0
  %v10108 = vpop.f32.mrb[0].mxu0
  %v10109 = vpop.f32.mrb[0].mxu0
  %10110 = vdwg.mxu0
  %v10111 = vadd.f32 %v9957, %v10106
  %v10112 = vld [vmem:[#allocation6 + $0x16] sm:$0x1]
  %v10113 = vld [vmem:[#allocation6 + $0x36] sm:$0x1]
  %v10114 = vld [vmem:[#allocation6 + $0x56] sm:$0x1]
  %v10115 = vld [vmem:[#allocation6 + $0x76] sm:$0x1]
  %v10116 = vld [vmem:[#allocation6 + $0x96] sm:$0x1]
  %v10117 = vld [vmem:[#allocation6 + $0xb6] sm:$0x1]
  %v10118 = vld [vmem:[#allocation6 + $0xd6] sm:$0x1]
  %v10119 = vld [vmem:[#allocation6 + $0xf6] sm:$0x1]
  %v10120 = vpack.c.bf16 %v10112, %v10112
  %v10121 = vpack.c.bf16 %v10113, %v10113
  %v10122 = vpack.c.bf16 %v10114, %v10114
  %v10123 = vpack.c.bf16 %v10115, %v10115
  %v10124 = vpack.c.bf16 %v10116, %v10116
  %v10125 = vpack.c.bf16 %v10117, %v10117
  %v10126 = vpack.c.bf16 %v10118, %v10118
  %v10127 = vpack.c.bf16 %v10119, %v10119
  %s10128 = scalar_lea.vmem %s7, 1408
  %v10129 = vld [vmem:[%s10128] sm:$0xf]
  %v10130 = vld [vmem:[%s10128 + $0x4] sm:$0xf]
  %v10131 = vld [vmem:[%s10128 + $0x8] sm:$0xf]
  %v10132 = vld [vmem:[%s10128 + $0xc] sm:$0xf]
  %v10133 = vld [vmem:[%s10128 + $0x10] sm:$0xf]
  %v10134 = vld [vmem:[%s10128 + $0x14] sm:$0xf]
  %v10135 = vld [vmem:[%s10128 + $0x18] sm:$0xf]
  %v10136 = vld [vmem:[%s10128 + $0x1c] sm:$0xf]
  %v10137 = vld [vmem:[%s10128 + $0x20] sm:$0xf]
  %v10138 = vld [vmem:[%s10128 + $0x24] sm:$0xf]
  %v10139 = vld [vmem:[%s10128 + $0x28] sm:$0xf]
  %v10140 = vld [vmem:[%s10128 + $0x2c] sm:$0xf]
  %v10141 = vld [vmem:[%s10128 + $0x30] sm:$0xf]
  %v10142 = vld [vmem:[%s10128 + $0x34] sm:$0xf]
  %v10143 = vld [vmem:[%s10128 + $0x38] sm:$0xf]
  %v10144 = vld [vmem:[%s10128 + $0x3c] sm:$0xf]
  %v10153 = vunpack.c.l.b16 %v10120
  %v10154 = vunpack.c.l.b16 %v10121
  %v10155 = vunpack.c.l.b16 %v10122
  %v10156 = vunpack.c.l.b16 %v10123
  %v10157 = vunpack.c.l.b16 %v10124
  %v10158 = vunpack.c.l.b16 %v10125
  %v10159 = vunpack.c.l.b16 %v10126
  %v10160 = vunpack.c.l.b16 %v10127
  %v10161 = vrot.slane %v10154, 7
  %v10162 = vsel %vm6802, %v10161, %v10153
  %v10163 = vrot.slane %v10155, 6
  %v10164 = vsel %vm6805, %v10163, %v10162
  %v10165 = vrot.slane %v10156, 5
  %v10166 = vsel %vm6808, %v10165, %v10164
  %v10167 = vrot.slane %v10157, 4
  %v10168 = vsel %vm6811, %v10167, %v10166
  %v10169 = vrot.slane %v10158, 3
  %v10170 = vsel %vm6814, %v10169, %v10168
  %v10171 = vrot.slane %v10159, 2
  %v10172 = vsel %vm6817, %v10171, %v10170
  %v10173 = vrot.slane %v10160, 1
  %v10174 = vsel %vm6820, %v10173, %v10172
  %v10175 = vpack.c.b16 %v10174, %v10174
  %v10193 = vunpack.c.l.b16 %v10129
  %v10194 = vunpack.c.l.b16 %v10130
  %v10195 = vunpack.c.l.b16 %v10131
  %v10196 = vunpack.c.l.b16 %v10132
  %v10197 = vunpack.c.l.b16 %v10133
  %v10198 = vunpack.c.l.b16 %v10134
  %v10199 = vunpack.c.l.b16 %v10135
  %v10200 = vunpack.c.l.b16 %v10136
  %v10201 = vunpack.c.l.b16 %v10137
  %v10202 = vunpack.c.l.b16 %v10138
  %v10203 = vunpack.c.l.b16 %v10139
  %v10204 = vunpack.c.l.b16 %v10140
  %v10205 = vunpack.c.l.b16 %v10141
  %v10206 = vunpack.c.l.b16 %v10142
  %v10207 = vunpack.c.l.b16 %v10143
  %v10208 = vunpack.c.l.b16 %v10144
  %v10209 = vpack.c.b16 %v10194, %v10193
  %v10210 = vpack.c.b16 %v10196, %v10195
  %v10211 = vpack.c.b16 %v10198, %v10197
  %v10212 = vpack.c.b16 %v10200, %v10199
  %v10213 = vpack.c.b16 %v10202, %v10201
  %v10214 = vpack.c.b16 %v10204, %v10203
  %v10215 = vpack.c.b16 %v10206, %v10205
  %v10216 = vpack.c.b16 %v10208, %v10207
  %10225 = vmatprep.subr.bf16.mxu0 0
  %10226 = vmatpush1.bf16.msra.mxu0 %v10209
  %10227 = vmatprep.subr.bf16.mxu0 0
  %10228 = vmatpush1.bf16.msra.mxu0 %v10210
  %10229 = vmatprep.subr.bf16.mxu0 0
  %10230 = vmatpush1.bf16.msra.mxu0 %v10211
  %10231 = vmatprep.subr.bf16.mxu0 0
  %10232 = vmatpush1.bf16.msra.mxu0 %v10212
  %10233 = vmatprep.subr.bf16.mxu0 0
  %10234 = vmatpush1.bf16.msra.mxu0 %v10213
  %10235 = vmatprep.subr.bf16.mxu0 0
  %10236 = vmatpush1.bf16.msra.mxu0 %v10214
  %10237 = vmatprep.subr.bf16.mxu0 0
  %10238 = vmatpush1.bf16.msra.mxu0 %v10215
  %10239 = vmatprep.subr.bf16.mxu0 0
  %10240 = vmatpush1.bf16.msra.mxu0 %v10216
  %10241 = vmatprep.subr.bf16.mxu0 0
  %10242 = vmatpush1.bf16.msra.mxu0 0
  %10243 = vmatprep.subr.bf16.mxu0 0
  %10244 = vmatpush1.bf16.msra.mxu0 0
  %10245 = vmatprep.subr.bf16.mxu0 0
  %10246 = vmatpush1.bf16.msra.mxu0 0
  %10247 = vmatprep.subr.bf16.mxu0 0
  %10248 = vmatpush1.bf16.msra.mxu0 0
  %10249 = vmatprep.subr.bf16.mxu0 0
  %10250 = vmatpush1.bf16.msra.mxu0 0
  %10251 = vmatprep.subr.bf16.mxu0 0
  %10252 = vmatpush1.bf16.msra.mxu0 0
  %10253 = vmatprep.subr.bf16.mxu0 0
  %10254 = vmatpush1.bf16.msra.mxu0 0
  %10255 = vmatprep.subr.bf16.mxu0 0
  %10256 = vmatpush1.bf16.msra.mxu0 0
  %10257 = vmatprep.mubr.bf16.mxu0 0
  %10258 = vmatmul.mubr.bf16.gmra.mrb[0].mxu0 %v10175
  %v10259 = vpop.f32.mrb[0].mxu0
  %v10260 = vadd.f32 0.0, %v10259
  %v10261 = vpop.f32.mrb[0].mxu0
  %v10262 = vpop.f32.mrb[0].mxu0
  %v10263 = vpop.f32.mrb[0].mxu0
  %10264 = vdwg.mxu0
  %v10265 = vadd.f32 %v10111, %v10260
  %v10266 = vld [vmem:[#allocation6 + $0x17] sm:$0x1]
  %v10267 = vld [vmem:[#allocation6 + $0x37] sm:$0x1]
  %v10268 = vld [vmem:[#allocation6 + $0x57] sm:$0x1]
  %v10269 = vld [vmem:[#allocation6 + $0x77] sm:$0x1]
  %v10270 = vld [vmem:[#allocation6 + $0x97] sm:$0x1]
  %v10271 = vld [vmem:[#allocation6 + $0xb7] sm:$0x1]
  %v10272 = vld [vmem:[#allocation6 + $0xd7] sm:$0x1]
  %v10273 = vld [vmem:[#allocation6 + $0xf7] sm:$0x1]
  %v10274 = vpack.c.bf16 %v10266, %v10266
  %v10275 = vpack.c.bf16 %v10267, %v10267
  %v10276 = vpack.c.bf16 %v10268, %v10268
  %v10277 = vpack.c.bf16 %v10269, %v10269
  %v10278 = vpack.c.bf16 %v10270, %v10270
  %v10279 = vpack.c.bf16 %v10271, %v10271
  %v10280 = vpack.c.bf16 %v10272, %v10272
  %v10281 = vpack.c.bf16 %v10273, %v10273
  %s10282 = scalar_lea.vmem %s7, 1472
  %v10283 = vld [vmem:[%s10282] sm:$0xf]
  %v10284 = vld [vmem:[%s10282 + $0x4] sm:$0xf]
  %v10285 = vld [vmem:[%s10282 + $0x8] sm:$0xf]
  %v10286 = vld [vmem:[%s10282 + $0xc] sm:$0xf]
  %v10287 = vld [vmem:[%s10282 + $0x10] sm:$0xf]
  %v10288 = vld [vmem:[%s10282 + $0x14] sm:$0xf]
  %v10289 = vld [vmem:[%s10282 + $0x18] sm:$0xf]
  %v10290 = vld [vmem:[%s10282 + $0x1c] sm:$0xf]
  %v10291 = vld [vmem:[%s10282 + $0x20] sm:$0xf]
  %v10292 = vld [vmem:[%s10282 + $0x24] sm:$0xf]
  %v10293 = vld [vmem:[%s10282 + $0x28] sm:$0xf]
  %v10294 = vld [vmem:[%s10282 + $0x2c] sm:$0xf]
  %v10295 = vld [vmem:[%s10282 + $0x30] sm:$0xf]
  %v10296 = vld [vmem:[%s10282 + $0x34] sm:$0xf]
  %v10297 = vld [vmem:[%s10282 + $0x38] sm:$0xf]
  %v10298 = vld [vmem:[%s10282 + $0x3c] sm:$0xf]
  %v10307 = vunpack.c.l.b16 %v10274
  %v10308 = vunpack.c.l.b16 %v10275
  %v10309 = vunpack.c.l.b16 %v10276
  %v10310 = vunpack.c.l.b16 %v10277
  %v10311 = vunpack.c.l.b16 %v10278
  %v10312 = vunpack.c.l.b16 %v10279
  %v10313 = vunpack.c.l.b16 %v10280
  %v10314 = vunpack.c.l.b16 %v10281
  %v10315 = vrot.slane %v10308, 7
  %v10316 = vsel %vm6802, %v10315, %v10307
  %v10317 = vrot.slane %v10309, 6
  %v10318 = vsel %vm6805, %v10317, %v10316
  %v10319 = vrot.slane %v10310, 5
  %v10320 = vsel %vm6808, %v10319, %v10318
  %v10321 = vrot.slane %v10311, 4
  %v10322 = vsel %vm6811, %v10321, %v10320
  %v10323 = vrot.slane %v10312, 3
  %v10324 = vsel %vm6814, %v10323, %v10322
  %v10325 = vrot.slane %v10313, 2
  %v10326 = vsel %vm6817, %v10325, %v10324
  %v10327 = vrot.slane %v10314, 1
  %v10328 = vsel %vm6820, %v10327, %v10326
  %v10329 = vpack.c.b16 %v10328, %v10328
  %v10347 = vunpack.c.l.b16 %v10283
  %v10348 = vunpack.c.l.b16 %v10284
  %v10349 = vunpack.c.l.b16 %v10285
  %v10350 = vunpack.c.l.b16 %v10286
  %v10351 = vunpack.c.l.b16 %v10287
  %v10352 = vunpack.c.l.b16 %v10288
  %v10353 = vunpack.c.l.b16 %v10289
  %v10354 = vunpack.c.l.b16 %v10290
  %v10355 = vunpack.c.l.b16 %v10291
  %v10356 = vunpack.c.l.b16 %v10292
  %v10357 = vunpack.c.l.b16 %v10293
  %v10358 = vunpack.c.l.b16 %v10294
  %v10359 = vunpack.c.l.b16 %v10295
  %v10360 = vunpack.c.l.b16 %v10296
  %v10361 = vunpack.c.l.b16 %v10297
  %v10362 = vunpack.c.l.b16 %v10298
  %v10363 = vpack.c.b16 %v10348, %v10347
  %v10364 = vpack.c.b16 %v10350, %v10349
  %v10365 = vpack.c.b16 %v10352, %v10351
  %v10366 = vpack.c.b16 %v10354, %v10353
  %v10367 = vpack.c.b16 %v10356, %v10355
  %v10368 = vpack.c.b16 %v10358, %v10357
  %v10369 = vpack.c.b16 %v10360, %v10359
  %v10370 = vpack.c.b16 %v10362, %v10361
  %10379 = vmatprep.subr.bf16.mxu0 0
  %10380 = vmatpush1.bf16.msra.mxu0 %v10363
  %10381 = vmatprep.subr.bf16.mxu0 0
  %10382 = vmatpush1.bf16.msra.mxu0 %v10364
  %10383 = vmatprep.subr.bf16.mxu0 0
  %10384 = vmatpush1.bf16.msra.mxu0 %v10365
  %10385 = vmatprep.subr.bf16.mxu0 0
  %10386 = vmatpush1.bf16.msra.mxu0 %v10366
  %10387 = vmatprep.subr.bf16.mxu0 0
  %10388 = vmatpush1.bf16.msra.mxu0 %v10367
  %10389 = vmatprep.subr.bf16.mxu0 0
  %10390 = vmatpush1.bf16.msra.mxu0 %v10368
  %10391 = vmatprep.subr.bf16.mxu0 0
  %10392 = vmatpush1.bf16.msra.mxu0 %v10369
  %10393 = vmatprep.subr.bf16.mxu0 0
  %10394 = vmatpush1.bf16.msra.mxu0 %v10370
  %10395 = vmatprep.subr.bf16.mxu0 0
  %10396 = vmatpush1.bf16.msra.mxu0 0
  %10397 = vmatprep.subr.bf16.mxu0 0
  %10398 = vmatpush1.bf16.msra.mxu0 0
  %10399 = vmatprep.subr.bf16.mxu0 0
  %10400 = vmatpush1.bf16.msra.mxu0 0
  %10401 = vmatprep.subr.bf16.mxu0 0
  %10402 = vmatpush1.bf16.msra.mxu0 0
  %10403 = vmatprep.subr.bf16.mxu0 0
  %10404 = vmatpush1.bf16.msra.mxu0 0
  %10405 = vmatprep.subr.bf16.mxu0 0
  %10406 = vmatpush1.bf16.msra.mxu0 0
  %10407 = vmatprep.subr.bf16.mxu0 0
  %10408 = vmatpush1.bf16.msra.mxu0 0
  %10409 = vmatprep.subr.bf16.mxu0 0
  %10410 = vmatpush1.bf16.msra.mxu0 0
  %10411 = vmatprep.mubr.bf16.mxu0 0
  %10412 = vmatmul.mubr.bf16.gmra.mrb[0].mxu0 %v10329
  %v10413 = vpop.f32.mrb[0].mxu0
  %v10414 = vadd.f32 0.0, %v10413
  %v10415 = vpop.f32.mrb[0].mxu0
  %v10416 = vpop.f32.mrb[0].mxu0
  %v10417 = vpop.f32.mrb[0].mxu0
  %10418 = vdwg.mxu0
  %v10419 = vadd.f32 %v10265, %v10414
  %v10420 = vld [vmem:[#allocation6 + $0x18] sm:$0x1]
  %v10421 = vld [vmem:[#allocation6 + $0x38] sm:$0x1]
  %v10422 = vld [vmem:[#allocation6 + $0x58] sm:$0x1]
  %v10423 = vld [vmem:[#allocation6 + $0x78] sm:$0x1]
  %v10424 = vld [vmem:[#allocation6 + $0x98] sm:$0x1]
  %v10425 = vld [vmem:[#allocation6 + $0xb8] sm:$0x1]
  %v10426 = vld [vmem:[#allocation6 + $0xd8] sm:$0x1]
  %v10427 = vld [vmem:[#allocation6 + $0xf8] sm:$0x1]
  %v10428 = vpack.c.bf16 %v10420, %v10420
  %v10429 = vpack.c.bf16 %v10421, %v10421
  %v10430 = vpack.c.bf16 %v10422, %v10422
  %v10431 = vpack.c.bf16 %v10423, %v10423
  %v10432 = vpack.c.bf16 %v10424, %v10424
  %v10433 = vpack.c.bf16 %v10425, %v10425
  %v10434 = vpack.c.bf16 %v10426, %v10426
  %v10435 = vpack.c.bf16 %v10427, %v10427
  %s10436 = scalar_lea.vmem %s7, 1536
  %v10437 = vld [vmem:[%s10436] sm:$0xf]
  %v10438 = vld [vmem:[%s10436 + $0x4] sm:$0xf]
  %v10439 = vld [vmem:[%s10436 + $0x8] sm:$0xf]
  %v10440 = vld [vmem:[%s10436 + $0xc] sm:$0xf]
  %v10441 = vld [vmem:[%s10436 + $0x10] sm:$0xf]
  %v10442 = vld [vmem:[%s10436 + $0x14] sm:$0xf]
  %v10443 = vld [vmem:[%s10436 + $0x18] sm:$0xf]
  %v10444 = vld [vmem:[%s10436 + $0x1c] sm:$0xf]
  %v10445 = vld [vmem:[%s10436 + $0x20] sm:$0xf]
  %v10446 = vld [vmem:[%s10436 + $0x24] sm:$0xf]
  %v10447 = vld [vmem:[%s10436 + $0x28] sm:$0xf]
  %v10448 = vld [vmem:[%s10436 + $0x2c] sm:$0xf]
  %v10449 = vld [vmem:[%s10436 + $0x30] sm:$0xf]
  %v10450 = vld [vmem:[%s10436 + $0x34] sm:$0xf]
  %v10451 = vld [vmem:[%s10436 + $0x38] sm:$0xf]
  %v10452 = vld [vmem:[%s10436 + $0x3c] sm:$0xf]
  %v10461 = vunpack.c.l.b16 %v10428
  %v10462 = vunpack.c.l.b16 %v10429
  %v10463 = vunpack.c.l.b16 %v10430
  %v10464 = vunpack.c.l.b16 %v10431
  %v10465 = vunpack.c.l.b16 %v10432
  %v10466 = vunpack.c.l.b16 %v10433
  %v10467 = vunpack.c.l.b16 %v10434
  %v10468 = vunpack.c.l.b16 %v10435
  %v10469 = vrot.slane %v10462, 7
  %v10470 = vsel %vm6802, %v10469, %v10461
  %v10471 = vrot.slane %v10463, 6
  %v10472 = vsel %vm6805, %v10471, %v10470
  %v10473 = vrot.slane %v10464, 5
  %v10474 = vsel %vm6808, %v10473, %v10472
  %v10475 = vrot.slane %v10465, 4
  %v10476 = vsel %vm6811, %v10475, %v10474
  %v10477 = vrot.slane %v10466, 3
  %v10478 = vsel %vm6814, %v10477, %v10476
  %v10479 = vrot.slane %v10467, 2
  %v10480 = vsel %vm6817, %v10479, %v10478
  %v10481 = vrot.slane %v10468, 1
  %v10482 = vsel %vm6820, %v10481, %v10480
  %v10483 = vpack.c.b16 %v10482, %v10482
  %v10501 = vunpack.c.l.b16 %v10437
  %v10502 = vunpack.c.l.b16 %v10438
  %v10503 = vunpack.c.l.b16 %v10439
  %v10504 = vunpack.c.l.b16 %v10440
  %v10505 = vunpack.c.l.b16 %v10441
  %v10506 = vunpack.c.l.b16 %v10442
  %v10507 = vunpack.c.l.b16 %v10443
  %v10508 = vunpack.c.l.b16 %v10444
  %v10509 = vunpack.c.l.b16 %v10445
  %v10510 = vunpack.c.l.b16 %v10446
  %v10511 = vunpack.c.l.b16 %v10447
  %v10512 = vunpack.c.l.b16 %v10448
  %v10513 = vunpack.c.l.b16 %v10449
  %v10514 = vunpack.c.l.b16 %v10450
  %v10515 = vunpack.c.l.b16 %v10451
  %v10516 = vunpack.c.l.b16 %v10452
  %v10517 = vpack.c.b16 %v10502, %v10501
  %v10518 = vpack.c.b16 %v10504, %v10503
  %v10519 = vpack.c.b16 %v10506, %v10505
  %v10520 = vpack.c.b16 %v10508, %v10507
  %v10521 = vpack.c.b16 %v10510, %v10509
  %v10522 = vpack.c.b16 %v10512, %v10511
  %v10523 = vpack.c.b16 %v10514, %v10513
  %v10524 = vpack.c.b16 %v10516, %v10515
  %10533 = vmatprep.subr.bf16.mxu0 0
  %10534 = vmatpush1.bf16.msra.mxu0 %v10517
  %10535 = vmatprep.subr.bf16.mxu0 0
  %10536 = vmatpush1.bf16.msra.mxu0 %v10518
  %10537 = vmatprep.subr.bf16.mxu0 0
  %10538 = vmatpush1.bf16.msra.mxu0 %v10519
  %10539 = vmatprep.subr.bf16.mxu0 0
  %10540 = vmatpush1.bf16.msra.mxu0 %v10520
  %10541 = vmatprep.subr.bf16.mxu0 0
  %10542 = vmatpush1.bf16.msra.mxu0 %v10521
  %10543 = vmatprep.subr.bf16.mxu0 0
  %10544 = vmatpush1.bf16.msra.mxu0 %v10522
  %10545 = vmatprep.subr.bf16.mxu0 0
  %10546 = vmatpush1.bf16.msra.mxu0 %v10523
  %10547 = vmatprep.subr.bf16.mxu0 0
  %10548 = vmatpush1.bf16.msra.mxu0 %v10524
  %10549 = vmatprep.subr.bf16.mxu0 0
  %10550 = vmatpush1.bf16.msra.mxu0 0
  %10551 = vmatprep.subr.bf16.mxu0 0
  %10552 = vmatpush1.bf16.msra.mxu0 0
  %10553 = vmatprep.subr.bf16.mxu0 0
  %10554 = vmatpush1.bf16.msra.mxu0 0
  %10555 = vmatprep.subr.bf16.mxu0 0
  %10556 = vmatpush1.bf16.msra.mxu0 0
  %10557 = vmatprep.subr.bf16.mxu0 0
  %10558 = vmatpush1.bf16.msra.mxu0 0
  %10559 = vmatprep.subr.bf16.mxu0 0
  %10560 = vmatpush1.bf16.msra.mxu0 0
  %10561 = vmatprep.subr.bf16.mxu0 0
  %10562 = vmatpush1.bf16.msra.mxu0 0
  %10563 = vmatprep.subr.bf16.mxu0 0
  %10564 = vmatpush1.bf16.msra.mxu0 0
  %10565 = vmatprep.mubr.bf16.mxu0 0
  %10566 = vmatmul.mubr.bf16.gmra.mrb[0].mxu0 %v10483
  %v10567 = vpop.f32.mrb[0].mxu0
  %v10568 = vadd.f32 0.0, %v10567
  %v10569 = vpop.f32.mrb[0].mxu0
  %v10570 = vpop.f32.mrb[0].mxu0
  %v10571 = vpop.f32.mrb[0].mxu0
  %10572 = vdwg.mxu0
  %v10573 = vadd.f32 %v10419, %v10568
  %v10574 = vld [vmem:[#allocation6 + $0x19] sm:$0x1]
  %v10575 = vld [vmem:[#allocation6 + $0x39] sm:$0x1]
  %v10576 = vld [vmem:[#allocation6 + $0x59] sm:$0x1]
  %v10577 = vld [vmem:[#allocation6 + $0x79] sm:$0x1]
  %v10578 = vld [vmem:[#allocation6 + $0x99] sm:$0x1]
  %v10579 = vld [vmem:[#allocation6 + $0xb9] sm:$0x1]
  %v10580 = vld [vmem:[#allocation6 + $0xd9] sm:$0x1]
  %v10581 = vld [vmem:[#allocation6 + $0xf9] sm:$0x1]
  %v10582 = vpack.c.bf16 %v10574, %v10574
  %v10583 = vpack.c.bf16 %v10575, %v10575
  %v10584 = vpack.c.bf16 %v10576, %v10576
  %v10585 = vpack.c.bf16 %v10577, %v10577
  %v10586 = vpack.c.bf16 %v10578, %v10578
  %v10587 = vpack.c.bf16 %v10579, %v10579
  %v10588 = vpack.c.bf16 %v10580, %v10580
  %v10589 = vpack.c.bf16 %v10581, %v10581
  %s10590 = scalar_lea.vmem %s7, 1600
  %v10591 = vld [vmem:[%s10590] sm:$0xf]
  %v10592 = vld [vmem:[%s10590 + $0x4] sm:$0xf]
  %v10593 = vld [vmem:[%s10590 + $0x8] sm:$0xf]
  %v10594 = vld [vmem:[%s10590 + $0xc] sm:$0xf]
  %v10595 = vld [vmem:[%s10590 + $0x10] sm:$0xf]
  %v10596 = vld [vmem:[%s10590 + $0x14] sm:$0xf]
  %v10597 = vld [vmem:[%s10590 + $0x18] sm:$0xf]
  %v10598 = vld [vmem:[%s10590 + $0x1c] sm:$0xf]
  %v10599 = vld [vmem:[%s10590 + $0x20] sm:$0xf]
  %v10600 = vld [vmem:[%s10590 + $0x24] sm:$0xf]
  %v10601 = vld [vmem:[%s10590 + $0x28] sm:$0xf]
  %v10602 = vld [vmem:[%s10590 + $0x2c] sm:$0xf]
  %v10603 = vld [vmem:[%s10590 + $0x30] sm:$0xf]
  %v10604 = vld [vmem:[%s10590 + $0x34] sm:$0xf]
  %v10605 = vld [vmem:[%s10590 + $0x38] sm:$0xf]
  %v10606 = vld [vmem:[%s10590 + $0x3c] sm:$0xf]
  %v10615 = vunpack.c.l.b16 %v10582
  %v10616 = vunpack.c.l.b16 %v10583
  %v10617 = vunpack.c.l.b16 %v10584
  %v10618 = vunpack.c.l.b16 %v10585
  %v10619 = vunpack.c.l.b16 %v10586
  %v10620 = vunpack.c.l.b16 %v10587
  %v10621 = vunpack.c.l.b16 %v10588
  %v10622 = vunpack.c.l.b16 %v10589
  %v10623 = vrot.slane %v10616, 7
  %v10624 = vsel %vm6802, %v10623, %v10615
  %v10625 = vrot.slane %v10617, 6
  %v10626 = vsel %vm6805, %v10625, %v10624
  %v10627 = vrot.slane %v10618, 5
  %v10628 = vsel %vm6808, %v10627, %v10626
  %v10629 = vrot.slane %v10619, 4
  %v10630 = vsel %vm6811, %v10629, %v10628
  %v10631 = vrot.slane %v10620, 3
  %v10632 = vsel %vm6814, %v10631, %v10630
  %v10633 = vrot.slane %v10621, 2
  %v10634 = vsel %vm6817, %v10633, %v10632
  %v10635 = vrot.slane %v10622, 1
  %v10636 = vsel %vm6820, %v10635, %v10634
  %v10637 = vpack.c.b16 %v10636, %v10636
  %v10655 = vunpack.c.l.b16 %v10591
  %v10656 = vunpack.c.l.b16 %v10592
  %v10657 = vunpack.c.l.b16 %v10593
  %v10658 = vunpack.c.l.b16 %v10594
  %v10659 = vunpack.c.l.b16 %v10595
  %v10660 = vunpack.c.l.b16 %v10596
  %v10661 = vunpack.c.l.b16 %v10597
  %v10662 = vunpack.c.l.b16 %v10598
  %v10663 = vunpack.c.l.b16 %v10599
  %v10664 = vunpack.c.l.b16 %v10600
  %v10665 = vunpack.c.l.b16 %v10601
  %v10666 = vunpack.c.l.b16 %v10602
  %v10667 = vunpack.c.l.b16 %v10603
  %v10668 = vunpack.c.l.b16 %v10604
  %v10669 = vunpack.c.l.b16 %v10605
  %v10670 = vunpack.c.l.b16 %v10606
  %v10671 = vpack.c.b16 %v10656, %v10655
  %v10672 = vpack.c.b16 %v10658, %v10657
  %v10673 = vpack.c.b16 %v10660, %v10659
  %v10674 = vpack.c.b16 %v10662, %v10661
  %v10675 = vpack.c.b16 %v10664, %v10663
  %v10676 = vpack.c.b16 %v10666, %v10665
  %v10677 = vpack.c.b16 %v10668, %v10667
  %v10678 = vpack.c.b16 %v10670, %v10669
  %10687 = vmatprep.subr.bf16.mxu0 0
  %10688 = vmatpush1.bf16.msra.mxu0 %v10671
  %10689 = vmatprep.subr.bf16.mxu0 0
  %10690 = vmatpush1.bf16.msra.mxu0 %v10672
  %10691 = vmatprep.subr.bf16.mxu0 0
  %10692 = vmatpush1.bf16.msra.mxu0 %v10673
  %10693 = vmatprep.subr.bf16.mxu0 0
  %10694 = vmatpush1.bf16.msra.mxu0 %v10674
  %10695 = vmatprep.subr.bf16.mxu0 0
  %10696 = vmatpush1.bf16.msra.mxu0 %v10675
  %10697 = vmatprep.subr.bf16.mxu0 0
  %10698 = vmatpush1.bf16.msra.mxu0 %v10676
  %10699 = vmatprep.subr.bf16.mxu0 0
  %10700 = vmatpush1.bf16.msra.mxu0 %v10677
  %10701 = vmatprep.subr.bf16.mxu0 0
  %10702 = vmatpush1.bf16.msra.mxu0 %v10678
  %10703 = vmatprep.subr.bf16.mxu0 0
  %10704 = vmatpush1.bf16.msra.mxu0 0
  %10705 = vmatprep.subr.bf16.mxu0 0
  %10706 = vmatpush1.bf16.msra.mxu0 0
  %10707 = vmatprep.subr.bf16.mxu0 0
  %10708 = vmatpush1.bf16.msra.mxu0 0
  %10709 = vmatprep.subr.bf16.mxu0 0
  %10710 = vmatpush1.bf16.msra.mxu0 0
  %10711 = vmatprep.subr.bf16.mxu0 0
  %10712 = vmatpush1.bf16.msra.mxu0 0
  %10713 = vmatprep.subr.bf16.mxu0 0
  %10714 = vmatpush1.bf16.msra.mxu0 0
  %10715 = vmatprep.subr.bf16.mxu0 0
  %10716 = vmatpush1.bf16.msra.mxu0 0
  %10717 = vmatprep.subr.bf16.mxu0 0
  %10718 = vmatpush1.bf16.msra.mxu0 0
  %10719 = vmatprep.mubr.bf16.mxu0 0
  %10720 = vmatmul.mubr.bf16.gmra.mrb[0].mxu0 %v10637
  %v10721 = vpop.f32.mrb[0].mxu0
  %v10722 = vadd.f32 0.0, %v10721
  %v10723 = vpop.f32.mrb[0].mxu0
  %v10724 = vpop.f32.mrb[0].mxu0
  %v10725 = vpop.f32.mrb[0].mxu0
  %10726 = vdwg.mxu0
  %v10727 = vadd.f32 %v10573, %v10722
  %v10728 = vld [vmem:[#allocation6 + $0x1a] sm:$0x1]
  %v10729 = vld [vmem:[#allocation6 + $0x3a] sm:$0x1]
  %v10730 = vld [vmem:[#allocation6 + $0x5a] sm:$0x1]
  %v10731 = vld [vmem:[#allocation6 + $0x7a] sm:$0x1]
  %v10732 = vld [vmem:[#allocation6 + $0x9a] sm:$0x1]
  %v10733 = vld [vmem:[#allocation6 + $0xba] sm:$0x1]
  %v10734 = vld [vmem:[#allocation6 + $0xda] sm:$0x1]
  %v10735 = vld [vmem:[#allocation6 + $0xfa] sm:$0x1]
  %v10736 = vpack.c.bf16 %v10728, %v10728
  %v10737 = vpack.c.bf16 %v10729, %v10729
  %v10738 = vpack.c.bf16 %v10730, %v10730
  %v10739 = vpack.c.bf16 %v10731, %v10731
  %v10740 = vpack.c.bf16 %v10732, %v10732
  %v10741 = vpack.c.bf16 %v10733, %v10733
  %v10742 = vpack.c.bf16 %v10734, %v10734
  %v10743 = vpack.c.bf16 %v10735, %v10735
  %s10744 = scalar_lea.vmem %s7, 1664
  %v10745 = vld [vmem:[%s10744] sm:$0xf]
  %v10746 = vld [vmem:[%s10744 + $0x4] sm:$0xf]
  %v10747 = vld [vmem:[%s10744 + $0x8] sm:$0xf]
  %v10748 = vld [vmem:[%s10744 + $0xc] sm:$0xf]
  %v10749 = vld [vmem:[%s10744 + $0x10] sm:$0xf]
  %v10750 = vld [vmem:[%s10744 + $0x14] sm:$0xf]
  %v10751 = vld [vmem:[%s10744 + $0x18] sm:$0xf]
  %v10752 = vld [vmem:[%s10744 + $0x1c] sm:$0xf]
  %v10753 = vld [vmem:[%s10744 + $0x20] sm:$0xf]
  %v10754 = vld [vmem:[%s10744 + $0x24] sm:$0xf]
  %v10755 = vld [vmem:[%s10744 + $0x28] sm:$0xf]
  %v10756 = vld [vmem:[%s10744 + $0x2c] sm:$0xf]
  %v10757 = vld [vmem:[%s10744 + $0x30] sm:$0xf]
  %v10758 = vld [vmem:[%s10744 + $0x34] sm:$0xf]
  %v10759 = vld [vmem:[%s10744 + $0x38] sm:$0xf]
  %v10760 = vld [vmem:[%s10744 + $0x3c] sm:$0xf]
  %v10769 = vunpack.c.l.b16 %v10736
  %v10770 = vunpack.c.l.b16 %v10737
  %v10771 = vunpack.c.l.b16 %v10738
  %v10772 = vunpack.c.l.b16 %v10739
  %v10773 = vunpack.c.l.b16 %v10740
  %v10774 = vunpack.c.l.b16 %v10741
  %v10775 = vunpack.c.l.b16 %v10742
  %v10776 = vunpack.c.l.b16 %v10743
  %v10777 = vrot.slane %v10770, 7
  %v10778 = vsel %vm6802, %v10777, %v10769
  %v10779 = vrot.slane %v10771, 6
  %v10780 = vsel %vm6805, %v10779, %v10778
  %v10781 = vrot.slane %v10772, 5
  %v10782 = vsel %vm6808, %v10781, %v10780
  %v10783 = vrot.slane %v10773, 4
  %v10784 = vsel %vm6811, %v10783, %v10782
  %v10785 = vrot.slane %v10774, 3
  %v10786 = vsel %vm6814, %v10785, %v10784
  %v10787 = vrot.slane %v10775, 2
  %v10788 = vsel %vm6817, %v10787, %v10786
  %v10789 = vrot.slane %v10776, 1
  %v10790 = vsel %vm6820, %v10789, %v10788
  %v10791 = vpack.c.b16 %v10790, %v10790
  %v10809 = vunpack.c.l.b16 %v10745
  %v10810 = vunpack.c.l.b16 %v10746
  %v10811 = vunpack.c.l.b16 %v10747
  %v10812 = vunpack.c.l.b16 %v10748
  %v10813 = vunpack.c.l.b16 %v10749
  %v10814 = vunpack.c.l.b16 %v10750
  %v10815 = vunpack.c.l.b16 %v10751
  %v10816 = vunpack.c.l.b16 %v10752
  %v10817 = vunpack.c.l.b16 %v10753
  %v10818 = vunpack.c.l.b16 %v10754
  %v10819 = vunpack.c.l.b16 %v10755
  %v10820 = vunpack.c.l.b16 %v10756
  %v10821 = vunpack.c.l.b16 %v10757
  %v10822 = vunpack.c.l.b16 %v10758
  %v10823 = vunpack.c.l.b16 %v10759
  %v10824 = vunpack.c.l.b16 %v10760
  %v10825 = vpack.c.b16 %v10810, %v10809
  %v10826 = vpack.c.b16 %v10812, %v10811
  %v10827 = vpack.c.b16 %v10814, %v10813
  %v10828 = vpack.c.b16 %v10816, %v10815
  %v10829 = vpack.c.b16 %v10818, %v10817
  %v10830 = vpack.c.b16 %v10820, %v10819
  %v10831 = vpack.c.b16 %v10822, %v10821
  %v10832 = vpack.c.b16 %v10824, %v10823
  %10841 = vmatprep.subr.bf16.mxu0 0
  %10842 = vmatpush1.bf16.msra.mxu0 %v10825
  %10843 = vmatprep.subr.bf16.mxu0 0
  %10844 = vmatpush1.bf16.msra.mxu0 %v10826
  %10845 = vmatprep.subr.bf16.mxu0 0
  %10846 = vmatpush1.bf16.msra.mxu0 %v10827
  %10847 = vmatprep.subr.bf16.mxu0 0
  %10848 = vmatpush1.bf16.msra.mxu0 %v10828
  %10849 = vmatprep.subr.bf16.mxu0 0
  %10850 = vmatpush1.bf16.msra.mxu0 %v10829
  %10851 = vmatprep.subr.bf16.mxu0 0
  %10852 = vmatpush1.bf16.msra.mxu0 %v10830
  %10853 = vmatprep.subr.bf16.mxu0 0
  %10854 = vmatpush1.bf16.msra.mxu0 %v10831
  %10855 = vmatprep.subr.bf16.mxu0 0
  %10856 = vmatpush1.bf16.msra.mxu0 %v10832
  %10857 = vmatprep.subr.bf16.mxu0 0
  %10858 = vmatpush1.bf16.msra.mxu0 0
  %10859 = vmatprep.subr.bf16.mxu0 0
  %10860 = vmatpush1.bf16.msra.mxu0 0
  %10861 = vmatprep.subr.bf16.mxu0 0
  %10862 = vmatpush1.bf16.msra.mxu0 0
  %10863 = vmatprep.subr.bf16.mxu0 0
  %10864 = vmatpush1.bf16.msra.mxu0 0
  %10865 = vmatprep.subr.bf16.mxu0 0
  %10866 = vmatpush1.bf16.msra.mxu0 0
  %10867 = vmatprep.subr.bf16.mxu0 0
  %10868 = vmatpush1.bf16.msra.mxu0 0
  %10869 = vmatprep.subr.bf16.mxu0 0
  %10870 = vmatpush1.bf16.msra.mxu0 0
  %10871 = vmatprep.subr.bf16.mxu0 0
  %10872 = vmatpush1.bf16.msra.mxu0 0
  %10873 = vmatprep.mubr.bf16.mxu0 0
  %10874 = vmatmul.mubr.bf16.gmra.mrb[0].mxu0 %v10791
  %v10875 = vpop.f32.mrb[0].mxu0
  %v10876 = vadd.f32 0.0, %v10875
  %v10877 = vpop.f32.mrb[0].mxu0
  %v10878 = vpop.f32.mrb[0].mxu0
  %v10879 = vpop.f32.mrb[0].mxu0
  %10880 = vdwg.mxu0
  %v10881 = vadd.f32 %v10727, %v10876
  %v10882 = vld [vmem:[#allocation6 + $0x1b] sm:$0x1]
  %v10883 = vld [vmem:[#allocation6 + $0x3b] sm:$0x1]
  %v10884 = vld [vmem:[#allocation6 + $0x5b] sm:$0x1]
  %v10885 = vld [vmem:[#allocation6 + $0x7b] sm:$0x1]
  %v10886 = vld [vmem:[#allocation6 + $0x9b] sm:$0x1]
  %v10887 = vld [vmem:[#allocation6 + $0xbb] sm:$0x1]
  %v10888 = vld [vmem:[#allocation6 + $0xdb] sm:$0x1]
  %v10889 = vld [vmem:[#allocation6 + $0xfb] sm:$0x1]
  %v10890 = vpack.c.bf16 %v10882, %v10882
  %v10891 = vpack.c.bf16 %v10883, %v10883
  %v10892 = vpack.c.bf16 %v10884, %v10884
  %v10893 = vpack.c.bf16 %v10885, %v10885
  %v10894 = vpack.c.bf16 %v10886, %v10886
  %v10895 = vpack.c.bf16 %v10887, %v10887
  %v10896 = vpack.c.bf16 %v10888, %v10888
  %v10897 = vpack.c.bf16 %v10889, %v10889
  %s10898 = scalar_lea.vmem %s7, 1728
  %v10899 = vld [vmem:[%s10898] sm:$0xf]
  %v10900 = vld [vmem:[%s10898 + $0x4] sm:$0xf]
  %v10901 = vld [vmem:[%s10898 + $0x8] sm:$0xf]
  %v10902 = vld [vmem:[%s10898 + $0xc] sm:$0xf]
  %v10903 = vld [vmem:[%s10898 + $0x10] sm:$0xf]
  %v10904 = vld [vmem:[%s10898 + $0x14] sm:$0xf]
  %v10905 = vld [vmem:[%s10898 + $0x18] sm:$0xf]
  %v10906 = vld [vmem:[%s10898 + $0x1c] sm:$0xf]
  %v10907 = vld [vmem:[%s10898 + $0x20] sm:$0xf]
  %v10908 = vld [vmem:[%s10898 + $0x24] sm:$0xf]
  %v10909 = vld [vmem:[%s10898 + $0x28] sm:$0xf]
  %v10910 = vld [vmem:[%s10898 + $0x2c] sm:$0xf]
  %v10911 = vld [vmem:[%s10898 + $0x30] sm:$0xf]
  %v10912 = vld [vmem:[%s10898 + $0x34] sm:$0xf]
  %v10913 = vld [vmem:[%s10898 + $0x38] sm:$0xf]
  %v10914 = vld [vmem:[%s10898 + $0x3c] sm:$0xf]
  %v10923 = vunpack.c.l.b16 %v10890
  %v10924 = vunpack.c.l.b16 %v10891
  %v10925 = vunpack.c.l.b16 %v10892
  %v10926 = vunpack.c.l.b16 %v10893
  %v10927 = vunpack.c.l.b16 %v10894
  %v10928 = vunpack.c.l.b16 %v10895
  %v10929 = vunpack.c.l.b16 %v10896
  %v10930 = vunpack.c.l.b16 %v10897
  %v10931 = vrot.slane %v10924, 7
  %v10932 = vsel %vm6802, %v10931, %v10923
  %v10933 = vrot.slane %v10925, 6
  %v10934 = vsel %vm6805, %v10933, %v10932
  %v10935 = vrot.slane %v10926, 5
  %v10936 = vsel %vm6808, %v10935, %v10934
  %v10937 = vrot.slane %v10927, 4
  %v10938 = vsel %vm6811, %v10937, %v10936
  %v10939 = vrot.slane %v10928, 3
  %v10940 = vsel %vm6814, %v10939, %v10938
  %v10941 = vrot.slane %v10929, 2
  %v10942 = vsel %vm6817, %v10941, %v10940
  %v10943 = vrot.slane %v10930, 1
  %v10944 = vsel %vm6820, %v10943, %v10942
  %v10945 = vpack.c.b16 %v10944, %v10944
  %v10963 = vunpack.c.l.b16 %v10899
  %v10964 = vunpack.c.l.b16 %v10900
  %v10965 = vunpack.c.l.b16 %v10901
  %v10966 = vunpack.c.l.b16 %v10902
  %v10967 = vunpack.c.l.b16 %v10903
  %v10968 = vunpack.c.l.b16 %v10904
  %v10969 = vunpack.c.l.b16 %v10905
  %v10970 = vunpack.c.l.b16 %v10906
  %v10971 = vunpack.c.l.b16 %v10907
  %v10972 = vunpack.c.l.b16 %v10908
  %v10973 = vunpack.c.l.b16 %v10909
  %v10974 = vunpack.c.l.b16 %v10910
  %v10975 = vunpack.c.l.b16 %v10911
  %v10976 = vunpack.c.l.b16 %v10912
  %v10977 = vunpack.c.l.b16 %v10913
  %v10978 = vunpack.c.l.b16 %v10914
  %v10979 = vpack.c.b16 %v10964, %v10963
  %v10980 = vpack.c.b16 %v10966, %v10965
  %v10981 = vpack.c.b16 %v10968, %v10967
  %v10982 = vpack.c.b16 %v10970, %v10969
  %v10983 = vpack.c.b16 %v10972, %v10971
  %v10984 = vpack.c.b16 %v10974, %v10973
  %v10985 = vpack.c.b16 %v10976, %v10975
  %v10986 = vpack.c.b16 %v10978, %v10977
  %10995 = vmatprep.subr.bf16.mxu0 0
  %10996 = vmatpush1.bf16.msra.mxu0 %v10979
  %10997 = vmatprep.subr.bf16.mxu0 0
  %10998 = vmatpush1.bf16.msra.mxu0 %v10980
  %10999 = vmatprep.subr.bf16.mxu0 0
  %11000 = vmatpush1.bf16.msra.mxu0 %v10981
  %11001 = vmatprep.subr.bf16.mxu0 0
  %11002 = vmatpush1.bf16.msra.mxu0 %v10982
  %11003 = vmatprep.subr.bf16.mxu0 0
  %11004 = vmatpush1.bf16.msra.mxu0 %v10983
  %11005 = vmatprep.subr.bf16.mxu0 0
  %11006 = vmatpush1.bf16.msra.mxu0 %v10984
  %11007 = vmatprep.subr.bf16.mxu0 0
  %11008 = vmatpush1.bf16.msra.mxu0 %v10985
  %11009 = vmatprep.subr.bf16.mxu0 0
  %11010 = vmatpush1.bf16.msra.mxu0 %v10986
  %11011 = vmatprep.subr.bf16.mxu0 0
  %11012 = vmatpush1.bf16.msra.mxu0 0
  %11013 = vmatprep.subr.bf16.mxu0 0
  %11014 = vmatpush1.bf16.msra.mxu0 0
  %11015 = vmatprep.subr.bf16.mxu0 0
  %11016 = vmatpush1.bf16.msra.mxu0 0
  %11017 = vmatprep.subr.bf16.mxu0 0
  %11018 = vmatpush1.bf16.msra.mxu0 0
  %11019 = vmatprep.subr.bf16.mxu0 0
  %11020 = vmatpush1.bf16.msra.mxu0 0
  %11021 = vmatprep.subr.bf16.mxu0 0
  %11022 = vmatpush1.bf16.msra.mxu0 0
  %11023 = vmatprep.subr.bf16.mxu0 0
  %11024 = vmatpush1.bf16.msra.mxu0 0
  %11025 = vmatprep.subr.bf16.mxu0 0
  %11026 = vmatpush1.bf16.msra.mxu0 0
  %11027 = vmatprep.mubr.bf16.mxu0 0
  %11028 = vmatmul.mubr.bf16.gmra.mrb[0].mxu0 %v10945
  %v11029 = vpop.f32.mrb[0].mxu0
  %v11030 = vadd.f32 0.0, %v11029
  %v11031 = vpop.f32.mrb[0].mxu0
  %v11032 = vpop.f32.mrb[0].mxu0
  %v11033 = vpop.f32.mrb[0].mxu0
  %11034 = vdwg.mxu0
  %v11035 = vadd.f32 %v10881, %v11030
  %v11036 = vld [vmem:[#allocation6 + $0x1c] sm:$0x1]
  %v11037 = vld [vmem:[#allocation6 + $0x3c] sm:$0x1]
  %v11038 = vld [vmem:[#allocation6 + $0x5c] sm:$0x1]
  %v11039 = vld [vmem:[#allocation6 + $0x7c] sm:$0x1]
  %v11040 = vld [vmem:[#allocation6 + $0x9c] sm:$0x1]
  %v11041 = vld [vmem:[#allocation6 + $0xbc] sm:$0x1]
  %v11042 = vld [vmem:[#allocation6 + $0xdc] sm:$0x1]
  %v11043 = vld [vmem:[#allocation6 + $0xfc] sm:$0x1]
  %v11044 = vpack.c.bf16 %v11036, %v11036
  %v11045 = vpack.c.bf16 %v11037, %v11037
  %v11046 = vpack.c.bf16 %v11038, %v11038
  %v11047 = vpack.c.bf16 %v11039, %v11039
  %v11048 = vpack.c.bf16 %v11040, %v11040
  %v11049 = vpack.c.bf16 %v11041, %v11041
  %v11050 = vpack.c.bf16 %v11042, %v11042
  %v11051 = vpack.c.bf16 %v11043, %v11043
  %s11052 = scalar_lea.vmem %s7, 1792
  %v11053 = vld [vmem:[%s11052] sm:$0xf]
  %v11054 = vld [vmem:[%s11052 + $0x4] sm:$0xf]
  %v11055 = vld [vmem:[%s11052 + $0x8] sm:$0xf]
  %v11056 = vld [vmem:[%s11052 + $0xc] sm:$0xf]
  %v11057 = vld [vmem:[%s11052 + $0x10] sm:$0xf]
  %v11058 = vld [vmem:[%s11052 + $0x14] sm:$0xf]
  %v11059 = vld [vmem:[%s11052 + $0x18] sm:$0xf]
  %v11060 = vld [vmem:[%s11052 + $0x1c] sm:$0xf]
  %v11061 = vld [vmem:[%s11052 + $0x20] sm:$0xf]
  %v11062 = vld [vmem:[%s11052 + $0x24] sm:$0xf]
  %v11063 = vld [vmem:[%s11052 + $0x28] sm:$0xf]
  %v11064 = vld [vmem:[%s11052 + $0x2c] sm:$0xf]
  %v11065 = vld [vmem:[%s11052 + $0x30] sm:$0xf]
  %v11066 = vld [vmem:[%s11052 + $0x34] sm:$0xf]
  %v11067 = vld [vmem:[%s11052 + $0x38] sm:$0xf]
  %v11068 = vld [vmem:[%s11052 + $0x3c] sm:$0xf]
  %v11077 = vunpack.c.l.b16 %v11044
  %v11078 = vunpack.c.l.b16 %v11045
  %v11079 = vunpack.c.l.b16 %v11046
  %v11080 = vunpack.c.l.b16 %v11047
  %v11081 = vunpack.c.l.b16 %v11048
  %v11082 = vunpack.c.l.b16 %v11049
  %v11083 = vunpack.c.l.b16 %v11050
  %v11084 = vunpack.c.l.b16 %v11051
  %v11085 = vrot.slane %v11078, 7
  %v11086 = vsel %vm6802, %v11085, %v11077
  %v11087 = vrot.slane %v11079, 6
  %v11088 = vsel %vm6805, %v11087, %v11086
  %v11089 = vrot.slane %v11080, 5
  %v11090 = vsel %vm6808, %v11089, %v11088
  %v11091 = vrot.slane %v11081, 4
  %v11092 = vsel %vm6811, %v11091, %v11090
  %v11093 = vrot.slane %v11082, 3
  %v11094 = vsel %vm6814, %v11093, %v11092
  %v11095 = vrot.slane %v11083, 2
  %v11096 = vsel %vm6817, %v11095, %v11094
  %v11097 = vrot.slane %v11084, 1
  %v11098 = vsel %vm6820, %v11097, %v11096
  %v11099 = vpack.c.b16 %v11098, %v11098
  %v11117 = vunpack.c.l.b16 %v11053
  %v11118 = vunpack.c.l.b16 %v11054
  %v11119 = vunpack.c.l.b16 %v11055
  %v11120 = vunpack.c.l.b16 %v11056
  %v11121 = vunpack.c.l.b16 %v11057
  %v11122 = vunpack.c.l.b16 %v11058
  %v11123 = vunpack.c.l.b16 %v11059
  %v11124 = vunpack.c.l.b16 %v11060
  %v11125 = vunpack.c.l.b16 %v11061
  %v11126 = vunpack.c.l.b16 %v11062
  %v11127 = vunpack.c.l.b16 %v11063
  %v11128 = vunpack.c.l.b16 %v11064
  %v11129 = vunpack.c.l.b16 %v11065
  %v11130 = vunpack.c.l.b16 %v11066
  %v11131 = vunpack.c.l.b16 %v11067
  %v11132 = vunpack.c.l.b16 %v11068
  %v11133 = vpack.c.b16 %v11118, %v11117
  %v11134 = vpack.c.b16 %v11120, %v11119
  %v11135 = vpack.c.b16 %v11122, %v11121
  %v11136 = vpack.c.b16 %v11124, %v11123
  %v11137 = vpack.c.b16 %v11126, %v11125
  %v11138 = vpack.c.b16 %v11128, %v11127
  %v11139 = vpack.c.b16 %v11130, %v11129
  %v11140 = vpack.c.b16 %v11132, %v11131
  %11149 = vmatprep.subr.bf16.mxu0 0
  %11150 = vmatpush1.bf16.msra.mxu0 %v11133
  %11151 = vmatprep.subr.bf16.mxu0 0
  %11152 = vmatpush1.bf16.msra.mxu0 %v11134
  %11153 = vmatprep.subr.bf16.mxu0 0
  %11154 = vmatpush1.bf16.msra.mxu0 %v11135
  %11155 = vmatprep.subr.bf16.mxu0 0
  %11156 = vmatpush1.bf16.msra.mxu0 %v11136
  %11157 = vmatprep.subr.bf16.mxu0 0
  %11158 = vmatpush1.bf16.msra.mxu0 %v11137
  %11159 = vmatprep.subr.bf16.mxu0 0
  %11160 = vmatpush1.bf16.msra.mxu0 %v11138
  %11161 = vmatprep.subr.bf16.mxu0 0
  %11162 = vmatpush1.bf16.msra.mxu0 %v11139
  %11163 = vmatprep.subr.bf16.mxu0 0
  %11164 = vmatpush1.bf16.msra.mxu0 %v11140
  %11165 = vmatprep.subr.bf16.mxu0 0
  %11166 = vmatpush1.bf16.msra.mxu0 0
  %11167 = vmatprep.subr.bf16.mxu0 0
  %11168 = vmatpush1.bf16.msra.mxu0 0
  %11169 = vmatprep.subr.bf16.mxu0 0
  %11170 = vmatpush1.bf16.msra.mxu0 0
  %11171 = vmatprep.subr.bf16.mxu0 0
  %11172 = vmatpush1.bf16.msra.mxu0 0
  %11173 = vmatprep.subr.bf16.mxu0 0
  %11174 = vmatpush1.bf16.msra.mxu0 0
  %11175 = vmatprep.subr.bf16.mxu0 0
  %11176 = vmatpush1.bf16.msra.mxu0 0
  %11177 = vmatprep.subr.bf16.mxu0 0
  %11178 = vmatpush1.bf16.msra.mxu0 0
  %11179 = vmatprep.subr.bf16.mxu0 0
  %11180 = vmatpush1.bf16.msra.mxu0 0
  %11181 = vmatprep.mubr.bf16.mxu0 0
  %11182 = vmatmul.mubr.bf16.gmra.mrb[0].mxu0 %v11099
  %v11183 = vpop.f32.mrb[0].mxu0
  %v11184 = vadd.f32 0.0, %v11183
  %v11185 = vpop.f32.mrb[0].mxu0
  %v11186 = vpop.f32.mrb[0].mxu0
  %v11187 = vpop.f32.mrb[0].mxu0
  %11188 = vdwg.mxu0
  %v11189 = vadd.f32 %v11035, %v11184
  %v11190 = vld [vmem:[#allocation6 + $0x1d] sm:$0x1]
  %v11191 = vld [vmem:[#allocation6 + $0x3d] sm:$0x1]
  %v11192 = vld [vmem:[#allocation6 + $0x5d] sm:$0x1]
  %v11193 = vld [vmem:[#allocation6 + $0x7d] sm:$0x1]
  %v11194 = vld [vmem:[#allocation6 + $0x9d] sm:$0x1]
  %v11195 = vld [vmem:[#allocation6 + $0xbd] sm:$0x1]
  %v11196 = vld [vmem:[#allocation6 + $0xdd] sm:$0x1]
  %v11197 = vld [vmem:[#allocation6 + $0xfd] sm:$0x1]
  %v11198 = vpack.c.bf16 %v11190, %v11190
  %v11199 = vpack.c.bf16 %v11191, %v11191
  %v11200 = vpack.c.bf16 %v11192, %v11192
  %v11201 = vpack.c.bf16 %v11193, %v11193
  %v11202 = vpack.c.bf16 %v11194, %v11194
  %v11203 = vpack.c.bf16 %v11195, %v11195
  %v11204 = vpack.c.bf16 %v11196, %v11196
  %v11205 = vpack.c.bf16 %v11197, %v11197
  %s11206 = scalar_lea.vmem %s7, 1856
  %v11207 = vld [vmem:[%s11206] sm:$0xf]
  %v11208 = vld [vmem:[%s11206 + $0x4] sm:$0xf]
  %v11209 = vld [vmem:[%s11206 + $0x8] sm:$0xf]
  %v11210 = vld [vmem:[%s11206 + $0xc] sm:$0xf]
  %v11211 = vld [vmem:[%s11206 + $0x10] sm:$0xf]
  %v11212 = vld [vmem:[%s11206 + $0x14] sm:$0xf]
  %v11213 = vld [vmem:[%s11206 + $0x18] sm:$0xf]
  %v11214 = vld [vmem:[%s11206 + $0x1c] sm:$0xf]
  %v11215 = vld [vmem:[%s11206 + $0x20] sm:$0xf]
  %v11216 = vld [vmem:[%s11206 + $0x24] sm:$0xf]
  %v11217 = vld [vmem:[%s11206 + $0x28] sm:$0xf]
  %v11218 = vld [vmem:[%s11206 + $0x2c] sm:$0xf]
  %v11219 = vld [vmem:[%s11206 + $0x30] sm:$0xf]
  %v11220 = vld [vmem:[%s11206 + $0x34] sm:$0xf]
  %v11221 = vld [vmem:[%s11206 + $0x38] sm:$0xf]
  %v11222 = vld [vmem:[%s11206 + $0x3c] sm:$0xf]
  %v11231 = vunpack.c.l.b16 %v11198
  %v11232 = vunpack.c.l.b16 %v11199
  %v11233 = vunpack.c.l.b16 %v11200
  %v11234 = vunpack.c.l.b16 %v11201
  %v11235 = vunpack.c.l.b16 %v11202
  %v11236 = vunpack.c.l.b16 %v11203
  %v11237 = vunpack.c.l.b16 %v11204
  %v11238 = vunpack.c.l.b16 %v11205
  %v11239 = vrot.slane %v11232, 7
  %v11240 = vsel %vm6802, %v11239, %v11231
  %v11241 = vrot.slane %v11233, 6
  %v11242 = vsel %vm6805, %v11241, %v11240
  %v11243 = vrot.slane %v11234, 5
  %v11244 = vsel %vm6808, %v11243, %v11242
  %v11245 = vrot.slane %v11235, 4
  %v11246 = vsel %vm6811, %v11245, %v11244
  %v11247 = vrot.slane %v11236, 3
  %v11248 = vsel %vm6814, %v11247, %v11246
  %v11249 = vrot.slane %v11237, 2
  %v11250 = vsel %vm6817, %v11249, %v11248
  %v11251 = vrot.slane %v11238, 1
  %v11252 = vsel %vm6820, %v11251, %v11250
  %v11253 = vpack.c.b16 %v11252, %v11252
  %v11271 = vunpack.c.l.b16 %v11207
  %v11272 = vunpack.c.l.b16 %v11208
  %v11273 = vunpack.c.l.b16 %v11209
  %v11274 = vunpack.c.l.b16 %v11210
  %v11275 = vunpack.c.l.b16 %v11211
  %v11276 = vunpack.c.l.b16 %v11212
  %v11277 = vunpack.c.l.b16 %v11213
  %v11278 = vunpack.c.l.b16 %v11214
  %v11279 = vunpack.c.l.b16 %v11215
  %v11280 = vunpack.c.l.b16 %v11216
  %v11281 = vunpack.c.l.b16 %v11217
  %v11282 = vunpack.c.l.b16 %v11218
  %v11283 = vunpack.c.l.b16 %v11219
  %v11284 = vunpack.c.l.b16 %v11220
  %v11285 = vunpack.c.l.b16 %v11221
  %v11286 = vunpack.c.l.b16 %v11222
  %v11287 = vpack.c.b16 %v11272, %v11271
  %v11288 = vpack.c.b16 %v11274, %v11273
  %v11289 = vpack.c.b16 %v11276, %v11275
  %v11290 = vpack.c.b16 %v11278, %v11277
  %v11291 = vpack.c.b16 %v11280, %v11279
  %v11292 = vpack.c.b16 %v11282, %v11281
  %v11293 = vpack.c.b16 %v11284, %v11283
  %v11294 = vpack.c.b16 %v11286, %v11285
  %11303 = vmatprep.subr.bf16.mxu0 0
  %11304 = vmatpush1.bf16.msra.mxu0 %v11287
  %11305 = vmatprep.subr.bf16.mxu0 0
  %11306 = vmatpush1.bf16.msra.mxu0 %v11288
  %11307 = vmatprep.subr.bf16.mxu0 0
  %11308 = vmatpush1.bf16.msra.mxu0 %v11289
  %11309 = vmatprep.subr.bf16.mxu0 0
  %11310 = vmatpush1.bf16.msra.mxu0 %v11290
  %11311 = vmatprep.subr.bf16.mxu0 0
  %11312 = vmatpush1.bf16.msra.mxu0 %v11291
  %11313 = vmatprep.subr.bf16.mxu0 0
  %11314 = vmatpush1.bf16.msra.mxu0 %v11292
  %11315 = vmatprep.subr.bf16.mxu0 0
  %11316 = vmatpush1.bf16.msra.mxu0 %v11293
  %11317 = vmatprep.subr.bf16.mxu0 0
  %11318 = vmatpush1.bf16.msra.mxu0 %v11294
  %11319 = vmatprep.subr.bf16.mxu0 0
  %11320 = vmatpush1.bf16.msra.mxu0 0
  %11321 = vmatprep.subr.bf16.mxu0 0
  %11322 = vmatpush1.bf16.msra.mxu0 0
  %11323 = vmatprep.subr.bf16.mxu0 0
  %11324 = vmatpush1.bf16.msra.mxu0 0
  %11325 = vmatprep.subr.bf16.mxu0 0
  %11326 = vmatpush1.bf16.msra.mxu0 0
  %11327 = vmatprep.subr.bf16.mxu0 0
  %11328 = vmatpush1.bf16.msra.mxu0 0
  %11329 = vmatprep.subr.bf16.mxu0 0
  %11330 = vmatpush1.bf16.msra.mxu0 0
  %11331 = vmatprep.subr.bf16.mxu0 0
  %11332 = vmatpush1.bf16.msra.mxu0 0
  %11333 = vmatprep.subr.bf16.mxu0 0
  %11334 = vmatpush1.bf16.msra.mxu0 0
  %11335 = vmatprep.mubr.bf16.mxu0 0
  %11336 = vmatmul.mubr.bf16.gmra.mrb[0].mxu0 %v11253
  %v11337 = vpop.f32.mrb[0].mxu0
  %v11338 = vadd.f32 0.0, %v11337
  %v11339 = vpop.f32.mrb[0].mxu0
  %v11340 = vpop.f32.mrb[0].mxu0
  %v11341 = vpop.f32.mrb[0].mxu0
  %11342 = vdwg.mxu0
  %v11343 = vadd.f32 %v11189, %v11338
  %v11344 = vld [vmem:[#allocation6 + $0x1e] sm:$0x1]
  %v11345 = vld [vmem:[#allocation6 + $0x3e] sm:$0x1]
  %v11346 = vld [vmem:[#allocation6 + $0x5e] sm:$0x1]
  %v11347 = vld [vmem:[#allocation6 + $0x7e] sm:$0x1]
  %v11348 = vld [vmem:[#allocation6 + $0x9e] sm:$0x1]
  %v11349 = vld [vmem:[#allocation6 + $0xbe] sm:$0x1]
  %v11350 = vld [vmem:[#allocation6 + $0xde] sm:$0x1]
  %v11351 = vld [vmem:[#allocation6 + $0xfe] sm:$0x1]
  %v11352 = vpack.c.bf16 %v11344, %v11344
  %v11353 = vpack.c.bf16 %v11345, %v11345
  %v11354 = vpack.c.bf16 %v11346, %v11346
  %v11355 = vpack.c.bf16 %v11347, %v11347
  %v11356 = vpack.c.bf16 %v11348, %v11348
  %v11357 = vpack.c.bf16 %v11349, %v11349
  %v11358 = vpack.c.bf16 %v11350, %v11350
  %v11359 = vpack.c.bf16 %v11351, %v11351
  %s11360 = scalar_lea.vmem %s7, 1920
  %v11361 = vld [vmem:[%s11360] sm:$0xf]
  %v11362 = vld [vmem:[%s11360 + $0x4] sm:$0xf]
  %v11363 = vld [vmem:[%s11360 + $0x8] sm:$0xf]
  %v11364 = vld [vmem:[%s11360 + $0xc] sm:$0xf]
  %v11365 = vld [vmem:[%s11360 + $0x10] sm:$0xf]
  %v11366 = vld [vmem:[%s11360 + $0x14] sm:$0xf]
  %v11367 = vld [vmem:[%s11360 + $0x18] sm:$0xf]
  %v11368 = vld [vmem:[%s11360 + $0x1c] sm:$0xf]
  %v11369 = vld [vmem:[%s11360 + $0x20] sm:$0xf]
  %v11370 = vld [vmem:[%s11360 + $0x24] sm:$0xf]
  %v11371 = vld [vmem:[%s11360 + $0x28] sm:$0xf]
  %v11372 = vld [vmem:[%s11360 + $0x2c] sm:$0xf]
  %v11373 = vld [vmem:[%s11360 + $0x30] sm:$0xf]
  %v11374 = vld [vmem:[%s11360 + $0x34] sm:$0xf]
  %v11375 = vld [vmem:[%s11360 + $0x38] sm:$0xf]
  %v11376 = vld [vmem:[%s11360 + $0x3c] sm:$0xf]
  %v11385 = vunpack.c.l.b16 %v11352
  %v11386 = vunpack.c.l.b16 %v11353
  %v11387 = vunpack.c.l.b16 %v11354
  %v11388 = vunpack.c.l.b16 %v11355
  %v11389 = vunpack.c.l.b16 %v11356
  %v11390 = vunpack.c.l.b16 %v11357
  %v11391 = vunpack.c.l.b16 %v11358
  %v11392 = vunpack.c.l.b16 %v11359
  %v11393 = vrot.slane %v11386, 7
  %v11394 = vsel %vm6802, %v11393, %v11385
  %v11395 = vrot.slane %v11387, 6
  %v11396 = vsel %vm6805, %v11395, %v11394
  %v11397 = vrot.slane %v11388, 5
  %v11398 = vsel %vm6808, %v11397, %v11396
  %v11399 = vrot.slane %v11389, 4
  %v11400 = vsel %vm6811, %v11399, %v11398
  %v11401 = vrot.slane %v11390, 3
  %v11402 = vsel %vm6814, %v11401, %v11400
  %v11403 = vrot.slane %v11391, 2
  %v11404 = vsel %vm6817, %v11403, %v11402
  %v11405 = vrot.slane %v11392, 1
  %v11406 = vsel %vm6820, %v11405, %v11404
  %v11407 = vpack.c.b16 %v11406, %v11406
  %v11425 = vunpack.c.l.b16 %v11361
  %v11426 = vunpack.c.l.b16 %v11362
  %v11427 = vunpack.c.l.b16 %v11363
  %v11428 = vunpack.c.l.b16 %v11364
  %v11429 = vunpack.c.l.b16 %v11365
  %v11430 = vunpack.c.l.b16 %v11366
  %v11431 = vunpack.c.l.b16 %v11367
  %v11432 = vunpack.c.l.b16 %v11368
  %v11433 = vunpack.c.l.b16 %v11369
  %v11434 = vunpack.c.l.b16 %v11370
  %v11435 = vunpack.c.l.b16 %v11371
  %v11436 = vunpack.c.l.b16 %v11372
  %v11437 = vunpack.c.l.b16 %v11373
  %v11438 = vunpack.c.l.b16 %v11374
  %v11439 = vunpack.c.l.b16 %v11375
  %v11440 = vunpack.c.l.b16 %v11376
  %v11441 = vpack.c.b16 %v11426, %v11425
  %v11442 = vpack.c.b16 %v11428, %v11427
  %v11443 = vpack.c.b16 %v11430, %v11429
  %v11444 = vpack.c.b16 %v11432, %v11431
  %v11445 = vpack.c.b16 %v11434, %v11433
  %v11446 = vpack.c.b16 %v11436, %v11435
  %v11447 = vpack.c.b16 %v11438, %v11437
  %v11448 = vpack.c.b16 %v11440, %v11439
  %11457 = vmatprep.subr.bf16.mxu0 0
  %11458 = vmatpush1.bf16.msra.mxu0 %v11441
  %11459 = vmatprep.subr.bf16.mxu0 0
  %11460 = vmatpush1.bf16.msra.mxu0 %v11442
  %11461 = vmatprep.subr.bf16.mxu0 0
  %11462 = vmatpush1.bf16.msra.mxu0 %v11443
  %11463 = vmatprep.subr.bf16.mxu0 0
  %11464 = vmatpush1.bf16.msra.mxu0 %v11444
  %11465 = vmatprep.subr.bf16.mxu0 0
  %11466 = vmatpush1.bf16.msra.mxu0 %v11445
  %11467 = vmatprep.subr.bf16.mxu0 0
  %11468 = vmatpush1.bf16.msra.mxu0 %v11446
  %11469 = vmatprep.subr.bf16.mxu0 0
  %11470 = vmatpush1.bf16.msra.mxu0 %v11447
  %11471 = vmatprep.subr.bf16.mxu0 0
  %11472 = vmatpush1.bf16.msra.mxu0 %v11448
  %11473 = vmatprep.subr.bf16.mxu0 0
  %11474 = vmatpush1.bf16.msra.mxu0 0
  %11475 = vmatprep.subr.bf16.mxu0 0
  %11476 = vmatpush1.bf16.msra.mxu0 0
  %11477 = vmatprep.subr.bf16.mxu0 0
  %11478 = vmatpush1.bf16.msra.mxu0 0
  %11479 = vmatprep.subr.bf16.mxu0 0
  %11480 = vmatpush1.bf16.msra.mxu0 0
  %11481 = vmatprep.subr.bf16.mxu0 0
  %11482 = vmatpush1.bf16.msra.mxu0 0
  %11483 = vmatprep.subr.bf16.mxu0 0
  %11484 = vmatpush1.bf16.msra.mxu0 0
  %11485 = vmatprep.subr.bf16.mxu0 0
  %11486 = vmatpush1.bf16.msra.mxu0 0
  %11487 = vmatprep.subr.bf16.mxu0 0
  %11488 = vmatpush1.bf16.msra.mxu0 0
  %11489 = vmatprep.mubr.bf16.mxu0 0
  %11490 = vmatmul.mubr.bf16.gmra.mrb[0].mxu0 %v11407
  %v11491 = vpop.f32.mrb[0].mxu0
  %v11492 = vadd.f32 0.0, %v11491
  %v11493 = vpop.f32.mrb[0].mxu0
  %v11494 = vpop.f32.mrb[0].mxu0
  %v11495 = vpop.f32.mrb[0].mxu0
  %11496 = vdwg.mxu0
  %v11497 = vadd.f32 %v11343, %v11492
  %v11498 = vld [vmem:[#allocation6 + $0x1f] sm:$0x1]
  %v11499 = vld [vmem:[#allocation6 + $0x3f] sm:$0x1]
  %v11500 = vld [vmem:[#allocation6 + $0x5f] sm:$0x1]
  %v11501 = vld [vmem:[#allocation6 + $0x7f] sm:$0x1]
  %v11502 = vld [vmem:[#allocation6 + $0x9f] sm:$0x1]
  %v11503 = vld [vmem:[#allocation6 + $0xbf] sm:$0x1]
  %v11504 = vld [vmem:[#allocation6 + $0xdf] sm:$0x1]
  %v11505 = vld [vmem:[#allocation6 + $0xff] sm:$0x1]
  %v11506 = vpack.c.bf16 %v11498, %v11498
  %v11507 = vpack.c.bf16 %v11499, %v11499
  %v11508 = vpack.c.bf16 %v11500, %v11500
  %v11509 = vpack.c.bf16 %v11501, %v11501
  %v11510 = vpack.c.bf16 %v11502, %v11502
  %v11511 = vpack.c.bf16 %v11503, %v11503
  %v11512 = vpack.c.bf16 %v11504, %v11504
  %v11513 = vpack.c.bf16 %v11505, %v11505
  %s11514 = scalar_lea.vmem %s7, 1984
  %v11515 = vld [vmem:[%s11514] sm:$0xf]
  %v11516 = vld [vmem:[%s11514 + $0x4] sm:$0xf]
  %v11517 = vld [vmem:[%s11514 + $0x8] sm:$0xf]
  %v11518 = vld [vmem:[%s11514 + $0xc] sm:$0xf]
  %v11519 = vld [vmem:[%s11514 + $0x10] sm:$0xf]
  %v11520 = vld [vmem:[%s11514 + $0x14] sm:$0xf]
  %v11521 = vld [vmem:[%s11514 + $0x18] sm:$0xf]
  %v11522 = vld [vmem:[%s11514 + $0x1c] sm:$0xf]
  %v11523 = vld [vmem:[%s11514 + $0x20] sm:$0xf]
  %v11524 = vld [vmem:[%s11514 + $0x24] sm:$0xf]
  %v11525 = vld [vmem:[%s11514 + $0x28] sm:$0xf]
  %v11526 = vld [vmem:[%s11514 + $0x2c] sm:$0xf]
  %v11527 = vld [vmem:[%s11514 + $0x30] sm:$0xf]
  %v11528 = vld [vmem:[%s11514 + $0x34] sm:$0xf]
  %v11529 = vld [vmem:[%s11514 + $0x38] sm:$0xf]
  %v11530 = vld [vmem:[%s11514 + $0x3c] sm:$0xf]
  %v11539 = vunpack.c.l.b16 %v11506
  %v11540 = vunpack.c.l.b16 %v11507
  %v11541 = vunpack.c.l.b16 %v11508
  %v11542 = vunpack.c.l.b16 %v11509
  %v11543 = vunpack.c.l.b16 %v11510
  %v11544 = vunpack.c.l.b16 %v11511
  %v11545 = vunpack.c.l.b16 %v11512
  %v11546 = vunpack.c.l.b16 %v11513
  %v11547 = vrot.slane %v11540, 7
  %v11548 = vsel %vm6802, %v11547, %v11539
  %v11549 = vrot.slane %v11541, 6
  %v11550 = vsel %vm6805, %v11549, %v11548
  %v11551 = vrot.slane %v11542, 5
  %v11552 = vsel %vm6808, %v11551, %v11550
  %v11553 = vrot.slane %v11543, 4
  %v11554 = vsel %vm6811, %v11553, %v11552
  %v11555 = vrot.slane %v11544, 3
  %v11556 = vsel %vm6814, %v11555, %v11554
  %v11557 = vrot.slane %v11545, 2
  %v11558 = vsel %vm6817, %v11557, %v11556
  %v11559 = vrot.slane %v11546, 1
  %v11560 = vsel %vm6820, %v11559, %v11558
  %v11561 = vpack.c.b16 %v11560, %v11560
  %v11579 = vunpack.c.l.b16 %v11515
  %v11580 = vunpack.c.l.b16 %v11516
  %v11581 = vunpack.c.l.b16 %v11517
  %v11582 = vunpack.c.l.b16 %v11518
  %v11583 = vunpack.c.l.b16 %v11519
  %v11584 = vunpack.c.l.b16 %v11520
  %v11585 = vunpack.c.l.b16 %v11521
  %v11586 = vunpack.c.l.b16 %v11522
  %v11587 = vunpack.c.l.b16 %v11523
  %v11588 = vunpack.c.l.b16 %v11524
  %v11589 = vunpack.c.l.b16 %v11525
  %v11590 = vunpack.c.l.b16 %v11526
  %v11591 = vunpack.c.l.b16 %v11527
  %v11592 = vunpack.c.l.b16 %v11528
  %v11593 = vunpack.c.l.b16 %v11529
  %v11594 = vunpack.c.l.b16 %v11530
  %v11595 = vpack.c.b16 %v11580, %v11579
  %v11596 = vpack.c.b16 %v11582, %v11581
  %v11597 = vpack.c.b16 %v11584, %v11583
  %v11598 = vpack.c.b16 %v11586, %v11585
  %v11599 = vpack.c.b16 %v11588, %v11587
  %v11600 = vpack.c.b16 %v11590, %v11589
  %v11601 = vpack.c.b16 %v11592, %v11591
  %v11602 = vpack.c.b16 %v11594, %v11593
  %11611 = vmatprep.subr.bf16.mxu0 0
  %11612 = vmatpush1.bf16.msra.mxu0 %v11595
  %11613 = vmatprep.subr.bf16.mxu0 0
  %11614 = vmatpush1.bf16.msra.mxu0 %v11596
  %11615 = vmatprep.subr.bf16.mxu0 0
  %11616 = vmatpush1.bf16.msra.mxu0 %v11597
  %11617 = vmatprep.subr.bf16.mxu0 0
  %11618 = vmatpush1.bf16.msra.mxu0 %v11598
  %11619 = vmatprep.subr.bf16.mxu0 0
  %11620 = vmatpush1.bf16.msra.mxu0 %v11599
  %11621 = vmatprep.subr.bf16.mxu0 0
  %11622 = vmatpush1.bf16.msra.mxu0 %v11600
  %11623 = vmatprep.subr.bf16.mxu0 0
  %11624 = vmatpush1.bf16.msra.mxu0 %v11601
  %11625 = vmatprep.subr.bf16.mxu0 0
  %11626 = vmatpush1.bf16.msra.mxu0 %v11602
  %11627 = vmatprep.subr.bf16.mxu0 0
  %11628 = vmatpush1.bf16.msra.mxu0 0
  %11629 = vmatprep.subr.bf16.mxu0 0
  %11630 = vmatpush1.bf16.msra.mxu0 0
  %11631 = vmatprep.subr.bf16.mxu0 0
  %11632 = vmatpush1.bf16.msra.mxu0 0
  %11633 = vmatprep.subr.bf16.mxu0 0
  %11634 = vmatpush1.bf16.msra.mxu0 0
  %11635 = vmatprep.subr.bf16.mxu0 0
  %11636 = vmatpush1.bf16.msra.mxu0 0
  %11637 = vmatprep.subr.bf16.mxu0 0
  %11638 = vmatpush1.bf16.msra.mxu0 0
  %11639 = vmatprep.subr.bf16.mxu0 0
  %11640 = vmatpush1.bf16.msra.mxu0 0
  %11641 = vmatprep.subr.bf16.mxu0 0
  %11642 = vmatpush1.bf16.msra.mxu0 0
  %11643 = vmatprep.mubr.bf16.mxu0 0
  %11644 = vmatmul.mubr.bf16.gmra.mrb[0].mxu0 %v11561
  %v11645 = vpop.f32.mrb[0].mxu0
  %v11646 = vadd.f32 0.0, %v11645
  %v11647 = vpop.f32.mrb[0].mxu0
  %v11648 = vpop.f32.mrb[0].mxu0
  %v11649 = vpop.f32.mrb[0].mxu0
  %11650 = vdwg.mxu0
  %v11651 = vadd.f32 %v11497, %v11646
  %v11652 = vld [vmem:[%s8] sm:$0x1]
  %v11654 = vlaneseq
  %v11655 = vshrl.u32 %v11654, 7
  %v11656 = vsub.s32 0, %v11655
  %v11657 = vrot.slane %v11652, %v11656
  %v11659 = vadd.f32 %v11651, %v11657
  %vm11660 = vcmp.gt.f32.partialorder %v11659, 0.0
  %v11661 = vmul.f32 %v11659, 0.2
  %v11662 = vsel %vm11660, %v11659, %v11661
  %v11663 = vld [vmem:[%s9] sm:$0x1]
  %v11665 = vlaneseq
  %v11666 = vshrl.u32 %v11665, 7
  %v11667 = vsub.s32 0, %v11666
  %v11668 = vrot.slane %v11663, %v11667
  %v11670 = vmul.f32 %v11662, %v11668
  %vm11671 = vcmask 261120
  %v11672 = vsel %vm11671, %v11670, 0.0
  %11673 = vadd.xlane.f32.xlu0 %v11672
  %v11674 = vpop.xlane.xlu0 %11673
  %v11675 = vld [vmem:[#allocation7] sm:$0x1]
  %v11677 = vlaneseq
  %v11678 = vshrl.u32 %v11677, 7
  %v11679 = vsub.s32 0, %v11678
  %v11680 = vrot.slane %v11675, %v11679
  %v11682 = vadd.f32 %v11674, %v11680
  %vm11683 = vcmask 7168
  %11684 = vst.msk [vmem:[%s11] sm:$0xff] %vm11683, %v11682
  // Predicated region
  $region46: #{discriminator_forward.1} parent=0 // pred_check
    _
  $region47: #{discriminator_forward.1} parent=0 // pred_check_branch
    %11686 = sbr.rel (0) target = $region49
  $region48: #{discriminator_forward.1} parent=0 // pred_region
    _
  $region49: #{discriminator_forward.1} parent=0 // pred_fallthru
    _
  // Predicated region
  $region50: #{discriminator_forward.1} parent=0 // pred_check
    _
  $region51: #{discriminator_forward.1} parent=0 // pred_check_branch
    %11688 = sbr.rel (0) target = $region53
  $region52: #{discriminator_forward.1} parent=0 // pred_region
    _
  $region53: #{discriminator_forward.1} parent=0 // pred_fallthru
    _

</llo_original>
